<compile_context>
chip_gen: v5e
topology: v5e:2x2
jax: 0.10.0
libtpu: 0.0.40
codegen_flags: <defaults>
</compile_context>

<pallas_src>
import math

import jax
import jax.numpy as jnp
from jax.experimental import pallas as pl
from jax.experimental.pallas import tpu as pltpu


def _round_up(x, m):
    return (x + m - 1) // m * m


# ----------------------------- Pallas kernel --------------------------------
def _matmul_bias_relu_kernel(x_ref, w_ref, b_ref, o_ref):
    # bf16 x bf16 -> f32 accumulate on the MXU, f32 bias + ReLU epilogue.
    acc = jnp.dot(x_ref[...], w_ref[...], preferred_element_type=jnp.float32)
    acc = acc + b_ref[...]
    o_ref[...] = jnp.maximum(acc, 0.0).astype(o_ref.dtype)


def matmul_bias_relu(x, w, b, *, out_dtype=jnp.float32):
    """relu(x @ w + b), tiled over (M, N); K kept resident per block.

    x: (M, K) activations, w: (K, N) weights (both cast to bf16), b: (N,) f32.
    """
    M, K = x.shape
    K2, N = w.shape
    assert K == K2

    # N tile: 256 fills the v6e/v7x MXU width; conv7_1 (N=128) uses 128.
    tn = min(256, N)
    assert N % tn == 0, (N, tn)

    # M tile: keep the whole M resident when it comfortably fits VMEM,
    # otherwise 512-row tiles (biggest tile that fits -> fewer weight
    # re-reads, less per-step overhead).
    if M <= 1024:
        tm = _round_up(M, 8)
    else:
        tm = 512
    Mp = _round_up(M, tm)

    xb = x.astype(jnp.bfloat16)
    if Mp != M:
        xb = jnp.pad(xb, ((0, Mp - M), (0, 0)))
    wb = w.astype(jnp.bfloat16)
    bf = b.reshape(1, N).astype(jnp.float32)

    grid = (Mp // tm, N // tn)
    out_bytes = jnp.dtype(out_dtype).itemsize
    cost = pl.CostEstimate(
        flops=2 * Mp * K * N,
        transcendentals=0,
        bytes_accessed=(Mp * K * 2 * grid[1]       # x re-read per N tile (bf16)
                        + K * N * 2 * grid[0]      # w re-read per M tile (bf16)
                        + N * 4                    # bias (f32)
                        + Mp * N * out_bytes),     # output
    )

    out = pl.pallas_call(
        _matmul_bias_relu_kernel,
        out_shape=jax.ShapeDtypeStruct((Mp, N), out_dtype),
        grid_spec=pltpu.PrefetchScalarGridSpec(
            num_scalar_prefetch=0,
            grid=grid,
            in_specs=[
                pl.BlockSpec((tm, K), lambda i, j: (i, 0)),
                pl.BlockSpec((K, tn), lambda i, j: (0, j)),
                pl.BlockSpec((1, tn), lambda i, j: (0, j)),
            ],
            out_specs=pl.BlockSpec((tm, tn), lambda i, j: (i, j)),
        ),
        compiler_params=pltpu.CompilerParams(
            dimension_semantics=("parallel", "parallel"),
            vmem_limit_bytes=64 * 1024 * 1024,
        ),
        cost_estimate=cost,
    )(xb, wb, bf)
    return out[:M] if Mp != M else out


# ------------------------------ conv wrappers --------------------------------
def conv1x1_relu(x_nhwc, w_oihw, b, *, out_dtype=jnp.float32):
    """1x1 conv, stride 1, no padding, fused ReLU."""
    N, H, W, Cin = x_nhwc.shape
    Cout = w_oihw.shape[0]
    w2d = w_oihw.reshape(Cout, Cin).T                     # (Cin, Cout)
    out = matmul_bias_relu(x_nhwc.reshape(N * H * W, Cin), w2d, b,
                           out_dtype=out_dtype)
    return out.reshape(N, H, W, Cout)


def conv3x3_s2_p1_relu(x_nhwc, w_oihw, b, *, out_dtype=jnp.float32):
    """3x3 conv, stride 2, padding 1, fused ReLU (bf16 im2col + GEMM)."""
    N, H, W, Cin = x_nhwc.shape
    Cout = w_oihw.shape[0]
    Ho = (H + 2 - 3) // 2 + 1
    Wo = (W + 2 - 3) // 2 + 1
    xb = x_nhwc.astype(jnp.bfloat16)                      # halve im2col traffic
    xp = jnp.pad(xb, ((0, 0), (1, 1), (1, 1), (0, 0)))
    taps = []
    for kh in range(3):
        for kw in range(3):
            taps.append(
                jax.lax.slice(
                    xp,
                    (0, kh, kw, 0),
                    (N, kh + 2 * (Ho - 1) + 1, kw + 2 * (Wo - 1) + 1, Cin),
                    (1, 2, 2, 1),
                )
            )
    # Concat on the channel (lane) axis -> (N, Ho, Wo, 9*Cin); K ordering is
    # (kh, kw, cin), matching the weight transpose below.
    cols = jnp.concatenate(taps, axis=-1).reshape(N * Ho * Wo, 9 * Cin)
    w2d = jnp.transpose(w_oihw, (2, 3, 1, 0)).reshape(9 * Cin, Cout)
    out = matmul_bias_relu(cols, w2d, b, out_dtype=out_dtype)
    return out.reshape(N, Ho, Wo, Cout)


# ------------------------------ parameters -----------------------------------
def xavier_uniform(key, shape):
    """PyTorch nn.init.xavier_uniform_ for an OIHW conv weight."""
    cout, cin, kh, kw = shape
    fan_in = cin * kh * kw
    fan_out = cout * kh * kw
    bound = math.sqrt(6.0 / (fan_in + fan_out))
    return jax.random.uniform(key, shape, jnp.float32, -bound, bound)


def init_params(key):
    k1, k2, k3, k4 = jax.random.split(key, 4)
    return {
        "conv6_1_w": xavier_uniform(k1, (256, 1024, 1, 1)),
        "conv6_1_b": jnp.zeros((256,), jnp.float32),
        "conv6_2_w": xavier_uniform(k2, (512, 256, 3, 3)),
        "conv6_2_b": jnp.zeros((512,), jnp.float32),
        "conv7_1_w": xavier_uniform(k3, (128, 512, 1, 1)),
        "conv7_1_b": jnp.zeros((128,), jnp.float32),
        "conv7_2_w": xavier_uniform(k4, (256, 128, 3, 3)),
        "conv7_2_b": jnp.zeros((256,), jnp.float32),
    }


# ------------------------------ forward pass ----------------------------------
def auxiliary_convolutions(conv_fc7_feats_nchw, params):
    x = jnp.transpose(conv_fc7_feats_nchw, (0, 2, 3, 1))   # NCHW -> NHWC
    # conv6_1 / conv7_1 outputs only feed the next conv -> keep them bf16;
    # returned feature maps (conv6_2, conv7_2) are emitted in f32 to match
    # the PyTorch reference.
    out = conv1x1_relu(x, params["conv6_1_w"], params["conv6_1_b"],
                       out_dtype=jnp.bfloat16)
    conv6_2_feats = conv3x3_s2_p1_relu(out, params["conv6_2_w"],
                                       params["conv6_2_b"],
                                       out_dtype=jnp.float32)
    out = conv1x1_relu(conv6_2_feats, params["conv7_1_w"], params["conv7_1_b"],
                       out_dtype=jnp.bfloat16)
    conv7_2_feats = conv3x3_s2_p1_relu(out, params["conv7_2_w"],
                                       params["conv7_2_b"],
                                       out_dtype=jnp.float32)
    # back to NCHW to match the PyTorch module's return convention
    return (jnp.transpose(conv6_2_feats, (0, 3, 1, 2)),
            jnp.transpose(conv7_2_feats, (0, 3, 1, 2)))


if __name__ == "__main__":
    key = jax.random.PRNGKey(0)
    pkey, xkey = jax.random.split(key)
    params = init_params(pkey)

    # Channels are fixed by the module (1024 in); spatial kept small (8x8), batch=2.
    x = jax.random.normal(xkey, (2, 1024, 8, 8), jnp.float32)

    fwd = jax.jit(auxiliary_convolutions)
    conv6_2_feats, conv7_2_feats = fwd(x, params)
    jax.block_until_ready((conv6_2_feats, conv7_2_feats))

    assert conv6_2_feats.shape == (2, 512, 4, 4), conv6_2_feats.shape
    assert conv7_2_feats.shape == (2, 256, 2, 2), conv7_2_feats.shape
    assert conv6_2_feats.dtype == jnp.float32 and conv7_2_feats.dtype == jnp.float32
    assert bool(jnp.all(jnp.isfinite(conv6_2_feats)))
    assert bool(jnp.all(jnp.isfinite(conv7_2_feats)))
    assert bool(jnp.all(conv6_2_feats >= 0)) and bool(jnp.all(conv7_2_feats >= 0))
    print("KERNEL_OK")
</pallas_src>

<mosaic_0001>
module attributes {stable_mosaic.version = 11 : i64} {
  func.func @_matmul_bias_relu_kernel(%arg0: i32, %arg1: i32, %arg2: memref<128x1024xbf16, #tpu.memory_space<vmem>>, %arg3: memref<1024x256xbf16, #tpu.memory_space<vmem>>, %arg4: memref<1x256xf32, #tpu.memory_space<vmem>>, %arg5: memref<128x256xbf16, #tpu.memory_space<vmem>>) attributes {dimension_semantics = [#tpu.dimension_semantics<parallel>, #tpu.dimension_semantics<parallel>], iteration_bounds = array<i64: 1, 1>, scalar_prefetch = 0 : i64, scratch_operands = 0 : i64, tpu.core_type = #tpu.core_type<tc>, window_params = [{transform_indices = @transform_0, window_bounds = array<i64: 128, 1024>}, {transform_indices = @transform_1, window_bounds = array<i64: 1024, 256>}, {transform_indices = @transform_2, window_bounds = array<i64: 1, 256>}, {transform_indices = @transform_3, window_bounds = array<i64: 128, 256>}]} {
    %c0 = arith.constant 0 : index
    %c0_0 = arith.constant 0 : index
    %0 = vector.load %arg2[%c0, %c0_0] : memref<128x1024xbf16, #tpu.memory_space<vmem>>, vector<128x1024xbf16>
    %c0_1 = arith.constant 0 : index
    %c0_2 = arith.constant 0 : index
    %1 = vector.load %arg3[%c0_1, %c0_2] : memref<1024x256xbf16, #tpu.memory_space<vmem>>, vector<1024x256xbf16>
    %cst = arith.constant dense<0.000000e+00> : vector<128x256xf32>
    %2 = tpu.matmul %0, %1, %cst {dimension_numbers = #tpu.dot_dimension_numbers<[1], [0], [0], [1], [0, 0, 1, 1], [], []>} : vector<128x1024xbf16>, vector<1024x256xbf16>, vector<128x256xf32> -> vector<128x256xf32>
    %c0_3 = arith.constant 0 : index
    %c0_4 = arith.constant 0 : index
    %3 = vector.load %arg4[%c0_3, %c0_4] : memref<1x256xf32, #tpu.memory_space<vmem>>, vector<1x256xf32>
    %4 = vector.broadcast %3 : vector<1x256xf32> to vector<128x256xf32>
    %5 = arith.addf %2, %4 : vector<128x256xf32>
    %cst_5 = arith.constant 0.000000e+00 : f32
    %6 = vector.broadcast %cst_5 : f32 to vector<128x256xf32>
    %7 = arith.maximumf %5, %6 : vector<128x256xf32>
    %8 = arith.truncf %7 : vector<128x256xf32> to vector<128x256xbf16>
    %c0_6 = arith.constant 0 : index
    %c0_7 = arith.constant 0 : index
    %9 = vector.load %arg5[%c0_6, %c0_7] : memref<128x256xbf16, #tpu.memory_space<vmem>>, vector<128x256xbf16>
    tpu.vector_store %arg5[%c0_6, %c0_7], %8 {strides = array<i32>} : memref<128x256xbf16, #tpu.memory_space<vmem>>, vector<128x256xbf16>,
    return
  }
  func.func @transform_0(%arg0: i32, %arg1: i32) -> (i32, i32) {
    %c0_i32 = arith.constant 0 : i32
    %c0_i32_0 = arith.constant 0 : i32
    return %arg0, %c0_i32 : i32, i32
  }
  func.func @transform_1(%arg0: i32, %arg1: i32) -> (i32, i32) {
    %c0_i32 = arith.constant 0 : i32
    %c0_i32_0 = arith.constant 0 : i32
    return %c0_i32, %arg1 : i32, i32
  }
  func.func @transform_2(%arg0: i32, %arg1: i32) -> (i32, i32) {
    %c0_i32 = arith.constant 0 : i32
    %c0_i32_0 = arith.constant 0 : i32
    return %c0_i32, %arg1 : i32, i32
  }
  func.func @transform_3(%arg0: i32, %arg1: i32) -> (i32, i32) {
    %c0_i32 = arith.constant 0 : i32
    return %arg0, %arg1 : i32, i32
  }
}

module attributes {stable_mosaic.version = 11 : i64} {
  func.func @_matmul_bias_relu_kernel(%arg0: i32, %arg1: i32, %arg2: memref<32x2304xbf16, #tpu.memory_space<vmem>>, %arg3: memref<2304x256xbf16, #tpu.memory_space<vmem>>, %arg4: memref<1x256xf32, #tpu.memory_space<vmem>>, %arg5: memref<32x256xf32, #tpu.memory_space<vmem>>) attributes {dimension_semantics = [#tpu.dimension_semantics<parallel>, #tpu.dimension_semantics<parallel>], iteration_bounds = array<i64: 1, 2>, scalar_prefetch = 0 : i64, scratch_operands = 0 : i64, tpu.core_type = #tpu.core_type<tc>, window_params = [{transform_indices = @transform_0, window_bounds = array<i64: 32, 2304>}, {transform_indices = @transform_1, window_bounds = array<i64: 2304, 256>}, {transform_indices = @transform_2, window_bounds = array<i64: 1, 256>}, {transform_indices = @transform_3, window_bounds = array<i64: 32, 256>}]} {
    %c0 = arith.constant 0 : index
    %c0_0 = arith.constant 0 : index
    %0 = vector.load %arg2[%c0, %c0_0] : memref<32x2304xbf16, #tpu.memory_space<vmem>>, vector<32x2304xbf16>
    %c0_1 = arith.constant 0 : index
    %c0_2 = arith.constant 0 : index
    %1 = vector.load %arg3[%c0_1, %c0_2] : memref<2304x256xbf16, #tpu.memory_space<vmem>>, vector<2304x256xbf16>
    %cst = arith.constant dense<0.000000e+00> : vector<32x256xf32>
    %2 = tpu.matmul %0, %1, %cst {dimension_numbers = #tpu.dot_dimension_numbers<[1], [0], [0], [1], [0, 0, 1, 1], [], []>} : vector<32x2304xbf16>, vector<2304x256xbf16>, vector<32x256xf32> -> vector<32x256xf32>
    %c0_3 = arith.constant 0 : index
    %c0_4 = arith.constant 0 : index
    %3 = vector.load %arg4[%c0_3, %c0_4] : memref<1x256xf32, #tpu.memory_space<vmem>>, vector<1x256xf32>
    %4 = vector.broadcast %3 : vector<1x256xf32> to vector<32x256xf32>
    %5 = arith.addf %2, %4 : vector<32x256xf32>
    %cst_5 = arith.constant 0.000000e+00 : f32
    %6 = vector.broadcast %cst_5 : f32 to vector<32x256xf32>
    %7 = arith.maximumf %5, %6 : vector<32x256xf32>
    %c0_6 = arith.constant 0 : index
    %c0_7 = arith.constant 0 : index
    %8 = vector.load %arg5[%c0_6, %c0_7] : memref<32x256xf32, #tpu.memory_space<vmem>>, vector<32x256xf32>
    tpu.vector_store %arg5[%c0_6, %c0_7], %7 {strides = array<i32>} : memref<32x256xf32, #tpu.memory_space<vmem>>, vector<32x256xf32>,
    return
  }
  func.func @transform_0(%arg0: i32, %arg1: i32) -> (i32, i32) {
    %c0_i32 = arith.constant 0 : i32
    %c0_i32_0 = arith.constant 0 : i32
    return %arg0, %c0_i32 : i32, i32
  }
  func.func @transform_1(%arg0: i32, %arg1: i32) -> (i32, i32) {
    %c0_i32 = arith.constant 0 : i32
    %c0_i32_0 = arith.constant 0 : i32
    return %c0_i32, %arg1 : i32, i32
  }
  func.func @transform_2(%arg0: i32, %arg1: i32) -> (i32, i32) {
    %c0_i32 = arith.constant 0 : i32
    %c0_i32_0 = arith.constant 0 : i32
    return %c0_i32, %arg1 : i32, i32
  }
  func.func @transform_3(%arg0: i32, %arg1: i32) -> (i32, i32) {
    %c0_i32 = arith.constant 0 : i32
    return %arg0, %arg1 : i32, i32
  }
}

module attributes {stable_mosaic.version = 11 : i64} {
  func.func @_matmul_bias_relu_kernel(%arg0: i32, %arg1: i32, %arg2: memref<32x512xbf16, #tpu.memory_space<vmem>>, %arg3: memref<512x128xbf16, #tpu.memory_space<vmem>>, %arg4: memref<1x128xf32, #tpu.memory_space<vmem>>, %arg5: memref<32x128xbf16, #tpu.memory_space<vmem>>) attributes {dimension_semantics = [#tpu.dimension_semantics<parallel>, #tpu.dimension_semantics<parallel>], iteration_bounds = array<i64: 1, 1>, scalar_prefetch = 0 : i64, scratch_operands = 0 : i64, tpu.core_type = #tpu.core_type<tc>, window_params = [{transform_indices = @transform_0, window_bounds = array<i64: 32, 512>}, {transform_indices = @transform_1, window_bounds = array<i64: 512, 128>}, {transform_indices = @transform_2, window_bounds = array<i64: 1, 128>}, {transform_indices = @transform_3, window_bounds = array<i64: 32, 128>}]} {
    %c0 = arith.constant 0 : index
    %c0_0 = arith.constant 0 : index
    %0 = vector.load %arg2[%c0, %c0_0] : memref<32x512xbf16, #tpu.memory_space<vmem>>, vector<32x512xbf16>
    %c0_1 = arith.constant 0 : index
    %c0_2 = arith.constant 0 : index
    %1 = vector.load %arg3[%c0_1, %c0_2] : memref<512x128xbf16, #tpu.memory_space<vmem>>, vector<512x128xbf16>
    %cst = arith.constant dense<0.000000e+00> : vector<32x128xf32>
    %2 = tpu.matmul %0, %1, %cst {dimension_numbers = #tpu.dot_dimension_numbers<[1], [0], [0], [1], [0, 0, 1, 1], [], []>} : vector<32x512xbf16>, vector<512x128xbf16>, vector<32x128xf32> -> vector<32x128xf32>
    %c0_3 = arith.constant 0 : index
    %c0_4 = arith.constant 0 : index
    %3 = vector.load %arg4[%c0_3, %c0_4] : memref<1x128xf32, #tpu.memory_space<vmem>>, vector<1x128xf32>
    %4 = vector.broadcast %3 : vector<1x128xf32> to vector<32x128xf32>
    %5 = arith.addf %2, %4 : vector<32x128xf32>
    %cst_5 = arith.constant 0.000000e+00 : f32
    %6 = vector.broadcast %cst_5 : f32 to vector<32x128xf32>
    %7 = arith.maximumf %5, %6 : vector<32x128xf32>
    %8 = arith.truncf %7 : vector<32x128xf32> to vector<32x128xbf16>
    %c0_6 = arith.constant 0 : index
    %c0_7 = arith.constant 0 : index
    %9 = vector.load %arg5[%c0_6, %c0_7] : memref<32x128xbf16, #tpu.memory_space<vmem>>, vector<32x128xbf16>
    tpu.vector_store %arg5[%c0_6, %c0_7], %8 {strides = array<i32>} : memref<32x128xbf16, #tpu.memory_space<vmem>>, vector<32x128xbf16>,
    return
  }
  func.func @transform_0(%arg0: i32, %arg1: i32) -> (i32, i32) {
    %c0_i32 = arith.constant 0 : i32
    %c0_i32_0 = arith.constant 0 : i32
    return %arg0, %c0_i32 : i32, i32
  }
  func.func @transform_1(%arg0: i32, %arg1: i32) -> (i32, i32) {
    %c0_i32 = arith.constant 0 : i32
    %c0_i32_0 = arith.constant 0 : i32
    return %c0_i32, %arg1 : i32, i32
  }
  func.func @transform_2(%arg0: i32, %arg1: i32) -> (i32, i32) {
    %c0_i32 = arith.constant 0 : i32
    %c0_i32_0 = arith.constant 0 : i32
    return %c0_i32, %arg1 : i32, i32
  }
  func.func @transform_3(%arg0: i32, %arg1: i32) -> (i32, i32) {
    %c0_i32 = arith.constant 0 : i32
    return %arg0, %arg1 : i32, i32
  }
}

module attributes {stable_mosaic.version = 11 : i64} {
  func.func @_matmul_bias_relu_kernel(%arg0: i32, %arg1: i32, %arg2: memref<8x1152xbf16, #tpu.memory_space<vmem>>, %arg3: memref<1152x256xbf16, #tpu.memory_space<vmem>>, %arg4: memref<1x256xf32, #tpu.memory_space<vmem>>, %arg5: memref<8x256xf32, #tpu.memory_space<vmem>>) attributes {dimension_semantics = [#tpu.dimension_semantics<parallel>, #tpu.dimension_semantics<parallel>], iteration_bounds = array<i64: 1, 1>, scalar_prefetch = 0 : i64, scratch_operands = 0 : i64, tpu.core_type = #tpu.core_type<tc>, window_params = [{transform_indices = @transform_0, window_bounds = array<i64: 8, 1152>}, {transform_indices = @transform_1, window_bounds = array<i64: 1152, 256>}, {transform_indices = @transform_2, window_bounds = array<i64: 1, 256>}, {transform_indices = @transform_3, window_bounds = array<i64: 8, 256>}]} {
    %c0 = arith.constant 0 : index
    %c0_0 = arith.constant 0 : index
    %0 = vector.load %arg2[%c0, %c0_0] : memref<8x1152xbf16, #tpu.memory_space<vmem>>, vector<8x1152xbf16>
    %c0_1 = arith.constant 0 : index
    %c0_2 = arith.constant 0 : index
    %1 = vector.load %arg3[%c0_1, %c0_2] : memref<1152x256xbf16, #tpu.memory_space<vmem>>, vector<1152x256xbf16>
    %cst = arith.constant dense<0.000000e+00> : vector<8x256xf32>
    %2 = tpu.matmul %0, %1, %cst {dimension_numbers = #tpu.dot_dimension_numbers<[1], [0], [0], [1], [0, 0, 1, 1], [], []>} : vector<8x1152xbf16>, vector<1152x256xbf16>, vector<8x256xf32> -> vector<8x256xf32>
    %c0_3 = arith.constant 0 : index
    %c0_4 = arith.constant 0 : index
    %3 = vector.load %arg4[%c0_3, %c0_4] : memref<1x256xf32, #tpu.memory_space<vmem>>, vector<1x256xf32>
    %4 = vector.broadcast %3 : vector<1x256xf32> to vector<8x256xf32>
    %5 = arith.addf %2, %4 : vector<8x256xf32>
    %cst_5 = arith.constant 0.000000e+00 : f32
    %6 = vector.broadcast %cst_5 : f32 to vector<8x256xf32>
    %7 = arith.maximumf %5, %6 : vector<8x256xf32>
    %c0_6 = arith.constant 0 : index
    %c0_7 = arith.constant 0 : index
    %8 = vector.load %arg5[%c0_6, %c0_7] : memref<8x256xf32, #tpu.memory_space<vmem>>, vector<8x256xf32>
    tpu.vector_store %arg5[%c0_6, %c0_7], %7 {strides = array<i32>} : memref<8x256xf32, #tpu.memory_space<vmem>>, vector<8x256xf32>,
    return
  }
  func.func @transform_0(%arg0: i32, %arg1: i32) -> (i32, i32) {
    %c0_i32 = arith.constant 0 : i32
    %c0_i32_0 = arith.constant 0 : i32
    return %arg0, %c0_i32 : i32, i32
  }
  func.func @transform_1(%arg0: i32, %arg1: i32) -> (i32, i32) {
    %c0_i32 = arith.constant 0 : i32
    %c0_i32_0 = arith.constant 0 : i32
    return %c0_i32, %arg1 : i32, i32
  }
  func.func @transform_2(%arg0: i32, %arg1: i32) -> (i32, i32) {
    %c0_i32 = arith.constant 0 : i32
    %c0_i32_0 = arith.constant 0 : i32
    return %c0_i32, %arg1 : i32, i32
  }
  func.func @transform_3(%arg0: i32, %arg1: i32) -> (i32, i32) {
    %c0_i32 = arith.constant 0 : i32
    return %arg0, %arg1 : i32, i32
  }
}

</mosaic_0001>

<llo_original>
// kernel: auxiliary_convolutions.4
$region0: #{auxiliary_convolutions.4}
  #allocation0 [shape = 'u32[]', space=smem, size = 0x4, offset = 0x4, fixed_abs, tag = 'smem constant byte address 0x4 - core index']
  #allocation1 [shape = 'u32[72,128]{1,0:T(1,128)}', space=vmem, size = 0x9000, scoped, tag = 'internal scratch']
  %s0 = inlined_call_operand.vmem [shape: bf16[128,1024], index: 0, kind: input, shape index: {}]
  %s1 = inlined_call_operand.vmem [shape: bf16[1024,256], index: 1, kind: input, shape index: {}]
  %s2 = inlined_call_operand.vmem [shape: f32[1,256], index: 2, kind: input, shape index: {}]
  %s3 = inlined_call_operand.vmem [shape: bf16[128,256], index: 3, kind: output, shape index: {}]
  %s4 = sld [smem:[#allocation0]]
  $region22: #{auxiliary_convolutions.4} parent=0
    _
  %s6 = ssub.s32 1, %s4
  %s7 = scalar_select 0, %s6, %s4
  // Predicated region
  $region2: #{auxiliary_convolutions.4} parent=0 // pred_check
    _
  $region3: #{auxiliary_convolutions.4} parent=0 // pred_check_branch
    %9 = sbr.rel (0) target = $region5
  $region4: #{auxiliary_convolutions.4} parent=0 // pred_region
    _
  $region5: #{auxiliary_convolutions.4} parent=0 // pred_fallthru
    _
  // Predicated region
  $region6: #{auxiliary_convolutions.4} parent=0 // pred_check
    _
  $region7: #{auxiliary_convolutions.4} parent=0 // pred_check_branch
    %11 = sbr.rel (0) target = $region9
  $region8: #{auxiliary_convolutions.4} parent=0 // pred_region
    _
  $region9: #{auxiliary_convolutions.4} parent=0 // pred_fallthru
    _
  // Predicated region
  $region10: #{auxiliary_convolutions.4} parent=0 // pred_check
    _
  $region11: #{auxiliary_convolutions.4} parent=0 // pred_check_branch
    %13 = sbr.rel (0) target = $region13
  $region12: #{auxiliary_convolutions.4} parent=0 // pred_region
    _
  $region13: #{auxiliary_convolutions.4} parent=0 // pred_fallthru
    _
  %v14 = vld [vmem:[%s0] sm:$0xff]
  %v15 = vld [vmem:[%s0 + $0x8] sm:$0xff]
  %v16 = vld [vmem:[%s0 + $0x10] sm:$0xff]
  %v17 = vld [vmem:[%s0 + $0x18] sm:$0xff]
  %v18 = vld [vmem:[%s0 + $0x20] sm:$0xff]
  %v19 = vld [vmem:[%s0 + $0x28] sm:$0xff]
  %v20 = vld [vmem:[%s0 + $0x30] sm:$0xff]
  %v21 = vld [vmem:[%s0 + $0x38] sm:$0xff]
  %v22 = vld [vmem:[%s0 + $0x40] sm:$0xff]
  %v23 = vld [vmem:[%s0 + $0x48] sm:$0xff]
  %v24 = vld [vmem:[%s0 + $0x50] sm:$0xff]
  %v25 = vld [vmem:[%s0 + $0x58] sm:$0xff]
  %v26 = vld [vmem:[%s0 + $0x60] sm:$0xff]
  %v27 = vld [vmem:[%s0 + $0x68] sm:$0xff]
  %v28 = vld [vmem:[%s0 + $0x70] sm:$0xff]
  %v29 = vld [vmem:[%s0 + $0x78] sm:$0xff]
  %v30 = vld [vmem:[%s0 + $0x80] sm:$0xff]
  %v31 = vld [vmem:[%s0 + $0x88] sm:$0xff]
  %v32 = vld [vmem:[%s0 + $0x90] sm:$0xff]
  %v33 = vld [vmem:[%s0 + $0x98] sm:$0xff]
  %v34 = vld [vmem:[%s0 + $0xa0] sm:$0xff]
  %v35 = vld [vmem:[%s0 + $0xa8] sm:$0xff]
  %v36 = vld [vmem:[%s0 + $0xb0] sm:$0xff]
  %v37 = vld [vmem:[%s0 + $0xb8] sm:$0xff]
  %v38 = vld [vmem:[%s0 + $0xc0] sm:$0xff]
  %v39 = vld [vmem:[%s0 + $0xc8] sm:$0xff]
  %v40 = vld [vmem:[%s0 + $0xd0] sm:$0xff]
  %v41 = vld [vmem:[%s0 + $0xd8] sm:$0xff]
  %v42 = vld [vmem:[%s0 + $0xe0] sm:$0xff]
  %v43 = vld [vmem:[%s0 + $0xe8] sm:$0xff]
  %v44 = vld [vmem:[%s0 + $0xf0] sm:$0xff]
  %v45 = vld [vmem:[%s0 + $0xf8] sm:$0xff]
  %v46 = vld [vmem:[%s0 + $0x100] sm:$0xff]
  %v47 = vld [vmem:[%s0 + $0x108] sm:$0xff]
  %v48 = vld [vmem:[%s0 + $0x110] sm:$0xff]
  %v49 = vld [vmem:[%s0 + $0x118] sm:$0xff]
  %v50 = vld [vmem:[%s0 + $0x120] sm:$0xff]
  %v51 = vld [vmem:[%s0 + $0x128] sm:$0xff]
  %v52 = vld [vmem:[%s0 + $0x130] sm:$0xff]
  %v53 = vld [vmem:[%s0 + $0x138] sm:$0xff]
  %v54 = vld [vmem:[%s0 + $0x140] sm:$0xff]
  %v55 = vld [vmem:[%s0 + $0x148] sm:$0xff]
  %v56 = vld [vmem:[%s0 + $0x150] sm:$0xff]
  %v57 = vld [vmem:[%s0 + $0x158] sm:$0xff]
  %v58 = vld [vmem:[%s0 + $0x160] sm:$0xff]
  %v59 = vld [vmem:[%s0 + $0x168] sm:$0xff]
  %v60 = vld [vmem:[%s0 + $0x170] sm:$0xff]
  %v61 = vld [vmem:[%s0 + $0x178] sm:$0xff]
  %v62 = vld [vmem:[%s0 + $0x180] sm:$0xff]
  %v63 = vld [vmem:[%s0 + $0x188] sm:$0xff]
  %v64 = vld [vmem:[%s0 + $0x190] sm:$0xff]
  %v65 = vld [vmem:[%s0 + $0x198] sm:$0xff]
  %v66 = vld [vmem:[%s0 + $0x1a0] sm:$0xff]
  %v67 = vld [vmem:[%s0 + $0x1a8] sm:$0xff]
  %v68 = vld [vmem:[%s0 + $0x1b0] sm:$0xff]
  %v69 = vld [vmem:[%s0 + $0x1b8] sm:$0xff]
  %v70 = vld [vmem:[%s0 + $0x1c0] sm:$0xff]
  %v71 = vld [vmem:[%s0 + $0x1c8] sm:$0xff]
  %v72 = vld [vmem:[%s0 + $0x1d0] sm:$0xff]
  %v73 = vld [vmem:[%s0 + $0x1d8] sm:$0xff]
  %v74 = vld [vmem:[%s0 + $0x1e0] sm:$0xff]
  %v75 = vld [vmem:[%s0 + $0x1e8] sm:$0xff]
  %v76 = vld [vmem:[%s0 + $0x1f0] sm:$0xff]
  %v77 = vld [vmem:[%s0 + $0x1f8] sm:$0xff]
  %v78 = vld [vmem:[%s1] sm:$0xff]
  %v79 = vld [vmem:[%s1 + $0x8] sm:$0xff]
  %v80 = vld [vmem:[%s1 + $0x10] sm:$0xff]
  %v81 = vld [vmem:[%s1 + $0x18] sm:$0xff]
  %v82 = vld [vmem:[%s1 + $0x20] sm:$0xff]
  %v83 = vld [vmem:[%s1 + $0x28] sm:$0xff]
  %v84 = vld [vmem:[%s1 + $0x30] sm:$0xff]
  %v85 = vld [vmem:[%s1 + $0x38] sm:$0xff]
  %v86 = vld [vmem:[%s1 + $0x40] sm:$0xff]
  %v87 = vld [vmem:[%s1 + $0x48] sm:$0xff]
  %v88 = vld [vmem:[%s1 + $0x50] sm:$0xff]
  %v89 = vld [vmem:[%s1 + $0x58] sm:$0xff]
  %v90 = vld [vmem:[%s1 + $0x60] sm:$0xff]
  %v91 = vld [vmem:[%s1 + $0x68] sm:$0xff]
  %v92 = vld [vmem:[%s1 + $0x70] sm:$0xff]
  %v93 = vld [vmem:[%s1 + $0x78] sm:$0xff]
  %v94 = vld [vmem:[%s1 + $0x80] sm:$0xff]
  %v95 = vld [vmem:[%s1 + $0x88] sm:$0xff]
  %v96 = vld [vmem:[%s1 + $0x90] sm:$0xff]
  %v97 = vld [vmem:[%s1 + $0x98] sm:$0xff]
  %v98 = vld [vmem:[%s1 + $0xa0] sm:$0xff]
  %v99 = vld [vmem:[%s1 + $0xa8] sm:$0xff]
  %v100 = vld [vmem:[%s1 + $0xb0] sm:$0xff]
  %v101 = vld [vmem:[%s1 + $0xb8] sm:$0xff]
  %v102 = vld [vmem:[%s1 + $0xc0] sm:$0xff]
  %v103 = vld [vmem:[%s1 + $0xc8] sm:$0xff]
  %v104 = vld [vmem:[%s1 + $0xd0] sm:$0xff]
  %v105 = vld [vmem:[%s1 + $0xd8] sm:$0xff]
  %v106 = vld [vmem:[%s1 + $0xe0] sm:$0xff]
  %v107 = vld [vmem:[%s1 + $0xe8] sm:$0xff]
  %v108 = vld [vmem:[%s1 + $0xf0] sm:$0xff]
  %v109 = vld [vmem:[%s1 + $0xf8] sm:$0xff]
  %v110 = vld [vmem:[%s1 + $0x100] sm:$0xff]
  %v111 = vld [vmem:[%s1 + $0x108] sm:$0xff]
  %v112 = vld [vmem:[%s1 + $0x110] sm:$0xff]
  %v113 = vld [vmem:[%s1 + $0x118] sm:$0xff]
  %v114 = vld [vmem:[%s1 + $0x120] sm:$0xff]
  %v115 = vld [vmem:[%s1 + $0x128] sm:$0xff]
  %v116 = vld [vmem:[%s1 + $0x130] sm:$0xff]
  %v117 = vld [vmem:[%s1 + $0x138] sm:$0xff]
  %v118 = vld [vmem:[%s1 + $0x140] sm:$0xff]
  %v119 = vld [vmem:[%s1 + $0x148] sm:$0xff]
  %v120 = vld [vmem:[%s1 + $0x150] sm:$0xff]
  %v121 = vld [vmem:[%s1 + $0x158] sm:$0xff]
  %v122 = vld [vmem:[%s1 + $0x160] sm:$0xff]
  %v123 = vld [vmem:[%s1 + $0x168] sm:$0xff]
  %v124 = vld [vmem:[%s1 + $0x170] sm:$0xff]
  %v125 = vld [vmem:[%s1 + $0x178] sm:$0xff]
  %v126 = vld [vmem:[%s1 + $0x180] sm:$0xff]
  %v127 = vld [vmem:[%s1 + $0x188] sm:$0xff]
  %v128 = vld [vmem:[%s1 + $0x190] sm:$0xff]
  %v129 = vld [vmem:[%s1 + $0x198] sm:$0xff]
  %v130 = vld [vmem:[%s1 + $0x1a0] sm:$0xff]
  %v131 = vld [vmem:[%s1 + $0x1a8] sm:$0xff]
  %v132 = vld [vmem:[%s1 + $0x1b0] sm:$0xff]
  %v133 = vld [vmem:[%s1 + $0x1b8] sm:$0xff]
  %v134 = vld [vmem:[%s1 + $0x1c0] sm:$0xff]
  %v135 = vld [vmem:[%s1 + $0x1c8] sm:$0xff]
  %v136 = vld [vmem:[%s1 + $0x1d0] sm:$0xff]
  %v137 = vld [vmem:[%s1 + $0x1d8] sm:$0xff]
  %v138 = vld [vmem:[%s1 + $0x1e0] sm:$0xff]
  %v139 = vld [vmem:[%s1 + $0x1e8] sm:$0xff]
  %v140 = vld [vmem:[%s1 + $0x1f0] sm:$0xff]
  %v141 = vld [vmem:[%s1 + $0x1f8] sm:$0xff]
  %v142 = vld [vmem:[%s1 + $0x200] sm:$0xff]
  %v143 = vld [vmem:[%s1 + $0x208] sm:$0xff]
  %v144 = vld [vmem:[%s1 + $0x210] sm:$0xff]
  %v145 = vld [vmem:[%s1 + $0x218] sm:$0xff]
  %v146 = vld [vmem:[%s1 + $0x220] sm:$0xff]
  %v147 = vld [vmem:[%s1 + $0x228] sm:$0xff]
  %v148 = vld [vmem:[%s1 + $0x230] sm:$0xff]
  %v149 = vld [vmem:[%s1 + $0x238] sm:$0xff]
  %v150 = vld [vmem:[%s1 + $0x240] sm:$0xff]
  %v151 = vld [vmem:[%s1 + $0x248] sm:$0xff]
  %v152 = vld [vmem:[%s1 + $0x250] sm:$0xff]
  %v153 = vld [vmem:[%s1 + $0x258] sm:$0xff]
  %v154 = vld [vmem:[%s1 + $0x260] sm:$0xff]
  %v155 = vld [vmem:[%s1 + $0x268] sm:$0xff]
  %v156 = vld [vmem:[%s1 + $0x270] sm:$0xff]
  %v157 = vld [vmem:[%s1 + $0x278] sm:$0xff]
  %v158 = vld [vmem:[%s1 + $0x280] sm:$0xff]
  %v159 = vld [vmem:[%s1 + $0x288] sm:$0xff]
  %v160 = vld [vmem:[%s1 + $0x290] sm:$0xff]
  %v161 = vld [vmem:[%s1 + $0x298] sm:$0xff]
  %v162 = vld [vmem:[%s1 + $0x2a0] sm:$0xff]
  %v163 = vld [vmem:[%s1 + $0x2a8] sm:$0xff]
  %v164 = vld [vmem:[%s1 + $0x2b0] sm:$0xff]
  %v165 = vld [vmem:[%s1 + $0x2b8] sm:$0xff]
  %v166 = vld [vmem:[%s1 + $0x2c0] sm:$0xff]
  %v167 = vld [vmem:[%s1 + $0x2c8] sm:$0xff]
  %v168 = vld [vmem:[%s1 + $0x2d0] sm:$0xff]
  %v169 = vld [vmem:[%s1 + $0x2d8] sm:$0xff]
  %v170 = vld [vmem:[%s1 + $0x2e0] sm:$0xff]
  %v171 = vld [vmem:[%s1 + $0x2e8] sm:$0xff]
  %v172 = vld [vmem:[%s1 + $0x2f0] sm:$0xff]
  %v173 = vld [vmem:[%s1 + $0x2f8] sm:$0xff]
  %v174 = vld [vmem:[%s1 + $0x300] sm:$0xff]
  %v175 = vld [vmem:[%s1 + $0x308] sm:$0xff]
  %v176 = vld [vmem:[%s1 + $0x310] sm:$0xff]
  %v177 = vld [vmem:[%s1 + $0x318] sm:$0xff]
  %v178 = vld [vmem:[%s1 + $0x320] sm:$0xff]
  %v179 = vld [vmem:[%s1 + $0x328] sm:$0xff]
  %v180 = vld [vmem:[%s1 + $0x330] sm:$0xff]
  %v181 = vld [vmem:[%s1 + $0x338] sm:$0xff]
  %v182 = vld [vmem:[%s1 + $0x340] sm:$0xff]
  %v183 = vld [vmem:[%s1 + $0x348] sm:$0xff]
  %v184 = vld [vmem:[%s1 + $0x350] sm:$0xff]
  %v185 = vld [vmem:[%s1 + $0x358] sm:$0xff]
  %v186 = vld [vmem:[%s1 + $0x360] sm:$0xff]
  %v187 = vld [vmem:[%s1 + $0x368] sm:$0xff]
  %v188 = vld [vmem:[%s1 + $0x370] sm:$0xff]
  %v189 = vld [vmem:[%s1 + $0x378] sm:$0xff]
  %v190 = vld [vmem:[%s1 + $0x380] sm:$0xff]
  %v191 = vld [vmem:[%s1 + $0x388] sm:$0xff]
  %v192 = vld [vmem:[%s1 + $0x390] sm:$0xff]
  %v193 = vld [vmem:[%s1 + $0x398] sm:$0xff]
  %v194 = vld [vmem:[%s1 + $0x3a0] sm:$0xff]
  %v195 = vld [vmem:[%s1 + $0x3a8] sm:$0xff]
  %v196 = vld [vmem:[%s1 + $0x3b0] sm:$0xff]
  %v197 = vld [vmem:[%s1 + $0x3b8] sm:$0xff]
  %v198 = vld [vmem:[%s1 + $0x3c0] sm:$0xff]
  %v199 = vld [vmem:[%s1 + $0x3c8] sm:$0xff]
  %v200 = vld [vmem:[%s1 + $0x3d0] sm:$0xff]
  %v201 = vld [vmem:[%s1 + $0x3d8] sm:$0xff]
  %v202 = vld [vmem:[%s1 + $0x3e0] sm:$0xff]
  %v203 = vld [vmem:[%s1 + $0x3e8] sm:$0xff]
  %v204 = vld [vmem:[%s1 + $0x3f0] sm:$0xff]
  %v205 = vld [vmem:[%s1 + $0x3f8] sm:$0xff]
  %v206 = vld [vmem:[%s2] sm:$0x3]
  %v208 = vperm.slane %v206, 0
  %v209 = vperm.slane %v206, 1
  %v276 = vunpack.c.l.b16 %v14
  %v277 = vunpack.c.h.b16 %v14
  %v278 = vunpack.c.l.b16 %v15
  %v279 = vunpack.c.h.b16 %v15
  %v280 = vunpack.c.l.b16 %v16
  %v281 = vunpack.c.h.b16 %v16
  %v282 = vunpack.c.l.b16 %v17
  %v283 = vunpack.c.h.b16 %v17
  %v284 = vunpack.c.l.b16 %v18
  %v285 = vunpack.c.h.b16 %v18
  %v286 = vunpack.c.l.b16 %v19
  %v287 = vunpack.c.h.b16 %v19
  %v288 = vunpack.c.l.b16 %v20
  %v289 = vunpack.c.h.b16 %v20
  %v290 = vunpack.c.l.b16 %v21
  %v291 = vunpack.c.h.b16 %v21
  %v292 = vunpack.c.l.b16 %v22
  %v293 = vunpack.c.h.b16 %v22
  %v294 = vunpack.c.l.b16 %v23
  %v295 = vunpack.c.h.b16 %v23
  %v296 = vunpack.c.l.b16 %v24
  %v297 = vunpack.c.h.b16 %v24
  %v298 = vunpack.c.l.b16 %v25
  %v299 = vunpack.c.h.b16 %v25
  %v300 = vunpack.c.l.b16 %v26
  %v301 = vunpack.c.h.b16 %v26
  %v302 = vunpack.c.l.b16 %v27
  %v303 = vunpack.c.h.b16 %v27
  %v304 = vunpack.c.l.b16 %v28
  %v305 = vunpack.c.h.b16 %v28
  %v306 = vunpack.c.l.b16 %v29
  %v307 = vunpack.c.h.b16 %v29
  %v308 = vunpack.c.l.b16 %v30
  %v309 = vunpack.c.h.b16 %v30
  %v310 = vunpack.c.l.b16 %v31
  %v311 = vunpack.c.h.b16 %v31
  %v312 = vunpack.c.l.b16 %v32
  %v313 = vunpack.c.h.b16 %v32
  %v314 = vunpack.c.l.b16 %v33
  %v315 = vunpack.c.h.b16 %v33
  %v316 = vunpack.c.l.b16 %v34
  %v317 = vunpack.c.h.b16 %v34
  %v318 = vunpack.c.l.b16 %v35
  %v319 = vunpack.c.h.b16 %v35
  %v320 = vunpack.c.l.b16 %v36
  %v321 = vunpack.c.h.b16 %v36
  %v322 = vunpack.c.l.b16 %v37
  %v323 = vunpack.c.h.b16 %v37
  %v324 = vunpack.c.l.b16 %v38
  %v325 = vunpack.c.h.b16 %v38
  %v326 = vunpack.c.l.b16 %v39
  %v327 = vunpack.c.h.b16 %v39
  %v328 = vunpack.c.l.b16 %v40
  %v329 = vunpack.c.h.b16 %v40
  %v330 = vunpack.c.l.b16 %v41
  %v331 = vunpack.c.h.b16 %v41
  %v332 = vunpack.c.l.b16 %v42
  %v333 = vunpack.c.h.b16 %v42
  %v334 = vunpack.c.l.b16 %v43
  %v335 = vunpack.c.h.b16 %v43
  %v336 = vunpack.c.l.b16 %v44
  %v337 = vunpack.c.h.b16 %v44
  %v338 = vunpack.c.l.b16 %v45
  %v339 = vunpack.c.h.b16 %v45
  %v340 = vunpack.c.l.b16 %v46
  %v341 = vunpack.c.h.b16 %v46
  %v342 = vunpack.c.l.b16 %v47
  %v343 = vunpack.c.h.b16 %v47
  %v344 = vunpack.c.l.b16 %v48
  %v345 = vunpack.c.h.b16 %v48
  %v346 = vunpack.c.l.b16 %v49
  %v347 = vunpack.c.h.b16 %v49
  %v348 = vunpack.c.l.b16 %v50
  %v349 = vunpack.c.h.b16 %v50
  %v350 = vunpack.c.l.b16 %v51
  %v351 = vunpack.c.h.b16 %v51
  %v352 = vunpack.c.l.b16 %v52
  %v353 = vunpack.c.h.b16 %v52
  %v354 = vunpack.c.l.b16 %v53
  %v355 = vunpack.c.h.b16 %v53
  %v356 = vunpack.c.l.b16 %v54
  %v357 = vunpack.c.h.b16 %v54
  %v358 = vunpack.c.l.b16 %v55
  %v359 = vunpack.c.h.b16 %v55
  %v360 = vunpack.c.l.b16 %v56
  %v361 = vunpack.c.h.b16 %v56
  %v362 = vunpack.c.l.b16 %v57
  %v363 = vunpack.c.h.b16 %v57
  %v364 = vunpack.c.l.b16 %v58
  %v365 = vunpack.c.h.b16 %v58
  %v366 = vunpack.c.l.b16 %v59
  %v367 = vunpack.c.h.b16 %v59
  %v368 = vunpack.c.l.b16 %v60
  %v369 = vunpack.c.h.b16 %v60
  %v370 = vunpack.c.l.b16 %v61
  %v371 = vunpack.c.h.b16 %v61
  %v372 = vunpack.c.l.b16 %v62
  %v373 = vunpack.c.h.b16 %v62
  %v374 = vunpack.c.l.b16 %v63
  %v375 = vunpack.c.h.b16 %v63
  %v376 = vunpack.c.l.b16 %v64
  %v377 = vunpack.c.h.b16 %v64
  %v378 = vunpack.c.l.b16 %v65
  %v379 = vunpack.c.h.b16 %v65
  %v380 = vunpack.c.l.b16 %v66
  %v381 = vunpack.c.h.b16 %v66
  %v382 = vunpack.c.l.b16 %v67
  %v383 = vunpack.c.h.b16 %v67
  %v384 = vunpack.c.l.b16 %v68
  %v385 = vunpack.c.h.b16 %v68
  %v386 = vunpack.c.l.b16 %v69
  %v387 = vunpack.c.h.b16 %v69
  %v388 = vunpack.c.l.b16 %v70
  %v389 = vunpack.c.h.b16 %v70
  %v390 = vunpack.c.l.b16 %v71
  %v391 = vunpack.c.h.b16 %v71
  %v392 = vunpack.c.l.b16 %v72
  %v393 = vunpack.c.h.b16 %v72
  %v394 = vunpack.c.l.b16 %v73
  %v395 = vunpack.c.h.b16 %v73
  %v396 = vunpack.c.l.b16 %v74
  %v397 = vunpack.c.h.b16 %v74
  %v398 = vunpack.c.l.b16 %v75
  %v399 = vunpack.c.h.b16 %v75
  %v400 = vunpack.c.l.b16 %v76
  %v401 = vunpack.c.h.b16 %v76
  %v402 = vunpack.c.l.b16 %v77
  %v403 = vunpack.c.h.b16 %v77
  %v404 = vpack.c.b16 %v284, %v276
  %v405 = vpack.c.b16 %v285, %v277
  %v406 = vpack.c.b16 %v286, %v278
  %v407 = vpack.c.b16 %v287, %v279
  %v408 = vpack.c.b16 %v288, %v280
  %v409 = vpack.c.b16 %v289, %v281
  %v410 = vpack.c.b16 %v290, %v282
  %v411 = vpack.c.b16 %v291, %v283
  %v412 = vpack.c.b16 %v300, %v292
  %v413 = vpack.c.b16 %v301, %v293
  %v414 = vpack.c.b16 %v302, %v294
  %v415 = vpack.c.b16 %v303, %v295
  %v416 = vpack.c.b16 %v304, %v296
  %v417 = vpack.c.b16 %v305, %v297
  %v418 = vpack.c.b16 %v306, %v298
  %v419 = vpack.c.b16 %v307, %v299
  %v420 = vpack.c.b16 %v316, %v308
  %v421 = vpack.c.b16 %v317, %v309
  %v422 = vpack.c.b16 %v318, %v310
  %v423 = vpack.c.b16 %v319, %v311
  %v424 = vpack.c.b16 %v320, %v312
  %v425 = vpack.c.b16 %v321, %v313
  %v426 = vpack.c.b16 %v322, %v314
  %v427 = vpack.c.b16 %v323, %v315
  %v428 = vpack.c.b16 %v332, %v324
  %v429 = vpack.c.b16 %v333, %v325
  %v430 = vpack.c.b16 %v334, %v326
  %v431 = vpack.c.b16 %v335, %v327
  %v432 = vpack.c.b16 %v336, %v328
  %v433 = vpack.c.b16 %v337, %v329
  %v434 = vpack.c.b16 %v338, %v330
  %v435 = vpack.c.b16 %v339, %v331
  %v436 = vpack.c.b16 %v348, %v340
  %v437 = vpack.c.b16 %v349, %v341
  %v438 = vpack.c.b16 %v350, %v342
  %v439 = vpack.c.b16 %v351, %v343
  %v440 = vpack.c.b16 %v352, %v344
  %v441 = vpack.c.b16 %v353, %v345
  %v442 = vpack.c.b16 %v354, %v346
  %v443 = vpack.c.b16 %v355, %v347
  %v444 = vpack.c.b16 %v364, %v356
  %v445 = vpack.c.b16 %v365, %v357
  %v446 = vpack.c.b16 %v366, %v358
  %v447 = vpack.c.b16 %v367, %v359
  %v448 = vpack.c.b16 %v368, %v360
  %v449 = vpack.c.b16 %v369, %v361
  %v450 = vpack.c.b16 %v370, %v362
  %v451 = vpack.c.b16 %v371, %v363
  %v452 = vpack.c.b16 %v380, %v372
  %v453 = vpack.c.b16 %v381, %v373
  %v454 = vpack.c.b16 %v382, %v374
  %v455 = vpack.c.b16 %v383, %v375
  %v456 = vpack.c.b16 %v384, %v376
  %v457 = vpack.c.b16 %v385, %v377
  %v458 = vpack.c.b16 %v386, %v378
  %v459 = vpack.c.b16 %v387, %v379
  %v460 = vpack.c.b16 %v396, %v388
  %v461 = vpack.c.b16 %v397, %v389
  %v462 = vpack.c.b16 %v398, %v390
  %v463 = vpack.c.b16 %v399, %v391
  %v464 = vpack.c.b16 %v400, %v392
  %v465 = vpack.c.b16 %v401, %v393
  %v466 = vpack.c.b16 %v402, %v394
  %v467 = vpack.c.b16 %v403, %v395
  %v660 = vunpack.c.l.b16 %v78
  %v661 = vunpack.c.h.b16 %v78
  %v662 = vunpack.c.l.b16 %v79
  %v663 = vunpack.c.h.b16 %v79
  %v664 = vunpack.c.l.b16 %v80
  %v665 = vunpack.c.h.b16 %v80
  %v666 = vunpack.c.l.b16 %v81
  %v667 = vunpack.c.h.b16 %v81
  %v668 = vunpack.c.l.b16 %v82
  %v669 = vunpack.c.h.b16 %v82
  %v670 = vunpack.c.l.b16 %v83
  %v671 = vunpack.c.h.b16 %v83
  %v672 = vunpack.c.l.b16 %v84
  %v673 = vunpack.c.h.b16 %v84
  %v674 = vunpack.c.l.b16 %v85
  %v675 = vunpack.c.h.b16 %v85
  %v676 = vunpack.c.l.b16 %v86
  %v677 = vunpack.c.h.b16 %v86
  %v678 = vunpack.c.l.b16 %v87
  %v679 = vunpack.c.h.b16 %v87
  %v680 = vunpack.c.l.b16 %v88
  %v681 = vunpack.c.h.b16 %v88
  %v682 = vunpack.c.l.b16 %v89
  %v683 = vunpack.c.h.b16 %v89
  %v684 = vunpack.c.l.b16 %v90
  %v685 = vunpack.c.h.b16 %v90
  %v686 = vunpack.c.l.b16 %v91
  %v687 = vunpack.c.h.b16 %v91
  %v688 = vunpack.c.l.b16 %v92
  %v689 = vunpack.c.h.b16 %v92
  %v690 = vunpack.c.l.b16 %v93
  %v691 = vunpack.c.h.b16 %v93
  %v692 = vunpack.c.l.b16 %v94
  %v693 = vunpack.c.h.b16 %v94
  %v694 = vunpack.c.l.b16 %v95
  %v695 = vunpack.c.h.b16 %v95
  %v696 = vunpack.c.l.b16 %v96
  %v697 = vunpack.c.h.b16 %v96
  %v698 = vunpack.c.l.b16 %v97
  %v699 = vunpack.c.h.b16 %v97
  %v700 = vunpack.c.l.b16 %v98
  %v701 = vunpack.c.h.b16 %v98
  %v702 = vunpack.c.l.b16 %v99
  %v703 = vunpack.c.h.b16 %v99
  %v704 = vunpack.c.l.b16 %v100
  %v705 = vunpack.c.h.b16 %v100
  %v706 = vunpack.c.l.b16 %v101
  %v707 = vunpack.c.h.b16 %v101
  %v708 = vunpack.c.l.b16 %v102
  %v709 = vunpack.c.h.b16 %v102
  %v710 = vunpack.c.l.b16 %v103
  %v711 = vunpack.c.h.b16 %v103
  %v712 = vunpack.c.l.b16 %v104
  %v713 = vunpack.c.h.b16 %v104
  %v714 = vunpack.c.l.b16 %v105
  %v715 = vunpack.c.h.b16 %v105
  %v716 = vunpack.c.l.b16 %v106
  %v717 = vunpack.c.h.b16 %v106
  %v718 = vunpack.c.l.b16 %v107
  %v719 = vunpack.c.h.b16 %v107
  %v720 = vunpack.c.l.b16 %v108
  %v721 = vunpack.c.h.b16 %v108
  %v722 = vunpack.c.l.b16 %v109
  %v723 = vunpack.c.h.b16 %v109
  %v724 = vunpack.c.l.b16 %v110
  %v725 = vunpack.c.h.b16 %v110
  %v726 = vunpack.c.l.b16 %v111
  %v727 = vunpack.c.h.b16 %v111
  %v728 = vunpack.c.l.b16 %v112
  %v729 = vunpack.c.h.b16 %v112
  %v730 = vunpack.c.l.b16 %v113
  %v731 = vunpack.c.h.b16 %v113
  %v732 = vunpack.c.l.b16 %v114
  %v733 = vunpack.c.h.b16 %v114
  %v734 = vunpack.c.l.b16 %v115
  %v735 = vunpack.c.h.b16 %v115
  %v736 = vunpack.c.l.b16 %v116
  %v737 = vunpack.c.h.b16 %v116
  %v738 = vunpack.c.l.b16 %v117
  %v739 = vunpack.c.h.b16 %v117
  %v740 = vunpack.c.l.b16 %v118
  %v741 = vunpack.c.h.b16 %v118
  %v742 = vunpack.c.l.b16 %v119
  %v743 = vunpack.c.h.b16 %v119
  %v744 = vunpack.c.l.b16 %v120
  %v745 = vunpack.c.h.b16 %v120
  %v746 = vunpack.c.l.b16 %v121
  %v747 = vunpack.c.h.b16 %v121
  %v748 = vunpack.c.l.b16 %v122
  %v749 = vunpack.c.h.b16 %v122
  %v750 = vunpack.c.l.b16 %v123
  %v751 = vunpack.c.h.b16 %v123
  %v752 = vunpack.c.l.b16 %v124
  %v753 = vunpack.c.h.b16 %v124
  %v754 = vunpack.c.l.b16 %v125
  %v755 = vunpack.c.h.b16 %v125
  %v756 = vunpack.c.l.b16 %v126
  %v757 = vunpack.c.h.b16 %v126
  %v758 = vunpack.c.l.b16 %v127
  %v759 = vunpack.c.h.b16 %v127
  %v760 = vunpack.c.l.b16 %v128
  %v761 = vunpack.c.h.b16 %v128
  %v762 = vunpack.c.l.b16 %v129
  %v763 = vunpack.c.h.b16 %v129
  %v764 = vunpack.c.l.b16 %v130
  %v765 = vunpack.c.h.b16 %v130
  %v766 = vunpack.c.l.b16 %v131
  %v767 = vunpack.c.h.b16 %v131
  %v768 = vunpack.c.l.b16 %v132
  %v769 = vunpack.c.h.b16 %v132
  %v770 = vunpack.c.l.b16 %v133
  %v771 = vunpack.c.h.b16 %v133
  %v772 = vunpack.c.l.b16 %v134
  %v773 = vunpack.c.h.b16 %v134
  %v774 = vunpack.c.l.b16 %v135
  %v775 = vunpack.c.h.b16 %v135
  %v776 = vunpack.c.l.b16 %v136
  %v777 = vunpack.c.h.b16 %v136
  %v778 = vunpack.c.l.b16 %v137
  %v779 = vunpack.c.h.b16 %v137
  %v780 = vunpack.c.l.b16 %v138
  %v781 = vunpack.c.h.b16 %v138
  %v782 = vunpack.c.l.b16 %v139
  %v783 = vunpack.c.h.b16 %v139
  %v784 = vunpack.c.l.b16 %v140
  %v785 = vunpack.c.h.b16 %v140
  %v786 = vunpack.c.l.b16 %v141
  %v787 = vunpack.c.h.b16 %v141
  %v788 = vunpack.c.l.b16 %v142
  %v789 = vunpack.c.h.b16 %v142
  %v790 = vunpack.c.l.b16 %v143
  %v791 = vunpack.c.h.b16 %v143
  %v792 = vunpack.c.l.b16 %v144
  %v793 = vunpack.c.h.b16 %v144
  %v794 = vunpack.c.l.b16 %v145
  %v795 = vunpack.c.h.b16 %v145
  %v796 = vunpack.c.l.b16 %v146
  %v797 = vunpack.c.h.b16 %v146
  %v798 = vunpack.c.l.b16 %v147
  %v799 = vunpack.c.h.b16 %v147
  %v800 = vunpack.c.l.b16 %v148
  %v801 = vunpack.c.h.b16 %v148
  %v802 = vunpack.c.l.b16 %v149
  %v803 = vunpack.c.h.b16 %v149
  %v804 = vunpack.c.l.b16 %v150
  %v805 = vunpack.c.h.b16 %v150
  %v806 = vunpack.c.l.b16 %v151
  %v807 = vunpack.c.h.b16 %v151
  %v808 = vunpack.c.l.b16 %v152
  %v809 = vunpack.c.h.b16 %v152
  %v810 = vunpack.c.l.b16 %v153
  %v811 = vunpack.c.h.b16 %v153
  %v812 = vunpack.c.l.b16 %v154
  %v813 = vunpack.c.h.b16 %v154
  %v814 = vunpack.c.l.b16 %v155
  %v815 = vunpack.c.h.b16 %v155
  %v816 = vunpack.c.l.b16 %v156
  %v817 = vunpack.c.h.b16 %v156
  %v818 = vunpack.c.l.b16 %v157
  %v819 = vunpack.c.h.b16 %v157
  %v820 = vunpack.c.l.b16 %v158
  %v821 = vunpack.c.h.b16 %v158
  %v822 = vunpack.c.l.b16 %v159
  %v823 = vunpack.c.h.b16 %v159
  %v824 = vunpack.c.l.b16 %v160
  %v825 = vunpack.c.h.b16 %v160
  %v826 = vunpack.c.l.b16 %v161
  %v827 = vunpack.c.h.b16 %v161
  %v828 = vunpack.c.l.b16 %v162
  %v829 = vunpack.c.h.b16 %v162
  %v830 = vunpack.c.l.b16 %v163
  %v831 = vunpack.c.h.b16 %v163
  %v832 = vunpack.c.l.b16 %v164
  %v833 = vunpack.c.h.b16 %v164
  %v834 = vunpack.c.l.b16 %v165
  %v835 = vunpack.c.h.b16 %v165
  %v836 = vunpack.c.l.b16 %v166
  %v837 = vunpack.c.h.b16 %v166
  %v838 = vunpack.c.l.b16 %v167
  %v839 = vunpack.c.h.b16 %v167
  %v840 = vunpack.c.l.b16 %v168
  %v841 = vunpack.c.h.b16 %v168
  %v842 = vunpack.c.l.b16 %v169
  %v843 = vunpack.c.h.b16 %v169
  %v844 = vunpack.c.l.b16 %v170
  %v845 = vunpack.c.h.b16 %v170
  %v846 = vunpack.c.l.b16 %v171
  %v847 = vunpack.c.h.b16 %v171
  %v848 = vunpack.c.l.b16 %v172
  %v849 = vunpack.c.h.b16 %v172
  %v850 = vunpack.c.l.b16 %v173
  %v851 = vunpack.c.h.b16 %v173
  %v852 = vunpack.c.l.b16 %v174
  %v853 = vunpack.c.h.b16 %v174
  %v854 = vunpack.c.l.b16 %v175
  %v855 = vunpack.c.h.b16 %v175
  %v856 = vunpack.c.l.b16 %v176
  %v857 = vunpack.c.h.b16 %v176
  %v858 = vunpack.c.l.b16 %v177
  %v859 = vunpack.c.h.b16 %v177
  %v860 = vunpack.c.l.b16 %v178
  %v861 = vunpack.c.h.b16 %v178
  %v862 = vunpack.c.l.b16 %v179
  %v863 = vunpack.c.h.b16 %v179
  %v864 = vunpack.c.l.b16 %v180
  %v865 = vunpack.c.h.b16 %v180
  %v866 = vunpack.c.l.b16 %v181
  %v867 = vunpack.c.h.b16 %v181
  %v868 = vunpack.c.l.b16 %v182
  %v869 = vunpack.c.h.b16 %v182
  %v870 = vunpack.c.l.b16 %v183
  %v871 = vunpack.c.h.b16 %v183
  %v872 = vunpack.c.l.b16 %v184
  %v873 = vunpack.c.h.b16 %v184
  %v874 = vunpack.c.l.b16 %v185
  %v875 = vunpack.c.h.b16 %v185
  %v876 = vunpack.c.l.b16 %v186
  %v877 = vunpack.c.h.b16 %v186
  %v878 = vunpack.c.l.b16 %v187
  %v879 = vunpack.c.h.b16 %v187
  %v880 = vunpack.c.l.b16 %v188
  %v881 = vunpack.c.h.b16 %v188
  %v882 = vunpack.c.l.b16 %v189
  %v883 = vunpack.c.h.b16 %v189
  %v884 = vunpack.c.l.b16 %v190
  %v885 = vunpack.c.h.b16 %v190
  %v886 = vunpack.c.l.b16 %v191
  %v887 = vunpack.c.h.b16 %v191
  %v888 = vunpack.c.l.b16 %v192
  %v889 = vunpack.c.h.b16 %v192
  %v890 = vunpack.c.l.b16 %v193
  %v891 = vunpack.c.h.b16 %v193
  %v892 = vunpack.c.l.b16 %v194
  %v893 = vunpack.c.h.b16 %v194
  %v894 = vunpack.c.l.b16 %v195
  %v895 = vunpack.c.h.b16 %v195
  %v896 = vunpack.c.l.b16 %v196
  %v897 = vunpack.c.h.b16 %v196
  %v898 = vunpack.c.l.b16 %v197
  %v899 = vunpack.c.h.b16 %v197
  %v900 = vunpack.c.l.b16 %v198
  %v901 = vunpack.c.h.b16 %v198
  %v902 = vunpack.c.l.b16 %v199
  %v903 = vunpack.c.h.b16 %v199
  %v904 = vunpack.c.l.b16 %v200
  %v905 = vunpack.c.h.b16 %v200
  %v906 = vunpack.c.l.b16 %v201
  %v907 = vunpack.c.h.b16 %v201
  %v908 = vunpack.c.l.b16 %v202
  %v909 = vunpack.c.h.b16 %v202
  %v910 = vunpack.c.l.b16 %v203
  %v911 = vunpack.c.h.b16 %v203
  %v912 = vunpack.c.l.b16 %v204
  %v913 = vunpack.c.h.b16 %v204
  %v914 = vunpack.c.l.b16 %v205
  %v915 = vunpack.c.h.b16 %v205
  %v916 = vpack.c.b16 %v662, %v660
  %v917 = vpack.c.b16 %v663, %v661
  %v918 = vpack.c.b16 %v666, %v664
  %v919 = vpack.c.b16 %v667, %v665
  %v920 = vpack.c.b16 %v670, %v668
  %v921 = vpack.c.b16 %v671, %v669
  %v922 = vpack.c.b16 %v674, %v672
  %v923 = vpack.c.b16 %v675, %v673
  %v924 = vpack.c.b16 %v678, %v676
  %v925 = vpack.c.b16 %v679, %v677
  %v926 = vpack.c.b16 %v682, %v680
  %v927 = vpack.c.b16 %v683, %v681
  %v928 = vpack.c.b16 %v686, %v684
  %v929 = vpack.c.b16 %v687, %v685
  %v930 = vpack.c.b16 %v690, %v688
  %v931 = vpack.c.b16 %v691, %v689
  %v932 = vpack.c.b16 %v694, %v692
  %v933 = vpack.c.b16 %v695, %v693
  %v934 = vpack.c.b16 %v698, %v696
  %v935 = vpack.c.b16 %v699, %v697
  %v936 = vpack.c.b16 %v702, %v700
  %v937 = vpack.c.b16 %v703, %v701
  %v938 = vpack.c.b16 %v706, %v704
  %v939 = vpack.c.b16 %v707, %v705
  %v940 = vpack.c.b16 %v710, %v708
  %v941 = vpack.c.b16 %v711, %v709
  %v942 = vpack.c.b16 %v714, %v712
  %v943 = vpack.c.b16 %v715, %v713
  %v944 = vpack.c.b16 %v718, %v716
  %v945 = vpack.c.b16 %v719, %v717
  %v946 = vpack.c.b16 %v722, %v720
  %v947 = vpack.c.b16 %v723, %v721
  %v948 = vpack.c.b16 %v726, %v724
  %v949 = vpack.c.b16 %v727, %v725
  %v950 = vpack.c.b16 %v730, %v728
  %v951 = vpack.c.b16 %v731, %v729
  %v952 = vpack.c.b16 %v734, %v732
  %v953 = vpack.c.b16 %v735, %v733
  %v954 = vpack.c.b16 %v738, %v736
  %v955 = vpack.c.b16 %v739, %v737
  %v956 = vpack.c.b16 %v742, %v740
  %v957 = vpack.c.b16 %v743, %v741
  %v958 = vpack.c.b16 %v746, %v744
  %v959 = vpack.c.b16 %v747, %v745
  %v960 = vpack.c.b16 %v750, %v748
  %v961 = vpack.c.b16 %v751, %v749
  %v962 = vpack.c.b16 %v754, %v752
  %v963 = vpack.c.b16 %v755, %v753
  %v964 = vpack.c.b16 %v758, %v756
  %v965 = vpack.c.b16 %v759, %v757
  %v966 = vpack.c.b16 %v762, %v760
  %v967 = vpack.c.b16 %v763, %v761
  %v968 = vpack.c.b16 %v766, %v764
  %v969 = vpack.c.b16 %v767, %v765
  %v970 = vpack.c.b16 %v770, %v768
  %v971 = vpack.c.b16 %v771, %v769
  %v972 = vpack.c.b16 %v774, %v772
  %v973 = vpack.c.b16 %v775, %v773
  %v974 = vpack.c.b16 %v778, %v776
  %v975 = vpack.c.b16 %v779, %v777
  %v976 = vpack.c.b16 %v782, %v780
  %v977 = vpack.c.b16 %v783, %v781
  %v978 = vpack.c.b16 %v786, %v784
  %v979 = vpack.c.b16 %v787, %v785
  %v980 = vpack.c.b16 %v790, %v788
  %v981 = vpack.c.b16 %v791, %v789
  %v982 = vpack.c.b16 %v794, %v792
  %v983 = vpack.c.b16 %v795, %v793
  %v984 = vpack.c.b16 %v798, %v796
  %v985 = vpack.c.b16 %v799, %v797
  %v986 = vpack.c.b16 %v802, %v800
  %v987 = vpack.c.b16 %v803, %v801
  %v988 = vpack.c.b16 %v806, %v804
  %v989 = vpack.c.b16 %v807, %v805
  %v990 = vpack.c.b16 %v810, %v808
  %v991 = vpack.c.b16 %v811, %v809
  %v992 = vpack.c.b16 %v814, %v812
  %v993 = vpack.c.b16 %v815, %v813
  %v994 = vpack.c.b16 %v818, %v816
  %v995 = vpack.c.b16 %v819, %v817
  %v996 = vpack.c.b16 %v822, %v820
  %v997 = vpack.c.b16 %v823, %v821
  %v998 = vpack.c.b16 %v826, %v824
  %v999 = vpack.c.b16 %v827, %v825
  %v1000 = vpack.c.b16 %v830, %v828
  %v1001 = vpack.c.b16 %v831, %v829
  %v1002 = vpack.c.b16 %v834, %v832
  %v1003 = vpack.c.b16 %v835, %v833
  %v1004 = vpack.c.b16 %v838, %v836
  %v1005 = vpack.c.b16 %v839, %v837
  %v1006 = vpack.c.b16 %v842, %v840
  %v1007 = vpack.c.b16 %v843, %v841
  %v1008 = vpack.c.b16 %v846, %v844
  %v1009 = vpack.c.b16 %v847, %v845
  %v1010 = vpack.c.b16 %v850, %v848
  %v1011 = vpack.c.b16 %v851, %v849
  %v1012 = vpack.c.b16 %v854, %v852
  %v1013 = vpack.c.b16 %v855, %v853
  %v1014 = vpack.c.b16 %v858, %v856
  %v1015 = vpack.c.b16 %v859, %v857
  %v1016 = vpack.c.b16 %v862, %v860
  %v1017 = vpack.c.b16 %v863, %v861
  %v1018 = vpack.c.b16 %v866, %v864
  %v1019 = vpack.c.b16 %v867, %v865
  %v1020 = vpack.c.b16 %v870, %v868
  %v1021 = vpack.c.b16 %v871, %v869
  %v1022 = vpack.c.b16 %v874, %v872
  %v1023 = vpack.c.b16 %v875, %v873
  %v1024 = vpack.c.b16 %v878, %v876
  %v1025 = vpack.c.b16 %v879, %v877
  %v1026 = vpack.c.b16 %v882, %v880
  %v1027 = vpack.c.b16 %v883, %v881
  %v1028 = vpack.c.b16 %v886, %v884
  %v1029 = vpack.c.b16 %v887, %v885
  %v1030 = vpack.c.b16 %v890, %v888
  %v1031 = vpack.c.b16 %v891, %v889
  %v1032 = vpack.c.b16 %v894, %v892
  %v1033 = vpack.c.b16 %v895, %v893
  %v1034 = vpack.c.b16 %v898, %v896
  %v1035 = vpack.c.b16 %v899, %v897
  %v1036 = vpack.c.b16 %v902, %v900
  %v1037 = vpack.c.b16 %v903, %v901
  %v1038 = vpack.c.b16 %v906, %v904
  %v1039 = vpack.c.b16 %v907, %v905
  %v1040 = vpack.c.b16 %v910, %v908
  %v1041 = vpack.c.b16 %v911, %v909
  %v1042 = vpack.c.b16 %v914, %v912
  %v1043 = vpack.c.b16 %v915, %v913
  %1172 = vmatpush.bf16.msra.mxu0 %v930
  %1173 = vmatpush.bf16.msra.mxu0 %v928
  %1174 = vmatpush.bf16.msra.mxu0 %v926
  %1175 = vmatpush.bf16.msra.mxu0 %v924
  %1176 = vmatpush.bf16.msra.mxu0 %v922
  %1177 = vmatpush.bf16.msra.mxu0 %v920
  %1178 = vmatpush.bf16.msra.mxu0 %v918
  %1179 = vmatpush.bf16.msra.mxu0 %v916
  %1180 = vmatmul.bf16.gmra.mxu0 %v404
  %v1181 = vpop.f32.mrf.mxu0
  %v1182 = vadd.f32 %v208, %v1181
  %v1183 = vpop.f32.mrf.mxu0
  %v1184 = vadd.f32 %v208, %v1183
  %1185 = vmatmul.bf16.gmra.mxu0 %v412
  %v1186 = vpop.f32.mrf.mxu0
  %v1187 = vadd.f32 %v208, %v1186
  %v1188 = vpop.f32.mrf.mxu0
  %v1189 = vadd.f32 %v208, %v1188
  %1190 = vmatmul.bf16.gmra.mxu0 %v420
  %v1191 = vpop.f32.mrf.mxu0
  %v1192 = vadd.f32 %v208, %v1191
  %v1193 = vpop.f32.mrf.mxu0
  %v1194 = vadd.f32 %v208, %v1193
  %1195 = vmatmul.bf16.gmra.mxu0 %v428
  %v1196 = vpop.f32.mrf.mxu0
  %v1197 = vadd.f32 %v208, %v1196
  %v1198 = vpop.f32.mrf.mxu0
  %v1199 = vadd.f32 %v208, %v1198
  %1200 = vmatmul.bf16.gmra.mxu0 %v436
  %v1201 = vpop.f32.mrf.mxu0
  %v1202 = vadd.f32 %v208, %v1201
  %v1203 = vpop.f32.mrf.mxu0
  %v1204 = vadd.f32 %v208, %v1203
  %1205 = vmatmul.bf16.gmra.mxu0 %v444
  %v1206 = vpop.f32.mrf.mxu0
  %v1207 = vadd.f32 %v208, %v1206
  %v1208 = vpop.f32.mrf.mxu0
  %v1209 = vadd.f32 %v208, %v1208
  %1210 = vmatmul.bf16.gmra.mxu0 %v452
  %v1211 = vpop.f32.mrf.mxu0
  %v1212 = vadd.f32 %v208, %v1211
  %v1213 = vpop.f32.mrf.mxu0
  %v1214 = vadd.f32 %v208, %v1213
  %1215 = vmatmul.bf16.gmra.mxu0 %v460
  %v1216 = vpop.f32.mrf.mxu0
  %v1217 = vadd.f32 %v208, %v1216
  %v1218 = vpop.f32.mrf.mxu0
  %v1219 = vadd.f32 %v208, %v1218
  %1220 = vdwg.mxu0
  %1221 = vmatpush.bf16.msra.mxu0 %v946
  %1222 = vmatpush.bf16.msra.mxu0 %v944
  %1223 = vmatpush.bf16.msra.mxu0 %v942
  %1224 = vmatpush.bf16.msra.mxu0 %v940
  %1225 = vmatpush.bf16.msra.mxu0 %v938
  %1226 = vmatpush.bf16.msra.mxu0 %v936
  %1227 = vmatpush.bf16.msra.mxu0 %v934
  %1228 = vmatpush.bf16.msra.mxu0 %v932
  %1229 = vmatmul.bf16.gmra.mxu0 %v405
  %v1230 = vpop.f32.mrf.mxu0
  %v1231 = vadd.f32 %v1182, %v1230
  %v1232 = vpop.f32.mrf.mxu0
  %v1233 = vadd.f32 %v1184, %v1232
  %1234 = vmatmul.bf16.gmra.mxu0 %v413
  %v1235 = vpop.f32.mrf.mxu0
  %v1236 = vadd.f32 %v1187, %v1235
  %v1237 = vpop.f32.mrf.mxu0
  %v1238 = vadd.f32 %v1189, %v1237
  %1239 = vmatmul.bf16.gmra.mxu0 %v421
  %v1240 = vpop.f32.mrf.mxu0
  %v1241 = vadd.f32 %v1192, %v1240
  %v1242 = vpop.f32.mrf.mxu0
  %v1243 = vadd.f32 %v1194, %v1242
  %1244 = vmatmul.bf16.gmra.mxu0 %v429
  %v1245 = vpop.f32.mrf.mxu0
  %v1246 = vadd.f32 %v1197, %v1245
  %v1247 = vpop.f32.mrf.mxu0
  %v1248 = vadd.f32 %v1199, %v1247
  %1249 = vmatmul.bf16.gmra.mxu0 %v437
  %v1250 = vpop.f32.mrf.mxu0
  %v1251 = vadd.f32 %v1202, %v1250
  %v1252 = vpop.f32.mrf.mxu0
  %v1253 = vadd.f32 %v1204, %v1252
  %1254 = vmatmul.bf16.gmra.mxu0 %v445
  %v1255 = vpop.f32.mrf.mxu0
  %v1256 = vadd.f32 %v1207, %v1255
  %v1257 = vpop.f32.mrf.mxu0
  %v1258 = vadd.f32 %v1209, %v1257
  %1259 = vmatmul.bf16.gmra.mxu0 %v453
  %v1260 = vpop.f32.mrf.mxu0
  %v1261 = vadd.f32 %v1212, %v1260
  %v1262 = vpop.f32.mrf.mxu0
  %v1263 = vadd.f32 %v1214, %v1262
  %1264 = vmatmul.bf16.gmra.mxu0 %v461
  %v1265 = vpop.f32.mrf.mxu0
  %v1266 = vadd.f32 %v1217, %v1265
  %v1267 = vpop.f32.mrf.mxu0
  %v1268 = vadd.f32 %v1219, %v1267
  %1269 = vdwg.mxu0
  %1270 = vmatpush.bf16.msra.mxu0 %v962
  %1271 = vmatpush.bf16.msra.mxu0 %v960
  %1272 = vmatpush.bf16.msra.mxu0 %v958
  %1273 = vmatpush.bf16.msra.mxu0 %v956
  %1274 = vmatpush.bf16.msra.mxu0 %v954
  %1275 = vmatpush.bf16.msra.mxu0 %v952
  %1276 = vmatpush.bf16.msra.mxu0 %v950
  %1277 = vmatpush.bf16.msra.mxu0 %v948
  %1278 = vmatmul.bf16.gmra.mxu0 %v406
  %v1279 = vpop.f32.mrf.mxu0
  %v1280 = vadd.f32 %v1231, %v1279
  %v1281 = vpop.f32.mrf.mxu0
  %v1282 = vadd.f32 %v1233, %v1281
  %1283 = vmatmul.bf16.gmra.mxu0 %v414
  %v1284 = vpop.f32.mrf.mxu0
  %v1285 = vadd.f32 %v1236, %v1284
  %v1286 = vpop.f32.mrf.mxu0
  %v1287 = vadd.f32 %v1238, %v1286
  %1288 = vmatmul.bf16.gmra.mxu0 %v422
  %v1289 = vpop.f32.mrf.mxu0
  %v1290 = vadd.f32 %v1241, %v1289
  %v1291 = vpop.f32.mrf.mxu0
  %v1292 = vadd.f32 %v1243, %v1291
  %1293 = vmatmul.bf16.gmra.mxu0 %v430
  %v1294 = vpop.f32.mrf.mxu0
  %v1295 = vadd.f32 %v1246, %v1294
  %v1296 = vpop.f32.mrf.mxu0
  %v1297 = vadd.f32 %v1248, %v1296
  %1298 = vmatmul.bf16.gmra.mxu0 %v438
  %v1299 = vpop.f32.mrf.mxu0
  %v1300 = vadd.f32 %v1251, %v1299
  %v1301 = vpop.f32.mrf.mxu0
  %v1302 = vadd.f32 %v1253, %v1301
  %1303 = vmatmul.bf16.gmra.mxu0 %v446
  %v1304 = vpop.f32.mrf.mxu0
  %v1305 = vadd.f32 %v1256, %v1304
  %v1306 = vpop.f32.mrf.mxu0
  %v1307 = vadd.f32 %v1258, %v1306
  %1308 = vmatmul.bf16.gmra.mxu0 %v454
  %v1309 = vpop.f32.mrf.mxu0
  %v1310 = vadd.f32 %v1261, %v1309
  %v1311 = vpop.f32.mrf.mxu0
  %v1312 = vadd.f32 %v1263, %v1311
  %1313 = vmatmul.bf16.gmra.mxu0 %v462
  %v1314 = vpop.f32.mrf.mxu0
  %v1315 = vadd.f32 %v1266, %v1314
  %v1316 = vpop.f32.mrf.mxu0
  %v1317 = vadd.f32 %v1268, %v1316
  %1318 = vdwg.mxu0
  %1319 = vmatpush.bf16.msra.mxu0 %v978
  %1320 = vmatpush.bf16.msra.mxu0 %v976
  %1321 = vmatpush.bf16.msra.mxu0 %v974
  %1322 = vmatpush.bf16.msra.mxu0 %v972
  %1323 = vmatpush.bf16.msra.mxu0 %v970
  %1324 = vmatpush.bf16.msra.mxu0 %v968
  %1325 = vmatpush.bf16.msra.mxu0 %v966
  %1326 = vmatpush.bf16.msra.mxu0 %v964
  %1327 = vmatmul.bf16.gmra.mxu0 %v407
  %v1328 = vpop.f32.mrf.mxu0
  %v1329 = vadd.f32 %v1280, %v1328
  %v1330 = vpop.f32.mrf.mxu0
  %v1331 = vadd.f32 %v1282, %v1330
  %1332 = vmatmul.bf16.gmra.mxu0 %v415
  %v1333 = vpop.f32.mrf.mxu0
  %v1334 = vadd.f32 %v1285, %v1333
  %v1335 = vpop.f32.mrf.mxu0
  %v1336 = vadd.f32 %v1287, %v1335
  %1337 = vmatmul.bf16.gmra.mxu0 %v423
  %v1338 = vpop.f32.mrf.mxu0
  %v1339 = vadd.f32 %v1290, %v1338
  %v1340 = vpop.f32.mrf.mxu0
  %v1341 = vadd.f32 %v1292, %v1340
  %1342 = vmatmul.bf16.gmra.mxu0 %v431
  %v1343 = vpop.f32.mrf.mxu0
  %v1344 = vadd.f32 %v1295, %v1343
  %v1345 = vpop.f32.mrf.mxu0
  %v1346 = vadd.f32 %v1297, %v1345
  %1347 = vmatmul.bf16.gmra.mxu0 %v439
  %v1348 = vpop.f32.mrf.mxu0
  %v1349 = vadd.f32 %v1300, %v1348
  %v1350 = vpop.f32.mrf.mxu0
  %v1351 = vadd.f32 %v1302, %v1350
  %1352 = vmatmul.bf16.gmra.mxu0 %v447
  %v1353 = vpop.f32.mrf.mxu0
  %v1354 = vadd.f32 %v1305, %v1353
  %v1355 = vpop.f32.mrf.mxu0
  %v1356 = vadd.f32 %v1307, %v1355
  %1357 = vmatmul.bf16.gmra.mxu0 %v455
  %v1358 = vpop.f32.mrf.mxu0
  %v1359 = vadd.f32 %v1310, %v1358
  %v1360 = vpop.f32.mrf.mxu0
  %v1361 = vadd.f32 %v1312, %v1360
  %1362 = vmatmul.bf16.gmra.mxu0 %v463
  %v1363 = vpop.f32.mrf.mxu0
  %v1364 = vadd.f32 %v1315, %v1363
  %v1365 = vpop.f32.mrf.mxu0
  %v1366 = vadd.f32 %v1317, %v1365
  %1367 = vdwg.mxu0
  %1368 = vmatpush.bf16.msra.mxu0 %v994
  %1369 = vmatpush.bf16.msra.mxu0 %v992
  %1370 = vmatpush.bf16.msra.mxu0 %v990
  %1371 = vmatpush.bf16.msra.mxu0 %v988
  %1372 = vmatpush.bf16.msra.mxu0 %v986
  %1373 = vmatpush.bf16.msra.mxu0 %v984
  %1374 = vmatpush.bf16.msra.mxu0 %v982
  %1375 = vmatpush.bf16.msra.mxu0 %v980
  %1376 = vmatmul.bf16.gmra.mxu0 %v408
  %v1377 = vpop.f32.mrf.mxu0
  %v1378 = vadd.f32 %v1329, %v1377
  %v1379 = vpop.f32.mrf.mxu0
  %v1380 = vadd.f32 %v1331, %v1379
  %1381 = vmatmul.bf16.gmra.mxu0 %v416
  %v1382 = vpop.f32.mrf.mxu0
  %v1383 = vadd.f32 %v1334, %v1382
  %v1384 = vpop.f32.mrf.mxu0
  %v1385 = vadd.f32 %v1336, %v1384
  %1386 = vmatmul.bf16.gmra.mxu0 %v424
  %v1387 = vpop.f32.mrf.mxu0
  %v1388 = vadd.f32 %v1339, %v1387
  %v1389 = vpop.f32.mrf.mxu0
  %v1390 = vadd.f32 %v1341, %v1389
  %1391 = vmatmul.bf16.gmra.mxu0 %v432
  %v1392 = vpop.f32.mrf.mxu0
  %v1393 = vadd.f32 %v1344, %v1392
  %v1394 = vpop.f32.mrf.mxu0
  %v1395 = vadd.f32 %v1346, %v1394
  %1396 = vmatmul.bf16.gmra.mxu0 %v440
  %v1397 = vpop.f32.mrf.mxu0
  %v1398 = vadd.f32 %v1349, %v1397
  %v1399 = vpop.f32.mrf.mxu0
  %v1400 = vadd.f32 %v1351, %v1399
  %1401 = vmatmul.bf16.gmra.mxu0 %v448
  %v1402 = vpop.f32.mrf.mxu0
  %v1403 = vadd.f32 %v1354, %v1402
  %v1404 = vpop.f32.mrf.mxu0
  %v1405 = vadd.f32 %v1356, %v1404
  %1406 = vmatmul.bf16.gmra.mxu0 %v456
  %v1407 = vpop.f32.mrf.mxu0
  %v1408 = vadd.f32 %v1359, %v1407
  %v1409 = vpop.f32.mrf.mxu0
  %v1410 = vadd.f32 %v1361, %v1409
  %1411 = vmatmul.bf16.gmra.mxu0 %v464
  %v1412 = vpop.f32.mrf.mxu0
  %v1413 = vadd.f32 %v1364, %v1412
  %v1414 = vpop.f32.mrf.mxu0
  %v1415 = vadd.f32 %v1366, %v1414
  %1416 = vdwg.mxu0
  %1417 = vmatpush.bf16.msra.mxu0 %v1010
  %1418 = vmatpush.bf16.msra.mxu0 %v1008
  %1419 = vmatpush.bf16.msra.mxu0 %v1006
  %1420 = vmatpush.bf16.msra.mxu0 %v1004
  %1421 = vmatpush.bf16.msra.mxu0 %v1002
  %1422 = vmatpush.bf16.msra.mxu0 %v1000
  %1423 = vmatpush.bf16.msra.mxu0 %v998
  %1424 = vmatpush.bf16.msra.mxu0 %v996
  %1425 = vmatmul.bf16.gmra.mxu0 %v409
  %v1426 = vpop.f32.mrf.mxu0
  %v1427 = vadd.f32 %v1378, %v1426
  %v1428 = vpop.f32.mrf.mxu0
  %v1429 = vadd.f32 %v1380, %v1428
  %1430 = vmatmul.bf16.gmra.mxu0 %v417
  %v1431 = vpop.f32.mrf.mxu0
  %v1432 = vadd.f32 %v1383, %v1431
  %v1433 = vpop.f32.mrf.mxu0
  %v1434 = vadd.f32 %v1385, %v1433
  %1435 = vmatmul.bf16.gmra.mxu0 %v425
  %v1436 = vpop.f32.mrf.mxu0
  %v1437 = vadd.f32 %v1388, %v1436
  %v1438 = vpop.f32.mrf.mxu0
  %v1439 = vadd.f32 %v1390, %v1438
  %1440 = vmatmul.bf16.gmra.mxu0 %v433
  %v1441 = vpop.f32.mrf.mxu0
  %v1442 = vadd.f32 %v1393, %v1441
  %v1443 = vpop.f32.mrf.mxu0
  %v1444 = vadd.f32 %v1395, %v1443
  %1445 = vmatmul.bf16.gmra.mxu0 %v441
  %v1446 = vpop.f32.mrf.mxu0
  %v1447 = vadd.f32 %v1398, %v1446
  %v1448 = vpop.f32.mrf.mxu0
  %v1449 = vadd.f32 %v1400, %v1448
  %1450 = vmatmul.bf16.gmra.mxu0 %v449
  %v1451 = vpop.f32.mrf.mxu0
  %v1452 = vadd.f32 %v1403, %v1451
  %v1453 = vpop.f32.mrf.mxu0
  %v1454 = vadd.f32 %v1405, %v1453
  %1455 = vmatmul.bf16.gmra.mxu0 %v457
  %v1456 = vpop.f32.mrf.mxu0
  %v1457 = vadd.f32 %v1408, %v1456
  %v1458 = vpop.f32.mrf.mxu0
  %v1459 = vadd.f32 %v1410, %v1458
  %1460 = vmatmul.bf16.gmra.mxu0 %v465
  %v1461 = vpop.f32.mrf.mxu0
  %v1462 = vadd.f32 %v1413, %v1461
  %v1463 = vpop.f32.mrf.mxu0
  %v1464 = vadd.f32 %v1415, %v1463
  %1465 = vdwg.mxu0
  %1466 = vmatpush.bf16.msra.mxu0 %v1026
  %1467 = vmatpush.bf16.msra.mxu0 %v1024
  %1468 = vmatpush.bf16.msra.mxu0 %v1022
  %1469 = vmatpush.bf16.msra.mxu0 %v1020
  %1470 = vmatpush.bf16.msra.mxu0 %v1018
  %1471 = vmatpush.bf16.msra.mxu0 %v1016
  %1472 = vmatpush.bf16.msra.mxu0 %v1014
  %1473 = vmatpush.bf16.msra.mxu0 %v1012
  %1474 = vmatmul.bf16.gmra.mxu0 %v410
  %v1475 = vpop.f32.mrf.mxu0
  %v1476 = vadd.f32 %v1427, %v1475
  %v1477 = vpop.f32.mrf.mxu0
  %v1478 = vadd.f32 %v1429, %v1477
  %1479 = vmatmul.bf16.gmra.mxu0 %v418
  %v1480 = vpop.f32.mrf.mxu0
  %v1481 = vadd.f32 %v1432, %v1480
  %v1482 = vpop.f32.mrf.mxu0
  %v1483 = vadd.f32 %v1434, %v1482
  %1484 = vmatmul.bf16.gmra.mxu0 %v426
  %v1485 = vpop.f32.mrf.mxu0
  %v1486 = vadd.f32 %v1437, %v1485
  %v1487 = vpop.f32.mrf.mxu0
  %v1488 = vadd.f32 %v1439, %v1487
  %1489 = vmatmul.bf16.gmra.mxu0 %v434
  %v1490 = vpop.f32.mrf.mxu0
  %v1491 = vadd.f32 %v1442, %v1490
  %v1492 = vpop.f32.mrf.mxu0
  %v1493 = vadd.f32 %v1444, %v1492
  %1494 = vmatmul.bf16.gmra.mxu0 %v442
  %v1495 = vpop.f32.mrf.mxu0
  %v1496 = vadd.f32 %v1447, %v1495
  %v1497 = vpop.f32.mrf.mxu0
  %v1498 = vadd.f32 %v1449, %v1497
  %1499 = vmatmul.bf16.gmra.mxu0 %v450
  %v1500 = vpop.f32.mrf.mxu0
  %v1501 = vadd.f32 %v1452, %v1500
  %v1502 = vpop.f32.mrf.mxu0
  %v1503 = vadd.f32 %v1454, %v1502
  %1504 = vmatmul.bf16.gmra.mxu0 %v458
  %v1505 = vpop.f32.mrf.mxu0
  %v1506 = vadd.f32 %v1457, %v1505
  %v1507 = vpop.f32.mrf.mxu0
  %v1508 = vadd.f32 %v1459, %v1507
  %1509 = vmatmul.bf16.gmra.mxu0 %v466
  %v1510 = vpop.f32.mrf.mxu0
  %v1511 = vadd.f32 %v1462, %v1510
  %v1512 = vpop.f32.mrf.mxu0
  %v1513 = vadd.f32 %v1464, %v1512
  %1514 = vdwg.mxu0
  %1515 = vmatpush.bf16.msra.mxu0 %v1042
  %1516 = vmatpush.bf16.msra.mxu0 %v1040
  %1517 = vmatpush.bf16.msra.mxu0 %v1038
  %1518 = vmatpush.bf16.msra.mxu0 %v1036
  %1519 = vmatpush.bf16.msra.mxu0 %v1034
  %1520 = vmatpush.bf16.msra.mxu0 %v1032
  %1521 = vmatpush.bf16.msra.mxu0 %v1030
  %1522 = vmatpush.bf16.msra.mxu0 %v1028
  %1523 = vmatmul.bf16.gmra.mxu0 %v411
  %v1524 = vpop.f32.mrf.mxu0
  %v1525 = vadd.f32 %v1476, %v1524
  %v1526 = vpop.f32.mrf.mxu0
  %v1527 = vadd.f32 %v1478, %v1526
  %1528 = vmatmul.bf16.gmra.mxu0 %v419
  %v1529 = vpop.f32.mrf.mxu0
  %v1530 = vadd.f32 %v1481, %v1529
  %v1531 = vpop.f32.mrf.mxu0
  %v1532 = vadd.f32 %v1483, %v1531
  %1533 = vmatmul.bf16.gmra.mxu0 %v427
  %v1534 = vpop.f32.mrf.mxu0
  %v1535 = vadd.f32 %v1486, %v1534
  %v1536 = vpop.f32.mrf.mxu0
  %v1537 = vadd.f32 %v1488, %v1536
  %1538 = vmatmul.bf16.gmra.mxu0 %v435
  %v1539 = vpop.f32.mrf.mxu0
  %v1540 = vadd.f32 %v1491, %v1539
  %v1541 = vpop.f32.mrf.mxu0
  %v1542 = vadd.f32 %v1493, %v1541
  %1543 = vmatmul.bf16.gmra.mxu0 %v443
  %v1544 = vpop.f32.mrf.mxu0
  %v1545 = vadd.f32 %v1496, %v1544
  %v1546 = vpop.f32.mrf.mxu0
  %v1547 = vadd.f32 %v1498, %v1546
  %1548 = vmatmul.bf16.gmra.mxu0 %v451
  %v1549 = vpop.f32.mrf.mxu0
  %v1550 = vadd.f32 %v1501, %v1549
  %v1551 = vpop.f32.mrf.mxu0
  %v1552 = vadd.f32 %v1503, %v1551
  %1553 = vmatmul.bf16.gmra.mxu0 %v459
  %v1554 = vpop.f32.mrf.mxu0
  %v1555 = vadd.f32 %v1506, %v1554
  %v1556 = vpop.f32.mrf.mxu0
  %v1557 = vadd.f32 %v1508, %v1556
  %1558 = vmatmul.bf16.gmra.mxu0 %v467
  %v1559 = vpop.f32.mrf.mxu0
  %v1560 = vadd.f32 %v1511, %v1559
  %v1561 = vpop.f32.mrf.mxu0
  %v1562 = vadd.f32 %v1513, %v1561
  %1563 = vdwg.mxu0
  %1564 = vmatpush.bf16.msra.mxu0 %v931
  %1565 = vmatpush.bf16.msra.mxu0 %v929
  %1566 = vmatpush.bf16.msra.mxu0 %v927
  %1567 = vmatpush.bf16.msra.mxu0 %v925
  %1568 = vmatpush.bf16.msra.mxu0 %v923
  %1569 = vmatpush.bf16.msra.mxu0 %v921
  %1570 = vmatpush.bf16.msra.mxu0 %v919
  %1571 = vmatpush.bf16.msra.mxu0 %v917
  %1572 = vmatmul.bf16.gmra.mxu0 %v404
  %v1573 = vpop.f32.mrf.mxu0
  %v1574 = vadd.f32 %v209, %v1573
  %v1575 = vpop.f32.mrf.mxu0
  %v1576 = vadd.f32 %v209, %v1575
  %1577 = vmatmul.bf16.gmra.mxu0 %v412
  %v1578 = vpop.f32.mrf.mxu0
  %v1579 = vadd.f32 %v209, %v1578
  %v1580 = vpop.f32.mrf.mxu0
  %v1581 = vadd.f32 %v209, %v1580
  %1582 = vmatmul.bf16.gmra.mxu0 %v420
  %v1583 = vpop.f32.mrf.mxu0
  %v1584 = vadd.f32 %v209, %v1583
  %v1585 = vpop.f32.mrf.mxu0
  %v1586 = vadd.f32 %v209, %v1585
  %1587 = vmatmul.bf16.gmra.mxu0 %v428
  %v1588 = vpop.f32.mrf.mxu0
  %v1589 = vadd.f32 %v209, %v1588
  %v1590 = vpop.f32.mrf.mxu0
  %v1591 = vadd.f32 %v209, %v1590
  %1592 = vmatmul.bf16.gmra.mxu0 %v436
  %v1593 = vpop.f32.mrf.mxu0
  %v1594 = vadd.f32 %v209, %v1593
  %v1595 = vpop.f32.mrf.mxu0
  %v1596 = vadd.f32 %v209, %v1595
  %1597 = vmatmul.bf16.gmra.mxu0 %v444
  %v1598 = vpop.f32.mrf.mxu0
  %v1599 = vadd.f32 %v209, %v1598
  %v1600 = vpop.f32.mrf.mxu0
  %v1601 = vadd.f32 %v209, %v1600
  %1602 = vmatmul.bf16.gmra.mxu0 %v452
  %v1603 = vpop.f32.mrf.mxu0
  %v1604 = vadd.f32 %v209, %v1603
  %v1605 = vpop.f32.mrf.mxu0
  %v1606 = vadd.f32 %v209, %v1605
  %1607 = vmatmul.bf16.gmra.mxu0 %v460
  %v1608 = vpop.f32.mrf.mxu0
  %v1609 = vadd.f32 %v209, %v1608
  %v1610 = vpop.f32.mrf.mxu0
  %v1611 = vadd.f32 %v209, %v1610
  %1612 = vdwg.mxu0
  %1613 = vmatpush.bf16.msra.mxu0 %v947
  %1614 = vmatpush.bf16.msra.mxu0 %v945
  %1615 = vmatpush.bf16.msra.mxu0 %v943
  %1616 = vmatpush.bf16.msra.mxu0 %v941
  %1617 = vmatpush.bf16.msra.mxu0 %v939
  %1618 = vmatpush.bf16.msra.mxu0 %v937
  %1619 = vmatpush.bf16.msra.mxu0 %v935
  %1620 = vmatpush.bf16.msra.mxu0 %v933
  %1621 = vmatmul.bf16.gmra.mxu0 %v405
  %v1622 = vpop.f32.mrf.mxu0
  %v1623 = vadd.f32 %v1574, %v1622
  %v1624 = vpop.f32.mrf.mxu0
  %v1625 = vadd.f32 %v1576, %v1624
  %1626 = vmatmul.bf16.gmra.mxu0 %v413
  %v1627 = vpop.f32.mrf.mxu0
  %v1628 = vadd.f32 %v1579, %v1627
  %v1629 = vpop.f32.mrf.mxu0
  %v1630 = vadd.f32 %v1581, %v1629
  %1631 = vmatmul.bf16.gmra.mxu0 %v421
  %v1632 = vpop.f32.mrf.mxu0
  %v1633 = vadd.f32 %v1584, %v1632
  %v1634 = vpop.f32.mrf.mxu0
  %v1635 = vadd.f32 %v1586, %v1634
  %1636 = vmatmul.bf16.gmra.mxu0 %v429
  %v1637 = vpop.f32.mrf.mxu0
  %v1638 = vadd.f32 %v1589, %v1637
  %v1639 = vpop.f32.mrf.mxu0
  %v1640 = vadd.f32 %v1591, %v1639
  %1641 = vmatmul.bf16.gmra.mxu0 %v437
  %v1642 = vpop.f32.mrf.mxu0
  %v1643 = vadd.f32 %v1594, %v1642
  %v1644 = vpop.f32.mrf.mxu0
  %v1645 = vadd.f32 %v1596, %v1644
  %1646 = vmatmul.bf16.gmra.mxu0 %v445
  %v1647 = vpop.f32.mrf.mxu0
  %v1648 = vadd.f32 %v1599, %v1647
  %v1649 = vpop.f32.mrf.mxu0
  %v1650 = vadd.f32 %v1601, %v1649
  %1651 = vmatmul.bf16.gmra.mxu0 %v453
  %v1652 = vpop.f32.mrf.mxu0
  %v1653 = vadd.f32 %v1604, %v1652
  %v1654 = vpop.f32.mrf.mxu0
  %v1655 = vadd.f32 %v1606, %v1654
  %1656 = vmatmul.bf16.gmra.mxu0 %v461
  %v1657 = vpop.f32.mrf.mxu0
  %v1658 = vadd.f32 %v1609, %v1657
  %v1659 = vpop.f32.mrf.mxu0
  %v1660 = vadd.f32 %v1611, %v1659
  %1661 = vdwg.mxu0
  %1662 = vmatpush.bf16.msra.mxu0 %v963
  %1663 = vmatpush.bf16.msra.mxu0 %v961
  %1664 = vmatpush.bf16.msra.mxu0 %v959
  %1665 = vmatpush.bf16.msra.mxu0 %v957
  %1666 = vmatpush.bf16.msra.mxu0 %v955
  %1667 = vmatpush.bf16.msra.mxu0 %v953
  %1668 = vmatpush.bf16.msra.mxu0 %v951
  %1669 = vmatpush.bf16.msra.mxu0 %v949
  %1670 = vmatmul.bf16.gmra.mxu0 %v406
  %v1671 = vpop.f32.mrf.mxu0
  %v1672 = vadd.f32 %v1623, %v1671
  %v1673 = vpop.f32.mrf.mxu0
  %v1674 = vadd.f32 %v1625, %v1673
  %1675 = vmatmul.bf16.gmra.mxu0 %v414
  %v1676 = vpop.f32.mrf.mxu0
  %v1677 = vadd.f32 %v1628, %v1676
  %v1678 = vpop.f32.mrf.mxu0
  %v1679 = vadd.f32 %v1630, %v1678
  %1680 = vmatmul.bf16.gmra.mxu0 %v422
  %v1681 = vpop.f32.mrf.mxu0
  %v1682 = vadd.f32 %v1633, %v1681
  %v1683 = vpop.f32.mrf.mxu0
  %v1684 = vadd.f32 %v1635, %v1683
  %1685 = vmatmul.bf16.gmra.mxu0 %v430
  %v1686 = vpop.f32.mrf.mxu0
  %v1687 = vadd.f32 %v1638, %v1686
  %v1688 = vpop.f32.mrf.mxu0
  %v1689 = vadd.f32 %v1640, %v1688
  %1690 = vmatmul.bf16.gmra.mxu0 %v438
  %v1691 = vpop.f32.mrf.mxu0
  %v1692 = vadd.f32 %v1643, %v1691
  %v1693 = vpop.f32.mrf.mxu0
  %v1694 = vadd.f32 %v1645, %v1693
  %1695 = vmatmul.bf16.gmra.mxu0 %v446
  %v1696 = vpop.f32.mrf.mxu0
  %v1697 = vadd.f32 %v1648, %v1696
  %v1698 = vpop.f32.mrf.mxu0
  %v1699 = vadd.f32 %v1650, %v1698
  %1700 = vmatmul.bf16.gmra.mxu0 %v454
  %v1701 = vpop.f32.mrf.mxu0
  %v1702 = vadd.f32 %v1653, %v1701
  %v1703 = vpop.f32.mrf.mxu0
  %v1704 = vadd.f32 %v1655, %v1703
  %1705 = vmatmul.bf16.gmra.mxu0 %v462
  %v1706 = vpop.f32.mrf.mxu0
  %v1707 = vadd.f32 %v1658, %v1706
  %v1708 = vpop.f32.mrf.mxu0
  %v1709 = vadd.f32 %v1660, %v1708
  %1710 = vdwg.mxu0
  %1711 = vmatpush.bf16.msra.mxu0 %v979
  %1712 = vmatpush.bf16.msra.mxu0 %v977
  %1713 = vmatpush.bf16.msra.mxu0 %v975
  %1714 = vmatpush.bf16.msra.mxu0 %v973
  %1715 = vmatpush.bf16.msra.mxu0 %v971
  %1716 = vmatpush.bf16.msra.mxu0 %v969
  %1717 = vmatpush.bf16.msra.mxu0 %v967
  %1718 = vmatpush.bf16.msra.mxu0 %v965
  %1719 = vmatmul.bf16.gmra.mxu0 %v407
  %v1720 = vpop.f32.mrf.mxu0
  %v1721 = vadd.f32 %v1672, %v1720
  %v1722 = vpop.f32.mrf.mxu0
  %v1723 = vadd.f32 %v1674, %v1722
  %1724 = vmatmul.bf16.gmra.mxu0 %v415
  %v1725 = vpop.f32.mrf.mxu0
  %v1726 = vadd.f32 %v1677, %v1725
  %v1727 = vpop.f32.mrf.mxu0
  %v1728 = vadd.f32 %v1679, %v1727
  %1729 = vmatmul.bf16.gmra.mxu0 %v423
  %v1730 = vpop.f32.mrf.mxu0
  %v1731 = vadd.f32 %v1682, %v1730
  %v1732 = vpop.f32.mrf.mxu0
  %v1733 = vadd.f32 %v1684, %v1732
  %1734 = vmatmul.bf16.gmra.mxu0 %v431
  %v1735 = vpop.f32.mrf.mxu0
  %v1736 = vadd.f32 %v1687, %v1735
  %v1737 = vpop.f32.mrf.mxu0
  %v1738 = vadd.f32 %v1689, %v1737
  %1739 = vmatmul.bf16.gmra.mxu0 %v439
  %v1740 = vpop.f32.mrf.mxu0
  %v1741 = vadd.f32 %v1692, %v1740
  %v1742 = vpop.f32.mrf.mxu0
  %v1743 = vadd.f32 %v1694, %v1742
  %1744 = vmatmul.bf16.gmra.mxu0 %v447
  %v1745 = vpop.f32.mrf.mxu0
  %v1746 = vadd.f32 %v1697, %v1745
  %v1747 = vpop.f32.mrf.mxu0
  %v1748 = vadd.f32 %v1699, %v1747
  %1749 = vmatmul.bf16.gmra.mxu0 %v455
  %v1750 = vpop.f32.mrf.mxu0
  %v1751 = vadd.f32 %v1702, %v1750
  %v1752 = vpop.f32.mrf.mxu0
  %v1753 = vadd.f32 %v1704, %v1752
  %1754 = vmatmul.bf16.gmra.mxu0 %v463
  %v1755 = vpop.f32.mrf.mxu0
  %v1756 = vadd.f32 %v1707, %v1755
  %v1757 = vpop.f32.mrf.mxu0
  %v1758 = vadd.f32 %v1709, %v1757
  %1759 = vdwg.mxu0
  %1760 = vmatpush.bf16.msra.mxu0 %v995
  %1761 = vmatpush.bf16.msra.mxu0 %v993
  %1762 = vmatpush.bf16.msra.mxu0 %v991
  %1763 = vmatpush.bf16.msra.mxu0 %v989
  %1764 = vmatpush.bf16.msra.mxu0 %v987
  %1765 = vmatpush.bf16.msra.mxu0 %v985
  %1766 = vmatpush.bf16.msra.mxu0 %v983
  %1767 = vmatpush.bf16.msra.mxu0 %v981
  %1768 = vmatmul.bf16.gmra.mxu0 %v408
  %v1769 = vpop.f32.mrf.mxu0
  %v1770 = vadd.f32 %v1721, %v1769
  %v1771 = vpop.f32.mrf.mxu0
  %v1772 = vadd.f32 %v1723, %v1771
  %1773 = vmatmul.bf16.gmra.mxu0 %v416
  %v1774 = vpop.f32.mrf.mxu0
  %v1775 = vadd.f32 %v1726, %v1774
  %v1776 = vpop.f32.mrf.mxu0
  %v1777 = vadd.f32 %v1728, %v1776
  %1778 = vmatmul.bf16.gmra.mxu0 %v424
  %v1779 = vpop.f32.mrf.mxu0
  %v1780 = vadd.f32 %v1731, %v1779
  %v1781 = vpop.f32.mrf.mxu0
  %v1782 = vadd.f32 %v1733, %v1781
  %1783 = vmatmul.bf16.gmra.mxu0 %v432
  %v1784 = vpop.f32.mrf.mxu0
  %v1785 = vadd.f32 %v1736, %v1784
  %v1786 = vpop.f32.mrf.mxu0
  %v1787 = vadd.f32 %v1738, %v1786
  %1788 = vmatmul.bf16.gmra.mxu0 %v440
  %v1789 = vpop.f32.mrf.mxu0
  %v1790 = vadd.f32 %v1741, %v1789
  %v1791 = vpop.f32.mrf.mxu0
  %v1792 = vadd.f32 %v1743, %v1791
  %1793 = vmatmul.bf16.gmra.mxu0 %v448
  %v1794 = vpop.f32.mrf.mxu0
  %v1795 = vadd.f32 %v1746, %v1794
  %v1796 = vpop.f32.mrf.mxu0
  %v1797 = vadd.f32 %v1748, %v1796
  %1798 = vmatmul.bf16.gmra.mxu0 %v456
  %v1799 = vpop.f32.mrf.mxu0
  %v1800 = vadd.f32 %v1751, %v1799
  %v1801 = vpop.f32.mrf.mxu0
  %v1802 = vadd.f32 %v1753, %v1801
  %1803 = vmatmul.bf16.gmra.mxu0 %v464
  %v1804 = vpop.f32.mrf.mxu0
  %v1805 = vadd.f32 %v1756, %v1804
  %v1806 = vpop.f32.mrf.mxu0
  %v1807 = vadd.f32 %v1758, %v1806
  %1808 = vdwg.mxu0
  %1809 = vmatpush.bf16.msra.mxu0 %v1011
  %1810 = vmatpush.bf16.msra.mxu0 %v1009
  %1811 = vmatpush.bf16.msra.mxu0 %v1007
  %1812 = vmatpush.bf16.msra.mxu0 %v1005
  %1813 = vmatpush.bf16.msra.mxu0 %v1003
  %1814 = vmatpush.bf16.msra.mxu0 %v1001
  %1815 = vmatpush.bf16.msra.mxu0 %v999
  %1816 = vmatpush.bf16.msra.mxu0 %v997
  %1817 = vmatmul.bf16.gmra.mxu0 %v409
  %v1818 = vpop.f32.mrf.mxu0
  %v1819 = vadd.f32 %v1770, %v1818
  %v1820 = vpop.f32.mrf.mxu0
  %v1821 = vadd.f32 %v1772, %v1820
  %1822 = vmatmul.bf16.gmra.mxu0 %v417
  %v1823 = vpop.f32.mrf.mxu0
  %v1824 = vadd.f32 %v1775, %v1823
  %v1825 = vpop.f32.mrf.mxu0
  %v1826 = vadd.f32 %v1777, %v1825
  %1827 = vmatmul.bf16.gmra.mxu0 %v425
  %v1828 = vpop.f32.mrf.mxu0
  %v1829 = vadd.f32 %v1780, %v1828
  %v1830 = vpop.f32.mrf.mxu0
  %v1831 = vadd.f32 %v1782, %v1830
  %1832 = vmatmul.bf16.gmra.mxu0 %v433
  %v1833 = vpop.f32.mrf.mxu0
  %v1834 = vadd.f32 %v1785, %v1833
  %v1835 = vpop.f32.mrf.mxu0
  %v1836 = vadd.f32 %v1787, %v1835
  %1837 = vmatmul.bf16.gmra.mxu0 %v441
  %v1838 = vpop.f32.mrf.mxu0
  %v1839 = vadd.f32 %v1790, %v1838
  %v1840 = vpop.f32.mrf.mxu0
  %v1841 = vadd.f32 %v1792, %v1840
  %1842 = vmatmul.bf16.gmra.mxu0 %v449
  %v1843 = vpop.f32.mrf.mxu0
  %v1844 = vadd.f32 %v1795, %v1843
  %v1845 = vpop.f32.mrf.mxu0
  %v1846 = vadd.f32 %v1797, %v1845
  %1847 = vmatmul.bf16.gmra.mxu0 %v457
  %v1848 = vpop.f32.mrf.mxu0
  %v1849 = vadd.f32 %v1800, %v1848
  %v1850 = vpop.f32.mrf.mxu0
  %v1851 = vadd.f32 %v1802, %v1850
  %1852 = vmatmul.bf16.gmra.mxu0 %v465
  %v1853 = vpop.f32.mrf.mxu0
  %v1854 = vadd.f32 %v1805, %v1853
  %v1855 = vpop.f32.mrf.mxu0
  %v1856 = vadd.f32 %v1807, %v1855
  %1857 = vdwg.mxu0
  %1858 = vmatpush.bf16.msra.mxu0 %v1027
  %1859 = vmatpush.bf16.msra.mxu0 %v1025
  %1860 = vmatpush.bf16.msra.mxu0 %v1023
  %1861 = vmatpush.bf16.msra.mxu0 %v1021
  %1862 = vmatpush.bf16.msra.mxu0 %v1019
  %1863 = vmatpush.bf16.msra.mxu0 %v1017
  %1864 = vmatpush.bf16.msra.mxu0 %v1015
  %1865 = vmatpush.bf16.msra.mxu0 %v1013
  %1866 = vmatmul.bf16.gmra.mxu0 %v410
  %v1867 = vpop.f32.mrf.mxu0
  %v1868 = vadd.f32 %v1819, %v1867
  %v1869 = vpop.f32.mrf.mxu0
  %v1870 = vadd.f32 %v1821, %v1869
  %1871 = vmatmul.bf16.gmra.mxu0 %v418
  %v1872 = vpop.f32.mrf.mxu0
  %v1873 = vadd.f32 %v1824, %v1872
  %v1874 = vpop.f32.mrf.mxu0
  %v1875 = vadd.f32 %v1826, %v1874
  %1876 = vmatmul.bf16.gmra.mxu0 %v426
  %v1877 = vpop.f32.mrf.mxu0
  %v1878 = vadd.f32 %v1829, %v1877
  %v1879 = vpop.f32.mrf.mxu0
  %v1880 = vadd.f32 %v1831, %v1879
  %1881 = vmatmul.bf16.gmra.mxu0 %v434
  %v1882 = vpop.f32.mrf.mxu0
  %v1883 = vadd.f32 %v1834, %v1882
  %v1884 = vpop.f32.mrf.mxu0
  %v1885 = vadd.f32 %v1836, %v1884
  %1886 = vmatmul.bf16.gmra.mxu0 %v442
  %v1887 = vpop.f32.mrf.mxu0
  %v1888 = vadd.f32 %v1839, %v1887
  %v1889 = vpop.f32.mrf.mxu0
  %v1890 = vadd.f32 %v1841, %v1889
  %1891 = vmatmul.bf16.gmra.mxu0 %v450
  %v1892 = vpop.f32.mrf.mxu0
  %v1893 = vadd.f32 %v1844, %v1892
  %v1894 = vpop.f32.mrf.mxu0
  %v1895 = vadd.f32 %v1846, %v1894
  %1896 = vmatmul.bf16.gmra.mxu0 %v458
  %v1897 = vpop.f32.mrf.mxu0
  %v1898 = vadd.f32 %v1849, %v1897
  %v1899 = vpop.f32.mrf.mxu0
  %v1900 = vadd.f32 %v1851, %v1899
  %1901 = vmatmul.bf16.gmra.mxu0 %v466
  %v1902 = vpop.f32.mrf.mxu0
  %v1903 = vadd.f32 %v1854, %v1902
  %v1904 = vpop.f32.mrf.mxu0
  %v1905 = vadd.f32 %v1856, %v1904
  %1906 = vdwg.mxu0
  %1907 = vmatpush.bf16.msra.mxu0 %v1043
  %1908 = vmatpush.bf16.msra.mxu0 %v1041
  %1909 = vmatpush.bf16.msra.mxu0 %v1039
  %1910 = vmatpush.bf16.msra.mxu0 %v1037
  %1911 = vmatpush.bf16.msra.mxu0 %v1035
  %1912 = vmatpush.bf16.msra.mxu0 %v1033
  %1913 = vmatpush.bf16.msra.mxu0 %v1031
  %1914 = vmatpush.bf16.msra.mxu0 %v1029
  %1915 = vmatmul.bf16.gmra.mxu0 %v411
  %v1916 = vpop.f32.mrf.mxu0
  %v1917 = vadd.f32 %v1868, %v1916
  %v1918 = vpop.f32.mrf.mxu0
  %v1919 = vadd.f32 %v1870, %v1918
  %1920 = vmatmul.bf16.gmra.mxu0 %v419
  %v1921 = vpop.f32.mrf.mxu0
  %v1922 = vadd.f32 %v1873, %v1921
  %v1923 = vpop.f32.mrf.mxu0
  %v1924 = vadd.f32 %v1875, %v1923
  %1925 = vmatmul.bf16.gmra.mxu0 %v427
  %v1926 = vpop.f32.mrf.mxu0
  %v1927 = vadd.f32 %v1878, %v1926
  %v1928 = vpop.f32.mrf.mxu0
  %v1929 = vadd.f32 %v1880, %v1928
  %1930 = vmatmul.bf16.gmra.mxu0 %v435
  %v1931 = vpop.f32.mrf.mxu0
  %v1932 = vadd.f32 %v1883, %v1931
  %v1933 = vpop.f32.mrf.mxu0
  %v1934 = vadd.f32 %v1885, %v1933
  %1935 = vmatmul.bf16.gmra.mxu0 %v443
  %v1936 = vpop.f32.mrf.mxu0
  %v1937 = vadd.f32 %v1888, %v1936
  %v1938 = vpop.f32.mrf.mxu0
  %v1939 = vadd.f32 %v1890, %v1938
  %1940 = vmatmul.bf16.gmra.mxu0 %v451
  %v1941 = vpop.f32.mrf.mxu0
  %v1942 = vadd.f32 %v1893, %v1941
  %v1943 = vpop.f32.mrf.mxu0
  %v1944 = vadd.f32 %v1895, %v1943
  %1945 = vmatmul.bf16.gmra.mxu0 %v459
  %v1946 = vpop.f32.mrf.mxu0
  %v1947 = vadd.f32 %v1898, %v1946
  %v1948 = vpop.f32.mrf.mxu0
  %v1949 = vadd.f32 %v1900, %v1948
  %1950 = vmatmul.bf16.gmra.mxu0 %v467
  %v1951 = vpop.f32.mrf.mxu0
  %v1952 = vadd.f32 %v1903, %v1951
  %v1953 = vpop.f32.mrf.mxu0
  %v1954 = vadd.f32 %v1905, %v1953
  %1955 = vdwg.mxu0
  %v1956 = vmax.f32 %v1525, 0.0
  %v1957 = vmax.f32 %v1917, 0.0
  %v1958 = vmax.f32 %v1527, 0.0
  %v1959 = vmax.f32 %v1919, 0.0
  %v1960 = vmax.f32 %v1530, 0.0
  %v1961 = vmax.f32 %v1922, 0.0
  %v1962 = vmax.f32 %v1532, 0.0
  %v1963 = vmax.f32 %v1924, 0.0
  %v1964 = vmax.f32 %v1535, 0.0
  %v1965 = vmax.f32 %v1927, 0.0
  %v1966 = vmax.f32 %v1537, 0.0
  %v1967 = vmax.f32 %v1929, 0.0
  %v1968 = vmax.f32 %v1540, 0.0
  %v1969 = vmax.f32 %v1932, 0.0
  %v1970 = vmax.f32 %v1542, 0.0
  %v1971 = vmax.f32 %v1934, 0.0
  %v1972 = vmax.f32 %v1545, 0.0
  %v1973 = vmax.f32 %v1937, 0.0
  %v1974 = vmax.f32 %v1547, 0.0
  %v1975 = vmax.f32 %v1939, 0.0
  %v1976 = vmax.f32 %v1550, 0.0
  %v1977 = vmax.f32 %v1942, 0.0
  %v1978 = vmax.f32 %v1552, 0.0
  %v1979 = vmax.f32 %v1944, 0.0
  %v1980 = vmax.f32 %v1555, 0.0
  %v1981 = vmax.f32 %v1947, 0.0
  %v1982 = vmax.f32 %v1557, 0.0
  %v1983 = vmax.f32 %v1949, 0.0
  %v1984 = vmax.f32 %v1560, 0.0
  %v1985 = vmax.f32 %v1952, 0.0
  %v1986 = vmax.f32 %v1562, 0.0
  %v1987 = vmax.f32 %v1954, 0.0
  %v1988 = vpack.c.bf16 %v1957, %v1956
  %v1989 = vpack.c.bf16 %v1959, %v1958
  %v1990 = vpack.c.bf16 %v1961, %v1960
  %v1991 = vpack.c.bf16 %v1963, %v1962
  %v1992 = vpack.c.bf16 %v1965, %v1964
  %v1993 = vpack.c.bf16 %v1967, %v1966
  %v1994 = vpack.c.bf16 %v1969, %v1968
  %v1995 = vpack.c.bf16 %v1971, %v1970
  %v1996 = vpack.c.bf16 %v1973, %v1972
  %v1997 = vpack.c.bf16 %v1975, %v1974
  %v1998 = vpack.c.bf16 %v1977, %v1976
  %v1999 = vpack.c.bf16 %v1979, %v1978
  %v2000 = vpack.c.bf16 %v1981, %v1980
  %v2001 = vpack.c.bf16 %v1983, %v1982
  %v2002 = vpack.c.bf16 %v1985, %v1984
  %v2003 = vpack.c.bf16 %v1987, %v1986
  %2004 = vst [vmem:[%s3] sm:$0xff] %v1988
  %2005 = vst [vmem:[%s3 + $0x8] sm:$0xff] %v1989
  %2006 = vst [vmem:[%s3 + $0x10] sm:$0xff] %v1990
  %2007 = vst [vmem:[%s3 + $0x18] sm:$0xff] %v1991
  %2008 = vst [vmem:[%s3 + $0x20] sm:$0xff] %v1992
  %2009 = vst [vmem:[%s3 + $0x28] sm:$0xff] %v1993
  %2010 = vst [vmem:[%s3 + $0x30] sm:$0xff] %v1994
  %2011 = vst [vmem:[%s3 + $0x38] sm:$0xff] %v1995
  %2012 = vst [vmem:[%s3 + $0x40] sm:$0xff] %v1996
  %2013 = vst [vmem:[%s3 + $0x48] sm:$0xff] %v1997
  %2014 = vst [vmem:[%s3 + $0x50] sm:$0xff] %v1998
  %2015 = vst [vmem:[%s3 + $0x58] sm:$0xff] %v1999
  %2016 = vst [vmem:[%s3 + $0x60] sm:$0xff] %v2000
  %2017 = vst [vmem:[%s3 + $0x68] sm:$0xff] %v2001
  %2018 = vst [vmem:[%s3 + $0x70] sm:$0xff] %v2002
  %2019 = vst [vmem:[%s3 + $0x78] sm:$0xff] %v2003
  // Predicated region
  $region14: #{auxiliary_convolutions.4} parent=0 // pred_check
    _
  $region15: #{auxiliary_convolutions.4} parent=0 // pred_check_branch
    %2021 = sbr.rel (0) target = $region17
  $region16: #{auxiliary_convolutions.4} parent=0 // pred_region
    _
  $region17: #{auxiliary_convolutions.4} parent=0 // pred_fallthru
    _
  // Predicated region
  $region18: #{auxiliary_convolutions.4} parent=0 // pred_check
    _
  $region19: #{auxiliary_convolutions.4} parent=0 // pred_check_branch
    %2023 = sbr.rel (0) target = $region21
  $region20: #{auxiliary_convolutions.4} parent=0 // pred_region
    _
  $region21: #{auxiliary_convolutions.4} parent=0 // pred_fallthru
    _

// kernel: auxiliary_convolutions.6
$region0: #{auxiliary_convolutions.6}
  #allocation0 [shape = 'u32[]', space=smem, size = 0x4, offset = 0x4, fixed_abs, tag = 'smem constant byte address 0x4 - core index']
  #allocation1 [shape = 'u32[72,128]{1,0:T(1,128)}', space=vmem, size = 0x9000, scoped, tag = 'internal scratch']
  %s0 = inlined_call_operand.vmem [shape: bf16[32,512], index: 0, kind: input, shape index: {}]
  %s1 = inlined_call_operand.vmem [shape: bf16[512,128], index: 1, kind: input, shape index: {}]
  %s2 = inlined_call_operand.vmem [shape: f32[1,128], index: 2, kind: input, shape index: {}]
  %s3 = inlined_call_operand.vmem [shape: bf16[32,128], index: 3, kind: output, shape index: {}]
  %s4 = sld [smem:[#allocation0]]
  $region22: #{auxiliary_convolutions.6} parent=0
    _
  %s6 = ssub.s32 1, %s4
  %s7 = scalar_select 0, %s6, %s4
  // Predicated region
  $region2: #{auxiliary_convolutions.6} parent=0 // pred_check
    _
  $region3: #{auxiliary_convolutions.6} parent=0 // pred_check_branch
    %9 = sbr.rel (0) target = $region5
  $region4: #{auxiliary_convolutions.6} parent=0 // pred_region
    _
  $region5: #{auxiliary_convolutions.6} parent=0 // pred_fallthru
    _
  // Predicated region
  $region6: #{auxiliary_convolutions.6} parent=0 // pred_check
    _
  $region7: #{auxiliary_convolutions.6} parent=0 // pred_check_branch
    %11 = sbr.rel (0) target = $region9
  $region8: #{auxiliary_convolutions.6} parent=0 // pred_region
    _
  $region9: #{auxiliary_convolutions.6} parent=0 // pred_fallthru
    _
  // Predicated region
  $region10: #{auxiliary_convolutions.6} parent=0 // pred_check
    _
  $region11: #{auxiliary_convolutions.6} parent=0 // pred_check_branch
    %13 = sbr.rel (0) target = $region13
  $region12: #{auxiliary_convolutions.6} parent=0 // pred_region
    _
  $region13: #{auxiliary_convolutions.6} parent=0 // pred_fallthru
    _
  %v14 = vld [vmem:[%s0] sm:$0xff]
  %v15 = vld [vmem:[%s0 + $0x8] sm:$0xff]
  %v16 = vld [vmem:[%s0 + $0x10] sm:$0xff]
  %v17 = vld [vmem:[%s0 + $0x18] sm:$0xff]
  %v18 = vld [vmem:[%s0 + $0x20] sm:$0xff]
  %v19 = vld [vmem:[%s0 + $0x28] sm:$0xff]
  %v20 = vld [vmem:[%s0 + $0x30] sm:$0xff]
  %v21 = vld [vmem:[%s0 + $0x38] sm:$0xff]
  %v22 = vld [vmem:[%s1] sm:$0xf]
  %v23 = vld [vmem:[%s1 + $0x4] sm:$0xf]
  %v24 = vld [vmem:[%s1 + $0x8] sm:$0xf]
  %v25 = vld [vmem:[%s1 + $0xc] sm:$0xf]
  %v26 = vld [vmem:[%s1 + $0x10] sm:$0xf]
  %v27 = vld [vmem:[%s1 + $0x14] sm:$0xf]
  %v28 = vld [vmem:[%s1 + $0x18] sm:$0xf]
  %v29 = vld [vmem:[%s1 + $0x1c] sm:$0xf]
  %v30 = vld [vmem:[%s1 + $0x20] sm:$0xf]
  %v31 = vld [vmem:[%s1 + $0x24] sm:$0xf]
  %v32 = vld [vmem:[%s1 + $0x28] sm:$0xf]
  %v33 = vld [vmem:[%s1 + $0x2c] sm:$0xf]
  %v34 = vld [vmem:[%s1 + $0x30] sm:$0xf]
  %v35 = vld [vmem:[%s1 + $0x34] sm:$0xf]
  %v36 = vld [vmem:[%s1 + $0x38] sm:$0xf]
  %v37 = vld [vmem:[%s1 + $0x3c] sm:$0xf]
  %v38 = vld [vmem:[%s1 + $0x40] sm:$0xf]
  %v39 = vld [vmem:[%s1 + $0x44] sm:$0xf]
  %v40 = vld [vmem:[%s1 + $0x48] sm:$0xf]
  %v41 = vld [vmem:[%s1 + $0x4c] sm:$0xf]
  %v42 = vld [vmem:[%s1 + $0x50] sm:$0xf]
  %v43 = vld [vmem:[%s1 + $0x54] sm:$0xf]
  %v44 = vld [vmem:[%s1 + $0x58] sm:$0xf]
  %v45 = vld [vmem:[%s1 + $0x5c] sm:$0xf]
  %v46 = vld [vmem:[%s1 + $0x60] sm:$0xf]
  %v47 = vld [vmem:[%s1 + $0x64] sm:$0xf]
  %v48 = vld [vmem:[%s1 + $0x68] sm:$0xf]
  %v49 = vld [vmem:[%s1 + $0x6c] sm:$0xf]
  %v50 = vld [vmem:[%s1 + $0x70] sm:$0xf]
  %v51 = vld [vmem:[%s1 + $0x74] sm:$0xf]
  %v52 = vld [vmem:[%s1 + $0x78] sm:$0xf]
  %v53 = vld [vmem:[%s1 + $0x7c] sm:$0xf]
  %v54 = vld [vmem:[%s1 + $0x80] sm:$0xf]
  %v55 = vld [vmem:[%s1 + $0x84] sm:$0xf]
  %v56 = vld [vmem:[%s1 + $0x88] sm:$0xf]
  %v57 = vld [vmem:[%s1 + $0x8c] sm:$0xf]
  %v58 = vld [vmem:[%s1 + $0x90] sm:$0xf]
  %v59 = vld [vmem:[%s1 + $0x94] sm:$0xf]
  %v60 = vld [vmem:[%s1 + $0x98] sm:$0xf]
  %v61 = vld [vmem:[%s1 + $0x9c] sm:$0xf]
  %v62 = vld [vmem:[%s1 + $0xa0] sm:$0xf]
  %v63 = vld [vmem:[%s1 + $0xa4] sm:$0xf]
  %v64 = vld [vmem:[%s1 + $0xa8] sm:$0xf]
  %v65 = vld [vmem:[%s1 + $0xac] sm:$0xf]
  %v66 = vld [vmem:[%s1 + $0xb0] sm:$0xf]
  %v67 = vld [vmem:[%s1 + $0xb4] sm:$0xf]
  %v68 = vld [vmem:[%s1 + $0xb8] sm:$0xf]
  %v69 = vld [vmem:[%s1 + $0xbc] sm:$0xf]
  %v70 = vld [vmem:[%s1 + $0xc0] sm:$0xf]
  %v71 = vld [vmem:[%s1 + $0xc4] sm:$0xf]
  %v72 = vld [vmem:[%s1 + $0xc8] sm:$0xf]
  %v73 = vld [vmem:[%s1 + $0xcc] sm:$0xf]
  %v74 = vld [vmem:[%s1 + $0xd0] sm:$0xf]
  %v75 = vld [vmem:[%s1 + $0xd4] sm:$0xf]
  %v76 = vld [vmem:[%s1 + $0xd8] sm:$0xf]
  %v77 = vld [vmem:[%s1 + $0xdc] sm:$0xf]
  %v78 = vld [vmem:[%s1 + $0xe0] sm:$0xf]
  %v79 = vld [vmem:[%s1 + $0xe4] sm:$0xf]
  %v80 = vld [vmem:[%s1 + $0xe8] sm:$0xf]
  %v81 = vld [vmem:[%s1 + $0xec] sm:$0xf]
  %v82 = vld [vmem:[%s1 + $0xf0] sm:$0xf]
  %v83 = vld [vmem:[%s1 + $0xf4] sm:$0xf]
  %v84 = vld [vmem:[%s1 + $0xf8] sm:$0xf]
  %v85 = vld [vmem:[%s1 + $0xfc] sm:$0xf]
  %v86 = vld [vmem:[%s2] sm:$0x1]
  %v88 = vperm.slane %v86, 0
  %v98 = vunpack.c.l.b16 %v14
  %v99 = vunpack.c.h.b16 %v14
  %v100 = vunpack.c.l.b16 %v15
  %v101 = vunpack.c.h.b16 %v15
  %v102 = vunpack.c.l.b16 %v16
  %v103 = vunpack.c.h.b16 %v16
  %v104 = vunpack.c.l.b16 %v17
  %v105 = vunpack.c.h.b16 %v17
  %v106 = vunpack.c.l.b16 %v18
  %v107 = vunpack.c.h.b16 %v18
  %v108 = vunpack.c.l.b16 %v19
  %v109 = vunpack.c.h.b16 %v19
  %v110 = vunpack.c.l.b16 %v20
  %v111 = vunpack.c.h.b16 %v20
  %v112 = vunpack.c.l.b16 %v21
  %v113 = vunpack.c.h.b16 %v21
  %v114 = vpack.c.b16 %v102, %v98
  %v115 = vpack.c.b16 %v103, %v99
  %v116 = vpack.c.b16 %v104, %v100
  %v117 = vpack.c.b16 %v105, %v101
  %v118 = vpack.c.b16 %v110, %v106
  %v119 = vpack.c.b16 %v111, %v107
  %v120 = vpack.c.b16 %v112, %v108
  %v121 = vpack.c.b16 %v113, %v109
  %v194 = vunpack.c.l.b16 %v22
  %v195 = vunpack.c.l.b16 %v23
  %v196 = vunpack.c.l.b16 %v24
  %v197 = vunpack.c.l.b16 %v25
  %v198 = vunpack.c.l.b16 %v26
  %v199 = vunpack.c.l.b16 %v27
  %v200 = vunpack.c.l.b16 %v28
  %v201 = vunpack.c.l.b16 %v29
  %v202 = vunpack.c.l.b16 %v30
  %v203 = vunpack.c.l.b16 %v31
  %v204 = vunpack.c.l.b16 %v32
  %v205 = vunpack.c.l.b16 %v33
  %v206 = vunpack.c.l.b16 %v34
  %v207 = vunpack.c.l.b16 %v35
  %v208 = vunpack.c.l.b16 %v36
  %v209 = vunpack.c.l.b16 %v37
  %v210 = vunpack.c.l.b16 %v38
  %v211 = vunpack.c.l.b16 %v39
  %v212 = vunpack.c.l.b16 %v40
  %v213 = vunpack.c.l.b16 %v41
  %v214 = vunpack.c.l.b16 %v42
  %v215 = vunpack.c.l.b16 %v43
  %v216 = vunpack.c.l.b16 %v44
  %v217 = vunpack.c.l.b16 %v45
  %v218 = vunpack.c.l.b16 %v46
  %v219 = vunpack.c.l.b16 %v47
  %v220 = vunpack.c.l.b16 %v48
  %v221 = vunpack.c.l.b16 %v49
  %v222 = vunpack.c.l.b16 %v50
  %v223 = vunpack.c.l.b16 %v51
  %v224 = vunpack.c.l.b16 %v52
  %v225 = vunpack.c.l.b16 %v53
  %v226 = vunpack.c.l.b16 %v54
  %v227 = vunpack.c.l.b16 %v55
  %v228 = vunpack.c.l.b16 %v56
  %v229 = vunpack.c.l.b16 %v57
  %v230 = vunpack.c.l.b16 %v58
  %v231 = vunpack.c.l.b16 %v59
  %v232 = vunpack.c.l.b16 %v60
  %v233 = vunpack.c.l.b16 %v61
  %v234 = vunpack.c.l.b16 %v62
  %v235 = vunpack.c.l.b16 %v63
  %v236 = vunpack.c.l.b16 %v64
  %v237 = vunpack.c.l.b16 %v65
  %v238 = vunpack.c.l.b16 %v66
  %v239 = vunpack.c.l.b16 %v67
  %v240 = vunpack.c.l.b16 %v68
  %v241 = vunpack.c.l.b16 %v69
  %v242 = vunpack.c.l.b16 %v70
  %v243 = vunpack.c.l.b16 %v71
  %v244 = vunpack.c.l.b16 %v72
  %v245 = vunpack.c.l.b16 %v73
  %v246 = vunpack.c.l.b16 %v74
  %v247 = vunpack.c.l.b16 %v75
  %v248 = vunpack.c.l.b16 %v76
  %v249 = vunpack.c.l.b16 %v77
  %v250 = vunpack.c.l.b16 %v78
  %v251 = vunpack.c.l.b16 %v79
  %v252 = vunpack.c.l.b16 %v80
  %v253 = vunpack.c.l.b16 %v81
  %v254 = vunpack.c.l.b16 %v82
  %v255 = vunpack.c.l.b16 %v83
  %v256 = vunpack.c.l.b16 %v84
  %v257 = vunpack.c.l.b16 %v85
  %v258 = vpack.c.b16 %v195, %v194
  %v259 = vpack.c.b16 %v197, %v196
  %v260 = vpack.c.b16 %v199, %v198
  %v261 = vpack.c.b16 %v201, %v200
  %v262 = vpack.c.b16 %v203, %v202
  %v263 = vpack.c.b16 %v205, %v204
  %v264 = vpack.c.b16 %v207, %v206
  %v265 = vpack.c.b16 %v209, %v208
  %v266 = vpack.c.b16 %v211, %v210
  %v267 = vpack.c.b16 %v213, %v212
  %v268 = vpack.c.b16 %v215, %v214
  %v269 = vpack.c.b16 %v217, %v216
  %v270 = vpack.c.b16 %v219, %v218
  %v271 = vpack.c.b16 %v221, %v220
  %v272 = vpack.c.b16 %v223, %v222
  %v273 = vpack.c.b16 %v225, %v224
  %v274 = vpack.c.b16 %v227, %v226
  %v275 = vpack.c.b16 %v229, %v228
  %v276 = vpack.c.b16 %v231, %v230
  %v277 = vpack.c.b16 %v233, %v232
  %v278 = vpack.c.b16 %v235, %v234
  %v279 = vpack.c.b16 %v237, %v236
  %v280 = vpack.c.b16 %v239, %v238
  %v281 = vpack.c.b16 %v241, %v240
  %v282 = vpack.c.b16 %v243, %v242
  %v283 = vpack.c.b16 %v245, %v244
  %v284 = vpack.c.b16 %v247, %v246
  %v285 = vpack.c.b16 %v249, %v248
  %v286 = vpack.c.b16 %v251, %v250
  %v287 = vpack.c.b16 %v253, %v252
  %v288 = vpack.c.b16 %v255, %v254
  %v289 = vpack.c.b16 %v257, %v256
  %322 = vmatpush.bf16.msra.mxu0 %v265
  %323 = vmatpush.bf16.msra.mxu0 %v264
  %324 = vmatpush.bf16.msra.mxu0 %v263
  %325 = vmatpush.bf16.msra.mxu0 %v262
  %326 = vmatpush.bf16.msra.mxu0 %v261
  %327 = vmatpush.bf16.msra.mxu0 %v260
  %328 = vmatpush.bf16.msra.mxu0 %v259
  %329 = vmatpush.bf16.msra.mxu0 %v258
  %330 = vmatmul.bf16.gmra.mxu0 %v114
  %v331 = vpop.f32.mrf.mxu0
  %v332 = vadd.f32 %v88, %v331
  %v333 = vpop.f32.mrf.mxu0
  %v334 = vadd.f32 %v88, %v333
  %335 = vmatmul.bf16.gmra.mxu0 %v118
  %v336 = vpop.f32.mrf.mxu0
  %v337 = vadd.f32 %v88, %v336
  %v338 = vpop.f32.mrf.mxu0
  %v339 = vadd.f32 %v88, %v338
  %340 = vdwg.mxu0
  %341 = vmatpush.bf16.msra.mxu0 %v273
  %342 = vmatpush.bf16.msra.mxu0 %v272
  %343 = vmatpush.bf16.msra.mxu0 %v271
  %344 = vmatpush.bf16.msra.mxu0 %v270
  %345 = vmatpush.bf16.msra.mxu0 %v269
  %346 = vmatpush.bf16.msra.mxu0 %v268
  %347 = vmatpush.bf16.msra.mxu0 %v267
  %348 = vmatpush.bf16.msra.mxu0 %v266
  %349 = vmatmul.bf16.gmra.mxu0 %v115
  %v350 = vpop.f32.mrf.mxu0
  %v351 = vadd.f32 %v332, %v350
  %v352 = vpop.f32.mrf.mxu0
  %v353 = vadd.f32 %v334, %v352
  %354 = vmatmul.bf16.gmra.mxu0 %v119
  %v355 = vpop.f32.mrf.mxu0
  %v356 = vadd.f32 %v337, %v355
  %v357 = vpop.f32.mrf.mxu0
  %v358 = vadd.f32 %v339, %v357
  %359 = vdwg.mxu0
  %360 = vmatpush.bf16.msra.mxu0 %v281
  %361 = vmatpush.bf16.msra.mxu0 %v280
  %362 = vmatpush.bf16.msra.mxu0 %v279
  %363 = vmatpush.bf16.msra.mxu0 %v278
  %364 = vmatpush.bf16.msra.mxu0 %v277
  %365 = vmatpush.bf16.msra.mxu0 %v276
  %366 = vmatpush.bf16.msra.mxu0 %v275
  %367 = vmatpush.bf16.msra.mxu0 %v274
  %368 = vmatmul.bf16.gmra.mxu0 %v116
  %v369 = vpop.f32.mrf.mxu0
  %v370 = vadd.f32 %v351, %v369
  %v371 = vpop.f32.mrf.mxu0
  %v372 = vadd.f32 %v353, %v371
  %373 = vmatmul.bf16.gmra.mxu0 %v120
  %v374 = vpop.f32.mrf.mxu0
  %v375 = vadd.f32 %v356, %v374
  %v376 = vpop.f32.mrf.mxu0
  %v377 = vadd.f32 %v358, %v376
  %378 = vdwg.mxu0
  %379 = vmatpush.bf16.msra.mxu0 %v289
  %380 = vmatpush.bf16.msra.mxu0 %v288
  %381 = vmatpush.bf16.msra.mxu0 %v287
  %382 = vmatpush.bf16.msra.mxu0 %v286
  %383 = vmatpush.bf16.msra.mxu0 %v285
  %384 = vmatpush.bf16.msra.mxu0 %v284
  %385 = vmatpush.bf16.msra.mxu0 %v283
  %386 = vmatpush.bf16.msra.mxu0 %v282
  %387 = vmatmul.bf16.gmra.mxu0 %v117
  %v388 = vpop.f32.mrf.mxu0
  %v389 = vadd.f32 %v370, %v388
  %v390 = vpop.f32.mrf.mxu0
  %v391 = vadd.f32 %v372, %v390
  %392 = vmatmul.bf16.gmra.mxu0 %v121
  %v393 = vpop.f32.mrf.mxu0
  %v394 = vadd.f32 %v375, %v393
  %v395 = vpop.f32.mrf.mxu0
  %v396 = vadd.f32 %v377, %v395
  %397 = vdwg.mxu0
  %v398 = vmax.f32 %v389, 0.0
  %v399 = vmax.f32 %v391, 0.0
  %v400 = vmax.f32 %v394, 0.0
  %v401 = vmax.f32 %v396, 0.0
  %v402 = vpack.c.bf16 %v398, %v398
  %v403 = vpack.c.bf16 %v399, %v399
  %v404 = vpack.c.bf16 %v400, %v400
  %v405 = vpack.c.bf16 %v401, %v401
  %406 = vst [vmem:[%s3] sm:$0xf] %v402
  %407 = vst [vmem:[%s3 + $0x4] sm:$0xf] %v403
  %408 = vst [vmem:[%s3 + $0x8] sm:$0xf] %v404
  %409 = vst [vmem:[%s3 + $0xc] sm:$0xf] %v405
  // Predicated region
  $region14: #{auxiliary_convolutions.6} parent=0 // pred_check
    _
  $region15: #{auxiliary_convolutions.6} parent=0 // pred_check_branch
    %411 = sbr.rel (0) target = $region17
  $region16: #{auxiliary_convolutions.6} parent=0 // pred_region
    _
  $region17: #{auxiliary_convolutions.6} parent=0 // pred_fallthru
    _
  // Predicated region
  $region18: #{auxiliary_convolutions.6} parent=0 // pred_check
    _
  $region19: #{auxiliary_convolutions.6} parent=0 // pred_check_branch
    %413 = sbr.rel (0) target = $region21
  $region20: #{auxiliary_convolutions.6} parent=0 // pred_region
    _
  $region21: #{auxiliary_convolutions.6} parent=0 // pred_fallthru
    _

// kernel: auxiliary_convolutions.5
$region0: #{auxiliary_convolutions.5}
  #allocation0 [shape = 'u32[]', space=smem, size = 0x4, offset = 0x4, fixed_abs, tag = 'smem constant byte address 0x4 - core index']
  #allocation1 [shape = 'u32[72,128]{1,0:T(1,128)}', space=vmem, size = 0x9000, scoped, tag = 'internal scratch']
  %s0 = inlined_call_operand.vmem [shape: bf16[32,2304], index: 0, kind: input, shape index: {}]
  %s1 = inlined_call_operand.vmem [shape: bf16[2304,512], index: 1, kind: input, shape index: {}]
  %s2 = inlined_call_operand.vmem [shape: f32[1,512], index: 2, kind: input, shape index: {}]
  %s3 = inlined_call_operand.vmem [shape: f32[32,512], index: 3, kind: output, shape index: {}]
  %s4 = sld [smem:[#allocation0]]
  $region116: #{auxiliary_convolutions.5} parent=0
    _
  %s6 = ssub.s32 1, %s4
  %s7 = scalar_select 0, %s6, %s4
  $region1: #{auxiliary_convolutions.5} parent=0
    #allocation2 [shape = 'u8[2359296]{0}', space=vmem, size = 0x240000, scoped, tag = 'input window, operand 1']
    #allocation3 [shape = 'u8[65536]{0}', space=vmem, size = 0x10000, scoped, tag = 'output window, operand 0']
    loop: start=0, step=1, limit=4
    $region2: #{auxiliary_convolutions.5} parent=1 // loop_pre_header
      _
    $region3: #{auxiliary_convolutions.5} parent=1 // loop_header
      %s9 = sphi 0, %s13
      %p10 = scmp.ge.s32.totalorder %s9, 4
      %s16 = sphi 0, %s28
      %s17 = sphi 0, %s24
      %s18 = sphi 0, %s16
      %s19 = sphi 0, %s17
      %s20 = sphi 0, %s18
      %s21 = sphi 0, %s19
      %s31 = sphi 0, %s33
      %s34 = sphi 0, %s31
      %s35 = sphi 0, %s34
      %s51 = sphi 0, %s35
      %s57 = sphi 0, %s59
      %s60 = sphi 0, %s57
      %s61 = sphi 0, %s60
      %s77 = sphi 0, %s61
      %s83 = sphi 0, %s85
      %s86 = sphi 0, %s83
      %s87 = sphi 0, %s86
      %s103 = sphi 0, %s87
      %s111 = sphi 0, %s113
      %s114 = sphi 0, %s111
      %s115 = sphi 0, %s114
      %s131 = sphi 0, %s115
    $region4: #{auxiliary_convolutions.5} parent=1 // loop_header_branch
      %12 = sbr.rel (%p10) target = $region8
    $region5: #{auxiliary_convolutions.5} parent=1 // loop_body
      %s14 = ssub.s32 %s9, 1
      %s15 = ssub.s32 %s9, 2
      %s22 = sadd.s32 1, %s17
      %p23 = scmp.ge.s32.totalorder %s22, 2
      %s24 = scalar_select %p23, 0, %s22
      %s25 = sadd.s32 1, %s16
      %s26 = scalar_select %p23, %s25, %s16
      %p27 = scmp.ge.s32.totalorder %s26, 1
      %s28 = scalar_select %p27, 0, %s26
      %s29 = ssub.s32 %s16, %s28
      %p30 = scmp.eq.s32.totalorder %s29, 0
      %s32 = sadd.s32 %s31, 1
      %s33 = scalar_select %p30, %s31, %s32
      %p36 = pneg %p30
      %p37 = scmp.eq.s32.totalorder %s9, 1
      %p38 = por %p36, %p37
      %p39 = scmp.ne.s32.totalorder %s31, %s34
      %p40 = scmp.eq.s32.totalorder %s9, 0
      %p41 = por %p39, %p40
      %p42 = scmp.ne.s32.totalorder %s31, %s34
      %p43 = scmp.eq.s32.totalorder %s14, 1
      %p44 = por %p42, %p43
      %p45 = scmp.ne.s32.totalorder %s34, %s35
      %p46 = scmp.eq.s32.totalorder %s14, 0
      %p47 = por %p45, %p46
      %p48 = scmp.ne.s32.totalorder %s34, %s35
      %p49 = scmp.eq.s32.totalorder %s15, 1
      %p50 = por %p48, %p49
      %p52 = scmp.ne.s32.totalorder %s35, %s51
      %p53 = scmp.eq.s32.totalorder %s15, 0
      %p54 = por %p52, %p53
      %s55 = ssub.s32 %s17, %s24
      %p56 = scmp.eq.s32.totalorder %s55, 0
      %s58 = sadd.s32 %s57, 1
      %s59 = scalar_select %p56, %s57, %s58
      %p62 = pneg %p56
      %p63 = scmp.eq.s32.totalorder %s9, 1
      %p64 = por %p62, %p63
      %p65 = scmp.ne.s32.totalorder %s57, %s60
      %p66 = scmp.eq.s32.totalorder %s9, 0
      %p67 = por %p65, %p66
      %p68 = scmp.ne.s32.totalorder %s57, %s60
      %p69 = scmp.eq.s32.totalorder %s14, 1
      %p70 = por %p68, %p69
      %p71 = scmp.ne.s32.totalorder %s60, %s61
      %p72 = scmp.eq.s32.totalorder %s14, 0
      %p73 = por %p71, %p72
      %p74 = scmp.ne.s32.totalorder %s60, %s61
      %p75 = scmp.eq.s32.totalorder %s15, 1
      %p76 = por %p74, %p75
      %p78 = scmp.ne.s32.totalorder %s61, %s77
      %p79 = scmp.eq.s32.totalorder %s15, 0
      %p80 = por %p78, %p79
      %s81 = ssub.s32 %s17, %s24
      %p82 = scmp.eq.s32.totalorder %s81, 0
      %s84 = sadd.s32 %s83, 1
      %s85 = scalar_select %p82, %s83, %s84
      %p88 = pneg %p82
      %p89 = scmp.eq.s32.totalorder %s9, 1
      %p90 = por %p88, %p89
      %p91 = scmp.ne.s32.totalorder %s83, %s86
      %p92 = scmp.eq.s32.totalorder %s9, 0
      %p93 = por %p91, %p92
      %p94 = scmp.ne.s32.totalorder %s83, %s86
      %p95 = scmp.eq.s32.totalorder %s14, 1
      %p96 = por %p94, %p95
      %p97 = scmp.ne.s32.totalorder %s86, %s87
      %p98 = scmp.eq.s32.totalorder %s14, 0
      %p99 = por %p97, %p98
      %p100 = scmp.ne.s32.totalorder %s86, %s87
      %p101 = scmp.eq.s32.totalorder %s15, 1
      %p102 = por %p100, %p101
      %p104 = scmp.ne.s32.totalorder %s87, %s103
      %p105 = scmp.eq.s32.totalorder %s15, 0
      %p106 = por %p104, %p105
      %s107 = ssub.s32 %s16, %s28
      %s108 = ssub.s32 %s17, %s24
      %s109 = sor.u32 %s107, %s108
      %p110 = scmp.eq.s32.totalorder %s109, 0
      %s112 = sadd.s32 %s111, 1
      %s113 = scalar_select %p110, %s111, %s112
      %p116 = pneg %p110
      %p117 = scmp.eq.s32.totalorder %s9, 1
      %p118 = por %p116, %p117
      %p119 = scmp.ne.s32.totalorder %s111, %s114
      %p120 = scmp.eq.s32.totalorder %s9, 0
      %p121 = por %p119, %p120
      %p122 = scmp.ne.s32.totalorder %s111, %s114
      %p123 = scmp.eq.s32.totalorder %s14, 1
      %p124 = por %p122, %p123
      %p125 = scmp.ne.s32.totalorder %s114, %s115
      %p126 = scmp.eq.s32.totalorder %s14, 0
      %p127 = por %p125, %p126
      %p128 = scmp.ne.s32.totalorder %s114, %s115
      %p129 = scmp.eq.s32.totalorder %s15, 1
      %p130 = por %p128, %p129
      %p132 = scmp.ne.s32.totalorder %s115, %s131
      %p133 = scmp.eq.s32.totalorder %s15, 0
      %p134 = por %p132, %p133
      %p135 = scmp.le.s32.totalorder 1, %s9
      %p136 = scmp.lt.s32.totalorder %s9, 3
      %p137 = pnand %p135, %p136
      %p138 = pneg %p137
      // Predicated region
      $region9: #{auxiliary_convolutions.5} parent=5 // pred_check
        _
      $region10: #{auxiliary_convolutions.5} parent=5 // pred_check_branch
        %140 = sbr.rel (%p137) target = $region12
      $region11: #{auxiliary_convolutions.5} parent=5 // pred_region
        %s141 = ssub.s32 %s9, 1
        // Predicated region
        $region13: #{auxiliary_convolutions.5} parent=11 // pred_check
          %p142 = pneg %p47
        $region14: #{auxiliary_convolutions.5} parent=11 // pred_check_branch
          %144 = sbr.rel (%p142) target = $region16
        $region15: #{auxiliary_convolutions.5} parent=11 // pred_region
          %s145 = smul.u32 4, %s18
          %p146 = scmp.lt.s32.totalorder %s145, 3
          %s147 = scalar_select %p146, %s145, 3
          %s148 = smul.addr %s147, 18
          %s149 = smul.addr %s148, 4
          %s150 = scalar_lea.vmem %s0, %s149
          %s151 = smul.u32 4, %s18
        $region16: #{auxiliary_convolutions.5} parent=11 // pred_fallthru
          _
      $region12: #{auxiliary_convolutions.5} parent=5 // pred_fallthru
        _
      %p152 = scmp.lt.s32.totalorder %s9, 2
      // Predicated region
      $region17: #{auxiliary_convolutions.5} parent=5 // pred_check
        %p153 = pneg %p152
      $region18: #{auxiliary_convolutions.5} parent=5 // pred_check_branch
        %155 = sbr.rel (%p153) target = $region20
      $region19: #{auxiliary_convolutions.5} parent=5 // pred_region
        // Predicated region
        $region21: #{auxiliary_convolutions.5} parent=19 // pred_check
          %p156 = pneg %p67
        $region22: #{auxiliary_convolutions.5} parent=19 // pred_check_branch
          %158 = sbr.rel (%p156) target = $region24
        $region23: #{auxiliary_convolutions.5} parent=19 // pred_region
          %s159 = sand.u32 %s57, 1
          %s160 = sand.u32 %s57, 1
          %s161 = smul.addr %s160, 2304
          %s162 = scalar_lea.vmem [#allocation2], %s161
          %s163 = smul.u32 2, %s17
          %s164 = smul.addr %s163, 4
          %s165 = scalar_lea.vmem %s1, %s164
          // Predicated region
          $region25: #{auxiliary_convolutions.5} parent=23 // pred_check
            _
          $region26: #{auxiliary_convolutions.5} parent=23 // pred_check_branch
            %167 = sbr.rel (0) target = $region28
          $region27: #{auxiliary_convolutions.5} parent=23 // pred_region
            // Predicated region
            $region29: #{auxiliary_convolutions.5} parent=27 // pred_check
              _
            $region30: #{auxiliary_convolutions.5} parent=27 // pred_check_branch
              %169 = sbr.rel (0) target = $region32
            $region31: #{auxiliary_convolutions.5} parent=27 // pred_region
              // Predicated region
              $region44: #{auxiliary_convolutions.5} parent=31 // pred_check
                _
              $region45: #{auxiliary_convolutions.5} parent=31 // pred_check_branch
                %759 = sbr.rel (0) target = $region47
              $region46: #{auxiliary_convolutions.5} parent=31 // pred_region
                loop: start=0, step=1, limit=1
                $region48: #{auxiliary_convolutions.5} parent=46 // loop_pre_header
                  _
                $region49: #{auxiliary_convolutions.5} parent=46 // loop_header
                  %s761 = sphi 0, %s765
                  %p762 = scmp.ge.s32.totalorder %s761, 1
                  %s766 = sphi 0, %s1347
                  %s767 = sphi %s165, %s1350
                  %s768 = sphi %s162, %s1351
                $region50: #{auxiliary_convolutions.5} parent=46 // loop_header_branch
                  %764 = sbr.rel (%p762) target = $region54
                $region51: #{auxiliary_convolutions.5} parent=46 // loop_body
                  %v769 = vld [vmem:[%s767] sm:$0xff]
                  %770 = vst [vmem:[%s768] sm:$0xff] %v769
                  %v771 = vld [vmem:[%s767 + $0x10] sm:$0xff]
                  %772 = vst [vmem:[%s768 + $0x8] sm:$0xff] %v771
                  %v773 = vld [vmem:[%s767 + $0x20] sm:$0xff]
                  %774 = vst [vmem:[%s768 + $0x10] sm:$0xff] %v773
                  %v775 = vld [vmem:[%s767 + $0x30] sm:$0xff]
                  %776 = vst [vmem:[%s768 + $0x18] sm:$0xff] %v775
                  %v777 = vld [vmem:[%s767 + $0x40] sm:$0xff]
                  %778 = vst [vmem:[%s768 + $0x20] sm:$0xff] %v777
                  %v779 = vld [vmem:[%s767 + $0x50] sm:$0xff]
                  %780 = vst [vmem:[%s768 + $0x28] sm:$0xff] %v779
                  %v781 = vld [vmem:[%s767 + $0x60] sm:$0xff]
                  %782 = vst [vmem:[%s768 + $0x30] sm:$0xff] %v781
                  %v783 = vld [vmem:[%s767 + $0x70] sm:$0xff]
                  %784 = vst [vmem:[%s768 + $0x38] sm:$0xff] %v783
                  %v785 = vld [vmem:[%s767 + $0x80] sm:$0xff]
                  %786 = vst [vmem:[%s768 + $0x40] sm:$0xff] %v785
                  %v787 = vld [vmem:[%s767 + $0x90] sm:$0xff]
                  %788 = vst [vmem:[%s768 + $0x48] sm:$0xff] %v787
                  %v789 = vld [vmem:[%s767 + $0xa0] sm:$0xff]
                  %790 = vst [vmem:[%s768 + $0x50] sm:$0xff] %v789
                  %v791 = vld [vmem:[%s767 + $0xb0] sm:$0xff]
                  %792 = vst [vmem:[%s768 + $0x58] sm:$0xff] %v791
                  %v793 = vld [vmem:[%s767 + $0xc0] sm:$0xff]
                  %794 = vst [vmem:[%s768 + $0x60] sm:$0xff] %v793
                  %v795 = vld [vmem:[%s767 + $0xd0] sm:$0xff]
                  %796 = vst [vmem:[%s768 + $0x68] sm:$0xff] %v795
                  %v797 = vld [vmem:[%s767 + $0xe0] sm:$0xff]
                  %798 = vst [vmem:[%s768 + $0x70] sm:$0xff] %v797
                  %v799 = vld [vmem:[%s767 + $0xf0] sm:$0xff]
                  %800 = vst [vmem:[%s768 + $0x78] sm:$0xff] %v799
                  %v801 = vld [vmem:[%s767 + $0x100] sm:$0xff]
                  %802 = vst [vmem:[%s768 + $0x80] sm:$0xff] %v801
                  %v803 = vld [vmem:[%s767 + $0x110] sm:$0xff]
                  %804 = vst [vmem:[%s768 + $0x88] sm:$0xff] %v803
                  %v805 = vld [vmem:[%s767 + $0x120] sm:$0xff]
                  %806 = vst [vmem:[%s768 + $0x90] sm:$0xff] %v805
                  %v807 = vld [vmem:[%s767 + $0x130] sm:$0xff]
                  %808 = vst [vmem:[%s768 + $0x98] sm:$0xff] %v807
                  %v809 = vld [vmem:[%s767 + $0x140] sm:$0xff]
                  %810 = vst [vmem:[%s768 + $0xa0] sm:$0xff] %v809
                  %v811 = vld [vmem:[%s767 + $0x150] sm:$0xff]
                  %812 = vst [vmem:[%s768 + $0xa8] sm:$0xff] %v811
                  %v813 = vld [vmem:[%s767 + $0x160] sm:$0xff]
                  %814 = vst [vmem:[%s768 + $0xb0] sm:$0xff] %v813
                  %v815 = vld [vmem:[%s767 + $0x170] sm:$0xff]
                  %816 = vst [vmem:[%s768 + $0xb8] sm:$0xff] %v815
                  %v817 = vld [vmem:[%s767 + $0x180] sm:$0xff]
                  %818 = vst [vmem:[%s768 + $0xc0] sm:$0xff] %v817
                  %v819 = vld [vmem:[%s767 + $0x190] sm:$0xff]
                  %820 = vst [vmem:[%s768 + $0xc8] sm:$0xff] %v819
                  %v821 = vld [vmem:[%s767 + $0x1a0] sm:$0xff]
                  %822 = vst [vmem:[%s768 + $0xd0] sm:$0xff] %v821
                  %v823 = vld [vmem:[%s767 + $0x1b0] sm:$0xff]
                  %824 = vst [vmem:[%s768 + $0xd8] sm:$0xff] %v823
                  %v825 = vld [vmem:[%s767 + $0x1c0] sm:$0xff]
                  %826 = vst [vmem:[%s768 + $0xe0] sm:$0xff] %v825
                  %v827 = vld [vmem:[%s767 + $0x1d0] sm:$0xff]
                  %828 = vst [vmem:[%s768 + $0xe8] sm:$0xff] %v827
                  %v829 = vld [vmem:[%s767 + $0x1e0] sm:$0xff]
                  %830 = vst [vmem:[%s768 + $0xf0] sm:$0xff] %v829
                  %v831 = vld [vmem:[%s767 + $0x1f0] sm:$0xff]
                  %832 = vst [vmem:[%s768 + $0xf8] sm:$0xff] %v831
                  %v833 = vld [vmem:[%s767 + $0x200] sm:$0xff]
                  %834 = vst [vmem:[%s768 + $0x100] sm:$0xff] %v833
                  %v835 = vld [vmem:[%s767 + $0x210] sm:$0xff]
                  %836 = vst [vmem:[%s768 + $0x108] sm:$0xff] %v835
                  %v837 = vld [vmem:[%s767 + $0x220] sm:$0xff]
                  %838 = vst [vmem:[%s768 + $0x110] sm:$0xff] %v837
                  %v839 = vld [vmem:[%s767 + $0x230] sm:$0xff]
                  %840 = vst [vmem:[%s768 + $0x118] sm:$0xff] %v839
                  %v841 = vld [vmem:[%s767 + $0x240] sm:$0xff]
                  %842 = vst [vmem:[%s768 + $0x120] sm:$0xff] %v841
                  %v843 = vld [vmem:[%s767 + $0x250] sm:$0xff]
                  %844 = vst [vmem:[%s768 + $0x128] sm:$0xff] %v843
                  %v845 = vld [vmem:[%s767 + $0x260] sm:$0xff]
                  %846 = vst [vmem:[%s768 + $0x130] sm:$0xff] %v845
                  %v847 = vld [vmem:[%s767 + $0x270] sm:$0xff]
                  %848 = vst [vmem:[%s768 + $0x138] sm:$0xff] %v847
                  %v849 = vld [vmem:[%s767 + $0x280] sm:$0xff]
                  %850 = vst [vmem:[%s768 + $0x140] sm:$0xff] %v849
                  %v851 = vld [vmem:[%s767 + $0x290] sm:$0xff]
                  %852 = vst [vmem:[%s768 + $0x148] sm:$0xff] %v851
                  %v853 = vld [vmem:[%s767 + $0x2a0] sm:$0xff]
                  %854 = vst [vmem:[%s768 + $0x150] sm:$0xff] %v853
                  %v855 = vld [vmem:[%s767 + $0x2b0] sm:$0xff]
                  %856 = vst [vmem:[%s768 + $0x158] sm:$0xff] %v855
                  %v857 = vld [vmem:[%s767 + $0x2c0] sm:$0xff]
                  %858 = vst [vmem:[%s768 + $0x160] sm:$0xff] %v857
                  %v859 = vld [vmem:[%s767 + $0x2d0] sm:$0xff]
                  %860 = vst [vmem:[%s768 + $0x168] sm:$0xff] %v859
                  %v861 = vld [vmem:[%s767 + $0x2e0] sm:$0xff]
                  %862 = vst [vmem:[%s768 + $0x170] sm:$0xff] %v861
                  %v863 = vld [vmem:[%s767 + $0x2f0] sm:$0xff]
                  %864 = vst [vmem:[%s768 + $0x178] sm:$0xff] %v863
                  %v865 = vld [vmem:[%s767 + $0x300] sm:$0xff]
                  %866 = vst [vmem:[%s768 + $0x180] sm:$0xff] %v865
                  %v867 = vld [vmem:[%s767 + $0x310] sm:$0xff]
                  %868 = vst [vmem:[%s768 + $0x188] sm:$0xff] %v867
                  %v869 = vld [vmem:[%s767 + $0x320] sm:$0xff]
                  %870 = vst [vmem:[%s768 + $0x190] sm:$0xff] %v869
                  %v871 = vld [vmem:[%s767 + $0x330] sm:$0xff]
                  %872 = vst [vmem:[%s768 + $0x198] sm:$0xff] %v871
                  %v873 = vld [vmem:[%s767 + $0x340] sm:$0xff]
                  %874 = vst [vmem:[%s768 + $0x1a0] sm:$0xff] %v873
                  %v875 = vld [vmem:[%s767 + $0x350] sm:$0xff]
                  %876 = vst [vmem:[%s768 + $0x1a8] sm:$0xff] %v875
                  %v877 = vld [vmem:[%s767 + $0x360] sm:$0xff]
                  %878 = vst [vmem:[%s768 + $0x1b0] sm:$0xff] %v877
                  %v879 = vld [vmem:[%s767 + $0x370] sm:$0xff]
                  %880 = vst [vmem:[%s768 + $0x1b8] sm:$0xff] %v879
                  %v881 = vld [vmem:[%s767 + $0x380] sm:$0xff]
                  %882 = vst [vmem:[%s768 + $0x1c0] sm:$0xff] %v881
                  %v883 = vld [vmem:[%s767 + $0x390] sm:$0xff]
                  %884 = vst [vmem:[%s768 + $0x1c8] sm:$0xff] %v883
                  %v885 = vld [vmem:[%s767 + $0x3a0] sm:$0xff]
                  %886 = vst [vmem:[%s768 + $0x1d0] sm:$0xff] %v885
                  %v887 = vld [vmem:[%s767 + $0x3b0] sm:$0xff]
                  %888 = vst [vmem:[%s768 + $0x1d8] sm:$0xff] %v887
                  %v889 = vld [vmem:[%s767 + $0x3c0] sm:$0xff]
                  %890 = vst [vmem:[%s768 + $0x1e0] sm:$0xff] %v889
                  %v891 = vld [vmem:[%s767 + $0x3d0] sm:$0xff]
                  %892 = vst [vmem:[%s768 + $0x1e8] sm:$0xff] %v891
                  %v893 = vld [vmem:[%s767 + $0x3e0] sm:$0xff]
                  %894 = vst [vmem:[%s768 + $0x1f0] sm:$0xff] %v893
                  %v895 = vld [vmem:[%s767 + $0x3f0] sm:$0xff]
                  %896 = vst [vmem:[%s768 + $0x1f8] sm:$0xff] %v895
                  %v897 = vld [vmem:[%s767 + $0x400] sm:$0xff]
                  %898 = vst [vmem:[%s768 + $0x200] sm:$0xff] %v897
                  %v899 = vld [vmem:[%s767 + $0x410] sm:$0xff]
                  %900 = vst [vmem:[%s768 + $0x208] sm:$0xff] %v899
                  %v901 = vld [vmem:[%s767 + $0x420] sm:$0xff]
                  %902 = vst [vmem:[%s768 + $0x210] sm:$0xff] %v901
                  %v903 = vld [vmem:[%s767 + $0x430] sm:$0xff]
                  %904 = vst [vmem:[%s768 + $0x218] sm:$0xff] %v903
                  %v905 = vld [vmem:[%s767 + $0x440] sm:$0xff]
                  %906 = vst [vmem:[%s768 + $0x220] sm:$0xff] %v905
                  %v907 = vld [vmem:[%s767 + $0x450] sm:$0xff]
                  %908 = vst [vmem:[%s768 + $0x228] sm:$0xff] %v907
                  %v909 = vld [vmem:[%s767 + $0x460] sm:$0xff]
                  %910 = vst [vmem:[%s768 + $0x230] sm:$0xff] %v909
                  %v911 = vld [vmem:[%s767 + $0x470] sm:$0xff]
                  %912 = vst [vmem:[%s768 + $0x238] sm:$0xff] %v911
                  %v913 = vld [vmem:[%s767 + $0x480] sm:$0xff]
                  %914 = vst [vmem:[%s768 + $0x240] sm:$0xff] %v913
                  %v915 = vld [vmem:[%s767 + $0x490] sm:$0xff]
                  %916 = vst [vmem:[%s768 + $0x248] sm:$0xff] %v915
                  %v917 = vld [vmem:[%s767 + $0x4a0] sm:$0xff]
                  %918 = vst [vmem:[%s768 + $0x250] sm:$0xff] %v917
                  %v919 = vld [vmem:[%s767 + $0x4b0] sm:$0xff]
                  %920 = vst [vmem:[%s768 + $0x258] sm:$0xff] %v919
                  %v921 = vld [vmem:[%s767 + $0x4c0] sm:$0xff]
                  %922 = vst [vmem:[%s768 + $0x260] sm:$0xff] %v921
                  %v923 = vld [vmem:[%s767 + $0x4d0] sm:$0xff]
                  %924 = vst [vmem:[%s768 + $0x268] sm:$0xff] %v923
                  %v925 = vld [vmem:[%s767 + $0x4e0] sm:$0xff]
                  %926 = vst [vmem:[%s768 + $0x270] sm:$0xff] %v925
                  %v927 = vld [vmem:[%s767 + $0x4f0] sm:$0xff]
                  %928 = vst [vmem:[%s768 + $0x278] sm:$0xff] %v927
                  %v929 = vld [vmem:[%s767 + $0x500] sm:$0xff]
                  %930 = vst [vmem:[%s768 + $0x280] sm:$0xff] %v929
                  %v931 = vld [vmem:[%s767 + $0x510] sm:$0xff]
                  %932 = vst [vmem:[%s768 + $0x288] sm:$0xff] %v931
                  %v933 = vld [vmem:[%s767 + $0x520] sm:$0xff]
                  %934 = vst [vmem:[%s768 + $0x290] sm:$0xff] %v933
                  %v935 = vld [vmem:[%s767 + $0x530] sm:$0xff]
                  %936 = vst [vmem:[%s768 + $0x298] sm:$0xff] %v935
                  %v937 = vld [vmem:[%s767 + $0x540] sm:$0xff]
                  %938 = vst [vmem:[%s768 + $0x2a0] sm:$0xff] %v937
                  %v939 = vld [vmem:[%s767 + $0x550] sm:$0xff]
                  %940 = vst [vmem:[%s768 + $0x2a8] sm:$0xff] %v939
                  %v941 = vld [vmem:[%s767 + $0x560] sm:$0xff]
                  %942 = vst [vmem:[%s768 + $0x2b0] sm:$0xff] %v941
                  %v943 = vld [vmem:[%s767 + $0x570] sm:$0xff]
                  %944 = vst [vmem:[%s768 + $0x2b8] sm:$0xff] %v943
                  %v945 = vld [vmem:[%s767 + $0x580] sm:$0xff]
                  %946 = vst [vmem:[%s768 + $0x2c0] sm:$0xff] %v945
                  %v947 = vld [vmem:[%s767 + $0x590] sm:$0xff]
                  %948 = vst [vmem:[%s768 + $0x2c8] sm:$0xff] %v947
                  %v949 = vld [vmem:[%s767 + $0x5a0] sm:$0xff]
                  %950 = vst [vmem:[%s768 + $0x2d0] sm:$0xff] %v949
                  %v951 = vld [vmem:[%s767 + $0x5b0] sm:$0xff]
                  %952 = vst [vmem:[%s768 + $0x2d8] sm:$0xff] %v951
                  %v953 = vld [vmem:[%s767 + $0x5c0] sm:$0xff]
                  %954 = vst [vmem:[%s768 + $0x2e0] sm:$0xff] %v953
                  %v955 = vld [vmem:[%s767 + $0x5d0] sm:$0xff]
                  %956 = vst [vmem:[%s768 + $0x2e8] sm:$0xff] %v955
                  %v957 = vld [vmem:[%s767 + $0x5e0] sm:$0xff]
                  %958 = vst [vmem:[%s768 + $0x2f0] sm:$0xff] %v957
                  %v959 = vld [vmem:[%s767 + $0x5f0] sm:$0xff]
                  %960 = vst [vmem:[%s768 + $0x2f8] sm:$0xff] %v959
                  %v961 = vld [vmem:[%s767 + $0x600] sm:$0xff]
                  %962 = vst [vmem:[%s768 + $0x300] sm:$0xff] %v961
                  %v963 = vld [vmem:[%s767 + $0x610] sm:$0xff]
                  %964 = vst [vmem:[%s768 + $0x308] sm:$0xff] %v963
                  %v965 = vld [vmem:[%s767 + $0x620] sm:$0xff]
                  %966 = vst [vmem:[%s768 + $0x310] sm:$0xff] %v965
                  %v967 = vld [vmem:[%s767 + $0x630] sm:$0xff]
                  %968 = vst [vmem:[%s768 + $0x318] sm:$0xff] %v967
                  %v969 = vld [vmem:[%s767 + $0x640] sm:$0xff]
                  %970 = vst [vmem:[%s768 + $0x320] sm:$0xff] %v969
                  %v971 = vld [vmem:[%s767 + $0x650] sm:$0xff]
                  %972 = vst [vmem:[%s768 + $0x328] sm:$0xff] %v971
                  %v973 = vld [vmem:[%s767 + $0x660] sm:$0xff]
                  %974 = vst [vmem:[%s768 + $0x330] sm:$0xff] %v973
                  %v975 = vld [vmem:[%s767 + $0x670] sm:$0xff]
                  %976 = vst [vmem:[%s768 + $0x338] sm:$0xff] %v975
                  %v977 = vld [vmem:[%s767 + $0x680] sm:$0xff]
                  %978 = vst [vmem:[%s768 + $0x340] sm:$0xff] %v977
                  %v979 = vld [vmem:[%s767 + $0x690] sm:$0xff]
                  %980 = vst [vmem:[%s768 + $0x348] sm:$0xff] %v979
                  %v981 = vld [vmem:[%s767 + $0x6a0] sm:$0xff]
                  %982 = vst [vmem:[%s768 + $0x350] sm:$0xff] %v981
                  %v983 = vld [vmem:[%s767 + $0x6b0] sm:$0xff]
                  %984 = vst [vmem:[%s768 + $0x358] sm:$0xff] %v983
                  %v985 = vld [vmem:[%s767 + $0x6c0] sm:$0xff]
                  %986 = vst [vmem:[%s768 + $0x360] sm:$0xff] %v985
                  %v987 = vld [vmem:[%s767 + $0x6d0] sm:$0xff]
                  %988 = vst [vmem:[%s768 + $0x368] sm:$0xff] %v987
                  %v989 = vld [vmem:[%s767 + $0x6e0] sm:$0xff]
                  %990 = vst [vmem:[%s768 + $0x370] sm:$0xff] %v989
                  %v991 = vld [vmem:[%s767 + $0x6f0] sm:$0xff]
                  %992 = vst [vmem:[%s768 + $0x378] sm:$0xff] %v991
                  %v993 = vld [vmem:[%s767 + $0x700] sm:$0xff]
                  %994 = vst [vmem:[%s768 + $0x380] sm:$0xff] %v993
                  %v995 = vld [vmem:[%s767 + $0x710] sm:$0xff]
                  %996 = vst [vmem:[%s768 + $0x388] sm:$0xff] %v995
                  %v997 = vld [vmem:[%s767 + $0x720] sm:$0xff]
                  %998 = vst [vmem:[%s768 + $0x390] sm:$0xff] %v997
                  %v999 = vld [vmem:[%s767 + $0x730] sm:$0xff]
                  %1000 = vst [vmem:[%s768 + $0x398] sm:$0xff] %v999
                  %v1001 = vld [vmem:[%s767 + $0x740] sm:$0xff]
                  %1002 = vst [vmem:[%s768 + $0x3a0] sm:$0xff] %v1001
                  %v1003 = vld [vmem:[%s767 + $0x750] sm:$0xff]
                  %1004 = vst [vmem:[%s768 + $0x3a8] sm:$0xff] %v1003
                  %v1005 = vld [vmem:[%s767 + $0x760] sm:$0xff]
                  %1006 = vst [vmem:[%s768 + $0x3b0] sm:$0xff] %v1005
                  %v1007 = vld [vmem:[%s767 + $0x770] sm:$0xff]
                  %1008 = vst [vmem:[%s768 + $0x3b8] sm:$0xff] %v1007
                  %v1009 = vld [vmem:[%s767 + $0x780] sm:$0xff]
                  %1010 = vst [vmem:[%s768 + $0x3c0] sm:$0xff] %v1009
                  %v1011 = vld [vmem:[%s767 + $0x790] sm:$0xff]
                  %1012 = vst [vmem:[%s768 + $0x3c8] sm:$0xff] %v1011
                  %v1013 = vld [vmem:[%s767 + $0x7a0] sm:$0xff]
                  %1014 = vst [vmem:[%s768 + $0x3d0] sm:$0xff] %v1013
                  %v1015 = vld [vmem:[%s767 + $0x7b0] sm:$0xff]
                  %1016 = vst [vmem:[%s768 + $0x3d8] sm:$0xff] %v1015
                  %v1017 = vld [vmem:[%s767 + $0x7c0] sm:$0xff]
                  %1018 = vst [vmem:[%s768 + $0x3e0] sm:$0xff] %v1017
                  %v1019 = vld [vmem:[%s767 + $0x7d0] sm:$0xff]
                  %1020 = vst [vmem:[%s768 + $0x3e8] sm:$0xff] %v1019
                  %v1021 = vld [vmem:[%s767 + $0x7e0] sm:$0xff]
                  %1022 = vst [vmem:[%s768 + $0x3f0] sm:$0xff] %v1021
                  %v1023 = vld [vmem:[%s767 + $0x7f0] sm:$0xff]
                  %1024 = vst [vmem:[%s768 + $0x3f8] sm:$0xff] %v1023
                  %v1025 = vld [vmem:[%s767 + $0x800] sm:$0xff]
                  %1026 = vst [vmem:[%s768 + $0x400] sm:$0xff] %v1025
                  %v1027 = vld [vmem:[%s767 + $0x810] sm:$0xff]
                  %1028 = vst [vmem:[%s768 + $0x408] sm:$0xff] %v1027
                  %v1029 = vld [vmem:[%s767 + $0x820] sm:$0xff]
                  %1030 = vst [vmem:[%s768 + $0x410] sm:$0xff] %v1029
                  %v1031 = vld [vmem:[%s767 + $0x830] sm:$0xff]
                  %1032 = vst [vmem:[%s768 + $0x418] sm:$0xff] %v1031
                  %v1033 = vld [vmem:[%s767 + $0x840] sm:$0xff]
                  %1034 = vst [vmem:[%s768 + $0x420] sm:$0xff] %v1033
                  %v1035 = vld [vmem:[%s767 + $0x850] sm:$0xff]
                  %1036 = vst [vmem:[%s768 + $0x428] sm:$0xff] %v1035
                  %v1037 = vld [vmem:[%s767 + $0x860] sm:$0xff]
                  %1038 = vst [vmem:[%s768 + $0x430] sm:$0xff] %v1037
                  %v1039 = vld [vmem:[%s767 + $0x870] sm:$0xff]
                  %1040 = vst [vmem:[%s768 + $0x438] sm:$0xff] %v1039
                  %v1041 = vld [vmem:[%s767 + $0x880] sm:$0xff]
                  %1042 = vst [vmem:[%s768 + $0x440] sm:$0xff] %v1041
                  %v1043 = vld [vmem:[%s767 + $0x890] sm:$0xff]
                  %1044 = vst [vmem:[%s768 + $0x448] sm:$0xff] %v1043
                  %v1045 = vld [vmem:[%s767 + $0x8a0] sm:$0xff]
                  %1046 = vst [vmem:[%s768 + $0x450] sm:$0xff] %v1045
                  %v1047 = vld [vmem:[%s767 + $0x8b0] sm:$0xff]
                  %1048 = vst [vmem:[%s768 + $0x458] sm:$0xff] %v1047
                  %v1049 = vld [vmem:[%s767 + $0x8c0] sm:$0xff]
                  %1050 = vst [vmem:[%s768 + $0x460] sm:$0xff] %v1049
                  %v1051 = vld [vmem:[%s767 + $0x8d0] sm:$0xff]
                  %1052 = vst [vmem:[%s768 + $0x468] sm:$0xff] %v1051
                  %v1053 = vld [vmem:[%s767 + $0x8e0] sm:$0xff]
                  %1054 = vst [vmem:[%s768 + $0x470] sm:$0xff] %v1053
                  %v1055 = vld [vmem:[%s767 + $0x8f0] sm:$0xff]
                  %1056 = vst [vmem:[%s768 + $0x478] sm:$0xff] %v1055
                  %v1057 = vld [vmem:[%s767 + $0x900] sm:$0xff]
                  %1058 = vst [vmem:[%s768 + $0x480] sm:$0xff] %v1057
                  %v1059 = vld [vmem:[%s767 + $0x910] sm:$0xff]
                  %1060 = vst [vmem:[%s768 + $0x488] sm:$0xff] %v1059
                  %v1061 = vld [vmem:[%s767 + $0x920] sm:$0xff]
                  %1062 = vst [vmem:[%s768 + $0x490] sm:$0xff] %v1061
                  %v1063 = vld [vmem:[%s767 + $0x930] sm:$0xff]
                  %1064 = vst [vmem:[%s768 + $0x498] sm:$0xff] %v1063
                  %v1065 = vld [vmem:[%s767 + $0x940] sm:$0xff]
                  %1066 = vst [vmem:[%s768 + $0x4a0] sm:$0xff] %v1065
                  %v1067 = vld [vmem:[%s767 + $0x950] sm:$0xff]
                  %1068 = vst [vmem:[%s768 + $0x4a8] sm:$0xff] %v1067
                  %v1069 = vld [vmem:[%s767 + $0x960] sm:$0xff]
                  %1070 = vst [vmem:[%s768 + $0x4b0] sm:$0xff] %v1069
                  %v1071 = vld [vmem:[%s767 + $0x970] sm:$0xff]
                  %1072 = vst [vmem:[%s768 + $0x4b8] sm:$0xff] %v1071
                  %v1073 = vld [vmem:[%s767 + $0x980] sm:$0xff]
                  %1074 = vst [vmem:[%s768 + $0x4c0] sm:$0xff] %v1073
                  %v1075 = vld [vmem:[%s767 + $0x990] sm:$0xff]
                  %1076 = vst [vmem:[%s768 + $0x4c8] sm:$0xff] %v1075
                  %v1077 = vld [vmem:[%s767 + $0x9a0] sm:$0xff]
                  %1078 = vst [vmem:[%s768 + $0x4d0] sm:$0xff] %v1077
                  %v1079 = vld [vmem:[%s767 + $0x9b0] sm:$0xff]
                  %1080 = vst [vmem:[%s768 + $0x4d8] sm:$0xff] %v1079
                  %v1081 = vld [vmem:[%s767 + $0x9c0] sm:$0xff]
                  %1082 = vst [vmem:[%s768 + $0x4e0] sm:$0xff] %v1081
                  %v1083 = vld [vmem:[%s767 + $0x9d0] sm:$0xff]
                  %1084 = vst [vmem:[%s768 + $0x4e8] sm:$0xff] %v1083
                  %v1085 = vld [vmem:[%s767 + $0x9e0] sm:$0xff]
                  %1086 = vst [vmem:[%s768 + $0x4f0] sm:$0xff] %v1085
                  %v1087 = vld [vmem:[%s767 + $0x9f0] sm:$0xff]
                  %1088 = vst [vmem:[%s768 + $0x4f8] sm:$0xff] %v1087
                  %v1089 = vld [vmem:[%s767 + $0xa00] sm:$0xff]
                  %1090 = vst [vmem:[%s768 + $0x500] sm:$0xff] %v1089
                  %v1091 = vld [vmem:[%s767 + $0xa10] sm:$0xff]
                  %1092 = vst [vmem:[%s768 + $0x508] sm:$0xff] %v1091
                  %v1093 = vld [vmem:[%s767 + $0xa20] sm:$0xff]
                  %1094 = vst [vmem:[%s768 + $0x510] sm:$0xff] %v1093
                  %v1095 = vld [vmem:[%s767 + $0xa30] sm:$0xff]
                  %1096 = vst [vmem:[%s768 + $0x518] sm:$0xff] %v1095
                  %v1097 = vld [vmem:[%s767 + $0xa40] sm:$0xff]
                  %1098 = vst [vmem:[%s768 + $0x520] sm:$0xff] %v1097
                  %v1099 = vld [vmem:[%s767 + $0xa50] sm:$0xff]
                  %1100 = vst [vmem:[%s768 + $0x528] sm:$0xff] %v1099
                  %v1101 = vld [vmem:[%s767 + $0xa60] sm:$0xff]
                  %1102 = vst [vmem:[%s768 + $0x530] sm:$0xff] %v1101
                  %v1103 = vld [vmem:[%s767 + $0xa70] sm:$0xff]
                  %1104 = vst [vmem:[%s768 + $0x538] sm:$0xff] %v1103
                  %v1105 = vld [vmem:[%s767 + $0xa80] sm:$0xff]
                  %1106 = vst [vmem:[%s768 + $0x540] sm:$0xff] %v1105
                  %v1107 = vld [vmem:[%s767 + $0xa90] sm:$0xff]
                  %1108 = vst [vmem:[%s768 + $0x548] sm:$0xff] %v1107
                  %v1109 = vld [vmem:[%s767 + $0xaa0] sm:$0xff]
                  %1110 = vst [vmem:[%s768 + $0x550] sm:$0xff] %v1109
                  %v1111 = vld [vmem:[%s767 + $0xab0] sm:$0xff]
                  %1112 = vst [vmem:[%s768 + $0x558] sm:$0xff] %v1111
                  %v1113 = vld [vmem:[%s767 + $0xac0] sm:$0xff]
                  %1114 = vst [vmem:[%s768 + $0x560] sm:$0xff] %v1113
                  %v1115 = vld [vmem:[%s767 + $0xad0] sm:$0xff]
                  %1116 = vst [vmem:[%s768 + $0x568] sm:$0xff] %v1115
                  %v1117 = vld [vmem:[%s767 + $0xae0] sm:$0xff]
                  %1118 = vst [vmem:[%s768 + $0x570] sm:$0xff] %v1117
                  %v1119 = vld [vmem:[%s767 + $0xaf0] sm:$0xff]
                  %1120 = vst [vmem:[%s768 + $0x578] sm:$0xff] %v1119
                  %v1121 = vld [vmem:[%s767 + $0xb00] sm:$0xff]
                  %1122 = vst [vmem:[%s768 + $0x580] sm:$0xff] %v1121
                  %v1123 = vld [vmem:[%s767 + $0xb10] sm:$0xff]
                  %1124 = vst [vmem:[%s768 + $0x588] sm:$0xff] %v1123
                  %v1125 = vld [vmem:[%s767 + $0xb20] sm:$0xff]
                  %1126 = vst [vmem:[%s768 + $0x590] sm:$0xff] %v1125
                  %v1127 = vld [vmem:[%s767 + $0xb30] sm:$0xff]
                  %1128 = vst [vmem:[%s768 + $0x598] sm:$0xff] %v1127
                  %v1129 = vld [vmem:[%s767 + $0xb40] sm:$0xff]
                  %1130 = vst [vmem:[%s768 + $0x5a0] sm:$0xff] %v1129
                  %v1131 = vld [vmem:[%s767 + $0xb50] sm:$0xff]
                  %1132 = vst [vmem:[%s768 + $0x5a8] sm:$0xff] %v1131
                  %v1133 = vld [vmem:[%s767 + $0xb60] sm:$0xff]
                  %1134 = vst [vmem:[%s768 + $0x5b0] sm:$0xff] %v1133
                  %v1135 = vld [vmem:[%s767 + $0xb70] sm:$0xff]
                  %1136 = vst [vmem:[%s768 + $0x5b8] sm:$0xff] %v1135
                  %v1137 = vld [vmem:[%s767 + $0xb80] sm:$0xff]
                  %1138 = vst [vmem:[%s768 + $0x5c0] sm:$0xff] %v1137
                  %v1139 = vld [vmem:[%s767 + $0xb90] sm:$0xff]
                  %1140 = vst [vmem:[%s768 + $0x5c8] sm:$0xff] %v1139
                  %v1141 = vld [vmem:[%s767 + $0xba0] sm:$0xff]
                  %1142 = vst [vmem:[%s768 + $0x5d0] sm:$0xff] %v1141
                  %v1143 = vld [vmem:[%s767 + $0xbb0] sm:$0xff]
                  %1144 = vst [vmem:[%s768 + $0x5d8] sm:$0xff] %v1143
                  %v1145 = vld [vmem:[%s767 + $0xbc0] sm:$0xff]
                  %1146 = vst [vmem:[%s768 + $0x5e0] sm:$0xff] %v1145
                  %v1147 = vld [vmem:[%s767 + $0xbd0] sm:$0xff]
                  %1148 = vst [vmem:[%s768 + $0x5e8] sm:$0xff] %v1147
                  %v1149 = vld [vmem:[%s767 + $0xbe0] sm:$0xff]
                  %1150 = vst [vmem:[%s768 + $0x5f0] sm:$0xff] %v1149
                  %v1151 = vld [vmem:[%s767 + $0xbf0] sm:$0xff]
                  %1152 = vst [vmem:[%s768 + $0x5f8] sm:$0xff] %v1151
                  %v1153 = vld [vmem:[%s767 + $0xc00] sm:$0xff]
                  %1154 = vst [vmem:[%s768 + $0x600] sm:$0xff] %v1153
                  %v1155 = vld [vmem:[%s767 + $0xc10] sm:$0xff]
                  %1156 = vst [vmem:[%s768 + $0x608] sm:$0xff] %v1155
                  %v1157 = vld [vmem:[%s767 + $0xc20] sm:$0xff]
                  %1158 = vst [vmem:[%s768 + $0x610] sm:$0xff] %v1157
                  %v1159 = vld [vmem:[%s767 + $0xc30] sm:$0xff]
                  %1160 = vst [vmem:[%s768 + $0x618] sm:$0xff] %v1159
                  %v1161 = vld [vmem:[%s767 + $0xc40] sm:$0xff]
                  %1162 = vst [vmem:[%s768 + $0x620] sm:$0xff] %v1161
                  %v1163 = vld [vmem:[%s767 + $0xc50] sm:$0xff]
                  %1164 = vst [vmem:[%s768 + $0x628] sm:$0xff] %v1163
                  %v1165 = vld [vmem:[%s767 + $0xc60] sm:$0xff]
                  %1166 = vst [vmem:[%s768 + $0x630] sm:$0xff] %v1165
                  %v1167 = vld [vmem:[%s767 + $0xc70] sm:$0xff]
                  %1168 = vst [vmem:[%s768 + $0x638] sm:$0xff] %v1167
                  %v1169 = vld [vmem:[%s767 + $0xc80] sm:$0xff]
                  %1170 = vst [vmem:[%s768 + $0x640] sm:$0xff] %v1169
                  %v1171 = vld [vmem:[%s767 + $0xc90] sm:$0xff]
                  %1172 = vst [vmem:[%s768 + $0x648] sm:$0xff] %v1171
                  %v1173 = vld [vmem:[%s767 + $0xca0] sm:$0xff]
                  %1174 = vst [vmem:[%s768 + $0x650] sm:$0xff] %v1173
                  %v1175 = vld [vmem:[%s767 + $0xcb0] sm:$0xff]
                  %1176 = vst [vmem:[%s768 + $0x658] sm:$0xff] %v1175
                  %v1177 = vld [vmem:[%s767 + $0xcc0] sm:$0xff]
                  %1178 = vst [vmem:[%s768 + $0x660] sm:$0xff] %v1177
                  %v1179 = vld [vmem:[%s767 + $0xcd0] sm:$0xff]
                  %1180 = vst [vmem:[%s768 + $0x668] sm:$0xff] %v1179
                  %v1181 = vld [vmem:[%s767 + $0xce0] sm:$0xff]
                  %1182 = vst [vmem:[%s768 + $0x670] sm:$0xff] %v1181
                  %v1183 = vld [vmem:[%s767 + $0xcf0] sm:$0xff]
                  %1184 = vst [vmem:[%s768 + $0x678] sm:$0xff] %v1183
                  %v1185 = vld [vmem:[%s767 + $0xd00] sm:$0xff]
                  %1186 = vst [vmem:[%s768 + $0x680] sm:$0xff] %v1185
                  %v1187 = vld [vmem:[%s767 + $0xd10] sm:$0xff]
                  %1188 = vst [vmem:[%s768 + $0x688] sm:$0xff] %v1187
                  %v1189 = vld [vmem:[%s767 + $0xd20] sm:$0xff]
                  %1190 = vst [vmem:[%s768 + $0x690] sm:$0xff] %v1189
                  %v1191 = vld [vmem:[%s767 + $0xd30] sm:$0xff]
                  %1192 = vst [vmem:[%s768 + $0x698] sm:$0xff] %v1191
                  %v1193 = vld [vmem:[%s767 + $0xd40] sm:$0xff]
                  %1194 = vst [vmem:[%s768 + $0x6a0] sm:$0xff] %v1193
                  %v1195 = vld [vmem:[%s767 + $0xd50] sm:$0xff]
                  %1196 = vst [vmem:[%s768 + $0x6a8] sm:$0xff] %v1195
                  %v1197 = vld [vmem:[%s767 + $0xd60] sm:$0xff]
                  %1198 = vst [vmem:[%s768 + $0x6b0] sm:$0xff] %v1197
                  %v1199 = vld [vmem:[%s767 + $0xd70] sm:$0xff]
                  %1200 = vst [vmem:[%s768 + $0x6b8] sm:$0xff] %v1199
                  %v1201 = vld [vmem:[%s767 + $0xd80] sm:$0xff]
                  %1202 = vst [vmem:[%s768 + $0x6c0] sm:$0xff] %v1201
                  %v1203 = vld [vmem:[%s767 + $0xd90] sm:$0xff]
                  %1204 = vst [vmem:[%s768 + $0x6c8] sm:$0xff] %v1203
                  %v1205 = vld [vmem:[%s767 + $0xda0] sm:$0xff]
                  %1206 = vst [vmem:[%s768 + $0x6d0] sm:$0xff] %v1205
                  %v1207 = vld [vmem:[%s767 + $0xdb0] sm:$0xff]
                  %1208 = vst [vmem:[%s768 + $0x6d8] sm:$0xff] %v1207
                  %v1209 = vld [vmem:[%s767 + $0xdc0] sm:$0xff]
                  %1210 = vst [vmem:[%s768 + $0x6e0] sm:$0xff] %v1209
                  %v1211 = vld [vmem:[%s767 + $0xdd0] sm:$0xff]
                  %1212 = vst [vmem:[%s768 + $0x6e8] sm:$0xff] %v1211
                  %v1213 = vld [vmem:[%s767 + $0xde0] sm:$0xff]
                  %1214 = vst [vmem:[%s768 + $0x6f0] sm:$0xff] %v1213
                  %v1215 = vld [vmem:[%s767 + $0xdf0] sm:$0xff]
                  %1216 = vst [vmem:[%s768 + $0x6f8] sm:$0xff] %v1215
                  %v1217 = vld [vmem:[%s767 + $0xe00] sm:$0xff]
                  %1218 = vst [vmem:[%s768 + $0x700] sm:$0xff] %v1217
                  %v1219 = vld [vmem:[%s767 + $0xe10] sm:$0xff]
                  %1220 = vst [vmem:[%s768 + $0x708] sm:$0xff] %v1219
                  %v1221 = vld [vmem:[%s767 + $0xe20] sm:$0xff]
                  %1222 = vst [vmem:[%s768 + $0x710] sm:$0xff] %v1221
                  %v1223 = vld [vmem:[%s767 + $0xe30] sm:$0xff]
                  %1224 = vst [vmem:[%s768 + $0x718] sm:$0xff] %v1223
                  %v1225 = vld [vmem:[%s767 + $0xe40] sm:$0xff]
                  %1226 = vst [vmem:[%s768 + $0x720] sm:$0xff] %v1225
                  %v1227 = vld [vmem:[%s767 + $0xe50] sm:$0xff]
                  %1228 = vst [vmem:[%s768 + $0x728] sm:$0xff] %v1227
                  %v1229 = vld [vmem:[%s767 + $0xe60] sm:$0xff]
                  %1230 = vst [vmem:[%s768 + $0x730] sm:$0xff] %v1229
                  %v1231 = vld [vmem:[%s767 + $0xe70] sm:$0xff]
                  %1232 = vst [vmem:[%s768 + $0x738] sm:$0xff] %v1231
                  %v1233 = vld [vmem:[%s767 + $0xe80] sm:$0xff]
                  %1234 = vst [vmem:[%s768 + $0x740] sm:$0xff] %v1233
                  %v1235 = vld [vmem:[%s767 + $0xe90] sm:$0xff]
                  %1236 = vst [vmem:[%s768 + $0x748] sm:$0xff] %v1235
                  %v1237 = vld [vmem:[%s767 + $0xea0] sm:$0xff]
                  %1238 = vst [vmem:[%s768 + $0x750] sm:$0xff] %v1237
                  %v1239 = vld [vmem:[%s767 + $0xeb0] sm:$0xff]
                  %1240 = vst [vmem:[%s768 + $0x758] sm:$0xff] %v1239
                  %v1241 = vld [vmem:[%s767 + $0xec0] sm:$0xff]
                  %1242 = vst [vmem:[%s768 + $0x760] sm:$0xff] %v1241
                  %v1243 = vld [vmem:[%s767 + $0xed0] sm:$0xff]
                  %1244 = vst [vmem:[%s768 + $0x768] sm:$0xff] %v1243
                  %v1245 = vld [vmem:[%s767 + $0xee0] sm:$0xff]
                  %1246 = vst [vmem:[%s768 + $0x770] sm:$0xff] %v1245
                  %v1247 = vld [vmem:[%s767 + $0xef0] sm:$0xff]
                  %1248 = vst [vmem:[%s768 + $0x778] sm:$0xff] %v1247
                  %v1249 = vld [vmem:[%s767 + $0xf00] sm:$0xff]
                  %1250 = vst [vmem:[%s768 + $0x780] sm:$0xff] %v1249
                  %v1251 = vld [vmem:[%s767 + $0xf10] sm:$0xff]
                  %1252 = vst [vmem:[%s768 + $0x788] sm:$0xff] %v1251
                  %v1253 = vld [vmem:[%s767 + $0xf20] sm:$0xff]
                  %1254 = vst [vmem:[%s768 + $0x790] sm:$0xff] %v1253
                  %v1255 = vld [vmem:[%s767 + $0xf30] sm:$0xff]
                  %1256 = vst [vmem:[%s768 + $0x798] sm:$0xff] %v1255
                  %v1257 = vld [vmem:[%s767 + $0xf40] sm:$0xff]
                  %1258 = vst [vmem:[%s768 + $0x7a0] sm:$0xff] %v1257
                  %v1259 = vld [vmem:[%s767 + $0xf50] sm:$0xff]
                  %1260 = vst [vmem:[%s768 + $0x7a8] sm:$0xff] %v1259
                  %v1261 = vld [vmem:[%s767 + $0xf60] sm:$0xff]
                  %1262 = vst [vmem:[%s768 + $0x7b0] sm:$0xff] %v1261
                  %v1263 = vld [vmem:[%s767 + $0xf70] sm:$0xff]
                  %1264 = vst [vmem:[%s768 + $0x7b8] sm:$0xff] %v1263
                  %v1265 = vld [vmem:[%s767 + $0xf80] sm:$0xff]
                  %1266 = vst [vmem:[%s768 + $0x7c0] sm:$0xff] %v1265
                  %v1267 = vld [vmem:[%s767 + $0xf90] sm:$0xff]
                  %1268 = vst [vmem:[%s768 + $0x7c8] sm:$0xff] %v1267
                  %v1269 = vld [vmem:[%s767 + $0xfa0] sm:$0xff]
                  %1270 = vst [vmem:[%s768 + $0x7d0] sm:$0xff] %v1269
                  %v1271 = vld [vmem:[%s767 + $0xfb0] sm:$0xff]
                  %1272 = vst [vmem:[%s768 + $0x7d8] sm:$0xff] %v1271
                  %v1273 = vld [vmem:[%s767 + $0xfc0] sm:$0xff]
                  %1274 = vst [vmem:[%s768 + $0x7e0] sm:$0xff] %v1273
                  %v1275 = vld [vmem:[%s767 + $0xfd0] sm:$0xff]
                  %1276 = vst [vmem:[%s768 + $0x7e8] sm:$0xff] %v1275
                  %v1277 = vld [vmem:[%s767 + $0xfe0] sm:$0xff]
                  %1278 = vst [vmem:[%s768 + $0x7f0] sm:$0xff] %v1277
                  %v1279 = vld [vmem:[%s767 + $0xff0] sm:$0xff]
                  %1280 = vst [vmem:[%s768 + $0x7f8] sm:$0xff] %v1279
                  %v1281 = vld [vmem:[%s767 + $0x1000] sm:$0xff]
                  %1282 = vst [vmem:[%s768 + $0x800] sm:$0xff] %v1281
                  %v1283 = vld [vmem:[%s767 + $0x1010] sm:$0xff]
                  %1284 = vst [vmem:[%s768 + $0x808] sm:$0xff] %v1283
                  %v1285 = vld [vmem:[%s767 + $0x1020] sm:$0xff]
                  %1286 = vst [vmem:[%s768 + $0x810] sm:$0xff] %v1285
                  %v1287 = vld [vmem:[%s767 + $0x1030] sm:$0xff]
                  %1288 = vst [vmem:[%s768 + $0x818] sm:$0xff] %v1287
                  %v1289 = vld [vmem:[%s767 + $0x1040] sm:$0xff]
                  %1290 = vst [vmem:[%s768 + $0x820] sm:$0xff] %v1289
                  %v1291 = vld [vmem:[%s767 + $0x1050] sm:$0xff]
                  %1292 = vst [vmem:[%s768 + $0x828] sm:$0xff] %v1291
                  %v1293 = vld [vmem:[%s767 + $0x1060] sm:$0xff]
                  %1294 = vst [vmem:[%s768 + $0x830] sm:$0xff] %v1293
                  %v1295 = vld [vmem:[%s767 + $0x1070] sm:$0xff]
                  %1296 = vst [vmem:[%s768 + $0x838] sm:$0xff] %v1295
                  %v1297 = vld [vmem:[%s767 + $0x1080] sm:$0xff]
                  %1298 = vst [vmem:[%s768 + $0x840] sm:$0xff] %v1297
                  %v1299 = vld [vmem:[%s767 + $0x1090] sm:$0xff]
                  %1300 = vst [vmem:[%s768 + $0x848] sm:$0xff] %v1299
                  %v1301 = vld [vmem:[%s767 + $0x10a0] sm:$0xff]
                  %1302 = vst [vmem:[%s768 + $0x850] sm:$0xff] %v1301
                  %v1303 = vld [vmem:[%s767 + $0x10b0] sm:$0xff]
                  %1304 = vst [vmem:[%s768 + $0x858] sm:$0xff] %v1303
                  %v1305 = vld [vmem:[%s767 + $0x10c0] sm:$0xff]
                  %1306 = vst [vmem:[%s768 + $0x860] sm:$0xff] %v1305
                  %v1307 = vld [vmem:[%s767 + $0x10d0] sm:$0xff]
                  %1308 = vst [vmem:[%s768 + $0x868] sm:$0xff] %v1307
                  %v1309 = vld [vmem:[%s767 + $0x10e0] sm:$0xff]
                  %1310 = vst [vmem:[%s768 + $0x870] sm:$0xff] %v1309
                  %v1311 = vld [vmem:[%s767 + $0x10f0] sm:$0xff]
                  %1312 = vst [vmem:[%s768 + $0x878] sm:$0xff] %v1311
                  %v1313 = vld [vmem:[%s767 + $0x1100] sm:$0xff]
                  %1314 = vst [vmem:[%s768 + $0x880] sm:$0xff] %v1313
                  %v1315 = vld [vmem:[%s767 + $0x1110] sm:$0xff]
                  %1316 = vst [vmem:[%s768 + $0x888] sm:$0xff] %v1315
                  %v1317 = vld [vmem:[%s767 + $0x1120] sm:$0xff]
                  %1318 = vst [vmem:[%s768 + $0x890] sm:$0xff] %v1317
                  %v1319 = vld [vmem:[%s767 + $0x1130] sm:$0xff]
                  %1320 = vst [vmem:[%s768 + $0x898] sm:$0xff] %v1319
                  %v1321 = vld [vmem:[%s767 + $0x1140] sm:$0xff]
                  %1322 = vst [vmem:[%s768 + $0x8a0] sm:$0xff] %v1321
                  %v1323 = vld [vmem:[%s767 + $0x1150] sm:$0xff]
                  %1324 = vst [vmem:[%s768 + $0x8a8] sm:$0xff] %v1323
                  %v1325 = vld [vmem:[%s767 + $0x1160] sm:$0xff]
                  %1326 = vst [vmem:[%s768 + $0x8b0] sm:$0xff] %v1325
                  %v1327 = vld [vmem:[%s767 + $0x1170] sm:$0xff]
                  %1328 = vst [vmem:[%s768 + $0x8b8] sm:$0xff] %v1327
                  %v1329 = vld [vmem:[%s767 + $0x1180] sm:$0xff]
                  %1330 = vst [vmem:[%s768 + $0x8c0] sm:$0xff] %v1329
                  %v1331 = vld [vmem:[%s767 + $0x1190] sm:$0xff]
                  %1332 = vst [vmem:[%s768 + $0x8c8] sm:$0xff] %v1331
                  %v1333 = vld [vmem:[%s767 + $0x11a0] sm:$0xff]
                  %1334 = vst [vmem:[%s768 + $0x8d0] sm:$0xff] %v1333
                  %v1335 = vld [vmem:[%s767 + $0x11b0] sm:$0xff]
                  %1336 = vst [vmem:[%s768 + $0x8d8] sm:$0xff] %v1335
                  %v1337 = vld [vmem:[%s767 + $0x11c0] sm:$0xff]
                  %1338 = vst [vmem:[%s768 + $0x8e0] sm:$0xff] %v1337
                  %v1339 = vld [vmem:[%s767 + $0x11d0] sm:$0xff]
                  %1340 = vst [vmem:[%s768 + $0x8e8] sm:$0xff] %v1339
                  %v1341 = vld [vmem:[%s767 + $0x11e0] sm:$0xff]
                  %1342 = vst [vmem:[%s768 + $0x8f0] sm:$0xff] %v1341
                  %v1343 = vld [vmem:[%s767 + $0x11f0] sm:$0xff]
                  %1344 = vst [vmem:[%s768 + $0x8f8] sm:$0xff] %v1343
                  %s1345 = sadd.s32 1, %s766
                  %p1346 = scmp.ge.s32.totalorder %s1345, 1
                  %s1347 = scalar_select %p1346, 0, %s1345
                  %s1348 = smul.u32 %s1347, 8
                  %s1349 = smul.u32 %s1347, 8
                  %s1350 = scalar_lea.vmem %s165, %s1348
                  %s1351 = scalar_lea.vmem %s162, %s1349 [#allocation2]
                $region52: #{auxiliary_convolutions.5} parent=46 // loop_footer
                  %s765 = sadd.s32 1, %s761
                $region53: #{auxiliary_convolutions.5} parent=46 // loop_footer_branch
                  %760 = sbr.rel target = $region49
                $region54: #{auxiliary_convolutions.5} parent=46 // loop_exit
                  _
              $region47: #{auxiliary_convolutions.5} parent=31 // pred_fallthru
                _
              // Predicated region
              $region55: #{auxiliary_convolutions.5} parent=31 // pred_check
                _
              $region56: #{auxiliary_convolutions.5} parent=31 // pred_check_branch
                %1353 = sbr.rel target = $region58
              $region57: #{auxiliary_convolutions.5} parent=31 // pred_region
                %s1354 = scalar_lea.vmem %s165, 8
                %s1355 = scalar_lea.vmem %s162, 8 [#allocation2]
                loop: start=0, step=1, limit=1
                $region59: #{auxiliary_convolutions.5} parent=57 // loop_pre_header
                  _
                $region60: #{auxiliary_convolutions.5} parent=57 // loop_header
                  %s1357 = sphi 0, %s1361
                  %p1358 = scmp.ge.s32.totalorder %s1357, 1
                  %s1362 = sphi 0, %s1943
                  %s1363 = sphi %s165, %s1946
                  %s1364 = sphi %s162, %s1947
                $region61: #{auxiliary_convolutions.5} parent=57 // loop_header_branch
                  %1360 = sbr.rel (%p1358) target = $region65
                $region62: #{auxiliary_convolutions.5} parent=57 // loop_body
                  %v1365 = vld [vmem:[%s1363] sm:$0xff]
                  %1366 = vst [vmem:[%s1364] sm:$0xff] %v1365
                  %v1367 = vld [vmem:[%s1363 + $0x10] sm:$0xff]
                  %1368 = vst [vmem:[%s1364 + $0x8] sm:$0xff] %v1367
                  %v1369 = vld [vmem:[%s1363 + $0x20] sm:$0xff]
                  %1370 = vst [vmem:[%s1364 + $0x10] sm:$0xff] %v1369
                  %v1371 = vld [vmem:[%s1363 + $0x30] sm:$0xff]
                  %1372 = vst [vmem:[%s1364 + $0x18] sm:$0xff] %v1371
                  %v1373 = vld [vmem:[%s1363 + $0x40] sm:$0xff]
                  %1374 = vst [vmem:[%s1364 + $0x20] sm:$0xff] %v1373
                  %v1375 = vld [vmem:[%s1363 + $0x50] sm:$0xff]
                  %1376 = vst [vmem:[%s1364 + $0x28] sm:$0xff] %v1375
                  %v1377 = vld [vmem:[%s1363 + $0x60] sm:$0xff]
                  %1378 = vst [vmem:[%s1364 + $0x30] sm:$0xff] %v1377
                  %v1379 = vld [vmem:[%s1363 + $0x70] sm:$0xff]
                  %1380 = vst [vmem:[%s1364 + $0x38] sm:$0xff] %v1379
                  %v1381 = vld [vmem:[%s1363 + $0x80] sm:$0xff]
                  %1382 = vst [vmem:[%s1364 + $0x40] sm:$0xff] %v1381
                  %v1383 = vld [vmem:[%s1363 + $0x90] sm:$0xff]
                  %1384 = vst [vmem:[%s1364 + $0x48] sm:$0xff] %v1383
                  %v1385 = vld [vmem:[%s1363 + $0xa0] sm:$0xff]
                  %1386 = vst [vmem:[%s1364 + $0x50] sm:$0xff] %v1385
                  %v1387 = vld [vmem:[%s1363 + $0xb0] sm:$0xff]
                  %1388 = vst [vmem:[%s1364 + $0x58] sm:$0xff] %v1387
                  %v1389 = vld [vmem:[%s1363 + $0xc0] sm:$0xff]
                  %1390 = vst [vmem:[%s1364 + $0x60] sm:$0xff] %v1389
                  %v1391 = vld [vmem:[%s1363 + $0xd0] sm:$0xff]
                  %1392 = vst [vmem:[%s1364 + $0x68] sm:$0xff] %v1391
                  %v1393 = vld [vmem:[%s1363 + $0xe0] sm:$0xff]
                  %1394 = vst [vmem:[%s1364 + $0x70] sm:$0xff] %v1393
                  %v1395 = vld [vmem:[%s1363 + $0xf0] sm:$0xff]
                  %1396 = vst [vmem:[%s1364 + $0x78] sm:$0xff] %v1395
                  %v1397 = vld [vmem:[%s1363 + $0x100] sm:$0xff]
                  %1398 = vst [vmem:[%s1364 + $0x80] sm:$0xff] %v1397
                  %v1399 = vld [vmem:[%s1363 + $0x110] sm:$0xff]
                  %1400 = vst [vmem:[%s1364 + $0x88] sm:$0xff] %v1399
                  %v1401 = vld [vmem:[%s1363 + $0x120] sm:$0xff]
                  %1402 = vst [vmem:[%s1364 + $0x90] sm:$0xff] %v1401
                  %v1403 = vld [vmem:[%s1363 + $0x130] sm:$0xff]
                  %1404 = vst [vmem:[%s1364 + $0x98] sm:$0xff] %v1403
                  %v1405 = vld [vmem:[%s1363 + $0x140] sm:$0xff]
                  %1406 = vst [vmem:[%s1364 + $0xa0] sm:$0xff] %v1405
                  %v1407 = vld [vmem:[%s1363 + $0x150] sm:$0xff]
                  %1408 = vst [vmem:[%s1364 + $0xa8] sm:$0xff] %v1407
                  %v1409 = vld [vmem:[%s1363 + $0x160] sm:$0xff]
                  %1410 = vst [vmem:[%s1364 + $0xb0] sm:$0xff] %v1409
                  %v1411 = vld [vmem:[%s1363 + $0x170] sm:$0xff]
                  %1412 = vst [vmem:[%s1364 + $0xb8] sm:$0xff] %v1411
                  %v1413 = vld [vmem:[%s1363 + $0x180] sm:$0xff]
                  %1414 = vst [vmem:[%s1364 + $0xc0] sm:$0xff] %v1413
                  %v1415 = vld [vmem:[%s1363 + $0x190] sm:$0xff]
                  %1416 = vst [vmem:[%s1364 + $0xc8] sm:$0xff] %v1415
                  %v1417 = vld [vmem:[%s1363 + $0x1a0] sm:$0xff]
                  %1418 = vst [vmem:[%s1364 + $0xd0] sm:$0xff] %v1417
                  %v1419 = vld [vmem:[%s1363 + $0x1b0] sm:$0xff]
                  %1420 = vst [vmem:[%s1364 + $0xd8] sm:$0xff] %v1419
                  %v1421 = vld [vmem:[%s1363 + $0x1c0] sm:$0xff]
                  %1422 = vst [vmem:[%s1364 + $0xe0] sm:$0xff] %v1421
                  %v1423 = vld [vmem:[%s1363 + $0x1d0] sm:$0xff]
                  %1424 = vst [vmem:[%s1364 + $0xe8] sm:$0xff] %v1423
                  %v1425 = vld [vmem:[%s1363 + $0x1e0] sm:$0xff]
                  %1426 = vst [vmem:[%s1364 + $0xf0] sm:$0xff] %v1425
                  %v1427 = vld [vmem:[%s1363 + $0x1f0] sm:$0xff]
                  %1428 = vst [vmem:[%s1364 + $0xf8] sm:$0xff] %v1427
                  %v1429 = vld [vmem:[%s1363 + $0x200] sm:$0xff]
                  %1430 = vst [vmem:[%s1364 + $0x100] sm:$0xff] %v1429
                  %v1431 = vld [vmem:[%s1363 + $0x210] sm:$0xff]
                  %1432 = vst [vmem:[%s1364 + $0x108] sm:$0xff] %v1431
                  %v1433 = vld [vmem:[%s1363 + $0x220] sm:$0xff]
                  %1434 = vst [vmem:[%s1364 + $0x110] sm:$0xff] %v1433
                  %v1435 = vld [vmem:[%s1363 + $0x230] sm:$0xff]
                  %1436 = vst [vmem:[%s1364 + $0x118] sm:$0xff] %v1435
                  %v1437 = vld [vmem:[%s1363 + $0x240] sm:$0xff]
                  %1438 = vst [vmem:[%s1364 + $0x120] sm:$0xff] %v1437
                  %v1439 = vld [vmem:[%s1363 + $0x250] sm:$0xff]
                  %1440 = vst [vmem:[%s1364 + $0x128] sm:$0xff] %v1439
                  %v1441 = vld [vmem:[%s1363 + $0x260] sm:$0xff]
                  %1442 = vst [vmem:[%s1364 + $0x130] sm:$0xff] %v1441
                  %v1443 = vld [vmem:[%s1363 + $0x270] sm:$0xff]
                  %1444 = vst [vmem:[%s1364 + $0x138] sm:$0xff] %v1443
                  %v1445 = vld [vmem:[%s1363 + $0x280] sm:$0xff]
                  %1446 = vst [vmem:[%s1364 + $0x140] sm:$0xff] %v1445
                  %v1447 = vld [vmem:[%s1363 + $0x290] sm:$0xff]
                  %1448 = vst [vmem:[%s1364 + $0x148] sm:$0xff] %v1447
                  %v1449 = vld [vmem:[%s1363 + $0x2a0] sm:$0xff]
                  %1450 = vst [vmem:[%s1364 + $0x150] sm:$0xff] %v1449
                  %v1451 = vld [vmem:[%s1363 + $0x2b0] sm:$0xff]
                  %1452 = vst [vmem:[%s1364 + $0x158] sm:$0xff] %v1451
                  %v1453 = vld [vmem:[%s1363 + $0x2c0] sm:$0xff]
                  %1454 = vst [vmem:[%s1364 + $0x160] sm:$0xff] %v1453
                  %v1455 = vld [vmem:[%s1363 + $0x2d0] sm:$0xff]
                  %1456 = vst [vmem:[%s1364 + $0x168] sm:$0xff] %v1455
                  %v1457 = vld [vmem:[%s1363 + $0x2e0] sm:$0xff]
                  %1458 = vst [vmem:[%s1364 + $0x170] sm:$0xff] %v1457
                  %v1459 = vld [vmem:[%s1363 + $0x2f0] sm:$0xff]
                  %1460 = vst [vmem:[%s1364 + $0x178] sm:$0xff] %v1459
                  %v1461 = vld [vmem:[%s1363 + $0x300] sm:$0xff]
                  %1462 = vst [vmem:[%s1364 + $0x180] sm:$0xff] %v1461
                  %v1463 = vld [vmem:[%s1363 + $0x310] sm:$0xff]
                  %1464 = vst [vmem:[%s1364 + $0x188] sm:$0xff] %v1463
                  %v1465 = vld [vmem:[%s1363 + $0x320] sm:$0xff]
                  %1466 = vst [vmem:[%s1364 + $0x190] sm:$0xff] %v1465
                  %v1467 = vld [vmem:[%s1363 + $0x330] sm:$0xff]
                  %1468 = vst [vmem:[%s1364 + $0x198] sm:$0xff] %v1467
                  %v1469 = vld [vmem:[%s1363 + $0x340] sm:$0xff]
                  %1470 = vst [vmem:[%s1364 + $0x1a0] sm:$0xff] %v1469
                  %v1471 = vld [vmem:[%s1363 + $0x350] sm:$0xff]
                  %1472 = vst [vmem:[%s1364 + $0x1a8] sm:$0xff] %v1471
                  %v1473 = vld [vmem:[%s1363 + $0x360] sm:$0xff]
                  %1474 = vst [vmem:[%s1364 + $0x1b0] sm:$0xff] %v1473
                  %v1475 = vld [vmem:[%s1363 + $0x370] sm:$0xff]
                  %1476 = vst [vmem:[%s1364 + $0x1b8] sm:$0xff] %v1475
                  %v1477 = vld [vmem:[%s1363 + $0x380] sm:$0xff]
                  %1478 = vst [vmem:[%s1364 + $0x1c0] sm:$0xff] %v1477
                  %v1479 = vld [vmem:[%s1363 + $0x390] sm:$0xff]
                  %1480 = vst [vmem:[%s1364 + $0x1c8] sm:$0xff] %v1479
                  %v1481 = vld [vmem:[%s1363 + $0x3a0] sm:$0xff]
                  %1482 = vst [vmem:[%s1364 + $0x1d0] sm:$0xff] %v1481
                  %v1483 = vld [vmem:[%s1363 + $0x3b0] sm:$0xff]
                  %1484 = vst [vmem:[%s1364 + $0x1d8] sm:$0xff] %v1483
                  %v1485 = vld [vmem:[%s1363 + $0x3c0] sm:$0xff]
                  %1486 = vst [vmem:[%s1364 + $0x1e0] sm:$0xff] %v1485
                  %v1487 = vld [vmem:[%s1363 + $0x3d0] sm:$0xff]
                  %1488 = vst [vmem:[%s1364 + $0x1e8] sm:$0xff] %v1487
                  %v1489 = vld [vmem:[%s1363 + $0x3e0] sm:$0xff]
                  %1490 = vst [vmem:[%s1364 + $0x1f0] sm:$0xff] %v1489
                  %v1491 = vld [vmem:[%s1363 + $0x3f0] sm:$0xff]
                  %1492 = vst [vmem:[%s1364 + $0x1f8] sm:$0xff] %v1491
                  %v1493 = vld [vmem:[%s1363 + $0x400] sm:$0xff]
                  %1494 = vst [vmem:[%s1364 + $0x200] sm:$0xff] %v1493
                  %v1495 = vld [vmem:[%s1363 + $0x410] sm:$0xff]
                  %1496 = vst [vmem:[%s1364 + $0x208] sm:$0xff] %v1495
                  %v1497 = vld [vmem:[%s1363 + $0x420] sm:$0xff]
                  %1498 = vst [vmem:[%s1364 + $0x210] sm:$0xff] %v1497
                  %v1499 = vld [vmem:[%s1363 + $0x430] sm:$0xff]
                  %1500 = vst [vmem:[%s1364 + $0x218] sm:$0xff] %v1499
                  %v1501 = vld [vmem:[%s1363 + $0x440] sm:$0xff]
                  %1502 = vst [vmem:[%s1364 + $0x220] sm:$0xff] %v1501
                  %v1503 = vld [vmem:[%s1363 + $0x450] sm:$0xff]
                  %1504 = vst [vmem:[%s1364 + $0x228] sm:$0xff] %v1503
                  %v1505 = vld [vmem:[%s1363 + $0x460] sm:$0xff]
                  %1506 = vst [vmem:[%s1364 + $0x230] sm:$0xff] %v1505
                  %v1507 = vld [vmem:[%s1363 + $0x470] sm:$0xff]
                  %1508 = vst [vmem:[%s1364 + $0x238] sm:$0xff] %v1507
                  %v1509 = vld [vmem:[%s1363 + $0x480] sm:$0xff]
                  %1510 = vst [vmem:[%s1364 + $0x240] sm:$0xff] %v1509
                  %v1511 = vld [vmem:[%s1363 + $0x490] sm:$0xff]
                  %1512 = vst [vmem:[%s1364 + $0x248] sm:$0xff] %v1511
                  %v1513 = vld [vmem:[%s1363 + $0x4a0] sm:$0xff]
                  %1514 = vst [vmem:[%s1364 + $0x250] sm:$0xff] %v1513
                  %v1515 = vld [vmem:[%s1363 + $0x4b0] sm:$0xff]
                  %1516 = vst [vmem:[%s1364 + $0x258] sm:$0xff] %v1515
                  %v1517 = vld [vmem:[%s1363 + $0x4c0] sm:$0xff]
                  %1518 = vst [vmem:[%s1364 + $0x260] sm:$0xff] %v1517
                  %v1519 = vld [vmem:[%s1363 + $0x4d0] sm:$0xff]
                  %1520 = vst [vmem:[%s1364 + $0x268] sm:$0xff] %v1519
                  %v1521 = vld [vmem:[%s1363 + $0x4e0] sm:$0xff]
                  %1522 = vst [vmem:[%s1364 + $0x270] sm:$0xff] %v1521
                  %v1523 = vld [vmem:[%s1363 + $0x4f0] sm:$0xff]
                  %1524 = vst [vmem:[%s1364 + $0x278] sm:$0xff] %v1523
                  %v1525 = vld [vmem:[%s1363 + $0x500] sm:$0xff]
                  %1526 = vst [vmem:[%s1364 + $0x280] sm:$0xff] %v1525
                  %v1527 = vld [vmem:[%s1363 + $0x510] sm:$0xff]
                  %1528 = vst [vmem:[%s1364 + $0x288] sm:$0xff] %v1527
                  %v1529 = vld [vmem:[%s1363 + $0x520] sm:$0xff]
                  %1530 = vst [vmem:[%s1364 + $0x290] sm:$0xff] %v1529
                  %v1531 = vld [vmem:[%s1363 + $0x530] sm:$0xff]
                  %1532 = vst [vmem:[%s1364 + $0x298] sm:$0xff] %v1531
                  %v1533 = vld [vmem:[%s1363 + $0x540] sm:$0xff]
                  %1534 = vst [vmem:[%s1364 + $0x2a0] sm:$0xff] %v1533
                  %v1535 = vld [vmem:[%s1363 + $0x550] sm:$0xff]
                  %1536 = vst [vmem:[%s1364 + $0x2a8] sm:$0xff] %v1535
                  %v1537 = vld [vmem:[%s1363 + $0x560] sm:$0xff]
                  %1538 = vst [vmem:[%s1364 + $0x2b0] sm:$0xff] %v1537
                  %v1539 = vld [vmem:[%s1363 + $0x570] sm:$0xff]
                  %1540 = vst [vmem:[%s1364 + $0x2b8] sm:$0xff] %v1539
                  %v1541 = vld [vmem:[%s1363 + $0x580] sm:$0xff]
                  %1542 = vst [vmem:[%s1364 + $0x2c0] sm:$0xff] %v1541
                  %v1543 = vld [vmem:[%s1363 + $0x590] sm:$0xff]
                  %1544 = vst [vmem:[%s1364 + $0x2c8] sm:$0xff] %v1543
                  %v1545 = vld [vmem:[%s1363 + $0x5a0] sm:$0xff]
                  %1546 = vst [vmem:[%s1364 + $0x2d0] sm:$0xff] %v1545
                  %v1547 = vld [vmem:[%s1363 + $0x5b0] sm:$0xff]
                  %1548 = vst [vmem:[%s1364 + $0x2d8] sm:$0xff] %v1547
                  %v1549 = vld [vmem:[%s1363 + $0x5c0] sm:$0xff]
                  %1550 = vst [vmem:[%s1364 + $0x2e0] sm:$0xff] %v1549
                  %v1551 = vld [vmem:[%s1363 + $0x5d0] sm:$0xff]
                  %1552 = vst [vmem:[%s1364 + $0x2e8] sm:$0xff] %v1551
                  %v1553 = vld [vmem:[%s1363 + $0x5e0] sm:$0xff]
                  %1554 = vst [vmem:[%s1364 + $0x2f0] sm:$0xff] %v1553
                  %v1555 = vld [vmem:[%s1363 + $0x5f0] sm:$0xff]
                  %1556 = vst [vmem:[%s1364 + $0x2f8] sm:$0xff] %v1555
                  %v1557 = vld [vmem:[%s1363 + $0x600] sm:$0xff]
                  %1558 = vst [vmem:[%s1364 + $0x300] sm:$0xff] %v1557
                  %v1559 = vld [vmem:[%s1363 + $0x610] sm:$0xff]
                  %1560 = vst [vmem:[%s1364 + $0x308] sm:$0xff] %v1559
                  %v1561 = vld [vmem:[%s1363 + $0x620] sm:$0xff]
                  %1562 = vst [vmem:[%s1364 + $0x310] sm:$0xff] %v1561
                  %v1563 = vld [vmem:[%s1363 + $0x630] sm:$0xff]
                  %1564 = vst [vmem:[%s1364 + $0x318] sm:$0xff] %v1563
                  %v1565 = vld [vmem:[%s1363 + $0x640] sm:$0xff]
                  %1566 = vst [vmem:[%s1364 + $0x320] sm:$0xff] %v1565
                  %v1567 = vld [vmem:[%s1363 + $0x650] sm:$0xff]
                  %1568 = vst [vmem:[%s1364 + $0x328] sm:$0xff] %v1567
                  %v1569 = vld [vmem:[%s1363 + $0x660] sm:$0xff]
                  %1570 = vst [vmem:[%s1364 + $0x330] sm:$0xff] %v1569
                  %v1571 = vld [vmem:[%s1363 + $0x670] sm:$0xff]
                  %1572 = vst [vmem:[%s1364 + $0x338] sm:$0xff] %v1571
                  %v1573 = vld [vmem:[%s1363 + $0x680] sm:$0xff]
                  %1574 = vst [vmem:[%s1364 + $0x340] sm:$0xff] %v1573
                  %v1575 = vld [vmem:[%s1363 + $0x690] sm:$0xff]
                  %1576 = vst [vmem:[%s1364 + $0x348] sm:$0xff] %v1575
                  %v1577 = vld [vmem:[%s1363 + $0x6a0] sm:$0xff]
                  %1578 = vst [vmem:[%s1364 + $0x350] sm:$0xff] %v1577
                  %v1579 = vld [vmem:[%s1363 + $0x6b0] sm:$0xff]
                  %1580 = vst [vmem:[%s1364 + $0x358] sm:$0xff] %v1579
                  %v1581 = vld [vmem:[%s1363 + $0x6c0] sm:$0xff]
                  %1582 = vst [vmem:[%s1364 + $0x360] sm:$0xff] %v1581
                  %v1583 = vld [vmem:[%s1363 + $0x6d0] sm:$0xff]
                  %1584 = vst [vmem:[%s1364 + $0x368] sm:$0xff] %v1583
                  %v1585 = vld [vmem:[%s1363 + $0x6e0] sm:$0xff]
                  %1586 = vst [vmem:[%s1364 + $0x370] sm:$0xff] %v1585
                  %v1587 = vld [vmem:[%s1363 + $0x6f0] sm:$0xff]
                  %1588 = vst [vmem:[%s1364 + $0x378] sm:$0xff] %v1587
                  %v1589 = vld [vmem:[%s1363 + $0x700] sm:$0xff]
                  %1590 = vst [vmem:[%s1364 + $0x380] sm:$0xff] %v1589
                  %v1591 = vld [vmem:[%s1363 + $0x710] sm:$0xff]
                  %1592 = vst [vmem:[%s1364 + $0x388] sm:$0xff] %v1591
                  %v1593 = vld [vmem:[%s1363 + $0x720] sm:$0xff]
                  %1594 = vst [vmem:[%s1364 + $0x390] sm:$0xff] %v1593
                  %v1595 = vld [vmem:[%s1363 + $0x730] sm:$0xff]
                  %1596 = vst [vmem:[%s1364 + $0x398] sm:$0xff] %v1595
                  %v1597 = vld [vmem:[%s1363 + $0x740] sm:$0xff]
                  %1598 = vst [vmem:[%s1364 + $0x3a0] sm:$0xff] %v1597
                  %v1599 = vld [vmem:[%s1363 + $0x750] sm:$0xff]
                  %1600 = vst [vmem:[%s1364 + $0x3a8] sm:$0xff] %v1599
                  %v1601 = vld [vmem:[%s1363 + $0x760] sm:$0xff]
                  %1602 = vst [vmem:[%s1364 + $0x3b0] sm:$0xff] %v1601
                  %v1603 = vld [vmem:[%s1363 + $0x770] sm:$0xff]
                  %1604 = vst [vmem:[%s1364 + $0x3b8] sm:$0xff] %v1603
                  %v1605 = vld [vmem:[%s1363 + $0x780] sm:$0xff]
                  %1606 = vst [vmem:[%s1364 + $0x3c0] sm:$0xff] %v1605
                  %v1607 = vld [vmem:[%s1363 + $0x790] sm:$0xff]
                  %1608 = vst [vmem:[%s1364 + $0x3c8] sm:$0xff] %v1607
                  %v1609 = vld [vmem:[%s1363 + $0x7a0] sm:$0xff]
                  %1610 = vst [vmem:[%s1364 + $0x3d0] sm:$0xff] %v1609
                  %v1611 = vld [vmem:[%s1363 + $0x7b0] sm:$0xff]
                  %1612 = vst [vmem:[%s1364 + $0x3d8] sm:$0xff] %v1611
                  %v1613 = vld [vmem:[%s1363 + $0x7c0] sm:$0xff]
                  %1614 = vst [vmem:[%s1364 + $0x3e0] sm:$0xff] %v1613
                  %v1615 = vld [vmem:[%s1363 + $0x7d0] sm:$0xff]
                  %1616 = vst [vmem:[%s1364 + $0x3e8] sm:$0xff] %v1615
                  %v1617 = vld [vmem:[%s1363 + $0x7e0] sm:$0xff]
                  %1618 = vst [vmem:[%s1364 + $0x3f0] sm:$0xff] %v1617
                  %v1619 = vld [vmem:[%s1363 + $0x7f0] sm:$0xff]
                  %1620 = vst [vmem:[%s1364 + $0x3f8] sm:$0xff] %v1619
                  %v1621 = vld [vmem:[%s1363 + $0x800] sm:$0xff]
                  %1622 = vst [vmem:[%s1364 + $0x400] sm:$0xff] %v1621
                  %v1623 = vld [vmem:[%s1363 + $0x810] sm:$0xff]
                  %1624 = vst [vmem:[%s1364 + $0x408] sm:$0xff] %v1623
                  %v1625 = vld [vmem:[%s1363 + $0x820] sm:$0xff]
                  %1626 = vst [vmem:[%s1364 + $0x410] sm:$0xff] %v1625
                  %v1627 = vld [vmem:[%s1363 + $0x830] sm:$0xff]
                  %1628 = vst [vmem:[%s1364 + $0x418] sm:$0xff] %v1627
                  %v1629 = vld [vmem:[%s1363 + $0x840] sm:$0xff]
                  %1630 = vst [vmem:[%s1364 + $0x420] sm:$0xff] %v1629
                  %v1631 = vld [vmem:[%s1363 + $0x850] sm:$0xff]
                  %1632 = vst [vmem:[%s1364 + $0x428] sm:$0xff] %v1631
                  %v1633 = vld [vmem:[%s1363 + $0x860] sm:$0xff]
                  %1634 = vst [vmem:[%s1364 + $0x430] sm:$0xff] %v1633
                  %v1635 = vld [vmem:[%s1363 + $0x870] sm:$0xff]
                  %1636 = vst [vmem:[%s1364 + $0x438] sm:$0xff] %v1635
                  %v1637 = vld [vmem:[%s1363 + $0x880] sm:$0xff]
                  %1638 = vst [vmem:[%s1364 + $0x440] sm:$0xff] %v1637
                  %v1639 = vld [vmem:[%s1363 + $0x890] sm:$0xff]
                  %1640 = vst [vmem:[%s1364 + $0x448] sm:$0xff] %v1639
                  %v1641 = vld [vmem:[%s1363 + $0x8a0] sm:$0xff]
                  %1642 = vst [vmem:[%s1364 + $0x450] sm:$0xff] %v1641
                  %v1643 = vld [vmem:[%s1363 + $0x8b0] sm:$0xff]
                  %1644 = vst [vmem:[%s1364 + $0x458] sm:$0xff] %v1643
                  %v1645 = vld [vmem:[%s1363 + $0x8c0] sm:$0xff]
                  %1646 = vst [vmem:[%s1364 + $0x460] sm:$0xff] %v1645
                  %v1647 = vld [vmem:[%s1363 + $0x8d0] sm:$0xff]
                  %1648 = vst [vmem:[%s1364 + $0x468] sm:$0xff] %v1647
                  %v1649 = vld [vmem:[%s1363 + $0x8e0] sm:$0xff]
                  %1650 = vst [vmem:[%s1364 + $0x470] sm:$0xff] %v1649
                  %v1651 = vld [vmem:[%s1363 + $0x8f0] sm:$0xff]
                  %1652 = vst [vmem:[%s1364 + $0x478] sm:$0xff] %v1651
                  %v1653 = vld [vmem:[%s1363 + $0x900] sm:$0xff]
                  %1654 = vst [vmem:[%s1364 + $0x480] sm:$0xff] %v1653
                  %v1655 = vld [vmem:[%s1363 + $0x910] sm:$0xff]
                  %1656 = vst [vmem:[%s1364 + $0x488] sm:$0xff] %v1655
                  %v1657 = vld [vmem:[%s1363 + $0x920] sm:$0xff]
                  %1658 = vst [vmem:[%s1364 + $0x490] sm:$0xff] %v1657
                  %v1659 = vld [vmem:[%s1363 + $0x930] sm:$0xff]
                  %1660 = vst [vmem:[%s1364 + $0x498] sm:$0xff] %v1659
                  %v1661 = vld [vmem:[%s1363 + $0x940] sm:$0xff]
                  %1662 = vst [vmem:[%s1364 + $0x4a0] sm:$0xff] %v1661
                  %v1663 = vld [vmem:[%s1363 + $0x950] sm:$0xff]
                  %1664 = vst [vmem:[%s1364 + $0x4a8] sm:$0xff] %v1663
                  %v1665 = vld [vmem:[%s1363 + $0x960] sm:$0xff]
                  %1666 = vst [vmem:[%s1364 + $0x4b0] sm:$0xff] %v1665
                  %v1667 = vld [vmem:[%s1363 + $0x970] sm:$0xff]
                  %1668 = vst [vmem:[%s1364 + $0x4b8] sm:$0xff] %v1667
                  %v1669 = vld [vmem:[%s1363 + $0x980] sm:$0xff]
                  %1670 = vst [vmem:[%s1364 + $0x4c0] sm:$0xff] %v1669
                  %v1671 = vld [vmem:[%s1363 + $0x990] sm:$0xff]
                  %1672 = vst [vmem:[%s1364 + $0x4c8] sm:$0xff] %v1671
                  %v1673 = vld [vmem:[%s1363 + $0x9a0] sm:$0xff]
                  %1674 = vst [vmem:[%s1364 + $0x4d0] sm:$0xff] %v1673
                  %v1675 = vld [vmem:[%s1363 + $0x9b0] sm:$0xff]
                  %1676 = vst [vmem:[%s1364 + $0x4d8] sm:$0xff] %v1675
                  %v1677 = vld [vmem:[%s1363 + $0x9c0] sm:$0xff]
                  %1678 = vst [vmem:[%s1364 + $0x4e0] sm:$0xff] %v1677
                  %v1679 = vld [vmem:[%s1363 + $0x9d0] sm:$0xff]
                  %1680 = vst [vmem:[%s1364 + $0x4e8] sm:$0xff] %v1679
                  %v1681 = vld [vmem:[%s1363 + $0x9e0] sm:$0xff]
                  %1682 = vst [vmem:[%s1364 + $0x4f0] sm:$0xff] %v1681
                  %v1683 = vld [vmem:[%s1363 + $0x9f0] sm:$0xff]
                  %1684 = vst [vmem:[%s1364 + $0x4f8] sm:$0xff] %v1683
                  %v1685 = vld [vmem:[%s1363 + $0xa00] sm:$0xff]
                  %1686 = vst [vmem:[%s1364 + $0x500] sm:$0xff] %v1685
                  %v1687 = vld [vmem:[%s1363 + $0xa10] sm:$0xff]
                  %1688 = vst [vmem:[%s1364 + $0x508] sm:$0xff] %v1687
                  %v1689 = vld [vmem:[%s1363 + $0xa20] sm:$0xff]
                  %1690 = vst [vmem:[%s1364 + $0x510] sm:$0xff] %v1689
                  %v1691 = vld [vmem:[%s1363 + $0xa30] sm:$0xff]
                  %1692 = vst [vmem:[%s1364 + $0x518] sm:$0xff] %v1691
                  %v1693 = vld [vmem:[%s1363 + $0xa40] sm:$0xff]
                  %1694 = vst [vmem:[%s1364 + $0x520] sm:$0xff] %v1693
                  %v1695 = vld [vmem:[%s1363 + $0xa50] sm:$0xff]
                  %1696 = vst [vmem:[%s1364 + $0x528] sm:$0xff] %v1695
                  %v1697 = vld [vmem:[%s1363 + $0xa60] sm:$0xff]
                  %1698 = vst [vmem:[%s1364 + $0x530] sm:$0xff] %v1697
                  %v1699 = vld [vmem:[%s1363 + $0xa70] sm:$0xff]
                  %1700 = vst [vmem:[%s1364 + $0x538] sm:$0xff] %v1699
                  %v1701 = vld [vmem:[%s1363 + $0xa80] sm:$0xff]
                  %1702 = vst [vmem:[%s1364 + $0x540] sm:$0xff] %v1701
                  %v1703 = vld [vmem:[%s1363 + $0xa90] sm:$0xff]
                  %1704 = vst [vmem:[%s1364 + $0x548] sm:$0xff] %v1703
                  %v1705 = vld [vmem:[%s1363 + $0xaa0] sm:$0xff]
                  %1706 = vst [vmem:[%s1364 + $0x550] sm:$0xff] %v1705
                  %v1707 = vld [vmem:[%s1363 + $0xab0] sm:$0xff]
                  %1708 = vst [vmem:[%s1364 + $0x558] sm:$0xff] %v1707
                  %v1709 = vld [vmem:[%s1363 + $0xac0] sm:$0xff]
                  %1710 = vst [vmem:[%s1364 + $0x560] sm:$0xff] %v1709
                  %v1711 = vld [vmem:[%s1363 + $0xad0] sm:$0xff]
                  %1712 = vst [vmem:[%s1364 + $0x568] sm:$0xff] %v1711
                  %v1713 = vld [vmem:[%s1363 + $0xae0] sm:$0xff]
                  %1714 = vst [vmem:[%s1364 + $0x570] sm:$0xff] %v1713
                  %v1715 = vld [vmem:[%s1363 + $0xaf0] sm:$0xff]
                  %1716 = vst [vmem:[%s1364 + $0x578] sm:$0xff] %v1715
                  %v1717 = vld [vmem:[%s1363 + $0xb00] sm:$0xff]
                  %1718 = vst [vmem:[%s1364 + $0x580] sm:$0xff] %v1717
                  %v1719 = vld [vmem:[%s1363 + $0xb10] sm:$0xff]
                  %1720 = vst [vmem:[%s1364 + $0x588] sm:$0xff] %v1719
                  %v1721 = vld [vmem:[%s1363 + $0xb20] sm:$0xff]
                  %1722 = vst [vmem:[%s1364 + $0x590] sm:$0xff] %v1721
                  %v1723 = vld [vmem:[%s1363 + $0xb30] sm:$0xff]
                  %1724 = vst [vmem:[%s1364 + $0x598] sm:$0xff] %v1723
                  %v1725 = vld [vmem:[%s1363 + $0xb40] sm:$0xff]
                  %1726 = vst [vmem:[%s1364 + $0x5a0] sm:$0xff] %v1725
                  %v1727 = vld [vmem:[%s1363 + $0xb50] sm:$0xff]
                  %1728 = vst [vmem:[%s1364 + $0x5a8] sm:$0xff] %v1727
                  %v1729 = vld [vmem:[%s1363 + $0xb60] sm:$0xff]
                  %1730 = vst [vmem:[%s1364 + $0x5b0] sm:$0xff] %v1729
                  %v1731 = vld [vmem:[%s1363 + $0xb70] sm:$0xff]
                  %1732 = vst [vmem:[%s1364 + $0x5b8] sm:$0xff] %v1731
                  %v1733 = vld [vmem:[%s1363 + $0xb80] sm:$0xff]
                  %1734 = vst [vmem:[%s1364 + $0x5c0] sm:$0xff] %v1733
                  %v1735 = vld [vmem:[%s1363 + $0xb90] sm:$0xff]
                  %1736 = vst [vmem:[%s1364 + $0x5c8] sm:$0xff] %v1735
                  %v1737 = vld [vmem:[%s1363 + $0xba0] sm:$0xff]
                  %1738 = vst [vmem:[%s1364 + $0x5d0] sm:$0xff] %v1737
                  %v1739 = vld [vmem:[%s1363 + $0xbb0] sm:$0xff]
                  %1740 = vst [vmem:[%s1364 + $0x5d8] sm:$0xff] %v1739
                  %v1741 = vld [vmem:[%s1363 + $0xbc0] sm:$0xff]
                  %1742 = vst [vmem:[%s1364 + $0x5e0] sm:$0xff] %v1741
                  %v1743 = vld [vmem:[%s1363 + $0xbd0] sm:$0xff]
                  %1744 = vst [vmem:[%s1364 + $0x5e8] sm:$0xff] %v1743
                  %v1745 = vld [vmem:[%s1363 + $0xbe0] sm:$0xff]
                  %1746 = vst [vmem:[%s1364 + $0x5f0] sm:$0xff] %v1745
                  %v1747 = vld [vmem:[%s1363 + $0xbf0] sm:$0xff]
                  %1748 = vst [vmem:[%s1364 + $0x5f8] sm:$0xff] %v1747
                  %v1749 = vld [vmem:[%s1363 + $0xc00] sm:$0xff]
                  %1750 = vst [vmem:[%s1364 + $0x600] sm:$0xff] %v1749
                  %v1751 = vld [vmem:[%s1363 + $0xc10] sm:$0xff]
                  %1752 = vst [vmem:[%s1364 + $0x608] sm:$0xff] %v1751
                  %v1753 = vld [vmem:[%s1363 + $0xc20] sm:$0xff]
                  %1754 = vst [vmem:[%s1364 + $0x610] sm:$0xff] %v1753
                  %v1755 = vld [vmem:[%s1363 + $0xc30] sm:$0xff]
                  %1756 = vst [vmem:[%s1364 + $0x618] sm:$0xff] %v1755
                  %v1757 = vld [vmem:[%s1363 + $0xc40] sm:$0xff]
                  %1758 = vst [vmem:[%s1364 + $0x620] sm:$0xff] %v1757
                  %v1759 = vld [vmem:[%s1363 + $0xc50] sm:$0xff]
                  %1760 = vst [vmem:[%s1364 + $0x628] sm:$0xff] %v1759
                  %v1761 = vld [vmem:[%s1363 + $0xc60] sm:$0xff]
                  %1762 = vst [vmem:[%s1364 + $0x630] sm:$0xff] %v1761
                  %v1763 = vld [vmem:[%s1363 + $0xc70] sm:$0xff]
                  %1764 = vst [vmem:[%s1364 + $0x638] sm:$0xff] %v1763
                  %v1765 = vld [vmem:[%s1363 + $0xc80] sm:$0xff]
                  %1766 = vst [vmem:[%s1364 + $0x640] sm:$0xff] %v1765
                  %v1767 = vld [vmem:[%s1363 + $0xc90] sm:$0xff]
                  %1768 = vst [vmem:[%s1364 + $0x648] sm:$0xff] %v1767
                  %v1769 = vld [vmem:[%s1363 + $0xca0] sm:$0xff]
                  %1770 = vst [vmem:[%s1364 + $0x650] sm:$0xff] %v1769
                  %v1771 = vld [vmem:[%s1363 + $0xcb0] sm:$0xff]
                  %1772 = vst [vmem:[%s1364 + $0x658] sm:$0xff] %v1771
                  %v1773 = vld [vmem:[%s1363 + $0xcc0] sm:$0xff]
                  %1774 = vst [vmem:[%s1364 + $0x660] sm:$0xff] %v1773
                  %v1775 = vld [vmem:[%s1363 + $0xcd0] sm:$0xff]
                  %1776 = vst [vmem:[%s1364 + $0x668] sm:$0xff] %v1775
                  %v1777 = vld [vmem:[%s1363 + $0xce0] sm:$0xff]
                  %1778 = vst [vmem:[%s1364 + $0x670] sm:$0xff] %v1777
                  %v1779 = vld [vmem:[%s1363 + $0xcf0] sm:$0xff]
                  %1780 = vst [vmem:[%s1364 + $0x678] sm:$0xff] %v1779
                  %v1781 = vld [vmem:[%s1363 + $0xd00] sm:$0xff]
                  %1782 = vst [vmem:[%s1364 + $0x680] sm:$0xff] %v1781
                  %v1783 = vld [vmem:[%s1363 + $0xd10] sm:$0xff]
                  %1784 = vst [vmem:[%s1364 + $0x688] sm:$0xff] %v1783
                  %v1785 = vld [vmem:[%s1363 + $0xd20] sm:$0xff]
                  %1786 = vst [vmem:[%s1364 + $0x690] sm:$0xff] %v1785
                  %v1787 = vld [vmem:[%s1363 + $0xd30] sm:$0xff]
                  %1788 = vst [vmem:[%s1364 + $0x698] sm:$0xff] %v1787
                  %v1789 = vld [vmem:[%s1363 + $0xd40] sm:$0xff]
                  %1790 = vst [vmem:[%s1364 + $0x6a0] sm:$0xff] %v1789
                  %v1791 = vld [vmem:[%s1363 + $0xd50] sm:$0xff]
                  %1792 = vst [vmem:[%s1364 + $0x6a8] sm:$0xff] %v1791
                  %v1793 = vld [vmem:[%s1363 + $0xd60] sm:$0xff]
                  %1794 = vst [vmem:[%s1364 + $0x6b0] sm:$0xff] %v1793
                  %v1795 = vld [vmem:[%s1363 + $0xd70] sm:$0xff]
                  %1796 = vst [vmem:[%s1364 + $0x6b8] sm:$0xff] %v1795
                  %v1797 = vld [vmem:[%s1363 + $0xd80] sm:$0xff]
                  %1798 = vst [vmem:[%s1364 + $0x6c0] sm:$0xff] %v1797
                  %v1799 = vld [vmem:[%s1363 + $0xd90] sm:$0xff]
                  %1800 = vst [vmem:[%s1364 + $0x6c8] sm:$0xff] %v1799
                  %v1801 = vld [vmem:[%s1363 + $0xda0] sm:$0xff]
                  %1802 = vst [vmem:[%s1364 + $0x6d0] sm:$0xff] %v1801
                  %v1803 = vld [vmem:[%s1363 + $0xdb0] sm:$0xff]
                  %1804 = vst [vmem:[%s1364 + $0x6d8] sm:$0xff] %v1803
                  %v1805 = vld [vmem:[%s1363 + $0xdc0] sm:$0xff]
                  %1806 = vst [vmem:[%s1364 + $0x6e0] sm:$0xff] %v1805
                  %v1807 = vld [vmem:[%s1363 + $0xdd0] sm:$0xff]
                  %1808 = vst [vmem:[%s1364 + $0x6e8] sm:$0xff] %v1807
                  %v1809 = vld [vmem:[%s1363 + $0xde0] sm:$0xff]
                  %1810 = vst [vmem:[%s1364 + $0x6f0] sm:$0xff] %v1809
                  %v1811 = vld [vmem:[%s1363 + $0xdf0] sm:$0xff]
                  %1812 = vst [vmem:[%s1364 + $0x6f8] sm:$0xff] %v1811
                  %v1813 = vld [vmem:[%s1363 + $0xe00] sm:$0xff]
                  %1814 = vst [vmem:[%s1364 + $0x700] sm:$0xff] %v1813
                  %v1815 = vld [vmem:[%s1363 + $0xe10] sm:$0xff]
                  %1816 = vst [vmem:[%s1364 + $0x708] sm:$0xff] %v1815
                  %v1817 = vld [vmem:[%s1363 + $0xe20] sm:$0xff]
                  %1818 = vst [vmem:[%s1364 + $0x710] sm:$0xff] %v1817
                  %v1819 = vld [vmem:[%s1363 + $0xe30] sm:$0xff]
                  %1820 = vst [vmem:[%s1364 + $0x718] sm:$0xff] %v1819
                  %v1821 = vld [vmem:[%s1363 + $0xe40] sm:$0xff]
                  %1822 = vst [vmem:[%s1364 + $0x720] sm:$0xff] %v1821
                  %v1823 = vld [vmem:[%s1363 + $0xe50] sm:$0xff]
                  %1824 = vst [vmem:[%s1364 + $0x728] sm:$0xff] %v1823
                  %v1825 = vld [vmem:[%s1363 + $0xe60] sm:$0xff]
                  %1826 = vst [vmem:[%s1364 + $0x730] sm:$0xff] %v1825
                  %v1827 = vld [vmem:[%s1363 + $0xe70] sm:$0xff]
                  %1828 = vst [vmem:[%s1364 + $0x738] sm:$0xff] %v1827
                  %v1829 = vld [vmem:[%s1363 + $0xe80] sm:$0xff]
                  %1830 = vst [vmem:[%s1364 + $0x740] sm:$0xff] %v1829
                  %v1831 = vld [vmem:[%s1363 + $0xe90] sm:$0xff]
                  %1832 = vst [vmem:[%s1364 + $0x748] sm:$0xff] %v1831
                  %v1833 = vld [vmem:[%s1363 + $0xea0] sm:$0xff]
                  %1834 = vst [vmem:[%s1364 + $0x750] sm:$0xff] %v1833
                  %v1835 = vld [vmem:[%s1363 + $0xeb0] sm:$0xff]
                  %1836 = vst [vmem:[%s1364 + $0x758] sm:$0xff] %v1835
                  %v1837 = vld [vmem:[%s1363 + $0xec0] sm:$0xff]
                  %1838 = vst [vmem:[%s1364 + $0x760] sm:$0xff] %v1837
                  %v1839 = vld [vmem:[%s1363 + $0xed0] sm:$0xff]
                  %1840 = vst [vmem:[%s1364 + $0x768] sm:$0xff] %v1839
                  %v1841 = vld [vmem:[%s1363 + $0xee0] sm:$0xff]
                  %1842 = vst [vmem:[%s1364 + $0x770] sm:$0xff] %v1841
                  %v1843 = vld [vmem:[%s1363 + $0xef0] sm:$0xff]
                  %1844 = vst [vmem:[%s1364 + $0x778] sm:$0xff] %v1843
                  %v1845 = vld [vmem:[%s1363 + $0xf00] sm:$0xff]
                  %1846 = vst [vmem:[%s1364 + $0x780] sm:$0xff] %v1845
                  %v1847 = vld [vmem:[%s1363 + $0xf10] sm:$0xff]
                  %1848 = vst [vmem:[%s1364 + $0x788] sm:$0xff] %v1847
                  %v1849 = vld [vmem:[%s1363 + $0xf20] sm:$0xff]
                  %1850 = vst [vmem:[%s1364 + $0x790] sm:$0xff] %v1849
                  %v1851 = vld [vmem:[%s1363 + $0xf30] sm:$0xff]
                  %1852 = vst [vmem:[%s1364 + $0x798] sm:$0xff] %v1851
                  %v1853 = vld [vmem:[%s1363 + $0xf40] sm:$0xff]
                  %1854 = vst [vmem:[%s1364 + $0x7a0] sm:$0xff] %v1853
                  %v1855 = vld [vmem:[%s1363 + $0xf50] sm:$0xff]
                  %1856 = vst [vmem:[%s1364 + $0x7a8] sm:$0xff] %v1855
                  %v1857 = vld [vmem:[%s1363 + $0xf60] sm:$0xff]
                  %1858 = vst [vmem:[%s1364 + $0x7b0] sm:$0xff] %v1857
                  %v1859 = vld [vmem:[%s1363 + $0xf70] sm:$0xff]
                  %1860 = vst [vmem:[%s1364 + $0x7b8] sm:$0xff] %v1859
                  %v1861 = vld [vmem:[%s1363 + $0xf80] sm:$0xff]
                  %1862 = vst [vmem:[%s1364 + $0x7c0] sm:$0xff] %v1861
                  %v1863 = vld [vmem:[%s1363 + $0xf90] sm:$0xff]
                  %1864 = vst [vmem:[%s1364 + $0x7c8] sm:$0xff] %v1863
                  %v1865 = vld [vmem:[%s1363 + $0xfa0] sm:$0xff]
                  %1866 = vst [vmem:[%s1364 + $0x7d0] sm:$0xff] %v1865
                  %v1867 = vld [vmem:[%s1363 + $0xfb0] sm:$0xff]
                  %1868 = vst [vmem:[%s1364 + $0x7d8] sm:$0xff] %v1867
                  %v1869 = vld [vmem:[%s1363 + $0xfc0] sm:$0xff]
                  %1870 = vst [vmem:[%s1364 + $0x7e0] sm:$0xff] %v1869
                  %v1871 = vld [vmem:[%s1363 + $0xfd0] sm:$0xff]
                  %1872 = vst [vmem:[%s1364 + $0x7e8] sm:$0xff] %v1871
                  %v1873 = vld [vmem:[%s1363 + $0xfe0] sm:$0xff]
                  %1874 = vst [vmem:[%s1364 + $0x7f0] sm:$0xff] %v1873
                  %v1875 = vld [vmem:[%s1363 + $0xff0] sm:$0xff]
                  %1876 = vst [vmem:[%s1364 + $0x7f8] sm:$0xff] %v1875
                  %v1877 = vld [vmem:[%s1363 + $0x1000] sm:$0xff]
                  %1878 = vst [vmem:[%s1364 + $0x800] sm:$0xff] %v1877
                  %v1879 = vld [vmem:[%s1363 + $0x1010] sm:$0xff]
                  %1880 = vst [vmem:[%s1364 + $0x808] sm:$0xff] %v1879
                  %v1881 = vld [vmem:[%s1363 + $0x1020] sm:$0xff]
                  %1882 = vst [vmem:[%s1364 + $0x810] sm:$0xff] %v1881
                  %v1883 = vld [vmem:[%s1363 + $0x1030] sm:$0xff]
                  %1884 = vst [vmem:[%s1364 + $0x818] sm:$0xff] %v1883
                  %v1885 = vld [vmem:[%s1363 + $0x1040] sm:$0xff]
                  %1886 = vst [vmem:[%s1364 + $0x820] sm:$0xff] %v1885
                  %v1887 = vld [vmem:[%s1363 + $0x1050] sm:$0xff]
                  %1888 = vst [vmem:[%s1364 + $0x828] sm:$0xff] %v1887
                  %v1889 = vld [vmem:[%s1363 + $0x1060] sm:$0xff]
                  %1890 = vst [vmem:[%s1364 + $0x830] sm:$0xff] %v1889
                  %v1891 = vld [vmem:[%s1363 + $0x1070] sm:$0xff]
                  %1892 = vst [vmem:[%s1364 + $0x838] sm:$0xff] %v1891
                  %v1893 = vld [vmem:[%s1363 + $0x1080] sm:$0xff]
                  %1894 = vst [vmem:[%s1364 + $0x840] sm:$0xff] %v1893
                  %v1895 = vld [vmem:[%s1363 + $0x1090] sm:$0xff]
                  %1896 = vst [vmem:[%s1364 + $0x848] sm:$0xff] %v1895
                  %v1897 = vld [vmem:[%s1363 + $0x10a0] sm:$0xff]
                  %1898 = vst [vmem:[%s1364 + $0x850] sm:$0xff] %v1897
                  %v1899 = vld [vmem:[%s1363 + $0x10b0] sm:$0xff]
                  %1900 = vst [vmem:[%s1364 + $0x858] sm:$0xff] %v1899
                  %v1901 = vld [vmem:[%s1363 + $0x10c0] sm:$0xff]
                  %1902 = vst [vmem:[%s1364 + $0x860] sm:$0xff] %v1901
                  %v1903 = vld [vmem:[%s1363 + $0x10d0] sm:$0xff]
                  %1904 = vst [vmem:[%s1364 + $0x868] sm:$0xff] %v1903
                  %v1905 = vld [vmem:[%s1363 + $0x10e0] sm:$0xff]
                  %1906 = vst [vmem:[%s1364 + $0x870] sm:$0xff] %v1905
                  %v1907 = vld [vmem:[%s1363 + $0x10f0] sm:$0xff]
                  %1908 = vst [vmem:[%s1364 + $0x878] sm:$0xff] %v1907
                  %v1909 = vld [vmem:[%s1363 + $0x1100] sm:$0xff]
                  %1910 = vst [vmem:[%s1364 + $0x880] sm:$0xff] %v1909
                  %v1911 = vld [vmem:[%s1363 + $0x1110] sm:$0xff]
                  %1912 = vst [vmem:[%s1364 + $0x888] sm:$0xff] %v1911
                  %v1913 = vld [vmem:[%s1363 + $0x1120] sm:$0xff]
                  %1914 = vst [vmem:[%s1364 + $0x890] sm:$0xff] %v1913
                  %v1915 = vld [vmem:[%s1363 + $0x1130] sm:$0xff]
                  %1916 = vst [vmem:[%s1364 + $0x898] sm:$0xff] %v1915
                  %v1917 = vld [vmem:[%s1363 + $0x1140] sm:$0xff]
                  %1918 = vst [vmem:[%s1364 + $0x8a0] sm:$0xff] %v1917
                  %v1919 = vld [vmem:[%s1363 + $0x1150] sm:$0xff]
                  %1920 = vst [vmem:[%s1364 + $0x8a8] sm:$0xff] %v1919
                  %v1921 = vld [vmem:[%s1363 + $0x1160] sm:$0xff]
                  %1922 = vst [vmem:[%s1364 + $0x8b0] sm:$0xff] %v1921
                  %v1923 = vld [vmem:[%s1363 + $0x1170] sm:$0xff]
                  %1924 = vst [vmem:[%s1364 + $0x8b8] sm:$0xff] %v1923
                  %v1925 = vld [vmem:[%s1363 + $0x1180] sm:$0xff]
                  %1926 = vst [vmem:[%s1364 + $0x8c0] sm:$0xff] %v1925
                  %v1927 = vld [vmem:[%s1363 + $0x1190] sm:$0xff]
                  %1928 = vst [vmem:[%s1364 + $0x8c8] sm:$0xff] %v1927
                  %v1929 = vld [vmem:[%s1363 + $0x11a0] sm:$0xff]
                  %1930 = vst [vmem:[%s1364 + $0x8d0] sm:$0xff] %v1929
                  %v1931 = vld [vmem:[%s1363 + $0x11b0] sm:$0xff]
                  %1932 = vst [vmem:[%s1364 + $0x8d8] sm:$0xff] %v1931
                  %v1933 = vld [vmem:[%s1363 + $0x11c0] sm:$0xff]
                  %1934 = vst [vmem:[%s1364 + $0x8e0] sm:$0xff] %v1933
                  %v1935 = vld [vmem:[%s1363 + $0x11d0] sm:$0xff]
                  %1936 = vst [vmem:[%s1364 + $0x8e8] sm:$0xff] %v1935
                  %v1937 = vld [vmem:[%s1363 + $0x11e0] sm:$0xff]
                  %1938 = vst [vmem:[%s1364 + $0x8f0] sm:$0xff] %v1937
                  %v1939 = vld [vmem:[%s1363 + $0x11f0] sm:$0xff]
                  %1940 = vst [vmem:[%s1364 + $0x8f8] sm:$0xff] %v1939
                  %s1941 = sadd.s32 1, %s1362
                  %p1942 = scmp.ge.s32.totalorder %s1941, 1
                  %s1943 = scalar_select %p1942, 0, %s1941
                  %s1944 = smul.u32 %s1943, 8
                  %s1945 = smul.u32 %s1943, 8
                  %s1946 = scalar_lea.vmem %s165, %s1944
                  %s1947 = scalar_lea.vmem %s162, %s1945 [#allocation2]
                $region63: #{auxiliary_convolutions.5} parent=57 // loop_footer
                  %s1361 = sadd.s32 1, %s1357
                $region64: #{auxiliary_convolutions.5} parent=57 // loop_footer_branch
                  %1356 = sbr.rel target = $region60
                $region65: #{auxiliary_convolutions.5} parent=57 // loop_exit
                  _
                %s1949 = ssub.s32 1, 1
                loop: start=0, step=1, limit=1
                $region66: #{auxiliary_convolutions.5} parent=57 // loop_pre_header
                  _
                $region67: #{auxiliary_convolutions.5} parent=57 // loop_header
                  %s1951 = sphi 0, %s1955
                  %p1952 = scmp.ge.s32.totalorder %s1951, 1
                  %s1956 = sphi %s1354, %s1354
                  %s1957 = sphi %s1355, %s1355
                $region68: #{auxiliary_convolutions.5} parent=57 // loop_header_branch
                  %1954 = sbr.rel (%p1952) target = $region72
                $region69: #{auxiliary_convolutions.5} parent=57 // loop_body
                  %v1958 = vld [vmem:[%s1956] sm:%s1949]
                  %1959 = vst [vmem:[%s1957] sm:%s1949] %v1958
                  %v1960 = vld [vmem:[%s1956 + $0x10] sm:%s1949]
                  %1961 = vst [vmem:[%s1957 + $0x8] sm:%s1949] %v1960
                  %v1962 = vld [vmem:[%s1956 + $0x20] sm:%s1949]
                  %1963 = vst [vmem:[%s1957 + $0x10] sm:%s1949] %v1962
                  %v1964 = vld [vmem:[%s1956 + $0x30] sm:%s1949]
                  %1965 = vst [vmem:[%s1957 + $0x18] sm:%s1949] %v1964
                  %v1966 = vld [vmem:[%s1956 + $0x40] sm:%s1949]
                  %1967 = vst [vmem:[%s1957 + $0x20] sm:%s1949] %v1966
                  %v1968 = vld [vmem:[%s1956 + $0x50] sm:%s1949]
                  %1969 = vst [vmem:[%s1957 + $0x28] sm:%s1949] %v1968
                  %v1970 = vld [vmem:[%s1956 + $0x60] sm:%s1949]
                  %1971 = vst [vmem:[%s1957 + $0x30] sm:%s1949] %v1970
                  %v1972 = vld [vmem:[%s1956 + $0x70] sm:%s1949]
                  %1973 = vst [vmem:[%s1957 + $0x38] sm:%s1949] %v1972
                  %v1974 = vld [vmem:[%s1956 + $0x80] sm:%s1949]
                  %1975 = vst [vmem:[%s1957 + $0x40] sm:%s1949] %v1974
                  %v1976 = vld [vmem:[%s1956 + $0x90] sm:%s1949]
                  %1977 = vst [vmem:[%s1957 + $0x48] sm:%s1949] %v1976
                  %v1978 = vld [vmem:[%s1956 + $0xa0] sm:%s1949]
                  %1979 = vst [vmem:[%s1957 + $0x50] sm:%s1949] %v1978
                  %v1980 = vld [vmem:[%s1956 + $0xb0] sm:%s1949]
                  %1981 = vst [vmem:[%s1957 + $0x58] sm:%s1949] %v1980
                  %v1982 = vld [vmem:[%s1956 + $0xc0] sm:%s1949]
                  %1983 = vst [vmem:[%s1957 + $0x60] sm:%s1949] %v1982
                  %v1984 = vld [vmem:[%s1956 + $0xd0] sm:%s1949]
                  %1985 = vst [vmem:[%s1957 + $0x68] sm:%s1949] %v1984
                  %v1986 = vld [vmem:[%s1956 + $0xe0] sm:%s1949]
                  %1987 = vst [vmem:[%s1957 + $0x70] sm:%s1949] %v1986
                  %v1988 = vld [vmem:[%s1956 + $0xf0] sm:%s1949]
                  %1989 = vst [vmem:[%s1957 + $0x78] sm:%s1949] %v1988
                  %v1990 = vld [vmem:[%s1956 + $0x100] sm:%s1949]
                  %1991 = vst [vmem:[%s1957 + $0x80] sm:%s1949] %v1990
                  %v1992 = vld [vmem:[%s1956 + $0x110] sm:%s1949]
                  %1993 = vst [vmem:[%s1957 + $0x88] sm:%s1949] %v1992
                  %v1994 = vld [vmem:[%s1956 + $0x120] sm:%s1949]
                  %1995 = vst [vmem:[%s1957 + $0x90] sm:%s1949] %v1994
                  %v1996 = vld [vmem:[%s1956 + $0x130] sm:%s1949]
                  %1997 = vst [vmem:[%s1957 + $0x98] sm:%s1949] %v1996
                  %v1998 = vld [vmem:[%s1956 + $0x140] sm:%s1949]
                  %1999 = vst [vmem:[%s1957 + $0xa0] sm:%s1949] %v1998
                  %v2000 = vld [vmem:[%s1956 + $0x150] sm:%s1949]
                  %2001 = vst [vmem:[%s1957 + $0xa8] sm:%s1949] %v2000
                  %v2002 = vld [vmem:[%s1956 + $0x160] sm:%s1949]
                  %2003 = vst [vmem:[%s1957 + $0xb0] sm:%s1949] %v2002
                  %v2004 = vld [vmem:[%s1956 + $0x170] sm:%s1949]
                  %2005 = vst [vmem:[%s1957 + $0xb8] sm:%s1949] %v2004
                  %v2006 = vld [vmem:[%s1956 + $0x180] sm:%s1949]
                  %2007 = vst [vmem:[%s1957 + $0xc0] sm:%s1949] %v2006
                  %v2008 = vld [vmem:[%s1956 + $0x190] sm:%s1949]
                  %2009 = vst [vmem:[%s1957 + $0xc8] sm:%s1949] %v2008
                  %v2010 = vld [vmem:[%s1956 + $0x1a0] sm:%s1949]
                  %2011 = vst [vmem:[%s1957 + $0xd0] sm:%s1949] %v2010
                  %v2012 = vld [vmem:[%s1956 + $0x1b0] sm:%s1949]
                  %2013 = vst [vmem:[%s1957 + $0xd8] sm:%s1949] %v2012
                  %v2014 = vld [vmem:[%s1956 + $0x1c0] sm:%s1949]
                  %2015 = vst [vmem:[%s1957 + $0xe0] sm:%s1949] %v2014
                  %v2016 = vld [vmem:[%s1956 + $0x1d0] sm:%s1949]
                  %2017 = vst [vmem:[%s1957 + $0xe8] sm:%s1949] %v2016
                  %v2018 = vld [vmem:[%s1956 + $0x1e0] sm:%s1949]
                  %2019 = vst [vmem:[%s1957 + $0xf0] sm:%s1949] %v2018
                  %v2020 = vld [vmem:[%s1956 + $0x1f0] sm:%s1949]
                  %2021 = vst [vmem:[%s1957 + $0xf8] sm:%s1949] %v2020
                  %v2022 = vld [vmem:[%s1956 + $0x200] sm:%s1949]
                  %2023 = vst [vmem:[%s1957 + $0x100] sm:%s1949] %v2022
                  %v2024 = vld [vmem:[%s1956 + $0x210] sm:%s1949]
                  %2025 = vst [vmem:[%s1957 + $0x108] sm:%s1949] %v2024
                  %v2026 = vld [vmem:[%s1956 + $0x220] sm:%s1949]
                  %2027 = vst [vmem:[%s1957 + $0x110] sm:%s1949] %v2026
                  %v2028 = vld [vmem:[%s1956 + $0x230] sm:%s1949]
                  %2029 = vst [vmem:[%s1957 + $0x118] sm:%s1949] %v2028
                  %v2030 = vld [vmem:[%s1956 + $0x240] sm:%s1949]
                  %2031 = vst [vmem:[%s1957 + $0x120] sm:%s1949] %v2030
                  %v2032 = vld [vmem:[%s1956 + $0x250] sm:%s1949]
                  %2033 = vst [vmem:[%s1957 + $0x128] sm:%s1949] %v2032
                  %v2034 = vld [vmem:[%s1956 + $0x260] sm:%s1949]
                  %2035 = vst [vmem:[%s1957 + $0x130] sm:%s1949] %v2034
                  %v2036 = vld [vmem:[%s1956 + $0x270] sm:%s1949]
                  %2037 = vst [vmem:[%s1957 + $0x138] sm:%s1949] %v2036
                  %v2038 = vld [vmem:[%s1956 + $0x280] sm:%s1949]
                  %2039 = vst [vmem:[%s1957 + $0x140] sm:%s1949] %v2038
                  %v2040 = vld [vmem:[%s1956 + $0x290] sm:%s1949]
                  %2041 = vst [vmem:[%s1957 + $0x148] sm:%s1949] %v2040
                  %v2042 = vld [vmem:[%s1956 + $0x2a0] sm:%s1949]
                  %2043 = vst [vmem:[%s1957 + $0x150] sm:%s1949] %v2042
                  %v2044 = vld [vmem:[%s1956 + $0x2b0] sm:%s1949]
                  %2045 = vst [vmem:[%s1957 + $0x158] sm:%s1949] %v2044
                  %v2046 = vld [vmem:[%s1956 + $0x2c0] sm:%s1949]
                  %2047 = vst [vmem:[%s1957 + $0x160] sm:%s1949] %v2046
                  %v2048 = vld [vmem:[%s1956 + $0x2d0] sm:%s1949]
                  %2049 = vst [vmem:[%s1957 + $0x168] sm:%s1949] %v2048
                  %v2050 = vld [vmem:[%s1956 + $0x2e0] sm:%s1949]
                  %2051 = vst [vmem:[%s1957 + $0x170] sm:%s1949] %v2050
                  %v2052 = vld [vmem:[%s1956 + $0x2f0] sm:%s1949]
                  %2053 = vst [vmem:[%s1957 + $0x178] sm:%s1949] %v2052
                  %v2054 = vld [vmem:[%s1956 + $0x300] sm:%s1949]
                  %2055 = vst [vmem:[%s1957 + $0x180] sm:%s1949] %v2054
                  %v2056 = vld [vmem:[%s1956 + $0x310] sm:%s1949]
                  %2057 = vst [vmem:[%s1957 + $0x188] sm:%s1949] %v2056
                  %v2058 = vld [vmem:[%s1956 + $0x320] sm:%s1949]
                  %2059 = vst [vmem:[%s1957 + $0x190] sm:%s1949] %v2058
                  %v2060 = vld [vmem:[%s1956 + $0x330] sm:%s1949]
                  %2061 = vst [vmem:[%s1957 + $0x198] sm:%s1949] %v2060
                  %v2062 = vld [vmem:[%s1956 + $0x340] sm:%s1949]
                  %2063 = vst [vmem:[%s1957 + $0x1a0] sm:%s1949] %v2062
                  %v2064 = vld [vmem:[%s1956 + $0x350] sm:%s1949]
                  %2065 = vst [vmem:[%s1957 + $0x1a8] sm:%s1949] %v2064
                  %v2066 = vld [vmem:[%s1956 + $0x360] sm:%s1949]
                  %2067 = vst [vmem:[%s1957 + $0x1b0] sm:%s1949] %v2066
                  %v2068 = vld [vmem:[%s1956 + $0x370] sm:%s1949]
                  %2069 = vst [vmem:[%s1957 + $0x1b8] sm:%s1949] %v2068
                  %v2070 = vld [vmem:[%s1956 + $0x380] sm:%s1949]
                  %2071 = vst [vmem:[%s1957 + $0x1c0] sm:%s1949] %v2070
                  %v2072 = vld [vmem:[%s1956 + $0x390] sm:%s1949]
                  %2073 = vst [vmem:[%s1957 + $0x1c8] sm:%s1949] %v2072
                  %v2074 = vld [vmem:[%s1956 + $0x3a0] sm:%s1949]
                  %2075 = vst [vmem:[%s1957 + $0x1d0] sm:%s1949] %v2074
                  %v2076 = vld [vmem:[%s1956 + $0x3b0] sm:%s1949]
                  %2077 = vst [vmem:[%s1957 + $0x1d8] sm:%s1949] %v2076
                  %v2078 = vld [vmem:[%s1956 + $0x3c0] sm:%s1949]
                  %2079 = vst [vmem:[%s1957 + $0x1e0] sm:%s1949] %v2078
                  %v2080 = vld [vmem:[%s1956 + $0x3d0] sm:%s1949]
                  %2081 = vst [vmem:[%s1957 + $0x1e8] sm:%s1949] %v2080
                  %v2082 = vld [vmem:[%s1956 + $0x3e0] sm:%s1949]
                  %2083 = vst [vmem:[%s1957 + $0x1f0] sm:%s1949] %v2082
                  %v2084 = vld [vmem:[%s1956 + $0x3f0] sm:%s1949]
                  %2085 = vst [vmem:[%s1957 + $0x1f8] sm:%s1949] %v2084
                  %v2086 = vld [vmem:[%s1956 + $0x400] sm:%s1949]
                  %2087 = vst [vmem:[%s1957 + $0x200] sm:%s1949] %v2086
                  %v2088 = vld [vmem:[%s1956 + $0x410] sm:%s1949]
                  %2089 = vst [vmem:[%s1957 + $0x208] sm:%s1949] %v2088
                  %v2090 = vld [vmem:[%s1956 + $0x420] sm:%s1949]
                  %2091 = vst [vmem:[%s1957 + $0x210] sm:%s1949] %v2090
                  %v2092 = vld [vmem:[%s1956 + $0x430] sm:%s1949]
                  %2093 = vst [vmem:[%s1957 + $0x218] sm:%s1949] %v2092
                  %v2094 = vld [vmem:[%s1956 + $0x440] sm:%s1949]
                  %2095 = vst [vmem:[%s1957 + $0x220] sm:%s1949] %v2094
                  %v2096 = vld [vmem:[%s1956 + $0x450] sm:%s1949]
                  %2097 = vst [vmem:[%s1957 + $0x228] sm:%s1949] %v2096
                  %v2098 = vld [vmem:[%s1956 + $0x460] sm:%s1949]
                  %2099 = vst [vmem:[%s1957 + $0x230] sm:%s1949] %v2098
                  %v2100 = vld [vmem:[%s1956 + $0x470] sm:%s1949]
                  %2101 = vst [vmem:[%s1957 + $0x238] sm:%s1949] %v2100
                  %v2102 = vld [vmem:[%s1956 + $0x480] sm:%s1949]
                  %2103 = vst [vmem:[%s1957 + $0x240] sm:%s1949] %v2102
                  %v2104 = vld [vmem:[%s1956 + $0x490] sm:%s1949]
                  %2105 = vst [vmem:[%s1957 + $0x248] sm:%s1949] %v2104
                  %v2106 = vld [vmem:[%s1956 + $0x4a0] sm:%s1949]
                  %2107 = vst [vmem:[%s1957 + $0x250] sm:%s1949] %v2106
                  %v2108 = vld [vmem:[%s1956 + $0x4b0] sm:%s1949]
                  %2109 = vst [vmem:[%s1957 + $0x258] sm:%s1949] %v2108
                  %v2110 = vld [vmem:[%s1956 + $0x4c0] sm:%s1949]
                  %2111 = vst [vmem:[%s1957 + $0x260] sm:%s1949] %v2110
                  %v2112 = vld [vmem:[%s1956 + $0x4d0] sm:%s1949]
                  %2113 = vst [vmem:[%s1957 + $0x268] sm:%s1949] %v2112
                  %v2114 = vld [vmem:[%s1956 + $0x4e0] sm:%s1949]
                  %2115 = vst [vmem:[%s1957 + $0x270] sm:%s1949] %v2114
                  %v2116 = vld [vmem:[%s1956 + $0x4f0] sm:%s1949]
                  %2117 = vst [vmem:[%s1957 + $0x278] sm:%s1949] %v2116
                  %v2118 = vld [vmem:[%s1956 + $0x500] sm:%s1949]
                  %2119 = vst [vmem:[%s1957 + $0x280] sm:%s1949] %v2118
                  %v2120 = vld [vmem:[%s1956 + $0x510] sm:%s1949]
                  %2121 = vst [vmem:[%s1957 + $0x288] sm:%s1949] %v2120
                  %v2122 = vld [vmem:[%s1956 + $0x520] sm:%s1949]
                  %2123 = vst [vmem:[%s1957 + $0x290] sm:%s1949] %v2122
                  %v2124 = vld [vmem:[%s1956 + $0x530] sm:%s1949]
                  %2125 = vst [vmem:[%s1957 + $0x298] sm:%s1949] %v2124
                  %v2126 = vld [vmem:[%s1956 + $0x540] sm:%s1949]
                  %2127 = vst [vmem:[%s1957 + $0x2a0] sm:%s1949] %v2126
                  %v2128 = vld [vmem:[%s1956 + $0x550] sm:%s1949]
                  %2129 = vst [vmem:[%s1957 + $0x2a8] sm:%s1949] %v2128
                  %v2130 = vld [vmem:[%s1956 + $0x560] sm:%s1949]
                  %2131 = vst [vmem:[%s1957 + $0x2b0] sm:%s1949] %v2130
                  %v2132 = vld [vmem:[%s1956 + $0x570] sm:%s1949]
                  %2133 = vst [vmem:[%s1957 + $0x2b8] sm:%s1949] %v2132
                  %v2134 = vld [vmem:[%s1956 + $0x580] sm:%s1949]
                  %2135 = vst [vmem:[%s1957 + $0x2c0] sm:%s1949] %v2134
                  %v2136 = vld [vmem:[%s1956 + $0x590] sm:%s1949]
                  %2137 = vst [vmem:[%s1957 + $0x2c8] sm:%s1949] %v2136
                  %v2138 = vld [vmem:[%s1956 + $0x5a0] sm:%s1949]
                  %2139 = vst [vmem:[%s1957 + $0x2d0] sm:%s1949] %v2138
                  %v2140 = vld [vmem:[%s1956 + $0x5b0] sm:%s1949]
                  %2141 = vst [vmem:[%s1957 + $0x2d8] sm:%s1949] %v2140
                  %v2142 = vld [vmem:[%s1956 + $0x5c0] sm:%s1949]
                  %2143 = vst [vmem:[%s1957 + $0x2e0] sm:%s1949] %v2142
                  %v2144 = vld [vmem:[%s1956 + $0x5d0] sm:%s1949]
                  %2145 = vst [vmem:[%s1957 + $0x2e8] sm:%s1949] %v2144
                  %v2146 = vld [vmem:[%s1956 + $0x5e0] sm:%s1949]
                  %2147 = vst [vmem:[%s1957 + $0x2f0] sm:%s1949] %v2146
                  %v2148 = vld [vmem:[%s1956 + $0x5f0] sm:%s1949]
                  %2149 = vst [vmem:[%s1957 + $0x2f8] sm:%s1949] %v2148
                  %v2150 = vld [vmem:[%s1956 + $0x600] sm:%s1949]
                  %2151 = vst [vmem:[%s1957 + $0x300] sm:%s1949] %v2150
                  %v2152 = vld [vmem:[%s1956 + $0x610] sm:%s1949]
                  %2153 = vst [vmem:[%s1957 + $0x308] sm:%s1949] %v2152
                  %v2154 = vld [vmem:[%s1956 + $0x620] sm:%s1949]
                  %2155 = vst [vmem:[%s1957 + $0x310] sm:%s1949] %v2154
                  %v2156 = vld [vmem:[%s1956 + $0x630] sm:%s1949]
                  %2157 = vst [vmem:[%s1957 + $0x318] sm:%s1949] %v2156
                  %v2158 = vld [vmem:[%s1956 + $0x640] sm:%s1949]
                  %2159 = vst [vmem:[%s1957 + $0x320] sm:%s1949] %v2158
                  %v2160 = vld [vmem:[%s1956 + $0x650] sm:%s1949]
                  %2161 = vst [vmem:[%s1957 + $0x328] sm:%s1949] %v2160
                  %v2162 = vld [vmem:[%s1956 + $0x660] sm:%s1949]
                  %2163 = vst [vmem:[%s1957 + $0x330] sm:%s1949] %v2162
                  %v2164 = vld [vmem:[%s1956 + $0x670] sm:%s1949]
                  %2165 = vst [vmem:[%s1957 + $0x338] sm:%s1949] %v2164
                  %v2166 = vld [vmem:[%s1956 + $0x680] sm:%s1949]
                  %2167 = vst [vmem:[%s1957 + $0x340] sm:%s1949] %v2166
                  %v2168 = vld [vmem:[%s1956 + $0x690] sm:%s1949]
                  %2169 = vst [vmem:[%s1957 + $0x348] sm:%s1949] %v2168
                  %v2170 = vld [vmem:[%s1956 + $0x6a0] sm:%s1949]
                  %2171 = vst [vmem:[%s1957 + $0x350] sm:%s1949] %v2170
                  %v2172 = vld [vmem:[%s1956 + $0x6b0] sm:%s1949]
                  %2173 = vst [vmem:[%s1957 + $0x358] sm:%s1949] %v2172
                  %v2174 = vld [vmem:[%s1956 + $0x6c0] sm:%s1949]
                  %2175 = vst [vmem:[%s1957 + $0x360] sm:%s1949] %v2174
                  %v2176 = vld [vmem:[%s1956 + $0x6d0] sm:%s1949]
                  %2177 = vst [vmem:[%s1957 + $0x368] sm:%s1949] %v2176
                  %v2178 = vld [vmem:[%s1956 + $0x6e0] sm:%s1949]
                  %2179 = vst [vmem:[%s1957 + $0x370] sm:%s1949] %v2178
                  %v2180 = vld [vmem:[%s1956 + $0x6f0] sm:%s1949]
                  %2181 = vst [vmem:[%s1957 + $0x378] sm:%s1949] %v2180
                  %v2182 = vld [vmem:[%s1956 + $0x700] sm:%s1949]
                  %2183 = vst [vmem:[%s1957 + $0x380] sm:%s1949] %v2182
                  %v2184 = vld [vmem:[%s1956 + $0x710] sm:%s1949]
                  %2185 = vst [vmem:[%s1957 + $0x388] sm:%s1949] %v2184
                  %v2186 = vld [vmem:[%s1956 + $0x720] sm:%s1949]
                  %2187 = vst [vmem:[%s1957 + $0x390] sm:%s1949] %v2186
                  %v2188 = vld [vmem:[%s1956 + $0x730] sm:%s1949]
                  %2189 = vst [vmem:[%s1957 + $0x398] sm:%s1949] %v2188
                  %v2190 = vld [vmem:[%s1956 + $0x740] sm:%s1949]
                  %2191 = vst [vmem:[%s1957 + $0x3a0] sm:%s1949] %v2190
                  %v2192 = vld [vmem:[%s1956 + $0x750] sm:%s1949]
                  %2193 = vst [vmem:[%s1957 + $0x3a8] sm:%s1949] %v2192
                  %v2194 = vld [vmem:[%s1956 + $0x760] sm:%s1949]
                  %2195 = vst [vmem:[%s1957 + $0x3b0] sm:%s1949] %v2194
                  %v2196 = vld [vmem:[%s1956 + $0x770] sm:%s1949]
                  %2197 = vst [vmem:[%s1957 + $0x3b8] sm:%s1949] %v2196
                  %v2198 = vld [vmem:[%s1956 + $0x780] sm:%s1949]
                  %2199 = vst [vmem:[%s1957 + $0x3c0] sm:%s1949] %v2198
                  %v2200 = vld [vmem:[%s1956 + $0x790] sm:%s1949]
                  %2201 = vst [vmem:[%s1957 + $0x3c8] sm:%s1949] %v2200
                  %v2202 = vld [vmem:[%s1956 + $0x7a0] sm:%s1949]
                  %2203 = vst [vmem:[%s1957 + $0x3d0] sm:%s1949] %v2202
                  %v2204 = vld [vmem:[%s1956 + $0x7b0] sm:%s1949]
                  %2205 = vst [vmem:[%s1957 + $0x3d8] sm:%s1949] %v2204
                  %v2206 = vld [vmem:[%s1956 + $0x7c0] sm:%s1949]
                  %2207 = vst [vmem:[%s1957 + $0x3e0] sm:%s1949] %v2206
                  %v2208 = vld [vmem:[%s1956 + $0x7d0] sm:%s1949]
                  %2209 = vst [vmem:[%s1957 + $0x3e8] sm:%s1949] %v2208
                  %v2210 = vld [vmem:[%s1956 + $0x7e0] sm:%s1949]
                  %2211 = vst [vmem:[%s1957 + $0x3f0] sm:%s1949] %v2210
                  %v2212 = vld [vmem:[%s1956 + $0x7f0] sm:%s1949]
                  %2213 = vst [vmem:[%s1957 + $0x3f8] sm:%s1949] %v2212
                  %v2214 = vld [vmem:[%s1956 + $0x800] sm:%s1949]
                  %2215 = vst [vmem:[%s1957 + $0x400] sm:%s1949] %v2214
                  %v2216 = vld [vmem:[%s1956 + $0x810] sm:%s1949]
                  %2217 = vst [vmem:[%s1957 + $0x408] sm:%s1949] %v2216
                  %v2218 = vld [vmem:[%s1956 + $0x820] sm:%s1949]
                  %2219 = vst [vmem:[%s1957 + $0x410] sm:%s1949] %v2218
                  %v2220 = vld [vmem:[%s1956 + $0x830] sm:%s1949]
                  %2221 = vst [vmem:[%s1957 + $0x418] sm:%s1949] %v2220
                  %v2222 = vld [vmem:[%s1956 + $0x840] sm:%s1949]
                  %2223 = vst [vmem:[%s1957 + $0x420] sm:%s1949] %v2222
                  %v2224 = vld [vmem:[%s1956 + $0x850] sm:%s1949]
                  %2225 = vst [vmem:[%s1957 + $0x428] sm:%s1949] %v2224
                  %v2226 = vld [vmem:[%s1956 + $0x860] sm:%s1949]
                  %2227 = vst [vmem:[%s1957 + $0x430] sm:%s1949] %v2226
                  %v2228 = vld [vmem:[%s1956 + $0x870] sm:%s1949]
                  %2229 = vst [vmem:[%s1957 + $0x438] sm:%s1949] %v2228
                  %v2230 = vld [vmem:[%s1956 + $0x880] sm:%s1949]
                  %2231 = vst [vmem:[%s1957 + $0x440] sm:%s1949] %v2230
                  %v2232 = vld [vmem:[%s1956 + $0x890] sm:%s1949]
                  %2233 = vst [vmem:[%s1957 + $0x448] sm:%s1949] %v2232
                  %v2234 = vld [vmem:[%s1956 + $0x8a0] sm:%s1949]
                  %2235 = vst [vmem:[%s1957 + $0x450] sm:%s1949] %v2234
                  %v2236 = vld [vmem:[%s1956 + $0x8b0] sm:%s1949]
                  %2237 = vst [vmem:[%s1957 + $0x458] sm:%s1949] %v2236
                  %v2238 = vld [vmem:[%s1956 + $0x8c0] sm:%s1949]
                  %2239 = vst [vmem:[%s1957 + $0x460] sm:%s1949] %v2238
                  %v2240 = vld [vmem:[%s1956 + $0x8d0] sm:%s1949]
                  %2241 = vst [vmem:[%s1957 + $0x468] sm:%s1949] %v2240
                  %v2242 = vld [vmem:[%s1956 + $0x8e0] sm:%s1949]
                  %2243 = vst [vmem:[%s1957 + $0x470] sm:%s1949] %v2242
                  %v2244 = vld [vmem:[%s1956 + $0x8f0] sm:%s1949]
                  %2245 = vst [vmem:[%s1957 + $0x478] sm:%s1949] %v2244
                  %v2246 = vld [vmem:[%s1956 + $0x900] sm:%s1949]
                  %2247 = vst [vmem:[%s1957 + $0x480] sm:%s1949] %v2246
                  %v2248 = vld [vmem:[%s1956 + $0x910] sm:%s1949]
                  %2249 = vst [vmem:[%s1957 + $0x488] sm:%s1949] %v2248
                  %v2250 = vld [vmem:[%s1956 + $0x920] sm:%s1949]
                  %2251 = vst [vmem:[%s1957 + $0x490] sm:%s1949] %v2250
                  %v2252 = vld [vmem:[%s1956 + $0x930] sm:%s1949]
                  %2253 = vst [vmem:[%s1957 + $0x498] sm:%s1949] %v2252
                  %v2254 = vld [vmem:[%s1956 + $0x940] sm:%s1949]
                  %2255 = vst [vmem:[%s1957 + $0x4a0] sm:%s1949] %v2254
                  %v2256 = vld [vmem:[%s1956 + $0x950] sm:%s1949]
                  %2257 = vst [vmem:[%s1957 + $0x4a8] sm:%s1949] %v2256
                  %v2258 = vld [vmem:[%s1956 + $0x960] sm:%s1949]
                  %2259 = vst [vmem:[%s1957 + $0x4b0] sm:%s1949] %v2258
                  %v2260 = vld [vmem:[%s1956 + $0x970] sm:%s1949]
                  %2261 = vst [vmem:[%s1957 + $0x4b8] sm:%s1949] %v2260
                  %v2262 = vld [vmem:[%s1956 + $0x980] sm:%s1949]
                  %2263 = vst [vmem:[%s1957 + $0x4c0] sm:%s1949] %v2262
                  %v2264 = vld [vmem:[%s1956 + $0x990] sm:%s1949]
                  %2265 = vst [vmem:[%s1957 + $0x4c8] sm:%s1949] %v2264
                  %v2266 = vld [vmem:[%s1956 + $0x9a0] sm:%s1949]
                  %2267 = vst [vmem:[%s1957 + $0x4d0] sm:%s1949] %v2266
                  %v2268 = vld [vmem:[%s1956 + $0x9b0] sm:%s1949]
                  %2269 = vst [vmem:[%s1957 + $0x4d8] sm:%s1949] %v2268
                  %v2270 = vld [vmem:[%s1956 + $0x9c0] sm:%s1949]
                  %2271 = vst [vmem:[%s1957 + $0x4e0] sm:%s1949] %v2270
                  %v2272 = vld [vmem:[%s1956 + $0x9d0] sm:%s1949]
                  %2273 = vst [vmem:[%s1957 + $0x4e8] sm:%s1949] %v2272
                  %v2274 = vld [vmem:[%s1956 + $0x9e0] sm:%s1949]
                  %2275 = vst [vmem:[%s1957 + $0x4f0] sm:%s1949] %v2274
                  %v2276 = vld [vmem:[%s1956 + $0x9f0] sm:%s1949]
                  %2277 = vst [vmem:[%s1957 + $0x4f8] sm:%s1949] %v2276
                  %v2278 = vld [vmem:[%s1956 + $0xa00] sm:%s1949]
                  %2279 = vst [vmem:[%s1957 + $0x500] sm:%s1949] %v2278
                  %v2280 = vld [vmem:[%s1956 + $0xa10] sm:%s1949]
                  %2281 = vst [vmem:[%s1957 + $0x508] sm:%s1949] %v2280
                  %v2282 = vld [vmem:[%s1956 + $0xa20] sm:%s1949]
                  %2283 = vst [vmem:[%s1957 + $0x510] sm:%s1949] %v2282
                  %v2284 = vld [vmem:[%s1956 + $0xa30] sm:%s1949]
                  %2285 = vst [vmem:[%s1957 + $0x518] sm:%s1949] %v2284
                  %v2286 = vld [vmem:[%s1956 + $0xa40] sm:%s1949]
                  %2287 = vst [vmem:[%s1957 + $0x520] sm:%s1949] %v2286
                  %v2288 = vld [vmem:[%s1956 + $0xa50] sm:%s1949]
                  %2289 = vst [vmem:[%s1957 + $0x528] sm:%s1949] %v2288
                  %v2290 = vld [vmem:[%s1956 + $0xa60] sm:%s1949]
                  %2291 = vst [vmem:[%s1957 + $0x530] sm:%s1949] %v2290
                  %v2292 = vld [vmem:[%s1956 + $0xa70] sm:%s1949]
                  %2293 = vst [vmem:[%s1957 + $0x538] sm:%s1949] %v2292
                  %v2294 = vld [vmem:[%s1956 + $0xa80] sm:%s1949]
                  %2295 = vst [vmem:[%s1957 + $0x540] sm:%s1949] %v2294
                  %v2296 = vld [vmem:[%s1956 + $0xa90] sm:%s1949]
                  %2297 = vst [vmem:[%s1957 + $0x548] sm:%s1949] %v2296
                  %v2298 = vld [vmem:[%s1956 + $0xaa0] sm:%s1949]
                  %2299 = vst [vmem:[%s1957 + $0x550] sm:%s1949] %v2298
                  %v2300 = vld [vmem:[%s1956 + $0xab0] sm:%s1949]
                  %2301 = vst [vmem:[%s1957 + $0x558] sm:%s1949] %v2300
                  %v2302 = vld [vmem:[%s1956 + $0xac0] sm:%s1949]
                  %2303 = vst [vmem:[%s1957 + $0x560] sm:%s1949] %v2302
                  %v2304 = vld [vmem:[%s1956 + $0xad0] sm:%s1949]
                  %2305 = vst [vmem:[%s1957 + $0x568] sm:%s1949] %v2304
                  %v2306 = vld [vmem:[%s1956 + $0xae0] sm:%s1949]
                  %2307 = vst [vmem:[%s1957 + $0x570] sm:%s1949] %v2306
                  %v2308 = vld [vmem:[%s1956 + $0xaf0] sm:%s1949]
                  %2309 = vst [vmem:[%s1957 + $0x578] sm:%s1949] %v2308
                  %v2310 = vld [vmem:[%s1956 + $0xb00] sm:%s1949]
                  %2311 = vst [vmem:[%s1957 + $0x580] sm:%s1949] %v2310
                  %v2312 = vld [vmem:[%s1956 + $0xb10] sm:%s1949]
                  %2313 = vst [vmem:[%s1957 + $0x588] sm:%s1949] %v2312
                  %v2314 = vld [vmem:[%s1956 + $0xb20] sm:%s1949]
                  %2315 = vst [vmem:[%s1957 + $0x590] sm:%s1949] %v2314
                  %v2316 = vld [vmem:[%s1956 + $0xb30] sm:%s1949]
                  %2317 = vst [vmem:[%s1957 + $0x598] sm:%s1949] %v2316
                  %v2318 = vld [vmem:[%s1956 + $0xb40] sm:%s1949]
                  %2319 = vst [vmem:[%s1957 + $0x5a0] sm:%s1949] %v2318
                  %v2320 = vld [vmem:[%s1956 + $0xb50] sm:%s1949]
                  %2321 = vst [vmem:[%s1957 + $0x5a8] sm:%s1949] %v2320
                  %v2322 = vld [vmem:[%s1956 + $0xb60] sm:%s1949]
                  %2323 = vst [vmem:[%s1957 + $0x5b0] sm:%s1949] %v2322
                  %v2324 = vld [vmem:[%s1956 + $0xb70] sm:%s1949]
                  %2325 = vst [vmem:[%s1957 + $0x5b8] sm:%s1949] %v2324
                  %v2326 = vld [vmem:[%s1956 + $0xb80] sm:%s1949]
                  %2327 = vst [vmem:[%s1957 + $0x5c0] sm:%s1949] %v2326
                  %v2328 = vld [vmem:[%s1956 + $0xb90] sm:%s1949]
                  %2329 = vst [vmem:[%s1957 + $0x5c8] sm:%s1949] %v2328
                  %v2330 = vld [vmem:[%s1956 + $0xba0] sm:%s1949]
                  %2331 = vst [vmem:[%s1957 + $0x5d0] sm:%s1949] %v2330
                  %v2332 = vld [vmem:[%s1956 + $0xbb0] sm:%s1949]
                  %2333 = vst [vmem:[%s1957 + $0x5d8] sm:%s1949] %v2332
                  %v2334 = vld [vmem:[%s1956 + $0xbc0] sm:%s1949]
                  %2335 = vst [vmem:[%s1957 + $0x5e0] sm:%s1949] %v2334
                  %v2336 = vld [vmem:[%s1956 + $0xbd0] sm:%s1949]
                  %2337 = vst [vmem:[%s1957 + $0x5e8] sm:%s1949] %v2336
                  %v2338 = vld [vmem:[%s1956 + $0xbe0] sm:%s1949]
                  %2339 = vst [vmem:[%s1957 + $0x5f0] sm:%s1949] %v2338
                  %v2340 = vld [vmem:[%s1956 + $0xbf0] sm:%s1949]
                  %2341 = vst [vmem:[%s1957 + $0x5f8] sm:%s1949] %v2340
                  %v2342 = vld [vmem:[%s1956 + $0xc00] sm:%s1949]
                  %2343 = vst [vmem:[%s1957 + $0x600] sm:%s1949] %v2342
                  %v2344 = vld [vmem:[%s1956 + $0xc10] sm:%s1949]
                  %2345 = vst [vmem:[%s1957 + $0x608] sm:%s1949] %v2344
                  %v2346 = vld [vmem:[%s1956 + $0xc20] sm:%s1949]
                  %2347 = vst [vmem:[%s1957 + $0x610] sm:%s1949] %v2346
                  %v2348 = vld [vmem:[%s1956 + $0xc30] sm:%s1949]
                  %2349 = vst [vmem:[%s1957 + $0x618] sm:%s1949] %v2348
                  %v2350 = vld [vmem:[%s1956 + $0xc40] sm:%s1949]
                  %2351 = vst [vmem:[%s1957 + $0x620] sm:%s1949] %v2350
                  %v2352 = vld [vmem:[%s1956 + $0xc50] sm:%s1949]
                  %2353 = vst [vmem:[%s1957 + $0x628] sm:%s1949] %v2352
                  %v2354 = vld [vmem:[%s1956 + $0xc60] sm:%s1949]
                  %2355 = vst [vmem:[%s1957 + $0x630] sm:%s1949] %v2354
                  %v2356 = vld [vmem:[%s1956 + $0xc70] sm:%s1949]
                  %2357 = vst [vmem:[%s1957 + $0x638] sm:%s1949] %v2356
                  %v2358 = vld [vmem:[%s1956 + $0xc80] sm:%s1949]
                  %2359 = vst [vmem:[%s1957 + $0x640] sm:%s1949] %v2358
                  %v2360 = vld [vmem:[%s1956 + $0xc90] sm:%s1949]
                  %2361 = vst [vmem:[%s1957 + $0x648] sm:%s1949] %v2360
                  %v2362 = vld [vmem:[%s1956 + $0xca0] sm:%s1949]
                  %2363 = vst [vmem:[%s1957 + $0x650] sm:%s1949] %v2362
                  %v2364 = vld [vmem:[%s1956 + $0xcb0] sm:%s1949]
                  %2365 = vst [vmem:[%s1957 + $0x658] sm:%s1949] %v2364
                  %v2366 = vld [vmem:[%s1956 + $0xcc0] sm:%s1949]
                  %2367 = vst [vmem:[%s1957 + $0x660] sm:%s1949] %v2366
                  %v2368 = vld [vmem:[%s1956 + $0xcd0] sm:%s1949]
                  %2369 = vst [vmem:[%s1957 + $0x668] sm:%s1949] %v2368
                  %v2370 = vld [vmem:[%s1956 + $0xce0] sm:%s1949]
                  %2371 = vst [vmem:[%s1957 + $0x670] sm:%s1949] %v2370
                  %v2372 = vld [vmem:[%s1956 + $0xcf0] sm:%s1949]
                  %2373 = vst [vmem:[%s1957 + $0x678] sm:%s1949] %v2372
                  %v2374 = vld [vmem:[%s1956 + $0xd00] sm:%s1949]
                  %2375 = vst [vmem:[%s1957 + $0x680] sm:%s1949] %v2374
                  %v2376 = vld [vmem:[%s1956 + $0xd10] sm:%s1949]
                  %2377 = vst [vmem:[%s1957 + $0x688] sm:%s1949] %v2376
                  %v2378 = vld [vmem:[%s1956 + $0xd20] sm:%s1949]
                  %2379 = vst [vmem:[%s1957 + $0x690] sm:%s1949] %v2378
                  %v2380 = vld [vmem:[%s1956 + $0xd30] sm:%s1949]
                  %2381 = vst [vmem:[%s1957 + $0x698] sm:%s1949] %v2380
                  %v2382 = vld [vmem:[%s1956 + $0xd40] sm:%s1949]
                  %2383 = vst [vmem:[%s1957 + $0x6a0] sm:%s1949] %v2382
                  %v2384 = vld [vmem:[%s1956 + $0xd50] sm:%s1949]
                  %2385 = vst [vmem:[%s1957 + $0x6a8] sm:%s1949] %v2384
                  %v2386 = vld [vmem:[%s1956 + $0xd60] sm:%s1949]
                  %2387 = vst [vmem:[%s1957 + $0x6b0] sm:%s1949] %v2386
                  %v2388 = vld [vmem:[%s1956 + $0xd70] sm:%s1949]
                  %2389 = vst [vmem:[%s1957 + $0x6b8] sm:%s1949] %v2388
                  %v2390 = vld [vmem:[%s1956 + $0xd80] sm:%s1949]
                  %2391 = vst [vmem:[%s1957 + $0x6c0] sm:%s1949] %v2390
                  %v2392 = vld [vmem:[%s1956 + $0xd90] sm:%s1949]
                  %2393 = vst [vmem:[%s1957 + $0x6c8] sm:%s1949] %v2392
                  %v2394 = vld [vmem:[%s1956 + $0xda0] sm:%s1949]
                  %2395 = vst [vmem:[%s1957 + $0x6d0] sm:%s1949] %v2394
                  %v2396 = vld [vmem:[%s1956 + $0xdb0] sm:%s1949]
                  %2397 = vst [vmem:[%s1957 + $0x6d8] sm:%s1949] %v2396
                  %v2398 = vld [vmem:[%s1956 + $0xdc0] sm:%s1949]
                  %2399 = vst [vmem:[%s1957 + $0x6e0] sm:%s1949] %v2398
                  %v2400 = vld [vmem:[%s1956 + $0xdd0] sm:%s1949]
                  %2401 = vst [vmem:[%s1957 + $0x6e8] sm:%s1949] %v2400
                  %v2402 = vld [vmem:[%s1956 + $0xde0] sm:%s1949]
                  %2403 = vst [vmem:[%s1957 + $0x6f0] sm:%s1949] %v2402
                  %v2404 = vld [vmem:[%s1956 + $0xdf0] sm:%s1949]
                  %2405 = vst [vmem:[%s1957 + $0x6f8] sm:%s1949] %v2404
                  %v2406 = vld [vmem:[%s1956 + $0xe00] sm:%s1949]
                  %2407 = vst [vmem:[%s1957 + $0x700] sm:%s1949] %v2406
                  %v2408 = vld [vmem:[%s1956 + $0xe10] sm:%s1949]
                  %2409 = vst [vmem:[%s1957 + $0x708] sm:%s1949] %v2408
                  %v2410 = vld [vmem:[%s1956 + $0xe20] sm:%s1949]
                  %2411 = vst [vmem:[%s1957 + $0x710] sm:%s1949] %v2410
                  %v2412 = vld [vmem:[%s1956 + $0xe30] sm:%s1949]
                  %2413 = vst [vmem:[%s1957 + $0x718] sm:%s1949] %v2412
                  %v2414 = vld [vmem:[%s1956 + $0xe40] sm:%s1949]
                  %2415 = vst [vmem:[%s1957 + $0x720] sm:%s1949] %v2414
                  %v2416 = vld [vmem:[%s1956 + $0xe50] sm:%s1949]
                  %2417 = vst [vmem:[%s1957 + $0x728] sm:%s1949] %v2416
                  %v2418 = vld [vmem:[%s1956 + $0xe60] sm:%s1949]
                  %2419 = vst [vmem:[%s1957 + $0x730] sm:%s1949] %v2418
                  %v2420 = vld [vmem:[%s1956 + $0xe70] sm:%s1949]
                  %2421 = vst [vmem:[%s1957 + $0x738] sm:%s1949] %v2420
                  %v2422 = vld [vmem:[%s1956 + $0xe80] sm:%s1949]
                  %2423 = vst [vmem:[%s1957 + $0x740] sm:%s1949] %v2422
                  %v2424 = vld [vmem:[%s1956 + $0xe90] sm:%s1949]
                  %2425 = vst [vmem:[%s1957 + $0x748] sm:%s1949] %v2424
                  %v2426 = vld [vmem:[%s1956 + $0xea0] sm:%s1949]
                  %2427 = vst [vmem:[%s1957 + $0x750] sm:%s1949] %v2426
                  %v2428 = vld [vmem:[%s1956 + $0xeb0] sm:%s1949]
                  %2429 = vst [vmem:[%s1957 + $0x758] sm:%s1949] %v2428
                  %v2430 = vld [vmem:[%s1956 + $0xec0] sm:%s1949]
                  %2431 = vst [vmem:[%s1957 + $0x760] sm:%s1949] %v2430
                  %v2432 = vld [vmem:[%s1956 + $0xed0] sm:%s1949]
                  %2433 = vst [vmem:[%s1957 + $0x768] sm:%s1949] %v2432
                  %v2434 = vld [vmem:[%s1956 + $0xee0] sm:%s1949]
                  %2435 = vst [vmem:[%s1957 + $0x770] sm:%s1949] %v2434
                  %v2436 = vld [vmem:[%s1956 + $0xef0] sm:%s1949]
                  %2437 = vst [vmem:[%s1957 + $0x778] sm:%s1949] %v2436
                  %v2438 = vld [vmem:[%s1956 + $0xf00] sm:%s1949]
                  %2439 = vst [vmem:[%s1957 + $0x780] sm:%s1949] %v2438
                  %v2440 = vld [vmem:[%s1956 + $0xf10] sm:%s1949]
                  %2441 = vst [vmem:[%s1957 + $0x788] sm:%s1949] %v2440
                  %v2442 = vld [vmem:[%s1956 + $0xf20] sm:%s1949]
                  %2443 = vst [vmem:[%s1957 + $0x790] sm:%s1949] %v2442
                  %v2444 = vld [vmem:[%s1956 + $0xf30] sm:%s1949]
                  %2445 = vst [vmem:[%s1957 + $0x798] sm:%s1949] %v2444
                  %v2446 = vld [vmem:[%s1956 + $0xf40] sm:%s1949]
                  %2447 = vst [vmem:[%s1957 + $0x7a0] sm:%s1949] %v2446
                  %v2448 = vld [vmem:[%s1956 + $0xf50] sm:%s1949]
                  %2449 = vst [vmem:[%s1957 + $0x7a8] sm:%s1949] %v2448
                  %v2450 = vld [vmem:[%s1956 + $0xf60] sm:%s1949]
                  %2451 = vst [vmem:[%s1957 + $0x7b0] sm:%s1949] %v2450
                  %v2452 = vld [vmem:[%s1956 + $0xf70] sm:%s1949]
                  %2453 = vst [vmem:[%s1957 + $0x7b8] sm:%s1949] %v2452
                  %v2454 = vld [vmem:[%s1956 + $0xf80] sm:%s1949]
                  %2455 = vst [vmem:[%s1957 + $0x7c0] sm:%s1949] %v2454
                  %v2456 = vld [vmem:[%s1956 + $0xf90] sm:%s1949]
                  %2457 = vst [vmem:[%s1957 + $0x7c8] sm:%s1949] %v2456
                  %v2458 = vld [vmem:[%s1956 + $0xfa0] sm:%s1949]
                  %2459 = vst [vmem:[%s1957 + $0x7d0] sm:%s1949] %v2458
                  %v2460 = vld [vmem:[%s1956 + $0xfb0] sm:%s1949]
                  %2461 = vst [vmem:[%s1957 + $0x7d8] sm:%s1949] %v2460
                  %v2462 = vld [vmem:[%s1956 + $0xfc0] sm:%s1949]
                  %2463 = vst [vmem:[%s1957 + $0x7e0] sm:%s1949] %v2462
                  %v2464 = vld [vmem:[%s1956 + $0xfd0] sm:%s1949]
                  %2465 = vst [vmem:[%s1957 + $0x7e8] sm:%s1949] %v2464
                  %v2466 = vld [vmem:[%s1956 + $0xfe0] sm:%s1949]
                  %2467 = vst [vmem:[%s1957 + $0x7f0] sm:%s1949] %v2466
                  %v2468 = vld [vmem:[%s1956 + $0xff0] sm:%s1949]
                  %2469 = vst [vmem:[%s1957 + $0x7f8] sm:%s1949] %v2468
                  %v2470 = vld [vmem:[%s1956 + $0x1000] sm:%s1949]
                  %2471 = vst [vmem:[%s1957 + $0x800] sm:%s1949] %v2470
                  %v2472 = vld [vmem:[%s1956 + $0x1010] sm:%s1949]
                  %2473 = vst [vmem:[%s1957 + $0x808] sm:%s1949] %v2472
                  %v2474 = vld [vmem:[%s1956 + $0x1020] sm:%s1949]
                  %2475 = vst [vmem:[%s1957 + $0x810] sm:%s1949] %v2474
                  %v2476 = vld [vmem:[%s1956 + $0x1030] sm:%s1949]
                  %2477 = vst [vmem:[%s1957 + $0x818] sm:%s1949] %v2476
                  %v2478 = vld [vmem:[%s1956 + $0x1040] sm:%s1949]
                  %2479 = vst [vmem:[%s1957 + $0x820] sm:%s1949] %v2478
                  %v2480 = vld [vmem:[%s1956 + $0x1050] sm:%s1949]
                  %2481 = vst [vmem:[%s1957 + $0x828] sm:%s1949] %v2480
                  %v2482 = vld [vmem:[%s1956 + $0x1060] sm:%s1949]
                  %2483 = vst [vmem:[%s1957 + $0x830] sm:%s1949] %v2482
                  %v2484 = vld [vmem:[%s1956 + $0x1070] sm:%s1949]
                  %2485 = vst [vmem:[%s1957 + $0x838] sm:%s1949] %v2484
                  %v2486 = vld [vmem:[%s1956 + $0x1080] sm:%s1949]
                  %2487 = vst [vmem:[%s1957 + $0x840] sm:%s1949] %v2486
                  %v2488 = vld [vmem:[%s1956 + $0x1090] sm:%s1949]
                  %2489 = vst [vmem:[%s1957 + $0x848] sm:%s1949] %v2488
                  %v2490 = vld [vmem:[%s1956 + $0x10a0] sm:%s1949]
                  %2491 = vst [vmem:[%s1957 + $0x850] sm:%s1949] %v2490
                  %v2492 = vld [vmem:[%s1956 + $0x10b0] sm:%s1949]
                  %2493 = vst [vmem:[%s1957 + $0x858] sm:%s1949] %v2492
                  %v2494 = vld [vmem:[%s1956 + $0x10c0] sm:%s1949]
                  %2495 = vst [vmem:[%s1957 + $0x860] sm:%s1949] %v2494
                  %v2496 = vld [vmem:[%s1956 + $0x10d0] sm:%s1949]
                  %2497 = vst [vmem:[%s1957 + $0x868] sm:%s1949] %v2496
                  %v2498 = vld [vmem:[%s1956 + $0x10e0] sm:%s1949]
                  %2499 = vst [vmem:[%s1957 + $0x870] sm:%s1949] %v2498
                  %v2500 = vld [vmem:[%s1956 + $0x10f0] sm:%s1949]
                  %2501 = vst [vmem:[%s1957 + $0x878] sm:%s1949] %v2500
                  %v2502 = vld [vmem:[%s1956 + $0x1100] sm:%s1949]
                  %2503 = vst [vmem:[%s1957 + $0x880] sm:%s1949] %v2502
                  %v2504 = vld [vmem:[%s1956 + $0x1110] sm:%s1949]
                  %2505 = vst [vmem:[%s1957 + $0x888] sm:%s1949] %v2504
                  %v2506 = vld [vmem:[%s1956 + $0x1120] sm:%s1949]
                  %2507 = vst [vmem:[%s1957 + $0x890] sm:%s1949] %v2506
                  %v2508 = vld [vmem:[%s1956 + $0x1130] sm:%s1949]
                  %2509 = vst [vmem:[%s1957 + $0x898] sm:%s1949] %v2508
                  %v2510 = vld [vmem:[%s1956 + $0x1140] sm:%s1949]
                  %2511 = vst [vmem:[%s1957 + $0x8a0] sm:%s1949] %v2510
                  %v2512 = vld [vmem:[%s1956 + $0x1150] sm:%s1949]
                  %2513 = vst [vmem:[%s1957 + $0x8a8] sm:%s1949] %v2512
                  %v2514 = vld [vmem:[%s1956 + $0x1160] sm:%s1949]
                  %2515 = vst [vmem:[%s1957 + $0x8b0] sm:%s1949] %v2514
                  %v2516 = vld [vmem:[%s1956 + $0x1170] sm:%s1949]
                  %2517 = vst [vmem:[%s1957 + $0x8b8] sm:%s1949] %v2516
                  %v2518 = vld [vmem:[%s1956 + $0x1180] sm:%s1949]
                  %2519 = vst [vmem:[%s1957 + $0x8c0] sm:%s1949] %v2518
                  %v2520 = vld [vmem:[%s1956 + $0x1190] sm:%s1949]
                  %2521 = vst [vmem:[%s1957 + $0x8c8] sm:%s1949] %v2520
                  %v2522 = vld [vmem:[%s1956 + $0x11a0] sm:%s1949]
                  %2523 = vst [vmem:[%s1957 + $0x8d0] sm:%s1949] %v2522
                  %v2524 = vld [vmem:[%s1956 + $0x11b0] sm:%s1949]
                  %2525 = vst [vmem:[%s1957 + $0x8d8] sm:%s1949] %v2524
                  %v2526 = vld [vmem:[%s1956 + $0x11c0] sm:%s1949]
                  %2527 = vst [vmem:[%s1957 + $0x8e0] sm:%s1949] %v2526
                  %v2528 = vld [vmem:[%s1956 + $0x11d0] sm:%s1949]
                  %2529 = vst [vmem:[%s1957 + $0x8e8] sm:%s1949] %v2528
                  %v2530 = vld [vmem:[%s1956 + $0x11e0] sm:%s1949]
                  %2531 = vst [vmem:[%s1957 + $0x8f0] sm:%s1949] %v2530
                  %v2532 = vld [vmem:[%s1956 + $0x11f0] sm:%s1949]
                  %2533 = vst [vmem:[%s1957 + $0x8f8] sm:%s1949] %v2532
                $region70: #{auxiliary_convolutions.5} parent=57 // loop_footer
                  %s1955 = sadd.s32 1, %s1951
                $region71: #{auxiliary_convolutions.5} parent=57 // loop_footer_branch
                  %1950 = sbr.rel target = $region67
                $region72: #{auxiliary_convolutions.5} parent=57 // loop_exit
                  _
              $region58: #{auxiliary_convolutions.5} parent=31 // pred_fallthru
                _
            $region32: #{auxiliary_convolutions.5} parent=27 // pred_fallthru
              _
            // Predicated region
            $region33: #{auxiliary_convolutions.5} parent=27 // pred_check
              _
            $region34: #{auxiliary_convolutions.5} parent=27 // pred_check_branch
              %171 = sbr.rel target = $region36
            $region35: #{auxiliary_convolutions.5} parent=27 // pred_region
              %s173 = ssub.s32 256, 1
              loop: start=0, step=1, limit=1
              $region37: #{auxiliary_convolutions.5} parent=35 // loop_pre_header
                _
              $region38: #{auxiliary_convolutions.5} parent=35 // loop_header
                %s175 = sphi 0, %s179
                %p176 = scmp.ge.s32.totalorder %s175, 1
                %s180 = sphi %s165, %s165
                %s181 = sphi %s162, %s162
              $region39: #{auxiliary_convolutions.5} parent=35 // loop_header_branch
                %178 = sbr.rel (%p176) target = $region43
              $region40: #{auxiliary_convolutions.5} parent=35 // loop_body
                %v182 = vld [vmem:[%s180] sm:%s173]
                %183 = vst [vmem:[%s181] sm:%s173] %v182
                %v184 = vld [vmem:[%s180 + $0x10] sm:%s173]
                %185 = vst [vmem:[%s181 + $0x8] sm:%s173] %v184
                %v186 = vld [vmem:[%s180 + $0x20] sm:%s173]
                %187 = vst [vmem:[%s181 + $0x10] sm:%s173] %v186
                %v188 = vld [vmem:[%s180 + $0x30] sm:%s173]
                %189 = vst [vmem:[%s181 + $0x18] sm:%s173] %v188
                %v190 = vld [vmem:[%s180 + $0x40] sm:%s173]
                %191 = vst [vmem:[%s181 + $0x20] sm:%s173] %v190
                %v192 = vld [vmem:[%s180 + $0x50] sm:%s173]
                %193 = vst [vmem:[%s181 + $0x28] sm:%s173] %v192
                %v194 = vld [vmem:[%s180 + $0x60] sm:%s173]
                %195 = vst [vmem:[%s181 + $0x30] sm:%s173] %v194
                %v196 = vld [vmem:[%s180 + $0x70] sm:%s173]
                %197 = vst [vmem:[%s181 + $0x38] sm:%s173] %v196
                %v198 = vld [vmem:[%s180 + $0x80] sm:%s173]
                %199 = vst [vmem:[%s181 + $0x40] sm:%s173] %v198
                %v200 = vld [vmem:[%s180 + $0x90] sm:%s173]
                %201 = vst [vmem:[%s181 + $0x48] sm:%s173] %v200
                %v202 = vld [vmem:[%s180 + $0xa0] sm:%s173]
                %203 = vst [vmem:[%s181 + $0x50] sm:%s173] %v202
                %v204 = vld [vmem:[%s180 + $0xb0] sm:%s173]
                %205 = vst [vmem:[%s181 + $0x58] sm:%s173] %v204
                %v206 = vld [vmem:[%s180 + $0xc0] sm:%s173]
                %207 = vst [vmem:[%s181 + $0x60] sm:%s173] %v206
                %v208 = vld [vmem:[%s180 + $0xd0] sm:%s173]
                %209 = vst [vmem:[%s181 + $0x68] sm:%s173] %v208
                %v210 = vld [vmem:[%s180 + $0xe0] sm:%s173]
                %211 = vst [vmem:[%s181 + $0x70] sm:%s173] %v210
                %v212 = vld [vmem:[%s180 + $0xf0] sm:%s173]
                %213 = vst [vmem:[%s181 + $0x78] sm:%s173] %v212
                %v214 = vld [vmem:[%s180 + $0x100] sm:%s173]
                %215 = vst [vmem:[%s181 + $0x80] sm:%s173] %v214
                %v216 = vld [vmem:[%s180 + $0x110] sm:%s173]
                %217 = vst [vmem:[%s181 + $0x88] sm:%s173] %v216
                %v218 = vld [vmem:[%s180 + $0x120] sm:%s173]
                %219 = vst [vmem:[%s181 + $0x90] sm:%s173] %v218
                %v220 = vld [vmem:[%s180 + $0x130] sm:%s173]
                %221 = vst [vmem:[%s181 + $0x98] sm:%s173] %v220
                %v222 = vld [vmem:[%s180 + $0x140] sm:%s173]
                %223 = vst [vmem:[%s181 + $0xa0] sm:%s173] %v222
                %v224 = vld [vmem:[%s180 + $0x150] sm:%s173]
                %225 = vst [vmem:[%s181 + $0xa8] sm:%s173] %v224
                %v226 = vld [vmem:[%s180 + $0x160] sm:%s173]
                %227 = vst [vmem:[%s181 + $0xb0] sm:%s173] %v226
                %v228 = vld [vmem:[%s180 + $0x170] sm:%s173]
                %229 = vst [vmem:[%s181 + $0xb8] sm:%s173] %v228
                %v230 = vld [vmem:[%s180 + $0x180] sm:%s173]
                %231 = vst [vmem:[%s181 + $0xc0] sm:%s173] %v230
                %v232 = vld [vmem:[%s180 + $0x190] sm:%s173]
                %233 = vst [vmem:[%s181 + $0xc8] sm:%s173] %v232
                %v234 = vld [vmem:[%s180 + $0x1a0] sm:%s173]
                %235 = vst [vmem:[%s181 + $0xd0] sm:%s173] %v234
                %v236 = vld [vmem:[%s180 + $0x1b0] sm:%s173]
                %237 = vst [vmem:[%s181 + $0xd8] sm:%s173] %v236
                %v238 = vld [vmem:[%s180 + $0x1c0] sm:%s173]
                %239 = vst [vmem:[%s181 + $0xe0] sm:%s173] %v238
                %v240 = vld [vmem:[%s180 + $0x1d0] sm:%s173]
                %241 = vst [vmem:[%s181 + $0xe8] sm:%s173] %v240
                %v242 = vld [vmem:[%s180 + $0x1e0] sm:%s173]
                %243 = vst [vmem:[%s181 + $0xf0] sm:%s173] %v242
                %v244 = vld [vmem:[%s180 + $0x1f0] sm:%s173]
                %245 = vst [vmem:[%s181 + $0xf8] sm:%s173] %v244
                %v246 = vld [vmem:[%s180 + $0x200] sm:%s173]
                %247 = vst [vmem:[%s181 + $0x100] sm:%s173] %v246
                %v248 = vld [vmem:[%s180 + $0x210] sm:%s173]
                %249 = vst [vmem:[%s181 + $0x108] sm:%s173] %v248
                %v250 = vld [vmem:[%s180 + $0x220] sm:%s173]
                %251 = vst [vmem:[%s181 + $0x110] sm:%s173] %v250
                %v252 = vld [vmem:[%s180 + $0x230] sm:%s173]
                %253 = vst [vmem:[%s181 + $0x118] sm:%s173] %v252
                %v254 = vld [vmem:[%s180 + $0x240] sm:%s173]
                %255 = vst [vmem:[%s181 + $0x120] sm:%s173] %v254
                %v256 = vld [vmem:[%s180 + $0x250] sm:%s173]
                %257 = vst [vmem:[%s181 + $0x128] sm:%s173] %v256
                %v258 = vld [vmem:[%s180 + $0x260] sm:%s173]
                %259 = vst [vmem:[%s181 + $0x130] sm:%s173] %v258
                %v260 = vld [vmem:[%s180 + $0x270] sm:%s173]
                %261 = vst [vmem:[%s181 + $0x138] sm:%s173] %v260
                %v262 = vld [vmem:[%s180 + $0x280] sm:%s173]
                %263 = vst [vmem:[%s181 + $0x140] sm:%s173] %v262
                %v264 = vld [vmem:[%s180 + $0x290] sm:%s173]
                %265 = vst [vmem:[%s181 + $0x148] sm:%s173] %v264
                %v266 = vld [vmem:[%s180 + $0x2a0] sm:%s173]
                %267 = vst [vmem:[%s181 + $0x150] sm:%s173] %v266
                %v268 = vld [vmem:[%s180 + $0x2b0] sm:%s173]
                %269 = vst [vmem:[%s181 + $0x158] sm:%s173] %v268
                %v270 = vld [vmem:[%s180 + $0x2c0] sm:%s173]
                %271 = vst [vmem:[%s181 + $0x160] sm:%s173] %v270
                %v272 = vld [vmem:[%s180 + $0x2d0] sm:%s173]
                %273 = vst [vmem:[%s181 + $0x168] sm:%s173] %v272
                %v274 = vld [vmem:[%s180 + $0x2e0] sm:%s173]
                %275 = vst [vmem:[%s181 + $0x170] sm:%s173] %v274
                %v276 = vld [vmem:[%s180 + $0x2f0] sm:%s173]
                %277 = vst [vmem:[%s181 + $0x178] sm:%s173] %v276
                %v278 = vld [vmem:[%s180 + $0x300] sm:%s173]
                %279 = vst [vmem:[%s181 + $0x180] sm:%s173] %v278
                %v280 = vld [vmem:[%s180 + $0x310] sm:%s173]
                %281 = vst [vmem:[%s181 + $0x188] sm:%s173] %v280
                %v282 = vld [vmem:[%s180 + $0x320] sm:%s173]
                %283 = vst [vmem:[%s181 + $0x190] sm:%s173] %v282
                %v284 = vld [vmem:[%s180 + $0x330] sm:%s173]
                %285 = vst [vmem:[%s181 + $0x198] sm:%s173] %v284
                %v286 = vld [vmem:[%s180 + $0x340] sm:%s173]
                %287 = vst [vmem:[%s181 + $0x1a0] sm:%s173] %v286
                %v288 = vld [vmem:[%s180 + $0x350] sm:%s173]
                %289 = vst [vmem:[%s181 + $0x1a8] sm:%s173] %v288
                %v290 = vld [vmem:[%s180 + $0x360] sm:%s173]
                %291 = vst [vmem:[%s181 + $0x1b0] sm:%s173] %v290
                %v292 = vld [vmem:[%s180 + $0x370] sm:%s173]
                %293 = vst [vmem:[%s181 + $0x1b8] sm:%s173] %v292
                %v294 = vld [vmem:[%s180 + $0x380] sm:%s173]
                %295 = vst [vmem:[%s181 + $0x1c0] sm:%s173] %v294
                %v296 = vld [vmem:[%s180 + $0x390] sm:%s173]
                %297 = vst [vmem:[%s181 + $0x1c8] sm:%s173] %v296
                %v298 = vld [vmem:[%s180 + $0x3a0] sm:%s173]
                %299 = vst [vmem:[%s181 + $0x1d0] sm:%s173] %v298
                %v300 = vld [vmem:[%s180 + $0x3b0] sm:%s173]
                %301 = vst [vmem:[%s181 + $0x1d8] sm:%s173] %v300
                %v302 = vld [vmem:[%s180 + $0x3c0] sm:%s173]
                %303 = vst [vmem:[%s181 + $0x1e0] sm:%s173] %v302
                %v304 = vld [vmem:[%s180 + $0x3d0] sm:%s173]
                %305 = vst [vmem:[%s181 + $0x1e8] sm:%s173] %v304
                %v306 = vld [vmem:[%s180 + $0x3e0] sm:%s173]
                %307 = vst [vmem:[%s181 + $0x1f0] sm:%s173] %v306
                %v308 = vld [vmem:[%s180 + $0x3f0] sm:%s173]
                %309 = vst [vmem:[%s181 + $0x1f8] sm:%s173] %v308
                %v310 = vld [vmem:[%s180 + $0x400] sm:%s173]
                %311 = vst [vmem:[%s181 + $0x200] sm:%s173] %v310
                %v312 = vld [vmem:[%s180 + $0x410] sm:%s173]
                %313 = vst [vmem:[%s181 + $0x208] sm:%s173] %v312
                %v314 = vld [vmem:[%s180 + $0x420] sm:%s173]
                %315 = vst [vmem:[%s181 + $0x210] sm:%s173] %v314
                %v316 = vld [vmem:[%s180 + $0x430] sm:%s173]
                %317 = vst [vmem:[%s181 + $0x218] sm:%s173] %v316
                %v318 = vld [vmem:[%s180 + $0x440] sm:%s173]
                %319 = vst [vmem:[%s181 + $0x220] sm:%s173] %v318
                %v320 = vld [vmem:[%s180 + $0x450] sm:%s173]
                %321 = vst [vmem:[%s181 + $0x228] sm:%s173] %v320
                %v322 = vld [vmem:[%s180 + $0x460] sm:%s173]
                %323 = vst [vmem:[%s181 + $0x230] sm:%s173] %v322
                %v324 = vld [vmem:[%s180 + $0x470] sm:%s173]
                %325 = vst [vmem:[%s181 + $0x238] sm:%s173] %v324
                %v326 = vld [vmem:[%s180 + $0x480] sm:%s173]
                %327 = vst [vmem:[%s181 + $0x240] sm:%s173] %v326
                %v328 = vld [vmem:[%s180 + $0x490] sm:%s173]
                %329 = vst [vmem:[%s181 + $0x248] sm:%s173] %v328
                %v330 = vld [vmem:[%s180 + $0x4a0] sm:%s173]
                %331 = vst [vmem:[%s181 + $0x250] sm:%s173] %v330
                %v332 = vld [vmem:[%s180 + $0x4b0] sm:%s173]
                %333 = vst [vmem:[%s181 + $0x258] sm:%s173] %v332
                %v334 = vld [vmem:[%s180 + $0x4c0] sm:%s173]
                %335 = vst [vmem:[%s181 + $0x260] sm:%s173] %v334
                %v336 = vld [vmem:[%s180 + $0x4d0] sm:%s173]
                %337 = vst [vmem:[%s181 + $0x268] sm:%s173] %v336
                %v338 = vld [vmem:[%s180 + $0x4e0] sm:%s173]
                %339 = vst [vmem:[%s181 + $0x270] sm:%s173] %v338
                %v340 = vld [vmem:[%s180 + $0x4f0] sm:%s173]
                %341 = vst [vmem:[%s181 + $0x278] sm:%s173] %v340
                %v342 = vld [vmem:[%s180 + $0x500] sm:%s173]
                %343 = vst [vmem:[%s181 + $0x280] sm:%s173] %v342
                %v344 = vld [vmem:[%s180 + $0x510] sm:%s173]
                %345 = vst [vmem:[%s181 + $0x288] sm:%s173] %v344
                %v346 = vld [vmem:[%s180 + $0x520] sm:%s173]
                %347 = vst [vmem:[%s181 + $0x290] sm:%s173] %v346
                %v348 = vld [vmem:[%s180 + $0x530] sm:%s173]
                %349 = vst [vmem:[%s181 + $0x298] sm:%s173] %v348
                %v350 = vld [vmem:[%s180 + $0x540] sm:%s173]
                %351 = vst [vmem:[%s181 + $0x2a0] sm:%s173] %v350
                %v352 = vld [vmem:[%s180 + $0x550] sm:%s173]
                %353 = vst [vmem:[%s181 + $0x2a8] sm:%s173] %v352
                %v354 = vld [vmem:[%s180 + $0x560] sm:%s173]
                %355 = vst [vmem:[%s181 + $0x2b0] sm:%s173] %v354
                %v356 = vld [vmem:[%s180 + $0x570] sm:%s173]
                %357 = vst [vmem:[%s181 + $0x2b8] sm:%s173] %v356
                %v358 = vld [vmem:[%s180 + $0x580] sm:%s173]
                %359 = vst [vmem:[%s181 + $0x2c0] sm:%s173] %v358
                %v360 = vld [vmem:[%s180 + $0x590] sm:%s173]
                %361 = vst [vmem:[%s181 + $0x2c8] sm:%s173] %v360
                %v362 = vld [vmem:[%s180 + $0x5a0] sm:%s173]
                %363 = vst [vmem:[%s181 + $0x2d0] sm:%s173] %v362
                %v364 = vld [vmem:[%s180 + $0x5b0] sm:%s173]
                %365 = vst [vmem:[%s181 + $0x2d8] sm:%s173] %v364
                %v366 = vld [vmem:[%s180 + $0x5c0] sm:%s173]
                %367 = vst [vmem:[%s181 + $0x2e0] sm:%s173] %v366
                %v368 = vld [vmem:[%s180 + $0x5d0] sm:%s173]
                %369 = vst [vmem:[%s181 + $0x2e8] sm:%s173] %v368
                %v370 = vld [vmem:[%s180 + $0x5e0] sm:%s173]
                %371 = vst [vmem:[%s181 + $0x2f0] sm:%s173] %v370
                %v372 = vld [vmem:[%s180 + $0x5f0] sm:%s173]
                %373 = vst [vmem:[%s181 + $0x2f8] sm:%s173] %v372
                %v374 = vld [vmem:[%s180 + $0x600] sm:%s173]
                %375 = vst [vmem:[%s181 + $0x300] sm:%s173] %v374
                %v376 = vld [vmem:[%s180 + $0x610] sm:%s173]
                %377 = vst [vmem:[%s181 + $0x308] sm:%s173] %v376
                %v378 = vld [vmem:[%s180 + $0x620] sm:%s173]
                %379 = vst [vmem:[%s181 + $0x310] sm:%s173] %v378
                %v380 = vld [vmem:[%s180 + $0x630] sm:%s173]
                %381 = vst [vmem:[%s181 + $0x318] sm:%s173] %v380
                %v382 = vld [vmem:[%s180 + $0x640] sm:%s173]
                %383 = vst [vmem:[%s181 + $0x320] sm:%s173] %v382
                %v384 = vld [vmem:[%s180 + $0x650] sm:%s173]
                %385 = vst [vmem:[%s181 + $0x328] sm:%s173] %v384
                %v386 = vld [vmem:[%s180 + $0x660] sm:%s173]
                %387 = vst [vmem:[%s181 + $0x330] sm:%s173] %v386
                %v388 = vld [vmem:[%s180 + $0x670] sm:%s173]
                %389 = vst [vmem:[%s181 + $0x338] sm:%s173] %v388
                %v390 = vld [vmem:[%s180 + $0x680] sm:%s173]
                %391 = vst [vmem:[%s181 + $0x340] sm:%s173] %v390
                %v392 = vld [vmem:[%s180 + $0x690] sm:%s173]
                %393 = vst [vmem:[%s181 + $0x348] sm:%s173] %v392
                %v394 = vld [vmem:[%s180 + $0x6a0] sm:%s173]
                %395 = vst [vmem:[%s181 + $0x350] sm:%s173] %v394
                %v396 = vld [vmem:[%s180 + $0x6b0] sm:%s173]
                %397 = vst [vmem:[%s181 + $0x358] sm:%s173] %v396
                %v398 = vld [vmem:[%s180 + $0x6c0] sm:%s173]
                %399 = vst [vmem:[%s181 + $0x360] sm:%s173] %v398
                %v400 = vld [vmem:[%s180 + $0x6d0] sm:%s173]
                %401 = vst [vmem:[%s181 + $0x368] sm:%s173] %v400
                %v402 = vld [vmem:[%s180 + $0x6e0] sm:%s173]
                %403 = vst [vmem:[%s181 + $0x370] sm:%s173] %v402
                %v404 = vld [vmem:[%s180 + $0x6f0] sm:%s173]
                %405 = vst [vmem:[%s181 + $0x378] sm:%s173] %v404
                %v406 = vld [vmem:[%s180 + $0x700] sm:%s173]
                %407 = vst [vmem:[%s181 + $0x380] sm:%s173] %v406
                %v408 = vld [vmem:[%s180 + $0x710] sm:%s173]
                %409 = vst [vmem:[%s181 + $0x388] sm:%s173] %v408
                %v410 = vld [vmem:[%s180 + $0x720] sm:%s173]
                %411 = vst [vmem:[%s181 + $0x390] sm:%s173] %v410
                %v412 = vld [vmem:[%s180 + $0x730] sm:%s173]
                %413 = vst [vmem:[%s181 + $0x398] sm:%s173] %v412
                %v414 = vld [vmem:[%s180 + $0x740] sm:%s173]
                %415 = vst [vmem:[%s181 + $0x3a0] sm:%s173] %v414
                %v416 = vld [vmem:[%s180 + $0x750] sm:%s173]
                %417 = vst [vmem:[%s181 + $0x3a8] sm:%s173] %v416
                %v418 = vld [vmem:[%s180 + $0x760] sm:%s173]
                %419 = vst [vmem:[%s181 + $0x3b0] sm:%s173] %v418
                %v420 = vld [vmem:[%s180 + $0x770] sm:%s173]
                %421 = vst [vmem:[%s181 + $0x3b8] sm:%s173] %v420
                %v422 = vld [vmem:[%s180 + $0x780] sm:%s173]
                %423 = vst [vmem:[%s181 + $0x3c0] sm:%s173] %v422
                %v424 = vld [vmem:[%s180 + $0x790] sm:%s173]
                %425 = vst [vmem:[%s181 + $0x3c8] sm:%s173] %v424
                %v426 = vld [vmem:[%s180 + $0x7a0] sm:%s173]
                %427 = vst [vmem:[%s181 + $0x3d0] sm:%s173] %v426
                %v428 = vld [vmem:[%s180 + $0x7b0] sm:%s173]
                %429 = vst [vmem:[%s181 + $0x3d8] sm:%s173] %v428
                %v430 = vld [vmem:[%s180 + $0x7c0] sm:%s173]
                %431 = vst [vmem:[%s181 + $0x3e0] sm:%s173] %v430
                %v432 = vld [vmem:[%s180 + $0x7d0] sm:%s173]
                %433 = vst [vmem:[%s181 + $0x3e8] sm:%s173] %v432
                %v434 = vld [vmem:[%s180 + $0x7e0] sm:%s173]
                %435 = vst [vmem:[%s181 + $0x3f0] sm:%s173] %v434
                %v436 = vld [vmem:[%s180 + $0x7f0] sm:%s173]
                %437 = vst [vmem:[%s181 + $0x3f8] sm:%s173] %v436
                %v438 = vld [vmem:[%s180 + $0x800] sm:%s173]
                %439 = vst [vmem:[%s181 + $0x400] sm:%s173] %v438
                %v440 = vld [vmem:[%s180 + $0x810] sm:%s173]
                %441 = vst [vmem:[%s181 + $0x408] sm:%s173] %v440
                %v442 = vld [vmem:[%s180 + $0x820] sm:%s173]
                %443 = vst [vmem:[%s181 + $0x410] sm:%s173] %v442
                %v444 = vld [vmem:[%s180 + $0x830] sm:%s173]
                %445 = vst [vmem:[%s181 + $0x418] sm:%s173] %v444
                %v446 = vld [vmem:[%s180 + $0x840] sm:%s173]
                %447 = vst [vmem:[%s181 + $0x420] sm:%s173] %v446
                %v448 = vld [vmem:[%s180 + $0x850] sm:%s173]
                %449 = vst [vmem:[%s181 + $0x428] sm:%s173] %v448
                %v450 = vld [vmem:[%s180 + $0x860] sm:%s173]
                %451 = vst [vmem:[%s181 + $0x430] sm:%s173] %v450
                %v452 = vld [vmem:[%s180 + $0x870] sm:%s173]
                %453 = vst [vmem:[%s181 + $0x438] sm:%s173] %v452
                %v454 = vld [vmem:[%s180 + $0x880] sm:%s173]
                %455 = vst [vmem:[%s181 + $0x440] sm:%s173] %v454
                %v456 = vld [vmem:[%s180 + $0x890] sm:%s173]
                %457 = vst [vmem:[%s181 + $0x448] sm:%s173] %v456
                %v458 = vld [vmem:[%s180 + $0x8a0] sm:%s173]
                %459 = vst [vmem:[%s181 + $0x450] sm:%s173] %v458
                %v460 = vld [vmem:[%s180 + $0x8b0] sm:%s173]
                %461 = vst [vmem:[%s181 + $0x458] sm:%s173] %v460
                %v462 = vld [vmem:[%s180 + $0x8c0] sm:%s173]
                %463 = vst [vmem:[%s181 + $0x460] sm:%s173] %v462
                %v464 = vld [vmem:[%s180 + $0x8d0] sm:%s173]
                %465 = vst [vmem:[%s181 + $0x468] sm:%s173] %v464
                %v466 = vld [vmem:[%s180 + $0x8e0] sm:%s173]
                %467 = vst [vmem:[%s181 + $0x470] sm:%s173] %v466
                %v468 = vld [vmem:[%s180 + $0x8f0] sm:%s173]
                %469 = vst [vmem:[%s181 + $0x478] sm:%s173] %v468
                %v470 = vld [vmem:[%s180 + $0x900] sm:%s173]
                %471 = vst [vmem:[%s181 + $0x480] sm:%s173] %v470
                %v472 = vld [vmem:[%s180 + $0x910] sm:%s173]
                %473 = vst [vmem:[%s181 + $0x488] sm:%s173] %v472
                %v474 = vld [vmem:[%s180 + $0x920] sm:%s173]
                %475 = vst [vmem:[%s181 + $0x490] sm:%s173] %v474
                %v476 = vld [vmem:[%s180 + $0x930] sm:%s173]
                %477 = vst [vmem:[%s181 + $0x498] sm:%s173] %v476
                %v478 = vld [vmem:[%s180 + $0x940] sm:%s173]
                %479 = vst [vmem:[%s181 + $0x4a0] sm:%s173] %v478
                %v480 = vld [vmem:[%s180 + $0x950] sm:%s173]
                %481 = vst [vmem:[%s181 + $0x4a8] sm:%s173] %v480
                %v482 = vld [vmem:[%s180 + $0x960] sm:%s173]
                %483 = vst [vmem:[%s181 + $0x4b0] sm:%s173] %v482
                %v484 = vld [vmem:[%s180 + $0x970] sm:%s173]
                %485 = vst [vmem:[%s181 + $0x4b8] sm:%s173] %v484
                %v486 = vld [vmem:[%s180 + $0x980] sm:%s173]
                %487 = vst [vmem:[%s181 + $0x4c0] sm:%s173] %v486
                %v488 = vld [vmem:[%s180 + $0x990] sm:%s173]
                %489 = vst [vmem:[%s181 + $0x4c8] sm:%s173] %v488
                %v490 = vld [vmem:[%s180 + $0x9a0] sm:%s173]
                %491 = vst [vmem:[%s181 + $0x4d0] sm:%s173] %v490
                %v492 = vld [vmem:[%s180 + $0x9b0] sm:%s173]
                %493 = vst [vmem:[%s181 + $0x4d8] sm:%s173] %v492
                %v494 = vld [vmem:[%s180 + $0x9c0] sm:%s173]
                %495 = vst [vmem:[%s181 + $0x4e0] sm:%s173] %v494
                %v496 = vld [vmem:[%s180 + $0x9d0] sm:%s173]
                %497 = vst [vmem:[%s181 + $0x4e8] sm:%s173] %v496
                %v498 = vld [vmem:[%s180 + $0x9e0] sm:%s173]
                %499 = vst [vmem:[%s181 + $0x4f0] sm:%s173] %v498
                %v500 = vld [vmem:[%s180 + $0x9f0] sm:%s173]
                %501 = vst [vmem:[%s181 + $0x4f8] sm:%s173] %v500
                %v502 = vld [vmem:[%s180 + $0xa00] sm:%s173]
                %503 = vst [vmem:[%s181 + $0x500] sm:%s173] %v502
                %v504 = vld [vmem:[%s180 + $0xa10] sm:%s173]
                %505 = vst [vmem:[%s181 + $0x508] sm:%s173] %v504
                %v506 = vld [vmem:[%s180 + $0xa20] sm:%s173]
                %507 = vst [vmem:[%s181 + $0x510] sm:%s173] %v506
                %v508 = vld [vmem:[%s180 + $0xa30] sm:%s173]
                %509 = vst [vmem:[%s181 + $0x518] sm:%s173] %v508
                %v510 = vld [vmem:[%s180 + $0xa40] sm:%s173]
                %511 = vst [vmem:[%s181 + $0x520] sm:%s173] %v510
                %v512 = vld [vmem:[%s180 + $0xa50] sm:%s173]
                %513 = vst [vmem:[%s181 + $0x528] sm:%s173] %v512
                %v514 = vld [vmem:[%s180 + $0xa60] sm:%s173]
                %515 = vst [vmem:[%s181 + $0x530] sm:%s173] %v514
                %v516 = vld [vmem:[%s180 + $0xa70] sm:%s173]
                %517 = vst [vmem:[%s181 + $0x538] sm:%s173] %v516
                %v518 = vld [vmem:[%s180 + $0xa80] sm:%s173]
                %519 = vst [vmem:[%s181 + $0x540] sm:%s173] %v518
                %v520 = vld [vmem:[%s180 + $0xa90] sm:%s173]
                %521 = vst [vmem:[%s181 + $0x548] sm:%s173] %v520
                %v522 = vld [vmem:[%s180 + $0xaa0] sm:%s173]
                %523 = vst [vmem:[%s181 + $0x550] sm:%s173] %v522
                %v524 = vld [vmem:[%s180 + $0xab0] sm:%s173]
                %525 = vst [vmem:[%s181 + $0x558] sm:%s173] %v524
                %v526 = vld [vmem:[%s180 + $0xac0] sm:%s173]
                %527 = vst [vmem:[%s181 + $0x560] sm:%s173] %v526
                %v528 = vld [vmem:[%s180 + $0xad0] sm:%s173]
                %529 = vst [vmem:[%s181 + $0x568] sm:%s173] %v528
                %v530 = vld [vmem:[%s180 + $0xae0] sm:%s173]
                %531 = vst [vmem:[%s181 + $0x570] sm:%s173] %v530
                %v532 = vld [vmem:[%s180 + $0xaf0] sm:%s173]
                %533 = vst [vmem:[%s181 + $0x578] sm:%s173] %v532
                %v534 = vld [vmem:[%s180 + $0xb00] sm:%s173]
                %535 = vst [vmem:[%s181 + $0x580] sm:%s173] %v534
                %v536 = vld [vmem:[%s180 + $0xb10] sm:%s173]
                %537 = vst [vmem:[%s181 + $0x588] sm:%s173] %v536
                %v538 = vld [vmem:[%s180 + $0xb20] sm:%s173]
                %539 = vst [vmem:[%s181 + $0x590] sm:%s173] %v538
                %v540 = vld [vmem:[%s180 + $0xb30] sm:%s173]
                %541 = vst [vmem:[%s181 + $0x598] sm:%s173] %v540
                %v542 = vld [vmem:[%s180 + $0xb40] sm:%s173]
                %543 = vst [vmem:[%s181 + $0x5a0] sm:%s173] %v542
                %v544 = vld [vmem:[%s180 + $0xb50] sm:%s173]
                %545 = vst [vmem:[%s181 + $0x5a8] sm:%s173] %v544
                %v546 = vld [vmem:[%s180 + $0xb60] sm:%s173]
                %547 = vst [vmem:[%s181 + $0x5b0] sm:%s173] %v546
                %v548 = vld [vmem:[%s180 + $0xb70] sm:%s173]
                %549 = vst [vmem:[%s181 + $0x5b8] sm:%s173] %v548
                %v550 = vld [vmem:[%s180 + $0xb80] sm:%s173]
                %551 = vst [vmem:[%s181 + $0x5c0] sm:%s173] %v550
                %v552 = vld [vmem:[%s180 + $0xb90] sm:%s173]
                %553 = vst [vmem:[%s181 + $0x5c8] sm:%s173] %v552
                %v554 = vld [vmem:[%s180 + $0xba0] sm:%s173]
                %555 = vst [vmem:[%s181 + $0x5d0] sm:%s173] %v554
                %v556 = vld [vmem:[%s180 + $0xbb0] sm:%s173]
                %557 = vst [vmem:[%s181 + $0x5d8] sm:%s173] %v556
                %v558 = vld [vmem:[%s180 + $0xbc0] sm:%s173]
                %559 = vst [vmem:[%s181 + $0x5e0] sm:%s173] %v558
                %v560 = vld [vmem:[%s180 + $0xbd0] sm:%s173]
                %561 = vst [vmem:[%s181 + $0x5e8] sm:%s173] %v560
                %v562 = vld [vmem:[%s180 + $0xbe0] sm:%s173]
                %563 = vst [vmem:[%s181 + $0x5f0] sm:%s173] %v562
                %v564 = vld [vmem:[%s180 + $0xbf0] sm:%s173]
                %565 = vst [vmem:[%s181 + $0x5f8] sm:%s173] %v564
                %v566 = vld [vmem:[%s180 + $0xc00] sm:%s173]
                %567 = vst [vmem:[%s181 + $0x600] sm:%s173] %v566
                %v568 = vld [vmem:[%s180 + $0xc10] sm:%s173]
                %569 = vst [vmem:[%s181 + $0x608] sm:%s173] %v568
                %v570 = vld [vmem:[%s180 + $0xc20] sm:%s173]
                %571 = vst [vmem:[%s181 + $0x610] sm:%s173] %v570
                %v572 = vld [vmem:[%s180 + $0xc30] sm:%s173]
                %573 = vst [vmem:[%s181 + $0x618] sm:%s173] %v572
                %v574 = vld [vmem:[%s180 + $0xc40] sm:%s173]
                %575 = vst [vmem:[%s181 + $0x620] sm:%s173] %v574
                %v576 = vld [vmem:[%s180 + $0xc50] sm:%s173]
                %577 = vst [vmem:[%s181 + $0x628] sm:%s173] %v576
                %v578 = vld [vmem:[%s180 + $0xc60] sm:%s173]
                %579 = vst [vmem:[%s181 + $0x630] sm:%s173] %v578
                %v580 = vld [vmem:[%s180 + $0xc70] sm:%s173]
                %581 = vst [vmem:[%s181 + $0x638] sm:%s173] %v580
                %v582 = vld [vmem:[%s180 + $0xc80] sm:%s173]
                %583 = vst [vmem:[%s181 + $0x640] sm:%s173] %v582
                %v584 = vld [vmem:[%s180 + $0xc90] sm:%s173]
                %585 = vst [vmem:[%s181 + $0x648] sm:%s173] %v584
                %v586 = vld [vmem:[%s180 + $0xca0] sm:%s173]
                %587 = vst [vmem:[%s181 + $0x650] sm:%s173] %v586
                %v588 = vld [vmem:[%s180 + $0xcb0] sm:%s173]
                %589 = vst [vmem:[%s181 + $0x658] sm:%s173] %v588
                %v590 = vld [vmem:[%s180 + $0xcc0] sm:%s173]
                %591 = vst [vmem:[%s181 + $0x660] sm:%s173] %v590
                %v592 = vld [vmem:[%s180 + $0xcd0] sm:%s173]
                %593 = vst [vmem:[%s181 + $0x668] sm:%s173] %v592
                %v594 = vld [vmem:[%s180 + $0xce0] sm:%s173]
                %595 = vst [vmem:[%s181 + $0x670] sm:%s173] %v594
                %v596 = vld [vmem:[%s180 + $0xcf0] sm:%s173]
                %597 = vst [vmem:[%s181 + $0x678] sm:%s173] %v596
                %v598 = vld [vmem:[%s180 + $0xd00] sm:%s173]
                %599 = vst [vmem:[%s181 + $0x680] sm:%s173] %v598
                %v600 = vld [vmem:[%s180 + $0xd10] sm:%s173]
                %601 = vst [vmem:[%s181 + $0x688] sm:%s173] %v600
                %v602 = vld [vmem:[%s180 + $0xd20] sm:%s173]
                %603 = vst [vmem:[%s181 + $0x690] sm:%s173] %v602
                %v604 = vld [vmem:[%s180 + $0xd30] sm:%s173]
                %605 = vst [vmem:[%s181 + $0x698] sm:%s173] %v604
                %v606 = vld [vmem:[%s180 + $0xd40] sm:%s173]
                %607 = vst [vmem:[%s181 + $0x6a0] sm:%s173] %v606
                %v608 = vld [vmem:[%s180 + $0xd50] sm:%s173]
                %609 = vst [vmem:[%s181 + $0x6a8] sm:%s173] %v608
                %v610 = vld [vmem:[%s180 + $0xd60] sm:%s173]
                %611 = vst [vmem:[%s181 + $0x6b0] sm:%s173] %v610
                %v612 = vld [vmem:[%s180 + $0xd70] sm:%s173]
                %613 = vst [vmem:[%s181 + $0x6b8] sm:%s173] %v612
                %v614 = vld [vmem:[%s180 + $0xd80] sm:%s173]
                %615 = vst [vmem:[%s181 + $0x6c0] sm:%s173] %v614
                %v616 = vld [vmem:[%s180 + $0xd90] sm:%s173]
                %617 = vst [vmem:[%s181 + $0x6c8] sm:%s173] %v616
                %v618 = vld [vmem:[%s180 + $0xda0] sm:%s173]
                %619 = vst [vmem:[%s181 + $0x6d0] sm:%s173] %v618
                %v620 = vld [vmem:[%s180 + $0xdb0] sm:%s173]
                %621 = vst [vmem:[%s181 + $0x6d8] sm:%s173] %v620
                %v622 = vld [vmem:[%s180 + $0xdc0] sm:%s173]
                %623 = vst [vmem:[%s181 + $0x6e0] sm:%s173] %v622
                %v624 = vld [vmem:[%s180 + $0xdd0] sm:%s173]
                %625 = vst [vmem:[%s181 + $0x6e8] sm:%s173] %v624
                %v626 = vld [vmem:[%s180 + $0xde0] sm:%s173]
                %627 = vst [vmem:[%s181 + $0x6f0] sm:%s173] %v626
                %v628 = vld [vmem:[%s180 + $0xdf0] sm:%s173]
                %629 = vst [vmem:[%s181 + $0x6f8] sm:%s173] %v628
                %v630 = vld [vmem:[%s180 + $0xe00] sm:%s173]
                %631 = vst [vmem:[%s181 + $0x700] sm:%s173] %v630
                %v632 = vld [vmem:[%s180 + $0xe10] sm:%s173]
                %633 = vst [vmem:[%s181 + $0x708] sm:%s173] %v632
                %v634 = vld [vmem:[%s180 + $0xe20] sm:%s173]
                %635 = vst [vmem:[%s181 + $0x710] sm:%s173] %v634
                %v636 = vld [vmem:[%s180 + $0xe30] sm:%s173]
                %637 = vst [vmem:[%s181 + $0x718] sm:%s173] %v636
                %v638 = vld [vmem:[%s180 + $0xe40] sm:%s173]
                %639 = vst [vmem:[%s181 + $0x720] sm:%s173] %v638
                %v640 = vld [vmem:[%s180 + $0xe50] sm:%s173]
                %641 = vst [vmem:[%s181 + $0x728] sm:%s173] %v640
                %v642 = vld [vmem:[%s180 + $0xe60] sm:%s173]
                %643 = vst [vmem:[%s181 + $0x730] sm:%s173] %v642
                %v644 = vld [vmem:[%s180 + $0xe70] sm:%s173]
                %645 = vst [vmem:[%s181 + $0x738] sm:%s173] %v644
                %v646 = vld [vmem:[%s180 + $0xe80] sm:%s173]
                %647 = vst [vmem:[%s181 + $0x740] sm:%s173] %v646
                %v648 = vld [vmem:[%s180 + $0xe90] sm:%s173]
                %649 = vst [vmem:[%s181 + $0x748] sm:%s173] %v648
                %v650 = vld [vmem:[%s180 + $0xea0] sm:%s173]
                %651 = vst [vmem:[%s181 + $0x750] sm:%s173] %v650
                %v652 = vld [vmem:[%s180 + $0xeb0] sm:%s173]
                %653 = vst [vmem:[%s181 + $0x758] sm:%s173] %v652
                %v654 = vld [vmem:[%s180 + $0xec0] sm:%s173]
                %655 = vst [vmem:[%s181 + $0x760] sm:%s173] %v654
                %v656 = vld [vmem:[%s180 + $0xed0] sm:%s173]
                %657 = vst [vmem:[%s181 + $0x768] sm:%s173] %v656
                %v658 = vld [vmem:[%s180 + $0xee0] sm:%s173]
                %659 = vst [vmem:[%s181 + $0x770] sm:%s173] %v658
                %v660 = vld [vmem:[%s180 + $0xef0] sm:%s173]
                %661 = vst [vmem:[%s181 + $0x778] sm:%s173] %v660
                %v662 = vld [vmem:[%s180 + $0xf00] sm:%s173]
                %663 = vst [vmem:[%s181 + $0x780] sm:%s173] %v662
                %v664 = vld [vmem:[%s180 + $0xf10] sm:%s173]
                %665 = vst [vmem:[%s181 + $0x788] sm:%s173] %v664
                %v666 = vld [vmem:[%s180 + $0xf20] sm:%s173]
                %667 = vst [vmem:[%s181 + $0x790] sm:%s173] %v666
                %v668 = vld [vmem:[%s180 + $0xf30] sm:%s173]
                %669 = vst [vmem:[%s181 + $0x798] sm:%s173] %v668
                %v670 = vld [vmem:[%s180 + $0xf40] sm:%s173]
                %671 = vst [vmem:[%s181 + $0x7a0] sm:%s173] %v670
                %v672 = vld [vmem:[%s180 + $0xf50] sm:%s173]
                %673 = vst [vmem:[%s181 + $0x7a8] sm:%s173] %v672
                %v674 = vld [vmem:[%s180 + $0xf60] sm:%s173]
                %675 = vst [vmem:[%s181 + $0x7b0] sm:%s173] %v674
                %v676 = vld [vmem:[%s180 + $0xf70] sm:%s173]
                %677 = vst [vmem:[%s181 + $0x7b8] sm:%s173] %v676
                %v678 = vld [vmem:[%s180 + $0xf80] sm:%s173]
                %679 = vst [vmem:[%s181 + $0x7c0] sm:%s173] %v678
                %v680 = vld [vmem:[%s180 + $0xf90] sm:%s173]
                %681 = vst [vmem:[%s181 + $0x7c8] sm:%s173] %v680
                %v682 = vld [vmem:[%s180 + $0xfa0] sm:%s173]
                %683 = vst [vmem:[%s181 + $0x7d0] sm:%s173] %v682
                %v684 = vld [vmem:[%s180 + $0xfb0] sm:%s173]
                %685 = vst [vmem:[%s181 + $0x7d8] sm:%s173] %v684
                %v686 = vld [vmem:[%s180 + $0xfc0] sm:%s173]
                %687 = vst [vmem:[%s181 + $0x7e0] sm:%s173] %v686
                %v688 = vld [vmem:[%s180 + $0xfd0] sm:%s173]
                %689 = vst [vmem:[%s181 + $0x7e8] sm:%s173] %v688
                %v690 = vld [vmem:[%s180 + $0xfe0] sm:%s173]
                %691 = vst [vmem:[%s181 + $0x7f0] sm:%s173] %v690
                %v692 = vld [vmem:[%s180 + $0xff0] sm:%s173]
                %693 = vst [vmem:[%s181 + $0x7f8] sm:%s173] %v692
                %v694 = vld [vmem:[%s180 + $0x1000] sm:%s173]
                %695 = vst [vmem:[%s181 + $0x800] sm:%s173] %v694
                %v696 = vld [vmem:[%s180 + $0x1010] sm:%s173]
                %697 = vst [vmem:[%s181 + $0x808] sm:%s173] %v696
                %v698 = vld [vmem:[%s180 + $0x1020] sm:%s173]
                %699 = vst [vmem:[%s181 + $0x810] sm:%s173] %v698
                %v700 = vld [vmem:[%s180 + $0x1030] sm:%s173]
                %701 = vst [vmem:[%s181 + $0x818] sm:%s173] %v700
                %v702 = vld [vmem:[%s180 + $0x1040] sm:%s173]
                %703 = vst [vmem:[%s181 + $0x820] sm:%s173] %v702
                %v704 = vld [vmem:[%s180 + $0x1050] sm:%s173]
                %705 = vst [vmem:[%s181 + $0x828] sm:%s173] %v704
                %v706 = vld [vmem:[%s180 + $0x1060] sm:%s173]
                %707 = vst [vmem:[%s181 + $0x830] sm:%s173] %v706
                %v708 = vld [vmem:[%s180 + $0x1070] sm:%s173]
                %709 = vst [vmem:[%s181 + $0x838] sm:%s173] %v708
                %v710 = vld [vmem:[%s180 + $0x1080] sm:%s173]
                %711 = vst [vmem:[%s181 + $0x840] sm:%s173] %v710
                %v712 = vld [vmem:[%s180 + $0x1090] sm:%s173]
                %713 = vst [vmem:[%s181 + $0x848] sm:%s173] %v712
                %v714 = vld [vmem:[%s180 + $0x10a0] sm:%s173]
                %715 = vst [vmem:[%s181 + $0x850] sm:%s173] %v714
                %v716 = vld [vmem:[%s180 + $0x10b0] sm:%s173]
                %717 = vst [vmem:[%s181 + $0x858] sm:%s173] %v716
                %v718 = vld [vmem:[%s180 + $0x10c0] sm:%s173]
                %719 = vst [vmem:[%s181 + $0x860] sm:%s173] %v718
                %v720 = vld [vmem:[%s180 + $0x10d0] sm:%s173]
                %721 = vst [vmem:[%s181 + $0x868] sm:%s173] %v720
                %v722 = vld [vmem:[%s180 + $0x10e0] sm:%s173]
                %723 = vst [vmem:[%s181 + $0x870] sm:%s173] %v722
                %v724 = vld [vmem:[%s180 + $0x10f0] sm:%s173]
                %725 = vst [vmem:[%s181 + $0x878] sm:%s173] %v724
                %v726 = vld [vmem:[%s180 + $0x1100] sm:%s173]
                %727 = vst [vmem:[%s181 + $0x880] sm:%s173] %v726
                %v728 = vld [vmem:[%s180 + $0x1110] sm:%s173]
                %729 = vst [vmem:[%s181 + $0x888] sm:%s173] %v728
                %v730 = vld [vmem:[%s180 + $0x1120] sm:%s173]
                %731 = vst [vmem:[%s181 + $0x890] sm:%s173] %v730
                %v732 = vld [vmem:[%s180 + $0x1130] sm:%s173]
                %733 = vst [vmem:[%s181 + $0x898] sm:%s173] %v732
                %v734 = vld [vmem:[%s180 + $0x1140] sm:%s173]
                %735 = vst [vmem:[%s181 + $0x8a0] sm:%s173] %v734
                %v736 = vld [vmem:[%s180 + $0x1150] sm:%s173]
                %737 = vst [vmem:[%s181 + $0x8a8] sm:%s173] %v736
                %v738 = vld [vmem:[%s180 + $0x1160] sm:%s173]
                %739 = vst [vmem:[%s181 + $0x8b0] sm:%s173] %v738
                %v740 = vld [vmem:[%s180 + $0x1170] sm:%s173]
                %741 = vst [vmem:[%s181 + $0x8b8] sm:%s173] %v740
                %v742 = vld [vmem:[%s180 + $0x1180] sm:%s173]
                %743 = vst [vmem:[%s181 + $0x8c0] sm:%s173] %v742
                %v744 = vld [vmem:[%s180 + $0x1190] sm:%s173]
                %745 = vst [vmem:[%s181 + $0x8c8] sm:%s173] %v744
                %v746 = vld [vmem:[%s180 + $0x11a0] sm:%s173]
                %747 = vst [vmem:[%s181 + $0x8d0] sm:%s173] %v746
                %v748 = vld [vmem:[%s180 + $0x11b0] sm:%s173]
                %749 = vst [vmem:[%s181 + $0x8d8] sm:%s173] %v748
                %v750 = vld [vmem:[%s180 + $0x11c0] sm:%s173]
                %751 = vst [vmem:[%s181 + $0x8e0] sm:%s173] %v750
                %v752 = vld [vmem:[%s180 + $0x11d0] sm:%s173]
                %753 = vst [vmem:[%s181 + $0x8e8] sm:%s173] %v752
                %v754 = vld [vmem:[%s180 + $0x11e0] sm:%s173]
                %755 = vst [vmem:[%s181 + $0x8f0] sm:%s173] %v754
                %v756 = vld [vmem:[%s180 + $0x11f0] sm:%s173]
                %757 = vst [vmem:[%s181 + $0x8f8] sm:%s173] %v756
              $region41: #{auxiliary_convolutions.5} parent=35 // loop_footer
                %s179 = sadd.s32 1, %s175
              $region42: #{auxiliary_convolutions.5} parent=35 // loop_footer_branch
                %174 = sbr.rel target = $region38
              $region43: #{auxiliary_convolutions.5} parent=35 // loop_exit
                _
            $region36: #{auxiliary_convolutions.5} parent=27 // pred_fallthru
              _
          $region28: #{auxiliary_convolutions.5} parent=23 // pred_fallthru
            _
          %2534 = vnop
        $region24: #{auxiliary_convolutions.5} parent=19 // pred_fallthru
          _
        // Predicated region
        $region73: #{auxiliary_convolutions.5} parent=19 // pred_check
          %p2535 = pneg %p93
        $region74: #{auxiliary_convolutions.5} parent=19 // pred_check_branch
          %2537 = sbr.rel (%p2535) target = $region76
        $region75: #{auxiliary_convolutions.5} parent=19 // pred_region
          %s2538 = smul.u32 2, %s17
          %p2539 = scmp.lt.s32.totalorder %s2538, 3
          %s2540 = scalar_select %p2539, %s2538, 3
          %s2541 = scalar_lea.vmem %s2, %s2540
          %s2542 = smul.u32 2, %s17
        $region76: #{auxiliary_convolutions.5} parent=19 // pred_fallthru
          _
      $region20: #{auxiliary_convolutions.5} parent=5 // pred_fallthru
        _
      %p2543 = scmp.le.s32.totalorder 1, %s9
      %p2544 = scmp.lt.s32.totalorder %s9, 3
      %p2545 = pnand %p2543, %p2544
      %p2546 = pneg %p2545
      // Predicated region
      $region77: #{auxiliary_convolutions.5} parent=5 // pred_check
        _
      $region78: #{auxiliary_convolutions.5} parent=5 // pred_check_branch
        %2548 = sbr.rel (%p2545) target = $region80
      $region79: #{auxiliary_convolutions.5} parent=5 // pred_region
        %s2549 = ssub.s32 %s9, 1
        %s2550 = sand.u32 %s60, 1
        %s2551 = sand.u32 %s60, 1
        %s2552 = smul.addr %s2551, 2304
        %s2553 = scalar_lea.vmem [#allocation2], %s2552
        // Predicated region
        $region81: #{auxiliary_convolutions.5} parent=79 // pred_check
          %p2554 = pneg %p73
        $region82: #{auxiliary_convolutions.5} parent=79 // pred_check_branch
          %2556 = sbr.rel (%p2554) target = $region84
        $region83: #{auxiliary_convolutions.5} parent=79 // pred_region
          _
        $region84: #{auxiliary_convolutions.5} parent=79 // pred_fallthru
          _
        %s2557 = smul.u32 4, %s18
        %p2558 = scmp.lt.s32.totalorder %s2557, 3
        %s2559 = scalar_select %p2558, %s2557, 3
        %s2560 = smul.addr %s2559, 18
        %s2561 = smul.addr %s2560, 4
        %s2562 = scalar_lea.vmem %s0, %s2561
        %p2563 = pneg %p47
        %p2564 = pneg %p44
        %s2565 = sand.u32 %s60, 1
        %s2566 = sand.u32 %s60, 1
        %s2567 = smul.addr %s2566, 2304
        %s2568 = scalar_lea.vmem [#allocation2], %s2567
        %p2569 = pneg %p73
        %p2570 = pneg %p70
        %s2571 = smul.u32 2, %s19
        %p2572 = scmp.lt.s32.totalorder %s2571, 3
        %s2573 = scalar_select %p2572, %s2571, 3
        %s2574 = scalar_lea.vmem %s2, %s2573
        %p2575 = pneg %p99
        %p2576 = pneg %p96
        %p2577 = pneg %p127
        %p2578 = pneg %p124
        %s2579 = sand.u32 %s114, 1
        %s2580 = sand.u32 %s114, 1
        %s2581 = smul.addr %s2580, 64
        %s2582 = scalar_lea.vmem [#allocation3], %s2581
        %s2583 = smul.u32 4, %s18
        %p2584 = scmp.lt.s32.totalorder %s2583, 3
        %s2585 = scalar_select %p2584, %s2583, 3
        %s2586 = smul.addr %s2585, 18
        %s2587 = smul.addr %s2586, 4
        %s2588 = scalar_lea.vmem %s0, %s2587
        %s2589 = smul.u32 4, %s18
        %s2590 = smul.u32 2, %s19
        %s2591 = smul.u32 2, %s19
        %p2592 = scmp.lt.s32.totalorder %s2591, 3
        %s2593 = scalar_select %p2592, %s2591, 3
        %s2594 = scalar_lea.vmem %s2, %s2593
        %s2595 = smul.u32 2, %s19
        %s2596 = smul.u32 4, %s18
        %s2597 = smul.u32 2, %s19
        %v2598 = vld [vmem:[%s2588] sm:$0xff]
        %v2599 = vld [vmem:[%s2588 + $0x8] sm:$0xff]
        %v2600 = vld [vmem:[%s2588 + $0x10] sm:$0xff]
        %v2601 = vld [vmem:[%s2588 + $0x18] sm:$0xff]
        %v2602 = vld [vmem:[%s2588 + $0x20] sm:$0xff]
        %v2603 = vld [vmem:[%s2588 + $0x28] sm:$0xff]
        %v2604 = vld [vmem:[%s2588 + $0x30] sm:$0xff]
        %v2605 = vld [vmem:[%s2588 + $0x38] sm:$0xff]
        %v2606 = vld [vmem:[%s2588 + $0x40] sm:$0xff]
        %v2607 = vld [vmem:[%s2588 + $0x48] sm:$0xff]
        %v2608 = vld [vmem:[%s2588 + $0x50] sm:$0xff]
        %v2609 = vld [vmem:[%s2588 + $0x58] sm:$0xff]
        %v2610 = vld [vmem:[%s2588 + $0x60] sm:$0xff]
        %v2611 = vld [vmem:[%s2588 + $0x68] sm:$0xff]
        %v2612 = vld [vmem:[%s2588 + $0x70] sm:$0xff]
        %v2613 = vld [vmem:[%s2588 + $0x78] sm:$0xff]
        %v2614 = vld [vmem:[%s2588 + $0x80] sm:$0xff]
        %v2615 = vld [vmem:[%s2588 + $0x88] sm:$0xff]
        %v2616 = vld [vmem:[%s2588 + $0x90] sm:$0xff]
        %v2617 = vld [vmem:[%s2588 + $0x98] sm:$0xff]
        %v2618 = vld [vmem:[%s2588 + $0xa0] sm:$0xff]
        %v2619 = vld [vmem:[%s2588 + $0xa8] sm:$0xff]
        %v2620 = vld [vmem:[%s2588 + $0xb0] sm:$0xff]
        %v2621 = vld [vmem:[%s2588 + $0xb8] sm:$0xff]
        %v2622 = vld [vmem:[%s2588 + $0xc0] sm:$0xff]
        %v2623 = vld [vmem:[%s2588 + $0xc8] sm:$0xff]
        %v2624 = vld [vmem:[%s2588 + $0xd0] sm:$0xff]
        %v2625 = vld [vmem:[%s2588 + $0xd8] sm:$0xff]
        %v2626 = vld [vmem:[%s2588 + $0xe0] sm:$0xff]
        %v2627 = vld [vmem:[%s2588 + $0xe8] sm:$0xff]
        %v2628 = vld [vmem:[%s2588 + $0xf0] sm:$0xff]
        %v2629 = vld [vmem:[%s2588 + $0xf8] sm:$0xff]
        %v2630 = vld [vmem:[%s2588 + $0x100] sm:$0xff]
        %v2631 = vld [vmem:[%s2588 + $0x108] sm:$0xff]
        %v2632 = vld [vmem:[%s2588 + $0x110] sm:$0xff]
        %v2633 = vld [vmem:[%s2588 + $0x118] sm:$0xff]
        %v2634 = vld [vmem:[%s2553] sm:$0xff]
        %v2635 = vld [vmem:[%s2553 + $0x8] sm:$0xff]
        %v2636 = vld [vmem:[%s2553 + $0x10] sm:$0xff]
        %v2637 = vld [vmem:[%s2553 + $0x18] sm:$0xff]
        %v2638 = vld [vmem:[%s2553 + $0x20] sm:$0xff]
        %v2639 = vld [vmem:[%s2553 + $0x28] sm:$0xff]
        %v2640 = vld [vmem:[%s2553 + $0x30] sm:$0xff]
        %v2641 = vld [vmem:[%s2553 + $0x38] sm:$0xff]
        %v2642 = vld [vmem:[%s2553 + $0x40] sm:$0xff]
        %v2643 = vld [vmem:[%s2553 + $0x48] sm:$0xff]
        %v2644 = vld [vmem:[%s2553 + $0x50] sm:$0xff]
        %v2645 = vld [vmem:[%s2553 + $0x58] sm:$0xff]
        %v2646 = vld [vmem:[%s2553 + $0x60] sm:$0xff]
        %v2647 = vld [vmem:[%s2553 + $0x68] sm:$0xff]
        %v2648 = vld [vmem:[%s2553 + $0x70] sm:$0xff]
        %v2649 = vld [vmem:[%s2553 + $0x78] sm:$0xff]
        %v2650 = vld [vmem:[%s2553 + $0x80] sm:$0xff]
        %v2651 = vld [vmem:[%s2553 + $0x88] sm:$0xff]
        %v2652 = vld [vmem:[%s2553 + $0x90] sm:$0xff]
        %v2653 = vld [vmem:[%s2553 + $0x98] sm:$0xff]
        %v2654 = vld [vmem:[%s2553 + $0xa0] sm:$0xff]
        %v2655 = vld [vmem:[%s2553 + $0xa8] sm:$0xff]
        %v2656 = vld [vmem:[%s2553 + $0xb0] sm:$0xff]
        %v2657 = vld [vmem:[%s2553 + $0xb8] sm:$0xff]
        %v2658 = vld [vmem:[%s2553 + $0xc0] sm:$0xff]
        %v2659 = vld [vmem:[%s2553 + $0xc8] sm:$0xff]
        %v2660 = vld [vmem:[%s2553 + $0xd0] sm:$0xff]
        %v2661 = vld [vmem:[%s2553 + $0xd8] sm:$0xff]
        %v2662 = vld [vmem:[%s2553 + $0xe0] sm:$0xff]
        %v2663 = vld [vmem:[%s2553 + $0xe8] sm:$0xff]
        %v2664 = vld [vmem:[%s2553 + $0xf0] sm:$0xff]
        %v2665 = vld [vmem:[%s2553 + $0xf8] sm:$0xff]
        %v2666 = vld [vmem:[%s2553 + $0x100] sm:$0xff]
        %v2667 = vld [vmem:[%s2553 + $0x108] sm:$0xff]
        %v2668 = vld [vmem:[%s2553 + $0x110] sm:$0xff]
        %v2669 = vld [vmem:[%s2553 + $0x118] sm:$0xff]
        %v2670 = vld [vmem:[%s2553 + $0x120] sm:$0xff]
        %v2671 = vld [vmem:[%s2553 + $0x128] sm:$0xff]
        %v2672 = vld [vmem:[%s2553 + $0x130] sm:$0xff]
        %v2673 = vld [vmem:[%s2553 + $0x138] sm:$0xff]
        %v2674 = vld [vmem:[%s2553 + $0x140] sm:$0xff]
        %v2675 = vld [vmem:[%s2553 + $0x148] sm:$0xff]
        %v2676 = vld [vmem:[%s2553 + $0x150] sm:$0xff]
        %v2677 = vld [vmem:[%s2553 + $0x158] sm:$0xff]
        %v2678 = vld [vmem:[%s2553 + $0x160] sm:$0xff]
        %v2679 = vld [vmem:[%s2553 + $0x168] sm:$0xff]
        %v2680 = vld [vmem:[%s2553 + $0x170] sm:$0xff]
        %v2681 = vld [vmem:[%s2553 + $0x178] sm:$0xff]
        %v2682 = vld [vmem:[%s2553 + $0x180] sm:$0xff]
        %v2683 = vld [vmem:[%s2553 + $0x188] sm:$0xff]
        %v2684 = vld [vmem:[%s2553 + $0x190] sm:$0xff]
        %v2685 = vld [vmem:[%s2553 + $0x198] sm:$0xff]
        %v2686 = vld [vmem:[%s2553 + $0x1a0] sm:$0xff]
        %v2687 = vld [vmem:[%s2553 + $0x1a8] sm:$0xff]
        %v2688 = vld [vmem:[%s2553 + $0x1b0] sm:$0xff]
        %v2689 = vld [vmem:[%s2553 + $0x1b8] sm:$0xff]
        %v2690 = vld [vmem:[%s2553 + $0x1c0] sm:$0xff]
        %v2691 = vld [vmem:[%s2553 + $0x1c8] sm:$0xff]
        %v2692 = vld [vmem:[%s2553 + $0x1d0] sm:$0xff]
        %v2693 = vld [vmem:[%s2553 + $0x1d8] sm:$0xff]
        %v2694 = vld [vmem:[%s2553 + $0x1e0] sm:$0xff]
        %v2695 = vld [vmem:[%s2553 + $0x1e8] sm:$0xff]
        %v2696 = vld [vmem:[%s2553 + $0x1f0] sm:$0xff]
        %v2697 = vld [vmem:[%s2553 + $0x1f8] sm:$0xff]
        %v2698 = vld [vmem:[%s2553 + $0x200] sm:$0xff]
        %v2699 = vld [vmem:[%s2553 + $0x208] sm:$0xff]
        %v2700 = vld [vmem:[%s2553 + $0x210] sm:$0xff]
        %v2701 = vld [vmem:[%s2553 + $0x218] sm:$0xff]
        %v2702 = vld [vmem:[%s2553 + $0x220] sm:$0xff]
        %v2703 = vld [vmem:[%s2553 + $0x228] sm:$0xff]
        %v2704 = vld [vmem:[%s2553 + $0x230] sm:$0xff]
        %v2705 = vld [vmem:[%s2553 + $0x238] sm:$0xff]
        %v2706 = vld [vmem:[%s2553 + $0x240] sm:$0xff]
        %v2707 = vld [vmem:[%s2553 + $0x248] sm:$0xff]
        %v2708 = vld [vmem:[%s2553 + $0x250] sm:$0xff]
        %v2709 = vld [vmem:[%s2553 + $0x258] sm:$0xff]
        %v2710 = vld [vmem:[%s2553 + $0x260] sm:$0xff]
        %v2711 = vld [vmem:[%s2553 + $0x268] sm:$0xff]
        %v2712 = vld [vmem:[%s2553 + $0x270] sm:$0xff]
        %v2713 = vld [vmem:[%s2553 + $0x278] sm:$0xff]
        %v2714 = vld [vmem:[%s2553 + $0x280] sm:$0xff]
        %v2715 = vld [vmem:[%s2553 + $0x288] sm:$0xff]
        %v2716 = vld [vmem:[%s2553 + $0x290] sm:$0xff]
        %v2717 = vld [vmem:[%s2553 + $0x298] sm:$0xff]
        %v2718 = vld [vmem:[%s2553 + $0x2a0] sm:$0xff]
        %v2719 = vld [vmem:[%s2553 + $0x2a8] sm:$0xff]
        %v2720 = vld [vmem:[%s2553 + $0x2b0] sm:$0xff]
        %v2721 = vld [vmem:[%s2553 + $0x2b8] sm:$0xff]
        %v2722 = vld [vmem:[%s2553 + $0x2c0] sm:$0xff]
        %v2723 = vld [vmem:[%s2553 + $0x2c8] sm:$0xff]
        %v2724 = vld [vmem:[%s2553 + $0x2d0] sm:$0xff]
        %v2725 = vld [vmem:[%s2553 + $0x2d8] sm:$0xff]
        %v2726 = vld [vmem:[%s2553 + $0x2e0] sm:$0xff]
        %v2727 = vld [vmem:[%s2553 + $0x2e8] sm:$0xff]
        %v2728 = vld [vmem:[%s2553 + $0x2f0] sm:$0xff]
        %v2729 = vld [vmem:[%s2553 + $0x2f8] sm:$0xff]
        %v2730 = vld [vmem:[%s2553 + $0x300] sm:$0xff]
        %v2731 = vld [vmem:[%s2553 + $0x308] sm:$0xff]
        %v2732 = vld [vmem:[%s2553 + $0x310] sm:$0xff]
        %v2733 = vld [vmem:[%s2553 + $0x318] sm:$0xff]
        %v2734 = vld [vmem:[%s2553 + $0x320] sm:$0xff]
        %v2735 = vld [vmem:[%s2553 + $0x328] sm:$0xff]
        %v2736 = vld [vmem:[%s2553 + $0x330] sm:$0xff]
        %v2737 = vld [vmem:[%s2553 + $0x338] sm:$0xff]
        %v2738 = vld [vmem:[%s2553 + $0x340] sm:$0xff]
        %v2739 = vld [vmem:[%s2553 + $0x348] sm:$0xff]
        %v2740 = vld [vmem:[%s2553 + $0x350] sm:$0xff]
        %v2741 = vld [vmem:[%s2553 + $0x358] sm:$0xff]
        %v2742 = vld [vmem:[%s2553 + $0x360] sm:$0xff]
        %v2743 = vld [vmem:[%s2553 + $0x368] sm:$0xff]
        %v2744 = vld [vmem:[%s2553 + $0x370] sm:$0xff]
        %v2745 = vld [vmem:[%s2553 + $0x378] sm:$0xff]
        %v2746 = vld [vmem:[%s2553 + $0x380] sm:$0xff]
        %v2747 = vld [vmem:[%s2553 + $0x388] sm:$0xff]
        %v2748 = vld [vmem:[%s2553 + $0x390] sm:$0xff]
        %v2749 = vld [vmem:[%s2553 + $0x398] sm:$0xff]
        %v2750 = vld [vmem:[%s2553 + $0x3a0] sm:$0xff]
        %v2751 = vld [vmem:[%s2553 + $0x3a8] sm:$0xff]
        %v2752 = vld [vmem:[%s2553 + $0x3b0] sm:$0xff]
        %v2753 = vld [vmem:[%s2553 + $0x3b8] sm:$0xff]
        %v2754 = vld [vmem:[%s2553 + $0x3c0] sm:$0xff]
        %v2755 = vld [vmem:[%s2553 + $0x3c8] sm:$0xff]
        %v2756 = vld [vmem:[%s2553 + $0x3d0] sm:$0xff]
        %v2757 = vld [vmem:[%s2553 + $0x3d8] sm:$0xff]
        %v2758 = vld [vmem:[%s2553 + $0x3e0] sm:$0xff]
        %v2759 = vld [vmem:[%s2553 + $0x3e8] sm:$0xff]
        %v2760 = vld [vmem:[%s2553 + $0x3f0] sm:$0xff]
        %v2761 = vld [vmem:[%s2553 + $0x3f8] sm:$0xff]
        %v2762 = vld [vmem:[%s2553 + $0x400] sm:$0xff]
        %v2763 = vld [vmem:[%s2553 + $0x408] sm:$0xff]
        %v2764 = vld [vmem:[%s2553 + $0x410] sm:$0xff]
        %v2765 = vld [vmem:[%s2553 + $0x418] sm:$0xff]
        %v2766 = vld [vmem:[%s2553 + $0x420] sm:$0xff]
        %v2767 = vld [vmem:[%s2553 + $0x428] sm:$0xff]
        %v2768 = vld [vmem:[%s2553 + $0x430] sm:$0xff]
        %v2769 = vld [vmem:[%s2553 + $0x438] sm:$0xff]
        %v2770 = vld [vmem:[%s2553 + $0x440] sm:$0xff]
        %v2771 = vld [vmem:[%s2553 + $0x448] sm:$0xff]
        %v2772 = vld [vmem:[%s2553 + $0x450] sm:$0xff]
        %v2773 = vld [vmem:[%s2553 + $0x458] sm:$0xff]
        %v2774 = vld [vmem:[%s2553 + $0x460] sm:$0xff]
        %v2775 = vld [vmem:[%s2553 + $0x468] sm:$0xff]
        %v2776 = vld [vmem:[%s2553 + $0x470] sm:$0xff]
        %v2777 = vld [vmem:[%s2553 + $0x478] sm:$0xff]
        %v2778 = vld [vmem:[%s2553 + $0x480] sm:$0xff]
        %v2779 = vld [vmem:[%s2553 + $0x488] sm:$0xff]
        %v2780 = vld [vmem:[%s2553 + $0x490] sm:$0xff]
        %v2781 = vld [vmem:[%s2553 + $0x498] sm:$0xff]
        %v2782 = vld [vmem:[%s2553 + $0x4a0] sm:$0xff]
        %v2783 = vld [vmem:[%s2553 + $0x4a8] sm:$0xff]
        %v2784 = vld [vmem:[%s2553 + $0x4b0] sm:$0xff]
        %v2785 = vld [vmem:[%s2553 + $0x4b8] sm:$0xff]
        %v2786 = vld [vmem:[%s2553 + $0x4c0] sm:$0xff]
        %v2787 = vld [vmem:[%s2553 + $0x4c8] sm:$0xff]
        %v2788 = vld [vmem:[%s2553 + $0x4d0] sm:$0xff]
        %v2789 = vld [vmem:[%s2553 + $0x4d8] sm:$0xff]
        %v2790 = vld [vmem:[%s2553 + $0x4e0] sm:$0xff]
        %v2791 = vld [vmem:[%s2553 + $0x4e8] sm:$0xff]
        %v2792 = vld [vmem:[%s2553 + $0x4f0] sm:$0xff]
        %v2793 = vld [vmem:[%s2553 + $0x4f8] sm:$0xff]
        %v2794 = vld [vmem:[%s2553 + $0x500] sm:$0xff]
        %v2795 = vld [vmem:[%s2553 + $0x508] sm:$0xff]
        %v2796 = vld [vmem:[%s2553 + $0x510] sm:$0xff]
        %v2797 = vld [vmem:[%s2553 + $0x518] sm:$0xff]
        %v2798 = vld [vmem:[%s2553 + $0x520] sm:$0xff]
        %v2799 = vld [vmem:[%s2553 + $0x528] sm:$0xff]
        %v2800 = vld [vmem:[%s2553 + $0x530] sm:$0xff]
        %v2801 = vld [vmem:[%s2553 + $0x538] sm:$0xff]
        %v2802 = vld [vmem:[%s2553 + $0x540] sm:$0xff]
        %v2803 = vld [vmem:[%s2553 + $0x548] sm:$0xff]
        %v2804 = vld [vmem:[%s2553 + $0x550] sm:$0xff]
        %v2805 = vld [vmem:[%s2553 + $0x558] sm:$0xff]
        %v2806 = vld [vmem:[%s2553 + $0x560] sm:$0xff]
        %v2807 = vld [vmem:[%s2553 + $0x568] sm:$0xff]
        %v2808 = vld [vmem:[%s2553 + $0x570] sm:$0xff]
        %v2809 = vld [vmem:[%s2553 + $0x578] sm:$0xff]
        %v2810 = vld [vmem:[%s2553 + $0x580] sm:$0xff]
        %v2811 = vld [vmem:[%s2553 + $0x588] sm:$0xff]
        %v2812 = vld [vmem:[%s2553 + $0x590] sm:$0xff]
        %v2813 = vld [vmem:[%s2553 + $0x598] sm:$0xff]
        %v2814 = vld [vmem:[%s2553 + $0x5a0] sm:$0xff]
        %v2815 = vld [vmem:[%s2553 + $0x5a8] sm:$0xff]
        %v2816 = vld [vmem:[%s2553 + $0x5b0] sm:$0xff]
        %v2817 = vld [vmem:[%s2553 + $0x5b8] sm:$0xff]
        %v2818 = vld [vmem:[%s2553 + $0x5c0] sm:$0xff]
        %v2819 = vld [vmem:[%s2553 + $0x5c8] sm:$0xff]
        %v2820 = vld [vmem:[%s2553 + $0x5d0] sm:$0xff]
        %v2821 = vld [vmem:[%s2553 + $0x5d8] sm:$0xff]
        %v2822 = vld [vmem:[%s2553 + $0x5e0] sm:$0xff]
        %v2823 = vld [vmem:[%s2553 + $0x5e8] sm:$0xff]
        %v2824 = vld [vmem:[%s2553 + $0x5f0] sm:$0xff]
        %v2825 = vld [vmem:[%s2553 + $0x5f8] sm:$0xff]
        %v2826 = vld [vmem:[%s2553 + $0x600] sm:$0xff]
        %v2827 = vld [vmem:[%s2553 + $0x608] sm:$0xff]
        %v2828 = vld [vmem:[%s2553 + $0x610] sm:$0xff]
        %v2829 = vld [vmem:[%s2553 + $0x618] sm:$0xff]
        %v2830 = vld [vmem:[%s2553 + $0x620] sm:$0xff]
        %v2831 = vld [vmem:[%s2553 + $0x628] sm:$0xff]
        %v2832 = vld [vmem:[%s2553 + $0x630] sm:$0xff]
        %v2833 = vld [vmem:[%s2553 + $0x638] sm:$0xff]
        %v2834 = vld [vmem:[%s2553 + $0x640] sm:$0xff]
        %v2835 = vld [vmem:[%s2553 + $0x648] sm:$0xff]
        %v2836 = vld [vmem:[%s2553 + $0x650] sm:$0xff]
        %v2837 = vld [vmem:[%s2553 + $0x658] sm:$0xff]
        %v2838 = vld [vmem:[%s2553 + $0x660] sm:$0xff]
        %v2839 = vld [vmem:[%s2553 + $0x668] sm:$0xff]
        %v2840 = vld [vmem:[%s2553 + $0x670] sm:$0xff]
        %v2841 = vld [vmem:[%s2553 + $0x678] sm:$0xff]
        %v2842 = vld [vmem:[%s2553 + $0x680] sm:$0xff]
        %v2843 = vld [vmem:[%s2553 + $0x688] sm:$0xff]
        %v2844 = vld [vmem:[%s2553 + $0x690] sm:$0xff]
        %v2845 = vld [vmem:[%s2553 + $0x698] sm:$0xff]
        %v2846 = vld [vmem:[%s2553 + $0x6a0] sm:$0xff]
        %v2847 = vld [vmem:[%s2553 + $0x6a8] sm:$0xff]
        %v2848 = vld [vmem:[%s2553 + $0x6b0] sm:$0xff]
        %v2849 = vld [vmem:[%s2553 + $0x6b8] sm:$0xff]
        %v2850 = vld [vmem:[%s2553 + $0x6c0] sm:$0xff]
        %v2851 = vld [vmem:[%s2553 + $0x6c8] sm:$0xff]
        %v2852 = vld [vmem:[%s2553 + $0x6d0] sm:$0xff]
        %v2853 = vld [vmem:[%s2553 + $0x6d8] sm:$0xff]
        %v2854 = vld [vmem:[%s2553 + $0x6e0] sm:$0xff]
        %v2855 = vld [vmem:[%s2553 + $0x6e8] sm:$0xff]
        %v2856 = vld [vmem:[%s2553 + $0x6f0] sm:$0xff]
        %v2857 = vld [vmem:[%s2553 + $0x6f8] sm:$0xff]
        %v2858 = vld [vmem:[%s2553 + $0x700] sm:$0xff]
        %v2859 = vld [vmem:[%s2553 + $0x708] sm:$0xff]
        %v2860 = vld [vmem:[%s2553 + $0x710] sm:$0xff]
        %v2861 = vld [vmem:[%s2553 + $0x718] sm:$0xff]
        %v2862 = vld [vmem:[%s2553 + $0x720] sm:$0xff]
        %v2863 = vld [vmem:[%s2553 + $0x728] sm:$0xff]
        %v2864 = vld [vmem:[%s2553 + $0x730] sm:$0xff]
        %v2865 = vld [vmem:[%s2553 + $0x738] sm:$0xff]
        %v2866 = vld [vmem:[%s2553 + $0x740] sm:$0xff]
        %v2867 = vld [vmem:[%s2553 + $0x748] sm:$0xff]
        %v2868 = vld [vmem:[%s2553 + $0x750] sm:$0xff]
        %v2869 = vld [vmem:[%s2553 + $0x758] sm:$0xff]
        %v2870 = vld [vmem:[%s2553 + $0x760] sm:$0xff]
        %v2871 = vld [vmem:[%s2553 + $0x768] sm:$0xff]
        %v2872 = vld [vmem:[%s2553 + $0x770] sm:$0xff]
        %v2873 = vld [vmem:[%s2553 + $0x778] sm:$0xff]
        %v2874 = vld [vmem:[%s2553 + $0x780] sm:$0xff]
        %v2875 = vld [vmem:[%s2553 + $0x788] sm:$0xff]
        %v2876 = vld [vmem:[%s2553 + $0x790] sm:$0xff]
        %v2877 = vld [vmem:[%s2553 + $0x798] sm:$0xff]
        %v2878 = vld [vmem:[%s2553 + $0x7a0] sm:$0xff]
        %v2879 = vld [vmem:[%s2553 + $0x7a8] sm:$0xff]
        %v2880 = vld [vmem:[%s2553 + $0x7b0] sm:$0xff]
        %v2881 = vld [vmem:[%s2553 + $0x7b8] sm:$0xff]
        %v2882 = vld [vmem:[%s2553 + $0x7c0] sm:$0xff]
        %v2883 = vld [vmem:[%s2553 + $0x7c8] sm:$0xff]
        %v2884 = vld [vmem:[%s2553 + $0x7d0] sm:$0xff]
        %v2885 = vld [vmem:[%s2553 + $0x7d8] sm:$0xff]
        %v2886 = vld [vmem:[%s2553 + $0x7e0] sm:$0xff]
        %v2887 = vld [vmem:[%s2553 + $0x7e8] sm:$0xff]
        %v2888 = vld [vmem:[%s2553 + $0x7f0] sm:$0xff]
        %v2889 = vld [vmem:[%s2553 + $0x7f8] sm:$0xff]
        %v2890 = vld [vmem:[%s2553 + $0x800] sm:$0xff]
        %v2891 = vld [vmem:[%s2553 + $0x808] sm:$0xff]
        %v2892 = vld [vmem:[%s2553 + $0x810] sm:$0xff]
        %v2893 = vld [vmem:[%s2553 + $0x818] sm:$0xff]
        %v2894 = vld [vmem:[%s2553 + $0x820] sm:$0xff]
        %v2895 = vld [vmem:[%s2553 + $0x828] sm:$0xff]
        %v2896 = vld [vmem:[%s2553 + $0x830] sm:$0xff]
        %v2897 = vld [vmem:[%s2553 + $0x838] sm:$0xff]
        %v2898 = vld [vmem:[%s2553 + $0x840] sm:$0xff]
        %v2899 = vld [vmem:[%s2553 + $0x848] sm:$0xff]
        %v2900 = vld [vmem:[%s2553 + $0x850] sm:$0xff]
        %v2901 = vld [vmem:[%s2553 + $0x858] sm:$0xff]
        %v2902 = vld [vmem:[%s2553 + $0x860] sm:$0xff]
        %v2903 = vld [vmem:[%s2553 + $0x868] sm:$0xff]
        %v2904 = vld [vmem:[%s2553 + $0x870] sm:$0xff]
        %v2905 = vld [vmem:[%s2553 + $0x878] sm:$0xff]
        %v2906 = vld [vmem:[%s2553 + $0x880] sm:$0xff]
        %v2907 = vld [vmem:[%s2553 + $0x888] sm:$0xff]
        %v2908 = vld [vmem:[%s2553 + $0x890] sm:$0xff]
        %v2909 = vld [vmem:[%s2553 + $0x898] sm:$0xff]
        %v2910 = vld [vmem:[%s2553 + $0x8a0] sm:$0xff]
        %v2911 = vld [vmem:[%s2553 + $0x8a8] sm:$0xff]
        %v2912 = vld [vmem:[%s2553 + $0x8b0] sm:$0xff]
        %v2913 = vld [vmem:[%s2553 + $0x8b8] sm:$0xff]
        %v2914 = vld [vmem:[%s2553 + $0x8c0] sm:$0xff]
        %v2915 = vld [vmem:[%s2553 + $0x8c8] sm:$0xff]
        %v2916 = vld [vmem:[%s2553 + $0x8d0] sm:$0xff]
        %v2917 = vld [vmem:[%s2553 + $0x8d8] sm:$0xff]
        %v2918 = vld [vmem:[%s2553 + $0x8e0] sm:$0xff]
        %v2919 = vld [vmem:[%s2553 + $0x8e8] sm:$0xff]
        %v2920 = vld [vmem:[%s2553 + $0x8f0] sm:$0xff]
        %v2921 = vld [vmem:[%s2553 + $0x8f8] sm:$0xff]
        %v2922 = vld [vmem:[%s2594] sm:$0x3]
        %v2924 = vperm.slane %v2922, 0
        %v2925 = vperm.slane %v2922, 1
        %v2964 = vunpack.c.l.b16 %v2598
        %v2965 = vunpack.c.h.b16 %v2598
        %v2966 = vunpack.c.l.b16 %v2599
        %v2967 = vunpack.c.h.b16 %v2599
        %v2968 = vunpack.c.l.b16 %v2600
        %v2969 = vunpack.c.h.b16 %v2600
        %v2970 = vunpack.c.l.b16 %v2601
        %v2971 = vunpack.c.h.b16 %v2601
        %v2972 = vunpack.c.l.b16 %v2602
        %v2973 = vunpack.c.h.b16 %v2602
        %v2974 = vunpack.c.l.b16 %v2603
        %v2975 = vunpack.c.h.b16 %v2603
        %v2976 = vunpack.c.l.b16 %v2604
        %v2977 = vunpack.c.h.b16 %v2604
        %v2978 = vunpack.c.l.b16 %v2605
        %v2979 = vunpack.c.h.b16 %v2605
        %v2980 = vunpack.c.l.b16 %v2606
        %v2981 = vunpack.c.h.b16 %v2606
        %v2982 = vunpack.c.l.b16 %v2607
        %v2983 = vunpack.c.h.b16 %v2607
        %v2984 = vunpack.c.l.b16 %v2608
        %v2985 = vunpack.c.h.b16 %v2608
        %v2986 = vunpack.c.l.b16 %v2609
        %v2987 = vunpack.c.h.b16 %v2609
        %v2988 = vunpack.c.l.b16 %v2610
        %v2989 = vunpack.c.h.b16 %v2610
        %v2990 = vunpack.c.l.b16 %v2611
        %v2991 = vunpack.c.h.b16 %v2611
        %v2992 = vunpack.c.l.b16 %v2612
        %v2993 = vunpack.c.h.b16 %v2612
        %v2994 = vunpack.c.l.b16 %v2613
        %v2995 = vunpack.c.h.b16 %v2613
        %v2996 = vunpack.c.l.b16 %v2614
        %v2997 = vunpack.c.h.b16 %v2614
        %v2998 = vunpack.c.l.b16 %v2615
        %v2999 = vunpack.c.h.b16 %v2615
        %v3000 = vunpack.c.l.b16 %v2616
        %v3001 = vunpack.c.h.b16 %v2616
        %v3002 = vunpack.c.l.b16 %v2617
        %v3003 = vunpack.c.h.b16 %v2617
        %v3004 = vunpack.c.l.b16 %v2618
        %v3005 = vunpack.c.h.b16 %v2618
        %v3006 = vunpack.c.l.b16 %v2619
        %v3007 = vunpack.c.h.b16 %v2619
        %v3008 = vunpack.c.l.b16 %v2620
        %v3009 = vunpack.c.h.b16 %v2620
        %v3010 = vunpack.c.l.b16 %v2621
        %v3011 = vunpack.c.h.b16 %v2621
        %v3012 = vunpack.c.l.b16 %v2622
        %v3013 = vunpack.c.h.b16 %v2622
        %v3014 = vunpack.c.l.b16 %v2623
        %v3015 = vunpack.c.h.b16 %v2623
        %v3016 = vunpack.c.l.b16 %v2624
        %v3017 = vunpack.c.h.b16 %v2624
        %v3018 = vunpack.c.l.b16 %v2625
        %v3019 = vunpack.c.h.b16 %v2625
        %v3020 = vunpack.c.l.b16 %v2626
        %v3021 = vunpack.c.h.b16 %v2626
        %v3022 = vunpack.c.l.b16 %v2627
        %v3023 = vunpack.c.h.b16 %v2627
        %v3024 = vunpack.c.l.b16 %v2628
        %v3025 = vunpack.c.h.b16 %v2628
        %v3026 = vunpack.c.l.b16 %v2629
        %v3027 = vunpack.c.h.b16 %v2629
        %v3028 = vunpack.c.l.b16 %v2630
        %v3029 = vunpack.c.h.b16 %v2630
        %v3030 = vunpack.c.l.b16 %v2631
        %v3031 = vunpack.c.h.b16 %v2631
        %v3032 = vunpack.c.l.b16 %v2632
        %v3033 = vunpack.c.h.b16 %v2632
        %v3034 = vunpack.c.l.b16 %v2633
        %v3035 = vunpack.c.h.b16 %v2633
        %v3036 = vpack.c.b16 %v2982, %v2964
        %v3037 = vpack.c.b16 %v2983, %v2965
        %v3038 = vpack.c.b16 %v2984, %v2966
        %v3039 = vpack.c.b16 %v2985, %v2967
        %v3040 = vpack.c.b16 %v2986, %v2968
        %v3041 = vpack.c.b16 %v2987, %v2969
        %v3042 = vpack.c.b16 %v2988, %v2970
        %v3043 = vpack.c.b16 %v2989, %v2971
        %v3044 = vpack.c.b16 %v2990, %v2972
        %v3045 = vpack.c.b16 %v2991, %v2973
        %v3046 = vpack.c.b16 %v2992, %v2974
        %v3047 = vpack.c.b16 %v2993, %v2975
        %v3048 = vpack.c.b16 %v2994, %v2976
        %v3049 = vpack.c.b16 %v2995, %v2977
        %v3050 = vpack.c.b16 %v2996, %v2978
        %v3051 = vpack.c.b16 %v2997, %v2979
        %v3052 = vpack.c.b16 %v2998, %v2980
        %v3053 = vpack.c.b16 %v2999, %v2981
        %v3054 = vpack.c.b16 %v3018, %v3000
        %v3055 = vpack.c.b16 %v3019, %v3001
        %v3056 = vpack.c.b16 %v3020, %v3002
        %v3057 = vpack.c.b16 %v3021, %v3003
        %v3058 = vpack.c.b16 %v3022, %v3004
        %v3059 = vpack.c.b16 %v3023, %v3005
        %v3060 = vpack.c.b16 %v3024, %v3006
        %v3061 = vpack.c.b16 %v3025, %v3007
        %v3062 = vpack.c.b16 %v3026, %v3008
        %v3063 = vpack.c.b16 %v3027, %v3009
        %v3064 = vpack.c.b16 %v3028, %v3010
        %v3065 = vpack.c.b16 %v3029, %v3011
        %v3066 = vpack.c.b16 %v3030, %v3012
        %v3067 = vpack.c.b16 %v3031, %v3013
        %v3068 = vpack.c.b16 %v3032, %v3014
        %v3069 = vpack.c.b16 %v3033, %v3015
        %v3070 = vpack.c.b16 %v3034, %v3016
        %v3071 = vpack.c.b16 %v3035, %v3017
        %v3396 = vunpack.c.l.b16 %v2634
        %v3397 = vunpack.c.h.b16 %v2634
        %v3398 = vunpack.c.l.b16 %v2635
        %v3399 = vunpack.c.h.b16 %v2635
        %v3400 = vunpack.c.l.b16 %v2636
        %v3401 = vunpack.c.h.b16 %v2636
        %v3402 = vunpack.c.l.b16 %v2637
        %v3403 = vunpack.c.h.b16 %v2637
        %v3404 = vunpack.c.l.b16 %v2638
        %v3405 = vunpack.c.h.b16 %v2638
        %v3406 = vunpack.c.l.b16 %v2639
        %v3407 = vunpack.c.h.b16 %v2639
        %v3408 = vunpack.c.l.b16 %v2640
        %v3409 = vunpack.c.h.b16 %v2640
        %v3410 = vunpack.c.l.b16 %v2641
        %v3411 = vunpack.c.h.b16 %v2641
        %v3412 = vunpack.c.l.b16 %v2642
        %v3413 = vunpack.c.h.b16 %v2642
        %v3414 = vunpack.c.l.b16 %v2643
        %v3415 = vunpack.c.h.b16 %v2643
        %v3416 = vunpack.c.l.b16 %v2644
        %v3417 = vunpack.c.h.b16 %v2644
        %v3418 = vunpack.c.l.b16 %v2645
        %v3419 = vunpack.c.h.b16 %v2645
        %v3420 = vunpack.c.l.b16 %v2646
        %v3421 = vunpack.c.h.b16 %v2646
        %v3422 = vunpack.c.l.b16 %v2647
        %v3423 = vunpack.c.h.b16 %v2647
        %v3424 = vunpack.c.l.b16 %v2648
        %v3425 = vunpack.c.h.b16 %v2648
        %v3426 = vunpack.c.l.b16 %v2649
        %v3427 = vunpack.c.h.b16 %v2649
        %v3428 = vunpack.c.l.b16 %v2650
        %v3429 = vunpack.c.h.b16 %v2650
        %v3430 = vunpack.c.l.b16 %v2651
        %v3431 = vunpack.c.h.b16 %v2651
        %v3432 = vunpack.c.l.b16 %v2652
        %v3433 = vunpack.c.h.b16 %v2652
        %v3434 = vunpack.c.l.b16 %v2653
        %v3435 = vunpack.c.h.b16 %v2653
        %v3436 = vunpack.c.l.b16 %v2654
        %v3437 = vunpack.c.h.b16 %v2654
        %v3438 = vunpack.c.l.b16 %v2655
        %v3439 = vunpack.c.h.b16 %v2655
        %v3440 = vunpack.c.l.b16 %v2656
        %v3441 = vunpack.c.h.b16 %v2656
        %v3442 = vunpack.c.l.b16 %v2657
        %v3443 = vunpack.c.h.b16 %v2657
        %v3444 = vunpack.c.l.b16 %v2658
        %v3445 = vunpack.c.h.b16 %v2658
        %v3446 = vunpack.c.l.b16 %v2659
        %v3447 = vunpack.c.h.b16 %v2659
        %v3448 = vunpack.c.l.b16 %v2660
        %v3449 = vunpack.c.h.b16 %v2660
        %v3450 = vunpack.c.l.b16 %v2661
        %v3451 = vunpack.c.h.b16 %v2661
        %v3452 = vunpack.c.l.b16 %v2662
        %v3453 = vunpack.c.h.b16 %v2662
        %v3454 = vunpack.c.l.b16 %v2663
        %v3455 = vunpack.c.h.b16 %v2663
        %v3456 = vunpack.c.l.b16 %v2664
        %v3457 = vunpack.c.h.b16 %v2664
        %v3458 = vunpack.c.l.b16 %v2665
        %v3459 = vunpack.c.h.b16 %v2665
        %v3460 = vunpack.c.l.b16 %v2666
        %v3461 = vunpack.c.h.b16 %v2666
        %v3462 = vunpack.c.l.b16 %v2667
        %v3463 = vunpack.c.h.b16 %v2667
        %v3464 = vunpack.c.l.b16 %v2668
        %v3465 = vunpack.c.h.b16 %v2668
        %v3466 = vunpack.c.l.b16 %v2669
        %v3467 = vunpack.c.h.b16 %v2669
        %v3468 = vunpack.c.l.b16 %v2670
        %v3469 = vunpack.c.h.b16 %v2670
        %v3470 = vunpack.c.l.b16 %v2671
        %v3471 = vunpack.c.h.b16 %v2671
        %v3472 = vunpack.c.l.b16 %v2672
        %v3473 = vunpack.c.h.b16 %v2672
        %v3474 = vunpack.c.l.b16 %v2673
        %v3475 = vunpack.c.h.b16 %v2673
        %v3476 = vunpack.c.l.b16 %v2674
        %v3477 = vunpack.c.h.b16 %v2674
        %v3478 = vunpack.c.l.b16 %v2675
        %v3479 = vunpack.c.h.b16 %v2675
        %v3480 = vunpack.c.l.b16 %v2676
        %v3481 = vunpack.c.h.b16 %v2676
        %v3482 = vunpack.c.l.b16 %v2677
        %v3483 = vunpack.c.h.b16 %v2677
        %v3484 = vunpack.c.l.b16 %v2678
        %v3485 = vunpack.c.h.b16 %v2678
        %v3486 = vunpack.c.l.b16 %v2679
        %v3487 = vunpack.c.h.b16 %v2679
        %v3488 = vunpack.c.l.b16 %v2680
        %v3489 = vunpack.c.h.b16 %v2680
        %v3490 = vunpack.c.l.b16 %v2681
        %v3491 = vunpack.c.h.b16 %v2681
        %v3492 = vunpack.c.l.b16 %v2682
        %v3493 = vunpack.c.h.b16 %v2682
        %v3494 = vunpack.c.l.b16 %v2683
        %v3495 = vunpack.c.h.b16 %v2683
        %v3496 = vunpack.c.l.b16 %v2684
        %v3497 = vunpack.c.h.b16 %v2684
        %v3498 = vunpack.c.l.b16 %v2685
        %v3499 = vunpack.c.h.b16 %v2685
        %v3500 = vunpack.c.l.b16 %v2686
        %v3501 = vunpack.c.h.b16 %v2686
        %v3502 = vunpack.c.l.b16 %v2687
        %v3503 = vunpack.c.h.b16 %v2687
        %v3504 = vunpack.c.l.b16 %v2688
        %v3505 = vunpack.c.h.b16 %v2688
        %v3506 = vunpack.c.l.b16 %v2689
        %v3507 = vunpack.c.h.b16 %v2689
        %v3508 = vunpack.c.l.b16 %v2690
        %v3509 = vunpack.c.h.b16 %v2690
        %v3510 = vunpack.c.l.b16 %v2691
        %v3511 = vunpack.c.h.b16 %v2691
        %v3512 = vunpack.c.l.b16 %v2692
        %v3513 = vunpack.c.h.b16 %v2692
        %v3514 = vunpack.c.l.b16 %v2693
        %v3515 = vunpack.c.h.b16 %v2693
        %v3516 = vunpack.c.l.b16 %v2694
        %v3517 = vunpack.c.h.b16 %v2694
        %v3518 = vunpack.c.l.b16 %v2695
        %v3519 = vunpack.c.h.b16 %v2695
        %v3520 = vunpack.c.l.b16 %v2696
        %v3521 = vunpack.c.h.b16 %v2696
        %v3522 = vunpack.c.l.b16 %v2697
        %v3523 = vunpack.c.h.b16 %v2697
        %v3524 = vunpack.c.l.b16 %v2698
        %v3525 = vunpack.c.h.b16 %v2698
        %v3526 = vunpack.c.l.b16 %v2699
        %v3527 = vunpack.c.h.b16 %v2699
        %v3528 = vunpack.c.l.b16 %v2700
        %v3529 = vunpack.c.h.b16 %v2700
        %v3530 = vunpack.c.l.b16 %v2701
        %v3531 = vunpack.c.h.b16 %v2701
        %v3532 = vunpack.c.l.b16 %v2702
        %v3533 = vunpack.c.h.b16 %v2702
        %v3534 = vunpack.c.l.b16 %v2703
        %v3535 = vunpack.c.h.b16 %v2703
        %v3536 = vunpack.c.l.b16 %v2704
        %v3537 = vunpack.c.h.b16 %v2704
        %v3538 = vunpack.c.l.b16 %v2705
        %v3539 = vunpack.c.h.b16 %v2705
        %v3540 = vunpack.c.l.b16 %v2706
        %v3541 = vunpack.c.h.b16 %v2706
        %v3542 = vunpack.c.l.b16 %v2707
        %v3543 = vunpack.c.h.b16 %v2707
        %v3544 = vunpack.c.l.b16 %v2708
        %v3545 = vunpack.c.h.b16 %v2708
        %v3546 = vunpack.c.l.b16 %v2709
        %v3547 = vunpack.c.h.b16 %v2709
        %v3548 = vunpack.c.l.b16 %v2710
        %v3549 = vunpack.c.h.b16 %v2710
        %v3550 = vunpack.c.l.b16 %v2711
        %v3551 = vunpack.c.h.b16 %v2711
        %v3552 = vunpack.c.l.b16 %v2712
        %v3553 = vunpack.c.h.b16 %v2712
        %v3554 = vunpack.c.l.b16 %v2713
        %v3555 = vunpack.c.h.b16 %v2713
        %v3556 = vunpack.c.l.b16 %v2714
        %v3557 = vunpack.c.h.b16 %v2714
        %v3558 = vunpack.c.l.b16 %v2715
        %v3559 = vunpack.c.h.b16 %v2715
        %v3560 = vunpack.c.l.b16 %v2716
        %v3561 = vunpack.c.h.b16 %v2716
        %v3562 = vunpack.c.l.b16 %v2717
        %v3563 = vunpack.c.h.b16 %v2717
        %v3564 = vunpack.c.l.b16 %v2718
        %v3565 = vunpack.c.h.b16 %v2718
        %v3566 = vunpack.c.l.b16 %v2719
        %v3567 = vunpack.c.h.b16 %v2719
        %v3568 = vunpack.c.l.b16 %v2720
        %v3569 = vunpack.c.h.b16 %v2720
        %v3570 = vunpack.c.l.b16 %v2721
        %v3571 = vunpack.c.h.b16 %v2721
        %v3572 = vunpack.c.l.b16 %v2722
        %v3573 = vunpack.c.h.b16 %v2722
        %v3574 = vunpack.c.l.b16 %v2723
        %v3575 = vunpack.c.h.b16 %v2723
        %v3576 = vunpack.c.l.b16 %v2724
        %v3577 = vunpack.c.h.b16 %v2724
        %v3578 = vunpack.c.l.b16 %v2725
        %v3579 = vunpack.c.h.b16 %v2725
        %v3580 = vunpack.c.l.b16 %v2726
        %v3581 = vunpack.c.h.b16 %v2726
        %v3582 = vunpack.c.l.b16 %v2727
        %v3583 = vunpack.c.h.b16 %v2727
        %v3584 = vunpack.c.l.b16 %v2728
        %v3585 = vunpack.c.h.b16 %v2728
        %v3586 = vunpack.c.l.b16 %v2729
        %v3587 = vunpack.c.h.b16 %v2729
        %v3588 = vunpack.c.l.b16 %v2730
        %v3589 = vunpack.c.h.b16 %v2730
        %v3590 = vunpack.c.l.b16 %v2731
        %v3591 = vunpack.c.h.b16 %v2731
        %v3592 = vunpack.c.l.b16 %v2732
        %v3593 = vunpack.c.h.b16 %v2732
        %v3594 = vunpack.c.l.b16 %v2733
        %v3595 = vunpack.c.h.b16 %v2733
        %v3596 = vunpack.c.l.b16 %v2734
        %v3597 = vunpack.c.h.b16 %v2734
        %v3598 = vunpack.c.l.b16 %v2735
        %v3599 = vunpack.c.h.b16 %v2735
        %v3600 = vunpack.c.l.b16 %v2736
        %v3601 = vunpack.c.h.b16 %v2736
        %v3602 = vunpack.c.l.b16 %v2737
        %v3603 = vunpack.c.h.b16 %v2737
        %v3604 = vunpack.c.l.b16 %v2738
        %v3605 = vunpack.c.h.b16 %v2738
        %v3606 = vunpack.c.l.b16 %v2739
        %v3607 = vunpack.c.h.b16 %v2739
        %v3608 = vunpack.c.l.b16 %v2740
        %v3609 = vunpack.c.h.b16 %v2740
        %v3610 = vunpack.c.l.b16 %v2741
        %v3611 = vunpack.c.h.b16 %v2741
        %v3612 = vunpack.c.l.b16 %v2742
        %v3613 = vunpack.c.h.b16 %v2742
        %v3614 = vunpack.c.l.b16 %v2743
        %v3615 = vunpack.c.h.b16 %v2743
        %v3616 = vunpack.c.l.b16 %v2744
        %v3617 = vunpack.c.h.b16 %v2744
        %v3618 = vunpack.c.l.b16 %v2745
        %v3619 = vunpack.c.h.b16 %v2745
        %v3620 = vunpack.c.l.b16 %v2746
        %v3621 = vunpack.c.h.b16 %v2746
        %v3622 = vunpack.c.l.b16 %v2747
        %v3623 = vunpack.c.h.b16 %v2747
        %v3624 = vunpack.c.l.b16 %v2748
        %v3625 = vunpack.c.h.b16 %v2748
        %v3626 = vunpack.c.l.b16 %v2749
        %v3627 = vunpack.c.h.b16 %v2749
        %v3628 = vunpack.c.l.b16 %v2750
        %v3629 = vunpack.c.h.b16 %v2750
        %v3630 = vunpack.c.l.b16 %v2751
        %v3631 = vunpack.c.h.b16 %v2751
        %v3632 = vunpack.c.l.b16 %v2752
        %v3633 = vunpack.c.h.b16 %v2752
        %v3634 = vunpack.c.l.b16 %v2753
        %v3635 = vunpack.c.h.b16 %v2753
        %v3636 = vunpack.c.l.b16 %v2754
        %v3637 = vunpack.c.h.b16 %v2754
        %v3638 = vunpack.c.l.b16 %v2755
        %v3639 = vunpack.c.h.b16 %v2755
        %v3640 = vunpack.c.l.b16 %v2756
        %v3641 = vunpack.c.h.b16 %v2756
        %v3642 = vunpack.c.l.b16 %v2757
        %v3643 = vunpack.c.h.b16 %v2757
        %v3644 = vunpack.c.l.b16 %v2758
        %v3645 = vunpack.c.h.b16 %v2758
        %v3646 = vunpack.c.l.b16 %v2759
        %v3647 = vunpack.c.h.b16 %v2759
        %v3648 = vunpack.c.l.b16 %v2760
        %v3649 = vunpack.c.h.b16 %v2760
        %v3650 = vunpack.c.l.b16 %v2761
        %v3651 = vunpack.c.h.b16 %v2761
        %v3652 = vunpack.c.l.b16 %v2762
        %v3653 = vunpack.c.h.b16 %v2762
        %v3654 = vunpack.c.l.b16 %v2763
        %v3655 = vunpack.c.h.b16 %v2763
        %v3656 = vunpack.c.l.b16 %v2764
        %v3657 = vunpack.c.h.b16 %v2764
        %v3658 = vunpack.c.l.b16 %v2765
        %v3659 = vunpack.c.h.b16 %v2765
        %v3660 = vunpack.c.l.b16 %v2766
        %v3661 = vunpack.c.h.b16 %v2766
        %v3662 = vunpack.c.l.b16 %v2767
        %v3663 = vunpack.c.h.b16 %v2767
        %v3664 = vunpack.c.l.b16 %v2768
        %v3665 = vunpack.c.h.b16 %v2768
        %v3666 = vunpack.c.l.b16 %v2769
        %v3667 = vunpack.c.h.b16 %v2769
        %v3668 = vunpack.c.l.b16 %v2770
        %v3669 = vunpack.c.h.b16 %v2770
        %v3670 = vunpack.c.l.b16 %v2771
        %v3671 = vunpack.c.h.b16 %v2771
        %v3672 = vunpack.c.l.b16 %v2772
        %v3673 = vunpack.c.h.b16 %v2772
        %v3674 = vunpack.c.l.b16 %v2773
        %v3675 = vunpack.c.h.b16 %v2773
        %v3676 = vunpack.c.l.b16 %v2774
        %v3677 = vunpack.c.h.b16 %v2774
        %v3678 = vunpack.c.l.b16 %v2775
        %v3679 = vunpack.c.h.b16 %v2775
        %v3680 = vunpack.c.l.b16 %v2776
        %v3681 = vunpack.c.h.b16 %v2776
        %v3682 = vunpack.c.l.b16 %v2777
        %v3683 = vunpack.c.h.b16 %v2777
        %v3684 = vunpack.c.l.b16 %v2778
        %v3685 = vunpack.c.h.b16 %v2778
        %v3686 = vunpack.c.l.b16 %v2779
        %v3687 = vunpack.c.h.b16 %v2779
        %v3688 = vunpack.c.l.b16 %v2780
        %v3689 = vunpack.c.h.b16 %v2780
        %v3690 = vunpack.c.l.b16 %v2781
        %v3691 = vunpack.c.h.b16 %v2781
        %v3692 = vunpack.c.l.b16 %v2782
        %v3693 = vunpack.c.h.b16 %v2782
        %v3694 = vunpack.c.l.b16 %v2783
        %v3695 = vunpack.c.h.b16 %v2783
        %v3696 = vunpack.c.l.b16 %v2784
        %v3697 = vunpack.c.h.b16 %v2784
        %v3698 = vunpack.c.l.b16 %v2785
        %v3699 = vunpack.c.h.b16 %v2785
        %v3700 = vunpack.c.l.b16 %v2786
        %v3701 = vunpack.c.h.b16 %v2786
        %v3702 = vunpack.c.l.b16 %v2787
        %v3703 = vunpack.c.h.b16 %v2787
        %v3704 = vunpack.c.l.b16 %v2788
        %v3705 = vunpack.c.h.b16 %v2788
        %v3706 = vunpack.c.l.b16 %v2789
        %v3707 = vunpack.c.h.b16 %v2789
        %v3708 = vunpack.c.l.b16 %v2790
        %v3709 = vunpack.c.h.b16 %v2790
        %v3710 = vunpack.c.l.b16 %v2791
        %v3711 = vunpack.c.h.b16 %v2791
        %v3712 = vunpack.c.l.b16 %v2792
        %v3713 = vunpack.c.h.b16 %v2792
        %v3714 = vunpack.c.l.b16 %v2793
        %v3715 = vunpack.c.h.b16 %v2793
        %v3716 = vunpack.c.l.b16 %v2794
        %v3717 = vunpack.c.h.b16 %v2794
        %v3718 = vunpack.c.l.b16 %v2795
        %v3719 = vunpack.c.h.b16 %v2795
        %v3720 = vunpack.c.l.b16 %v2796
        %v3721 = vunpack.c.h.b16 %v2796
        %v3722 = vunpack.c.l.b16 %v2797
        %v3723 = vunpack.c.h.b16 %v2797
        %v3724 = vunpack.c.l.b16 %v2798
        %v3725 = vunpack.c.h.b16 %v2798
        %v3726 = vunpack.c.l.b16 %v2799
        %v3727 = vunpack.c.h.b16 %v2799
        %v3728 = vunpack.c.l.b16 %v2800
        %v3729 = vunpack.c.h.b16 %v2800
        %v3730 = vunpack.c.l.b16 %v2801
        %v3731 = vunpack.c.h.b16 %v2801
        %v3732 = vunpack.c.l.b16 %v2802
        %v3733 = vunpack.c.h.b16 %v2802
        %v3734 = vunpack.c.l.b16 %v2803
        %v3735 = vunpack.c.h.b16 %v2803
        %v3736 = vunpack.c.l.b16 %v2804
        %v3737 = vunpack.c.h.b16 %v2804
        %v3738 = vunpack.c.l.b16 %v2805
        %v3739 = vunpack.c.h.b16 %v2805
        %v3740 = vunpack.c.l.b16 %v2806
        %v3741 = vunpack.c.h.b16 %v2806
        %v3742 = vunpack.c.l.b16 %v2807
        %v3743 = vunpack.c.h.b16 %v2807
        %v3744 = vunpack.c.l.b16 %v2808
        %v3745 = vunpack.c.h.b16 %v2808
        %v3746 = vunpack.c.l.b16 %v2809
        %v3747 = vunpack.c.h.b16 %v2809
        %v3748 = vunpack.c.l.b16 %v2810
        %v3749 = vunpack.c.h.b16 %v2810
        %v3750 = vunpack.c.l.b16 %v2811
        %v3751 = vunpack.c.h.b16 %v2811
        %v3752 = vunpack.c.l.b16 %v2812
        %v3753 = vunpack.c.h.b16 %v2812
        %v3754 = vunpack.c.l.b16 %v2813
        %v3755 = vunpack.c.h.b16 %v2813
        %v3756 = vunpack.c.l.b16 %v2814
        %v3757 = vunpack.c.h.b16 %v2814
        %v3758 = vunpack.c.l.b16 %v2815
        %v3759 = vunpack.c.h.b16 %v2815
        %v3760 = vunpack.c.l.b16 %v2816
        %v3761 = vunpack.c.h.b16 %v2816
        %v3762 = vunpack.c.l.b16 %v2817
        %v3763 = vunpack.c.h.b16 %v2817
        %v3764 = vunpack.c.l.b16 %v2818
        %v3765 = vunpack.c.h.b16 %v2818
        %v3766 = vunpack.c.l.b16 %v2819
        %v3767 = vunpack.c.h.b16 %v2819
        %v3768 = vunpack.c.l.b16 %v2820
        %v3769 = vunpack.c.h.b16 %v2820
        %v3770 = vunpack.c.l.b16 %v2821
        %v3771 = vunpack.c.h.b16 %v2821
        %v3772 = vunpack.c.l.b16 %v2822
        %v3773 = vunpack.c.h.b16 %v2822
        %v3774 = vunpack.c.l.b16 %v2823
        %v3775 = vunpack.c.h.b16 %v2823
        %v3776 = vunpack.c.l.b16 %v2824
        %v3777 = vunpack.c.h.b16 %v2824
        %v3778 = vunpack.c.l.b16 %v2825
        %v3779 = vunpack.c.h.b16 %v2825
        %v3780 = vunpack.c.l.b16 %v2826
        %v3781 = vunpack.c.h.b16 %v2826
        %v3782 = vunpack.c.l.b16 %v2827
        %v3783 = vunpack.c.h.b16 %v2827
        %v3784 = vunpack.c.l.b16 %v2828
        %v3785 = vunpack.c.h.b16 %v2828
        %v3786 = vunpack.c.l.b16 %v2829
        %v3787 = vunpack.c.h.b16 %v2829
        %v3788 = vunpack.c.l.b16 %v2830
        %v3789 = vunpack.c.h.b16 %v2830
        %v3790 = vunpack.c.l.b16 %v2831
        %v3791 = vunpack.c.h.b16 %v2831
        %v3792 = vunpack.c.l.b16 %v2832
        %v3793 = vunpack.c.h.b16 %v2832
        %v3794 = vunpack.c.l.b16 %v2833
        %v3795 = vunpack.c.h.b16 %v2833
        %v3796 = vunpack.c.l.b16 %v2834
        %v3797 = vunpack.c.h.b16 %v2834
        %v3798 = vunpack.c.l.b16 %v2835
        %v3799 = vunpack.c.h.b16 %v2835
        %v3800 = vunpack.c.l.b16 %v2836
        %v3801 = vunpack.c.h.b16 %v2836
        %v3802 = vunpack.c.l.b16 %v2837
        %v3803 = vunpack.c.h.b16 %v2837
        %v3804 = vunpack.c.l.b16 %v2838
        %v3805 = vunpack.c.h.b16 %v2838
        %v3806 = vunpack.c.l.b16 %v2839
        %v3807 = vunpack.c.h.b16 %v2839
        %v3808 = vunpack.c.l.b16 %v2840
        %v3809 = vunpack.c.h.b16 %v2840
        %v3810 = vunpack.c.l.b16 %v2841
        %v3811 = vunpack.c.h.b16 %v2841
        %v3812 = vunpack.c.l.b16 %v2842
        %v3813 = vunpack.c.h.b16 %v2842
        %v3814 = vunpack.c.l.b16 %v2843
        %v3815 = vunpack.c.h.b16 %v2843
        %v3816 = vunpack.c.l.b16 %v2844
        %v3817 = vunpack.c.h.b16 %v2844
        %v3818 = vunpack.c.l.b16 %v2845
        %v3819 = vunpack.c.h.b16 %v2845
        %v3820 = vunpack.c.l.b16 %v2846
        %v3821 = vunpack.c.h.b16 %v2846
        %v3822 = vunpack.c.l.b16 %v2847
        %v3823 = vunpack.c.h.b16 %v2847
        %v3824 = vunpack.c.l.b16 %v2848
        %v3825 = vunpack.c.h.b16 %v2848
        %v3826 = vunpack.c.l.b16 %v2849
        %v3827 = vunpack.c.h.b16 %v2849
        %v3828 = vunpack.c.l.b16 %v2850
        %v3829 = vunpack.c.h.b16 %v2850
        %v3830 = vunpack.c.l.b16 %v2851
        %v3831 = vunpack.c.h.b16 %v2851
        %v3832 = vunpack.c.l.b16 %v2852
        %v3833 = vunpack.c.h.b16 %v2852
        %v3834 = vunpack.c.l.b16 %v2853
        %v3835 = vunpack.c.h.b16 %v2853
        %v3836 = vunpack.c.l.b16 %v2854
        %v3837 = vunpack.c.h.b16 %v2854
        %v3838 = vunpack.c.l.b16 %v2855
        %v3839 = vunpack.c.h.b16 %v2855
        %v3840 = vunpack.c.l.b16 %v2856
        %v3841 = vunpack.c.h.b16 %v2856
        %v3842 = vunpack.c.l.b16 %v2857
        %v3843 = vunpack.c.h.b16 %v2857
        %v3844 = vunpack.c.l.b16 %v2858
        %v3845 = vunpack.c.h.b16 %v2858
        %v3846 = vunpack.c.l.b16 %v2859
        %v3847 = vunpack.c.h.b16 %v2859
        %v3848 = vunpack.c.l.b16 %v2860
        %v3849 = vunpack.c.h.b16 %v2860
        %v3850 = vunpack.c.l.b16 %v2861
        %v3851 = vunpack.c.h.b16 %v2861
        %v3852 = vunpack.c.l.b16 %v2862
        %v3853 = vunpack.c.h.b16 %v2862
        %v3854 = vunpack.c.l.b16 %v2863
        %v3855 = vunpack.c.h.b16 %v2863
        %v3856 = vunpack.c.l.b16 %v2864
        %v3857 = vunpack.c.h.b16 %v2864
        %v3858 = vunpack.c.l.b16 %v2865
        %v3859 = vunpack.c.h.b16 %v2865
        %v3860 = vunpack.c.l.b16 %v2866
        %v3861 = vunpack.c.h.b16 %v2866
        %v3862 = vunpack.c.l.b16 %v2867
        %v3863 = vunpack.c.h.b16 %v2867
        %v3864 = vunpack.c.l.b16 %v2868
        %v3865 = vunpack.c.h.b16 %v2868
        %v3866 = vunpack.c.l.b16 %v2869
        %v3867 = vunpack.c.h.b16 %v2869
        %v3868 = vunpack.c.l.b16 %v2870
        %v3869 = vunpack.c.h.b16 %v2870
        %v3870 = vunpack.c.l.b16 %v2871
        %v3871 = vunpack.c.h.b16 %v2871
        %v3872 = vunpack.c.l.b16 %v2872
        %v3873 = vunpack.c.h.b16 %v2872
        %v3874 = vunpack.c.l.b16 %v2873
        %v3875 = vunpack.c.h.b16 %v2873
        %v3876 = vunpack.c.l.b16 %v2874
        %v3877 = vunpack.c.h.b16 %v2874
        %v3878 = vunpack.c.l.b16 %v2875
        %v3879 = vunpack.c.h.b16 %v2875
        %v3880 = vunpack.c.l.b16 %v2876
        %v3881 = vunpack.c.h.b16 %v2876
        %v3882 = vunpack.c.l.b16 %v2877
        %v3883 = vunpack.c.h.b16 %v2877
        %v3884 = vunpack.c.l.b16 %v2878
        %v3885 = vunpack.c.h.b16 %v2878
        %v3886 = vunpack.c.l.b16 %v2879
        %v3887 = vunpack.c.h.b16 %v2879
        %v3888 = vunpack.c.l.b16 %v2880
        %v3889 = vunpack.c.h.b16 %v2880
        %v3890 = vunpack.c.l.b16 %v2881
        %v3891 = vunpack.c.h.b16 %v2881
        %v3892 = vunpack.c.l.b16 %v2882
        %v3893 = vunpack.c.h.b16 %v2882
        %v3894 = vunpack.c.l.b16 %v2883
        %v3895 = vunpack.c.h.b16 %v2883
        %v3896 = vunpack.c.l.b16 %v2884
        %v3897 = vunpack.c.h.b16 %v2884
        %v3898 = vunpack.c.l.b16 %v2885
        %v3899 = vunpack.c.h.b16 %v2885
        %v3900 = vunpack.c.l.b16 %v2886
        %v3901 = vunpack.c.h.b16 %v2886
        %v3902 = vunpack.c.l.b16 %v2887
        %v3903 = vunpack.c.h.b16 %v2887
        %v3904 = vunpack.c.l.b16 %v2888
        %v3905 = vunpack.c.h.b16 %v2888
        %v3906 = vunpack.c.l.b16 %v2889
        %v3907 = vunpack.c.h.b16 %v2889
        %v3908 = vunpack.c.l.b16 %v2890
        %v3909 = vunpack.c.h.b16 %v2890
        %v3910 = vunpack.c.l.b16 %v2891
        %v3911 = vunpack.c.h.b16 %v2891
        %v3912 = vunpack.c.l.b16 %v2892
        %v3913 = vunpack.c.h.b16 %v2892
        %v3914 = vunpack.c.l.b16 %v2893
        %v3915 = vunpack.c.h.b16 %v2893
        %v3916 = vunpack.c.l.b16 %v2894
        %v3917 = vunpack.c.h.b16 %v2894
        %v3918 = vunpack.c.l.b16 %v2895
        %v3919 = vunpack.c.h.b16 %v2895
        %v3920 = vunpack.c.l.b16 %v2896
        %v3921 = vunpack.c.h.b16 %v2896
        %v3922 = vunpack.c.l.b16 %v2897
        %v3923 = vunpack.c.h.b16 %v2897
        %v3924 = vunpack.c.l.b16 %v2898
        %v3925 = vunpack.c.h.b16 %v2898
        %v3926 = vunpack.c.l.b16 %v2899
        %v3927 = vunpack.c.h.b16 %v2899
        %v3928 = vunpack.c.l.b16 %v2900
        %v3929 = vunpack.c.h.b16 %v2900
        %v3930 = vunpack.c.l.b16 %v2901
        %v3931 = vunpack.c.h.b16 %v2901
        %v3932 = vunpack.c.l.b16 %v2902
        %v3933 = vunpack.c.h.b16 %v2902
        %v3934 = vunpack.c.l.b16 %v2903
        %v3935 = vunpack.c.h.b16 %v2903
        %v3936 = vunpack.c.l.b16 %v2904
        %v3937 = vunpack.c.h.b16 %v2904
        %v3938 = vunpack.c.l.b16 %v2905
        %v3939 = vunpack.c.h.b16 %v2905
        %v3940 = vunpack.c.l.b16 %v2906
        %v3941 = vunpack.c.h.b16 %v2906
        %v3942 = vunpack.c.l.b16 %v2907
        %v3943 = vunpack.c.h.b16 %v2907
        %v3944 = vunpack.c.l.b16 %v2908
        %v3945 = vunpack.c.h.b16 %v2908
        %v3946 = vunpack.c.l.b16 %v2909
        %v3947 = vunpack.c.h.b16 %v2909
        %v3948 = vunpack.c.l.b16 %v2910
        %v3949 = vunpack.c.h.b16 %v2910
        %v3950 = vunpack.c.l.b16 %v2911
        %v3951 = vunpack.c.h.b16 %v2911
        %v3952 = vunpack.c.l.b16 %v2912
        %v3953 = vunpack.c.h.b16 %v2912
        %v3954 = vunpack.c.l.b16 %v2913
        %v3955 = vunpack.c.h.b16 %v2913
        %v3956 = vunpack.c.l.b16 %v2914
        %v3957 = vunpack.c.h.b16 %v2914
        %v3958 = vunpack.c.l.b16 %v2915
        %v3959 = vunpack.c.h.b16 %v2915
        %v3960 = vunpack.c.l.b16 %v2916
        %v3961 = vunpack.c.h.b16 %v2916
        %v3962 = vunpack.c.l.b16 %v2917
        %v3963 = vunpack.c.h.b16 %v2917
        %v3964 = vunpack.c.l.b16 %v2918
        %v3965 = vunpack.c.h.b16 %v2918
        %v3966 = vunpack.c.l.b16 %v2919
        %v3967 = vunpack.c.h.b16 %v2919
        %v3968 = vunpack.c.l.b16 %v2920
        %v3969 = vunpack.c.h.b16 %v2920
        %v3970 = vunpack.c.l.b16 %v2921
        %v3971 = vunpack.c.h.b16 %v2921
        %v3972 = vpack.c.b16 %v3398, %v3396
        %v3973 = vpack.c.b16 %v3399, %v3397
        %v3974 = vpack.c.b16 %v3402, %v3400
        %v3975 = vpack.c.b16 %v3403, %v3401
        %v3976 = vpack.c.b16 %v3406, %v3404
        %v3977 = vpack.c.b16 %v3407, %v3405
        %v3978 = vpack.c.b16 %v3410, %v3408
        %v3979 = vpack.c.b16 %v3411, %v3409
        %v3980 = vpack.c.b16 %v3414, %v3412
        %v3981 = vpack.c.b16 %v3415, %v3413
        %v3982 = vpack.c.b16 %v3418, %v3416
        %v3983 = vpack.c.b16 %v3419, %v3417
        %v3984 = vpack.c.b16 %v3422, %v3420
        %v3985 = vpack.c.b16 %v3423, %v3421
        %v3986 = vpack.c.b16 %v3426, %v3424
        %v3987 = vpack.c.b16 %v3427, %v3425
        %v3988 = vpack.c.b16 %v3430, %v3428
        %v3989 = vpack.c.b16 %v3431, %v3429
        %v3990 = vpack.c.b16 %v3434, %v3432
        %v3991 = vpack.c.b16 %v3435, %v3433
        %v3992 = vpack.c.b16 %v3438, %v3436
        %v3993 = vpack.c.b16 %v3439, %v3437
        %v3994 = vpack.c.b16 %v3442, %v3440
        %v3995 = vpack.c.b16 %v3443, %v3441
        %v3996 = vpack.c.b16 %v3446, %v3444
        %v3997 = vpack.c.b16 %v3447, %v3445
        %v3998 = vpack.c.b16 %v3450, %v3448
        %v3999 = vpack.c.b16 %v3451, %v3449
        %v4000 = vpack.c.b16 %v3454, %v3452
        %v4001 = vpack.c.b16 %v3455, %v3453
        %v4002 = vpack.c.b16 %v3458, %v3456
        %v4003 = vpack.c.b16 %v3459, %v3457
        %v4004 = vpack.c.b16 %v3462, %v3460
        %v4005 = vpack.c.b16 %v3463, %v3461
        %v4006 = vpack.c.b16 %v3466, %v3464
        %v4007 = vpack.c.b16 %v3467, %v3465
        %v4008 = vpack.c.b16 %v3470, %v3468
        %v4009 = vpack.c.b16 %v3471, %v3469
        %v4010 = vpack.c.b16 %v3474, %v3472
        %v4011 = vpack.c.b16 %v3475, %v3473
        %v4012 = vpack.c.b16 %v3478, %v3476
        %v4013 = vpack.c.b16 %v3479, %v3477
        %v4014 = vpack.c.b16 %v3482, %v3480
        %v4015 = vpack.c.b16 %v3483, %v3481
        %v4016 = vpack.c.b16 %v3486, %v3484
        %v4017 = vpack.c.b16 %v3487, %v3485
        %v4018 = vpack.c.b16 %v3490, %v3488
        %v4019 = vpack.c.b16 %v3491, %v3489
        %v4020 = vpack.c.b16 %v3494, %v3492
        %v4021 = vpack.c.b16 %v3495, %v3493
        %v4022 = vpack.c.b16 %v3498, %v3496
        %v4023 = vpack.c.b16 %v3499, %v3497
        %v4024 = vpack.c.b16 %v3502, %v3500
        %v4025 = vpack.c.b16 %v3503, %v3501
        %v4026 = vpack.c.b16 %v3506, %v3504
        %v4027 = vpack.c.b16 %v3507, %v3505
        %v4028 = vpack.c.b16 %v3510, %v3508
        %v4029 = vpack.c.b16 %v3511, %v3509
        %v4030 = vpack.c.b16 %v3514, %v3512
        %v4031 = vpack.c.b16 %v3515, %v3513
        %v4032 = vpack.c.b16 %v3518, %v3516
        %v4033 = vpack.c.b16 %v3519, %v3517
        %v4034 = vpack.c.b16 %v3522, %v3520
        %v4035 = vpack.c.b16 %v3523, %v3521
        %v4036 = vpack.c.b16 %v3526, %v3524
        %v4037 = vpack.c.b16 %v3527, %v3525
        %v4038 = vpack.c.b16 %v3530, %v3528
        %v4039 = vpack.c.b16 %v3531, %v3529
        %v4040 = vpack.c.b16 %v3534, %v3532
        %v4041 = vpack.c.b16 %v3535, %v3533
        %v4042 = vpack.c.b16 %v3538, %v3536
        %v4043 = vpack.c.b16 %v3539, %v3537
        %v4044 = vpack.c.b16 %v3542, %v3540
        %v4045 = vpack.c.b16 %v3543, %v3541
        %v4046 = vpack.c.b16 %v3546, %v3544
        %v4047 = vpack.c.b16 %v3547, %v3545
        %v4048 = vpack.c.b16 %v3550, %v3548
        %v4049 = vpack.c.b16 %v3551, %v3549
        %v4050 = vpack.c.b16 %v3554, %v3552
        %v4051 = vpack.c.b16 %v3555, %v3553
        %v4052 = vpack.c.b16 %v3558, %v3556
        %v4053 = vpack.c.b16 %v3559, %v3557
        %v4054 = vpack.c.b16 %v3562, %v3560
        %v4055 = vpack.c.b16 %v3563, %v3561
        %v4056 = vpack.c.b16 %v3566, %v3564
        %v4057 = vpack.c.b16 %v3567, %v3565
        %v4058 = vpack.c.b16 %v3570, %v3568
        %v4059 = vpack.c.b16 %v3571, %v3569
        %v4060 = vpack.c.b16 %v3574, %v3572
        %v4061 = vpack.c.b16 %v3575, %v3573
        %v4062 = vpack.c.b16 %v3578, %v3576
        %v4063 = vpack.c.b16 %v3579, %v3577
        %v4064 = vpack.c.b16 %v3582, %v3580
        %v4065 = vpack.c.b16 %v3583, %v3581
        %v4066 = vpack.c.b16 %v3586, %v3584
        %v4067 = vpack.c.b16 %v3587, %v3585
        %v4068 = vpack.c.b16 %v3590, %v3588
        %v4069 = vpack.c.b16 %v3591, %v3589
        %v4070 = vpack.c.b16 %v3594, %v3592
        %v4071 = vpack.c.b16 %v3595, %v3593
        %v4072 = vpack.c.b16 %v3598, %v3596
        %v4073 = vpack.c.b16 %v3599, %v3597
        %v4074 = vpack.c.b16 %v3602, %v3600
        %v4075 = vpack.c.b16 %v3603, %v3601
        %v4076 = vpack.c.b16 %v3606, %v3604
        %v4077 = vpack.c.b16 %v3607, %v3605
        %v4078 = vpack.c.b16 %v3610, %v3608
        %v4079 = vpack.c.b16 %v3611, %v3609
        %v4080 = vpack.c.b16 %v3614, %v3612
        %v4081 = vpack.c.b16 %v3615, %v3613
        %v4082 = vpack.c.b16 %v3618, %v3616
        %v4083 = vpack.c.b16 %v3619, %v3617
        %v4084 = vpack.c.b16 %v3622, %v3620
        %v4085 = vpack.c.b16 %v3623, %v3621
        %v4086 = vpack.c.b16 %v3626, %v3624
        %v4087 = vpack.c.b16 %v3627, %v3625
        %v4088 = vpack.c.b16 %v3630, %v3628
        %v4089 = vpack.c.b16 %v3631, %v3629
        %v4090 = vpack.c.b16 %v3634, %v3632
        %v4091 = vpack.c.b16 %v3635, %v3633
        %v4092 = vpack.c.b16 %v3638, %v3636
        %v4093 = vpack.c.b16 %v3639, %v3637
        %v4094 = vpack.c.b16 %v3642, %v3640
        %v4095 = vpack.c.b16 %v3643, %v3641
        %v4096 = vpack.c.b16 %v3646, %v3644
        %v4097 = vpack.c.b16 %v3647, %v3645
        %v4098 = vpack.c.b16 %v3650, %v3648
        %v4099 = vpack.c.b16 %v3651, %v3649
        %v4100 = vpack.c.b16 %v3654, %v3652
        %v4101 = vpack.c.b16 %v3655, %v3653
        %v4102 = vpack.c.b16 %v3658, %v3656
        %v4103 = vpack.c.b16 %v3659, %v3657
        %v4104 = vpack.c.b16 %v3662, %v3660
        %v4105 = vpack.c.b16 %v3663, %v3661
        %v4106 = vpack.c.b16 %v3666, %v3664
        %v4107 = vpack.c.b16 %v3667, %v3665
        %v4108 = vpack.c.b16 %v3670, %v3668
        %v4109 = vpack.c.b16 %v3671, %v3669
        %v4110 = vpack.c.b16 %v3674, %v3672
        %v4111 = vpack.c.b16 %v3675, %v3673
        %v4112 = vpack.c.b16 %v3678, %v3676
        %v4113 = vpack.c.b16 %v3679, %v3677
        %v4114 = vpack.c.b16 %v3682, %v3680
        %v4115 = vpack.c.b16 %v3683, %v3681
        %v4116 = vpack.c.b16 %v3686, %v3684
        %v4117 = vpack.c.b16 %v3687, %v3685
        %v4118 = vpack.c.b16 %v3690, %v3688
        %v4119 = vpack.c.b16 %v3691, %v3689
        %v4120 = vpack.c.b16 %v3694, %v3692
        %v4121 = vpack.c.b16 %v3695, %v3693
        %v4122 = vpack.c.b16 %v3698, %v3696
        %v4123 = vpack.c.b16 %v3699, %v3697
        %v4124 = vpack.c.b16 %v3702, %v3700
        %v4125 = vpack.c.b16 %v3703, %v3701
        %v4126 = vpack.c.b16 %v3706, %v3704
        %v4127 = vpack.c.b16 %v3707, %v3705
        %v4128 = vpack.c.b16 %v3710, %v3708
        %v4129 = vpack.c.b16 %v3711, %v3709
        %v4130 = vpack.c.b16 %v3714, %v3712
        %v4131 = vpack.c.b16 %v3715, %v3713
        %v4132 = vpack.c.b16 %v3718, %v3716
        %v4133 = vpack.c.b16 %v3719, %v3717
        %v4134 = vpack.c.b16 %v3722, %v3720
        %v4135 = vpack.c.b16 %v3723, %v3721
        %v4136 = vpack.c.b16 %v3726, %v3724
        %v4137 = vpack.c.b16 %v3727, %v3725
        %v4138 = vpack.c.b16 %v3730, %v3728
        %v4139 = vpack.c.b16 %v3731, %v3729
        %v4140 = vpack.c.b16 %v3734, %v3732
        %v4141 = vpack.c.b16 %v3735, %v3733
        %v4142 = vpack.c.b16 %v3738, %v3736
        %v4143 = vpack.c.b16 %v3739, %v3737
        %v4144 = vpack.c.b16 %v3742, %v3740
        %v4145 = vpack.c.b16 %v3743, %v3741
        %v4146 = vpack.c.b16 %v3746, %v3744
        %v4147 = vpack.c.b16 %v3747, %v3745
        %v4148 = vpack.c.b16 %v3750, %v3748
        %v4149 = vpack.c.b16 %v3751, %v3749
        %v4150 = vpack.c.b16 %v3754, %v3752
        %v4151 = vpack.c.b16 %v3755, %v3753
        %v4152 = vpack.c.b16 %v3758, %v3756
        %v4153 = vpack.c.b16 %v3759, %v3757
        %v4154 = vpack.c.b16 %v3762, %v3760
        %v4155 = vpack.c.b16 %v3763, %v3761
        %v4156 = vpack.c.b16 %v3766, %v3764
        %v4157 = vpack.c.b16 %v3767, %v3765
        %v4158 = vpack.c.b16 %v3770, %v3768
        %v4159 = vpack.c.b16 %v3771, %v3769
        %v4160 = vpack.c.b16 %v3774, %v3772
        %v4161 = vpack.c.b16 %v3775, %v3773
        %v4162 = vpack.c.b16 %v3778, %v3776
        %v4163 = vpack.c.b16 %v3779, %v3777
        %v4164 = vpack.c.b16 %v3782, %v3780
        %v4165 = vpack.c.b16 %v3783, %v3781
        %v4166 = vpack.c.b16 %v3786, %v3784
        %v4167 = vpack.c.b16 %v3787, %v3785
        %v4168 = vpack.c.b16 %v3790, %v3788
        %v4169 = vpack.c.b16 %v3791, %v3789
        %v4170 = vpack.c.b16 %v3794, %v3792
        %v4171 = vpack.c.b16 %v3795, %v3793
        %v4172 = vpack.c.b16 %v3798, %v3796
        %v4173 = vpack.c.b16 %v3799, %v3797
        %v4174 = vpack.c.b16 %v3802, %v3800
        %v4175 = vpack.c.b16 %v3803, %v3801
        %v4176 = vpack.c.b16 %v3806, %v3804
        %v4177 = vpack.c.b16 %v3807, %v3805
        %v4178 = vpack.c.b16 %v3810, %v3808
        %v4179 = vpack.c.b16 %v3811, %v3809
        %v4180 = vpack.c.b16 %v3814, %v3812
        %v4181 = vpack.c.b16 %v3815, %v3813
        %v4182 = vpack.c.b16 %v3818, %v3816
        %v4183 = vpack.c.b16 %v3819, %v3817
        %v4184 = vpack.c.b16 %v3822, %v3820
        %v4185 = vpack.c.b16 %v3823, %v3821
        %v4186 = vpack.c.b16 %v3826, %v3824
        %v4187 = vpack.c.b16 %v3827, %v3825
        %v4188 = vpack.c.b16 %v3830, %v3828
        %v4189 = vpack.c.b16 %v3831, %v3829
        %v4190 = vpack.c.b16 %v3834, %v3832
        %v4191 = vpack.c.b16 %v3835, %v3833
        %v4192 = vpack.c.b16 %v3838, %v3836
        %v4193 = vpack.c.b16 %v3839, %v3837
        %v4194 = vpack.c.b16 %v3842, %v3840
        %v4195 = vpack.c.b16 %v3843, %v3841
        %v4196 = vpack.c.b16 %v3846, %v3844
        %v4197 = vpack.c.b16 %v3847, %v3845
        %v4198 = vpack.c.b16 %v3850, %v3848
        %v4199 = vpack.c.b16 %v3851, %v3849
        %v4200 = vpack.c.b16 %v3854, %v3852
        %v4201 = vpack.c.b16 %v3855, %v3853
        %v4202 = vpack.c.b16 %v3858, %v3856
        %v4203 = vpack.c.b16 %v3859, %v3857
        %v4204 = vpack.c.b16 %v3862, %v3860
        %v4205 = vpack.c.b16 %v3863, %v3861
        %v4206 = vpack.c.b16 %v3866, %v3864
        %v4207 = vpack.c.b16 %v3867, %v3865
        %v4208 = vpack.c.b16 %v3870, %v3868
        %v4209 = vpack.c.b16 %v3871, %v3869
        %v4210 = vpack.c.b16 %v3874, %v3872
        %v4211 = vpack.c.b16 %v3875, %v3873
        %v4212 = vpack.c.b16 %v3878, %v3876
        %v4213 = vpack.c.b16 %v3879, %v3877
        %v4214 = vpack.c.b16 %v3882, %v3880
        %v4215 = vpack.c.b16 %v3883, %v3881
        %v4216 = vpack.c.b16 %v3886, %v3884
        %v4217 = vpack.c.b16 %v3887, %v3885
        %v4218 = vpack.c.b16 %v3890, %v3888
        %v4219 = vpack.c.b16 %v3891, %v3889
        %v4220 = vpack.c.b16 %v3894, %v3892
        %v4221 = vpack.c.b16 %v3895, %v3893
        %v4222 = vpack.c.b16 %v3898, %v3896
        %v4223 = vpack.c.b16 %v3899, %v3897
        %v4224 = vpack.c.b16 %v3902, %v3900
        %v4225 = vpack.c.b16 %v3903, %v3901
        %v4226 = vpack.c.b16 %v3906, %v3904
        %v4227 = vpack.c.b16 %v3907, %v3905
        %v4228 = vpack.c.b16 %v3910, %v3908
        %v4229 = vpack.c.b16 %v3911, %v3909
        %v4230 = vpack.c.b16 %v3914, %v3912
        %v4231 = vpack.c.b16 %v3915, %v3913
        %v4232 = vpack.c.b16 %v3918, %v3916
        %v4233 = vpack.c.b16 %v3919, %v3917
        %v4234 = vpack.c.b16 %v3922, %v3920
        %v4235 = vpack.c.b16 %v3923, %v3921
        %v4236 = vpack.c.b16 %v3926, %v3924
        %v4237 = vpack.c.b16 %v3927, %v3925
        %v4238 = vpack.c.b16 %v3930, %v3928
        %v4239 = vpack.c.b16 %v3931, %v3929
        %v4240 = vpack.c.b16 %v3934, %v3932
        %v4241 = vpack.c.b16 %v3935, %v3933
        %v4242 = vpack.c.b16 %v3938, %v3936
        %v4243 = vpack.c.b16 %v3939, %v3937
        %v4244 = vpack.c.b16 %v3942, %v3940
        %v4245 = vpack.c.b16 %v3943, %v3941
        %v4246 = vpack.c.b16 %v3946, %v3944
        %v4247 = vpack.c.b16 %v3947, %v3945
        %v4248 = vpack.c.b16 %v3950, %v3948
        %v4249 = vpack.c.b16 %v3951, %v3949
        %v4250 = vpack.c.b16 %v3954, %v3952
        %v4251 = vpack.c.b16 %v3955, %v3953
        %v4252 = vpack.c.b16 %v3958, %v3956
        %v4253 = vpack.c.b16 %v3959, %v3957
        %v4254 = vpack.c.b16 %v3962, %v3960
        %v4255 = vpack.c.b16 %v3963, %v3961
        %v4256 = vpack.c.b16 %v3966, %v3964
        %v4257 = vpack.c.b16 %v3967, %v3965
        %v4258 = vpack.c.b16 %v3970, %v3968
        %v4259 = vpack.c.b16 %v3971, %v3969
        %4548 = vmatpush.bf16.msra.mxu0 %v3986
        %4549 = vmatpush.bf16.msra.mxu0 %v3984
        %4550 = vmatpush.bf16.msra.mxu0 %v3982
        %4551 = vmatpush.bf16.msra.mxu0 %v3980
        %4552 = vmatpush.bf16.msra.mxu0 %v3978
        %4553 = vmatpush.bf16.msra.mxu0 %v3976
        %4554 = vmatpush.bf16.msra.mxu0 %v3974
        %4555 = vmatpush.bf16.msra.mxu0 %v3972
        %4556 = vmatmul.bf16.gmra.mxu0 %v3036
        %v4557 = vpop.f32.mrf.mxu0
        %v4558 = vadd.f32 %v2924, %v4557
        %v4559 = vpop.f32.mrf.mxu0
        %v4560 = vadd.f32 %v2924, %v4559
        %4561 = vmatmul.bf16.gmra.mxu0 %v3054
        %v4562 = vpop.f32.mrf.mxu0
        %v4563 = vadd.f32 %v2924, %v4562
        %v4564 = vpop.f32.mrf.mxu0
        %v4565 = vadd.f32 %v2924, %v4564
        %4566 = vdwg.mxu0
        %4567 = vmatpush.bf16.msra.mxu0 %v4002
        %4568 = vmatpush.bf16.msra.mxu0 %v4000
        %4569 = vmatpush.bf16.msra.mxu0 %v3998
        %4570 = vmatpush.bf16.msra.mxu0 %v3996
        %4571 = vmatpush.bf16.msra.mxu0 %v3994
        %4572 = vmatpush.bf16.msra.mxu0 %v3992
        %4573 = vmatpush.bf16.msra.mxu0 %v3990
        %4574 = vmatpush.bf16.msra.mxu0 %v3988
        %4575 = vmatmul.bf16.gmra.mxu0 %v3037
        %v4576 = vpop.f32.mrf.mxu0
        %v4577 = vadd.f32 %v4558, %v4576
        %v4578 = vpop.f32.mrf.mxu0
        %v4579 = vadd.f32 %v4560, %v4578
        %4580 = vmatmul.bf16.gmra.mxu0 %v3055
        %v4581 = vpop.f32.mrf.mxu0
        %v4582 = vadd.f32 %v4563, %v4581
        %v4583 = vpop.f32.mrf.mxu0
        %v4584 = vadd.f32 %v4565, %v4583
        %4585 = vdwg.mxu0
        %4586 = vmatpush.bf16.msra.mxu0 %v4018
        %4587 = vmatpush.bf16.msra.mxu0 %v4016
        %4588 = vmatpush.bf16.msra.mxu0 %v4014
        %4589 = vmatpush.bf16.msra.mxu0 %v4012
        %4590 = vmatpush.bf16.msra.mxu0 %v4010
        %4591 = vmatpush.bf16.msra.mxu0 %v4008
        %4592 = vmatpush.bf16.msra.mxu0 %v4006
        %4593 = vmatpush.bf16.msra.mxu0 %v4004
        %4594 = vmatmul.bf16.gmra.mxu0 %v3038
        %v4595 = vpop.f32.mrf.mxu0
        %v4596 = vadd.f32 %v4577, %v4595
        %v4597 = vpop.f32.mrf.mxu0
        %v4598 = vadd.f32 %v4579, %v4597
        %4599 = vmatmul.bf16.gmra.mxu0 %v3056
        %v4600 = vpop.f32.mrf.mxu0
        %v4601 = vadd.f32 %v4582, %v4600
        %v4602 = vpop.f32.mrf.mxu0
        %v4603 = vadd.f32 %v4584, %v4602
        %4604 = vdwg.mxu0
        %4605 = vmatpush.bf16.msra.mxu0 %v4034
        %4606 = vmatpush.bf16.msra.mxu0 %v4032
        %4607 = vmatpush.bf16.msra.mxu0 %v4030
        %4608 = vmatpush.bf16.msra.mxu0 %v4028
        %4609 = vmatpush.bf16.msra.mxu0 %v4026
        %4610 = vmatpush.bf16.msra.mxu0 %v4024
        %4611 = vmatpush.bf16.msra.mxu0 %v4022
        %4612 = vmatpush.bf16.msra.mxu0 %v4020
        %4613 = vmatmul.bf16.gmra.mxu0 %v3039
        %v4614 = vpop.f32.mrf.mxu0
        %v4615 = vadd.f32 %v4596, %v4614
        %v4616 = vpop.f32.mrf.mxu0
        %v4617 = vadd.f32 %v4598, %v4616
        %4618 = vmatmul.bf16.gmra.mxu0 %v3057
        %v4619 = vpop.f32.mrf.mxu0
        %v4620 = vadd.f32 %v4601, %v4619
        %v4621 = vpop.f32.mrf.mxu0
        %v4622 = vadd.f32 %v4603, %v4621
        %4623 = vdwg.mxu0
        %4624 = vmatpush.bf16.msra.mxu0 %v4050
        %4625 = vmatpush.bf16.msra.mxu0 %v4048
        %4626 = vmatpush.bf16.msra.mxu0 %v4046
        %4627 = vmatpush.bf16.msra.mxu0 %v4044
        %4628 = vmatpush.bf16.msra.mxu0 %v4042
        %4629 = vmatpush.bf16.msra.mxu0 %v4040
        %4630 = vmatpush.bf16.msra.mxu0 %v4038
        %4631 = vmatpush.bf16.msra.mxu0 %v4036
        %4632 = vmatmul.bf16.gmra.mxu0 %v3040
        %v4633 = vpop.f32.mrf.mxu0
        %v4634 = vadd.f32 %v4615, %v4633
        %v4635 = vpop.f32.mrf.mxu0
        %v4636 = vadd.f32 %v4617, %v4635
        %4637 = vmatmul.bf16.gmra.mxu0 %v3058
        %v4638 = vpop.f32.mrf.mxu0
        %v4639 = vadd.f32 %v4620, %v4638
        %v4640 = vpop.f32.mrf.mxu0
        %v4641 = vadd.f32 %v4622, %v4640
        %4642 = vdwg.mxu0
        %4643 = vmatpush.bf16.msra.mxu0 %v4066
        %4644 = vmatpush.bf16.msra.mxu0 %v4064
        %4645 = vmatpush.bf16.msra.mxu0 %v4062
        %4646 = vmatpush.bf16.msra.mxu0 %v4060
        %4647 = vmatpush.bf16.msra.mxu0 %v4058
        %4648 = vmatpush.bf16.msra.mxu0 %v4056
        %4649 = vmatpush.bf16.msra.mxu0 %v4054
        %4650 = vmatpush.bf16.msra.mxu0 %v4052
        %4651 = vmatmul.bf16.gmra.mxu0 %v3041
        %v4652 = vpop.f32.mrf.mxu0
        %v4653 = vadd.f32 %v4634, %v4652
        %v4654 = vpop.f32.mrf.mxu0
        %v4655 = vadd.f32 %v4636, %v4654
        %4656 = vmatmul.bf16.gmra.mxu0 %v3059
        %v4657 = vpop.f32.mrf.mxu0
        %v4658 = vadd.f32 %v4639, %v4657
        %v4659 = vpop.f32.mrf.mxu0
        %v4660 = vadd.f32 %v4641, %v4659
        %4661 = vdwg.mxu0
        %4662 = vmatpush.bf16.msra.mxu0 %v4082
        %4663 = vmatpush.bf16.msra.mxu0 %v4080
        %4664 = vmatpush.bf16.msra.mxu0 %v4078
        %4665 = vmatpush.bf16.msra.mxu0 %v4076
        %4666 = vmatpush.bf16.msra.mxu0 %v4074
        %4667 = vmatpush.bf16.msra.mxu0 %v4072
        %4668 = vmatpush.bf16.msra.mxu0 %v4070
        %4669 = vmatpush.bf16.msra.mxu0 %v4068
        %4670 = vmatmul.bf16.gmra.mxu0 %v3042
        %v4671 = vpop.f32.mrf.mxu0
        %v4672 = vadd.f32 %v4653, %v4671
        %v4673 = vpop.f32.mrf.mxu0
        %v4674 = vadd.f32 %v4655, %v4673
        %4675 = vmatmul.bf16.gmra.mxu0 %v3060
        %v4676 = vpop.f32.mrf.mxu0
        %v4677 = vadd.f32 %v4658, %v4676
        %v4678 = vpop.f32.mrf.mxu0
        %v4679 = vadd.f32 %v4660, %v4678
        %4680 = vdwg.mxu0
        %4681 = vmatpush.bf16.msra.mxu0 %v4098
        %4682 = vmatpush.bf16.msra.mxu0 %v4096
        %4683 = vmatpush.bf16.msra.mxu0 %v4094
        %4684 = vmatpush.bf16.msra.mxu0 %v4092
        %4685 = vmatpush.bf16.msra.mxu0 %v4090
        %4686 = vmatpush.bf16.msra.mxu0 %v4088
        %4687 = vmatpush.bf16.msra.mxu0 %v4086
        %4688 = vmatpush.bf16.msra.mxu0 %v4084
        %4689 = vmatmul.bf16.gmra.mxu0 %v3043
        %v4690 = vpop.f32.mrf.mxu0
        %v4691 = vadd.f32 %v4672, %v4690
        %v4692 = vpop.f32.mrf.mxu0
        %v4693 = vadd.f32 %v4674, %v4692
        %4694 = vmatmul.bf16.gmra.mxu0 %v3061
        %v4695 = vpop.f32.mrf.mxu0
        %v4696 = vadd.f32 %v4677, %v4695
        %v4697 = vpop.f32.mrf.mxu0
        %v4698 = vadd.f32 %v4679, %v4697
        %4699 = vdwg.mxu0
        %4700 = vmatpush.bf16.msra.mxu0 %v4114
        %4701 = vmatpush.bf16.msra.mxu0 %v4112
        %4702 = vmatpush.bf16.msra.mxu0 %v4110
        %4703 = vmatpush.bf16.msra.mxu0 %v4108
        %4704 = vmatpush.bf16.msra.mxu0 %v4106
        %4705 = vmatpush.bf16.msra.mxu0 %v4104
        %4706 = vmatpush.bf16.msra.mxu0 %v4102
        %4707 = vmatpush.bf16.msra.mxu0 %v4100
        %4708 = vmatmul.bf16.gmra.mxu0 %v3044
        %v4709 = vpop.f32.mrf.mxu0
        %v4710 = vadd.f32 %v4691, %v4709
        %v4711 = vpop.f32.mrf.mxu0
        %v4712 = vadd.f32 %v4693, %v4711
        %4713 = vmatmul.bf16.gmra.mxu0 %v3062
        %v4714 = vpop.f32.mrf.mxu0
        %v4715 = vadd.f32 %v4696, %v4714
        %v4716 = vpop.f32.mrf.mxu0
        %v4717 = vadd.f32 %v4698, %v4716
        %4718 = vdwg.mxu0
        %4719 = vmatpush.bf16.msra.mxu0 %v4130
        %4720 = vmatpush.bf16.msra.mxu0 %v4128
        %4721 = vmatpush.bf16.msra.mxu0 %v4126
        %4722 = vmatpush.bf16.msra.mxu0 %v4124
        %4723 = vmatpush.bf16.msra.mxu0 %v4122
        %4724 = vmatpush.bf16.msra.mxu0 %v4120
        %4725 = vmatpush.bf16.msra.mxu0 %v4118
        %4726 = vmatpush.bf16.msra.mxu0 %v4116
        %4727 = vmatmul.bf16.gmra.mxu0 %v3045
        %v4728 = vpop.f32.mrf.mxu0
        %v4729 = vadd.f32 %v4710, %v4728
        %v4730 = vpop.f32.mrf.mxu0
        %v4731 = vadd.f32 %v4712, %v4730
        %4732 = vmatmul.bf16.gmra.mxu0 %v3063
        %v4733 = vpop.f32.mrf.mxu0
        %v4734 = vadd.f32 %v4715, %v4733
        %v4735 = vpop.f32.mrf.mxu0
        %v4736 = vadd.f32 %v4717, %v4735
        %4737 = vdwg.mxu0
        %4738 = vmatpush.bf16.msra.mxu0 %v4146
        %4739 = vmatpush.bf16.msra.mxu0 %v4144
        %4740 = vmatpush.bf16.msra.mxu0 %v4142
        %4741 = vmatpush.bf16.msra.mxu0 %v4140
        %4742 = vmatpush.bf16.msra.mxu0 %v4138
        %4743 = vmatpush.bf16.msra.mxu0 %v4136
        %4744 = vmatpush.bf16.msra.mxu0 %v4134
        %4745 = vmatpush.bf16.msra.mxu0 %v4132
        %4746 = vmatmul.bf16.gmra.mxu0 %v3046
        %v4747 = vpop.f32.mrf.mxu0
        %v4748 = vadd.f32 %v4729, %v4747
        %v4749 = vpop.f32.mrf.mxu0
        %v4750 = vadd.f32 %v4731, %v4749
        %4751 = vmatmul.bf16.gmra.mxu0 %v3064
        %v4752 = vpop.f32.mrf.mxu0
        %v4753 = vadd.f32 %v4734, %v4752
        %v4754 = vpop.f32.mrf.mxu0
        %v4755 = vadd.f32 %v4736, %v4754
        %4756 = vdwg.mxu0
        %4757 = vmatpush.bf16.msra.mxu0 %v4162
        %4758 = vmatpush.bf16.msra.mxu0 %v4160
        %4759 = vmatpush.bf16.msra.mxu0 %v4158
        %4760 = vmatpush.bf16.msra.mxu0 %v4156
        %4761 = vmatpush.bf16.msra.mxu0 %v4154
        %4762 = vmatpush.bf16.msra.mxu0 %v4152
        %4763 = vmatpush.bf16.msra.mxu0 %v4150
        %4764 = vmatpush.bf16.msra.mxu0 %v4148
        %4765 = vmatmul.bf16.gmra.mxu0 %v3047
        %v4766 = vpop.f32.mrf.mxu0
        %v4767 = vadd.f32 %v4748, %v4766
        %v4768 = vpop.f32.mrf.mxu0
        %v4769 = vadd.f32 %v4750, %v4768
        %4770 = vmatmul.bf16.gmra.mxu0 %v3065
        %v4771 = vpop.f32.mrf.mxu0
        %v4772 = vadd.f32 %v4753, %v4771
        %v4773 = vpop.f32.mrf.mxu0
        %v4774 = vadd.f32 %v4755, %v4773
        %4775 = vdwg.mxu0
        %4776 = vmatpush.bf16.msra.mxu0 %v4178
        %4777 = vmatpush.bf16.msra.mxu0 %v4176
        %4778 = vmatpush.bf16.msra.mxu0 %v4174
        %4779 = vmatpush.bf16.msra.mxu0 %v4172
        %4780 = vmatpush.bf16.msra.mxu0 %v4170
        %4781 = vmatpush.bf16.msra.mxu0 %v4168
        %4782 = vmatpush.bf16.msra.mxu0 %v4166
        %4783 = vmatpush.bf16.msra.mxu0 %v4164
        %4784 = vmatmul.bf16.gmra.mxu0 %v3048
        %v4785 = vpop.f32.mrf.mxu0
        %v4786 = vadd.f32 %v4767, %v4785
        %v4787 = vpop.f32.mrf.mxu0
        %v4788 = vadd.f32 %v4769, %v4787
        %4789 = vmatmul.bf16.gmra.mxu0 %v3066
        %v4790 = vpop.f32.mrf.mxu0
        %v4791 = vadd.f32 %v4772, %v4790
        %v4792 = vpop.f32.mrf.mxu0
        %v4793 = vadd.f32 %v4774, %v4792
        %4794 = vdwg.mxu0
        %4795 = vmatpush.bf16.msra.mxu0 %v4194
        %4796 = vmatpush.bf16.msra.mxu0 %v4192
        %4797 = vmatpush.bf16.msra.mxu0 %v4190
        %4798 = vmatpush.bf16.msra.mxu0 %v4188
        %4799 = vmatpush.bf16.msra.mxu0 %v4186
        %4800 = vmatpush.bf16.msra.mxu0 %v4184
        %4801 = vmatpush.bf16.msra.mxu0 %v4182
        %4802 = vmatpush.bf16.msra.mxu0 %v4180
        %4803 = vmatmul.bf16.gmra.mxu0 %v3049
        %v4804 = vpop.f32.mrf.mxu0
        %v4805 = vadd.f32 %v4786, %v4804
        %v4806 = vpop.f32.mrf.mxu0
        %v4807 = vadd.f32 %v4788, %v4806
        %4808 = vmatmul.bf16.gmra.mxu0 %v3067
        %v4809 = vpop.f32.mrf.mxu0
        %v4810 = vadd.f32 %v4791, %v4809
        %v4811 = vpop.f32.mrf.mxu0
        %v4812 = vadd.f32 %v4793, %v4811
        %4813 = vdwg.mxu0
        %4814 = vmatpush.bf16.msra.mxu0 %v4210
        %4815 = vmatpush.bf16.msra.mxu0 %v4208
        %4816 = vmatpush.bf16.msra.mxu0 %v4206
        %4817 = vmatpush.bf16.msra.mxu0 %v4204
        %4818 = vmatpush.bf16.msra.mxu0 %v4202
        %4819 = vmatpush.bf16.msra.mxu0 %v4200
        %4820 = vmatpush.bf16.msra.mxu0 %v4198
        %4821 = vmatpush.bf16.msra.mxu0 %v4196
        %4822 = vmatmul.bf16.gmra.mxu0 %v3050
        %v4823 = vpop.f32.mrf.mxu0
        %v4824 = vadd.f32 %v4805, %v4823
        %v4825 = vpop.f32.mrf.mxu0
        %v4826 = vadd.f32 %v4807, %v4825
        %4827 = vmatmul.bf16.gmra.mxu0 %v3068
        %v4828 = vpop.f32.mrf.mxu0
        %v4829 = vadd.f32 %v4810, %v4828
        %v4830 = vpop.f32.mrf.mxu0
        %v4831 = vadd.f32 %v4812, %v4830
        %4832 = vdwg.mxu0
        %4833 = vmatpush.bf16.msra.mxu0 %v4226
        %4834 = vmatpush.bf16.msra.mxu0 %v4224
        %4835 = vmatpush.bf16.msra.mxu0 %v4222
        %4836 = vmatpush.bf16.msra.mxu0 %v4220
        %4837 = vmatpush.bf16.msra.mxu0 %v4218
        %4838 = vmatpush.bf16.msra.mxu0 %v4216
        %4839 = vmatpush.bf16.msra.mxu0 %v4214
        %4840 = vmatpush.bf16.msra.mxu0 %v4212
        %4841 = vmatmul.bf16.gmra.mxu0 %v3051
        %v4842 = vpop.f32.mrf.mxu0
        %v4843 = vadd.f32 %v4824, %v4842
        %v4844 = vpop.f32.mrf.mxu0
        %v4845 = vadd.f32 %v4826, %v4844
        %4846 = vmatmul.bf16.gmra.mxu0 %v3069
        %v4847 = vpop.f32.mrf.mxu0
        %v4848 = vadd.f32 %v4829, %v4847
        %v4849 = vpop.f32.mrf.mxu0
        %v4850 = vadd.f32 %v4831, %v4849
        %4851 = vdwg.mxu0
        %4852 = vmatpush.bf16.msra.mxu0 %v4242
        %4853 = vmatpush.bf16.msra.mxu0 %v4240
        %4854 = vmatpush.bf16.msra.mxu0 %v4238
        %4855 = vmatpush.bf16.msra.mxu0 %v4236
        %4856 = vmatpush.bf16.msra.mxu0 %v4234
        %4857 = vmatpush.bf16.msra.mxu0 %v4232
        %4858 = vmatpush.bf16.msra.mxu0 %v4230
        %4859 = vmatpush.bf16.msra.mxu0 %v4228
        %4860 = vmatmul.bf16.gmra.mxu0 %v3052
        %v4861 = vpop.f32.mrf.mxu0
        %v4862 = vadd.f32 %v4843, %v4861
        %v4863 = vpop.f32.mrf.mxu0
        %v4864 = vadd.f32 %v4845, %v4863
        %4865 = vmatmul.bf16.gmra.mxu0 %v3070
        %v4866 = vpop.f32.mrf.mxu0
        %v4867 = vadd.f32 %v4848, %v4866
        %v4868 = vpop.f32.mrf.mxu0
        %v4869 = vadd.f32 %v4850, %v4868
        %4870 = vdwg.mxu0
        %4871 = vmatpush.bf16.msra.mxu0 %v4258
        %4872 = vmatpush.bf16.msra.mxu0 %v4256
        %4873 = vmatpush.bf16.msra.mxu0 %v4254
        %4874 = vmatpush.bf16.msra.mxu0 %v4252
        %4875 = vmatpush.bf16.msra.mxu0 %v4250
        %4876 = vmatpush.bf16.msra.mxu0 %v4248
        %4877 = vmatpush.bf16.msra.mxu0 %v4246
        %4878 = vmatpush.bf16.msra.mxu0 %v4244
        %4879 = vmatmul.bf16.gmra.mxu0 %v3053
        %v4880 = vpop.f32.mrf.mxu0
        %v4881 = vadd.f32 %v4862, %v4880
        %v4882 = vpop.f32.mrf.mxu0
        %v4883 = vadd.f32 %v4864, %v4882
        %4884 = vmatmul.bf16.gmra.mxu0 %v3071
        %v4885 = vpop.f32.mrf.mxu0
        %v4886 = vadd.f32 %v4867, %v4885
        %v4887 = vpop.f32.mrf.mxu0
        %v4888 = vadd.f32 %v4869, %v4887
        %4889 = vdwg.mxu0
        %4890 = vmatpush.bf16.msra.mxu0 %v3987
        %4891 = vmatpush.bf16.msra.mxu0 %v3985
        %4892 = vmatpush.bf16.msra.mxu0 %v3983
        %4893 = vmatpush.bf16.msra.mxu0 %v3981
        %4894 = vmatpush.bf16.msra.mxu0 %v3979
        %4895 = vmatpush.bf16.msra.mxu0 %v3977
        %4896 = vmatpush.bf16.msra.mxu0 %v3975
        %4897 = vmatpush.bf16.msra.mxu0 %v3973
        %4898 = vmatmul.bf16.gmra.mxu0 %v3036
        %v4899 = vpop.f32.mrf.mxu0
        %v4900 = vadd.f32 %v2925, %v4899
        %v4901 = vpop.f32.mrf.mxu0
        %v4902 = vadd.f32 %v2925, %v4901
        %4903 = vmatmul.bf16.gmra.mxu0 %v3054
        %v4904 = vpop.f32.mrf.mxu0
        %v4905 = vadd.f32 %v2925, %v4904
        %v4906 = vpop.f32.mrf.mxu0
        %v4907 = vadd.f32 %v2925, %v4906
        %4908 = vdwg.mxu0
        %4909 = vmatpush.bf16.msra.mxu0 %v4003
        %4910 = vmatpush.bf16.msra.mxu0 %v4001
        %4911 = vmatpush.bf16.msra.mxu0 %v3999
        %4912 = vmatpush.bf16.msra.mxu0 %v3997
        %4913 = vmatpush.bf16.msra.mxu0 %v3995
        %4914 = vmatpush.bf16.msra.mxu0 %v3993
        %4915 = vmatpush.bf16.msra.mxu0 %v3991
        %4916 = vmatpush.bf16.msra.mxu0 %v3989
        %4917 = vmatmul.bf16.gmra.mxu0 %v3037
        %v4918 = vpop.f32.mrf.mxu0
        %v4919 = vadd.f32 %v4900, %v4918
        %v4920 = vpop.f32.mrf.mxu0
        %v4921 = vadd.f32 %v4902, %v4920
        %4922 = vmatmul.bf16.gmra.mxu0 %v3055
        %v4923 = vpop.f32.mrf.mxu0
        %v4924 = vadd.f32 %v4905, %v4923
        %v4925 = vpop.f32.mrf.mxu0
        %v4926 = vadd.f32 %v4907, %v4925
        %4927 = vdwg.mxu0
        %4928 = vmatpush.bf16.msra.mxu0 %v4019
        %4929 = vmatpush.bf16.msra.mxu0 %v4017
        %4930 = vmatpush.bf16.msra.mxu0 %v4015
        %4931 = vmatpush.bf16.msra.mxu0 %v4013
        %4932 = vmatpush.bf16.msra.mxu0 %v4011
        %4933 = vmatpush.bf16.msra.mxu0 %v4009
        %4934 = vmatpush.bf16.msra.mxu0 %v4007
        %4935 = vmatpush.bf16.msra.mxu0 %v4005
        %4936 = vmatmul.bf16.gmra.mxu0 %v3038
        %v4937 = vpop.f32.mrf.mxu0
        %v4938 = vadd.f32 %v4919, %v4937
        %v4939 = vpop.f32.mrf.mxu0
        %v4940 = vadd.f32 %v4921, %v4939
        %4941 = vmatmul.bf16.gmra.mxu0 %v3056
        %v4942 = vpop.f32.mrf.mxu0
        %v4943 = vadd.f32 %v4924, %v4942
        %v4944 = vpop.f32.mrf.mxu0
        %v4945 = vadd.f32 %v4926, %v4944
        %4946 = vdwg.mxu0
        %4947 = vmatpush.bf16.msra.mxu0 %v4035
        %4948 = vmatpush.bf16.msra.mxu0 %v4033
        %4949 = vmatpush.bf16.msra.mxu0 %v4031
        %4950 = vmatpush.bf16.msra.mxu0 %v4029
        %4951 = vmatpush.bf16.msra.mxu0 %v4027
        %4952 = vmatpush.bf16.msra.mxu0 %v4025
        %4953 = vmatpush.bf16.msra.mxu0 %v4023
        %4954 = vmatpush.bf16.msra.mxu0 %v4021
        %4955 = vmatmul.bf16.gmra.mxu0 %v3039
        %v4956 = vpop.f32.mrf.mxu0
        %v4957 = vadd.f32 %v4938, %v4956
        %v4958 = vpop.f32.mrf.mxu0
        %v4959 = vadd.f32 %v4940, %v4958
        %4960 = vmatmul.bf16.gmra.mxu0 %v3057
        %v4961 = vpop.f32.mrf.mxu0
        %v4962 = vadd.f32 %v4943, %v4961
        %v4963 = vpop.f32.mrf.mxu0
        %v4964 = vadd.f32 %v4945, %v4963
        %4965 = vdwg.mxu0
        %4966 = vmatpush.bf16.msra.mxu0 %v4051
        %4967 = vmatpush.bf16.msra.mxu0 %v4049
        %4968 = vmatpush.bf16.msra.mxu0 %v4047
        %4969 = vmatpush.bf16.msra.mxu0 %v4045
        %4970 = vmatpush.bf16.msra.mxu0 %v4043
        %4971 = vmatpush.bf16.msra.mxu0 %v4041
        %4972 = vmatpush.bf16.msra.mxu0 %v4039
        %4973 = vmatpush.bf16.msra.mxu0 %v4037
        %4974 = vmatmul.bf16.gmra.mxu0 %v3040
        %v4975 = vpop.f32.mrf.mxu0
        %v4976 = vadd.f32 %v4957, %v4975
        %v4977 = vpop.f32.mrf.mxu0
        %v4978 = vadd.f32 %v4959, %v4977
        %4979 = vmatmul.bf16.gmra.mxu0 %v3058
        %v4980 = vpop.f32.mrf.mxu0
        %v4981 = vadd.f32 %v4962, %v4980
        %v4982 = vpop.f32.mrf.mxu0
        %v4983 = vadd.f32 %v4964, %v4982
        %4984 = vdwg.mxu0
        %4985 = vmatpush.bf16.msra.mxu0 %v4067
        %4986 = vmatpush.bf16.msra.mxu0 %v4065
        %4987 = vmatpush.bf16.msra.mxu0 %v4063
        %4988 = vmatpush.bf16.msra.mxu0 %v4061
        %4989 = vmatpush.bf16.msra.mxu0 %v4059
        %4990 = vmatpush.bf16.msra.mxu0 %v4057
        %4991 = vmatpush.bf16.msra.mxu0 %v4055
        %4992 = vmatpush.bf16.msra.mxu0 %v4053
        %4993 = vmatmul.bf16.gmra.mxu0 %v3041
        %v4994 = vpop.f32.mrf.mxu0
        %v4995 = vadd.f32 %v4976, %v4994
        %v4996 = vpop.f32.mrf.mxu0
        %v4997 = vadd.f32 %v4978, %v4996
        %4998 = vmatmul.bf16.gmra.mxu0 %v3059
        %v4999 = vpop.f32.mrf.mxu0
        %v5000 = vadd.f32 %v4981, %v4999
        %v5001 = vpop.f32.mrf.mxu0
        %v5002 = vadd.f32 %v4983, %v5001
        %5003 = vdwg.mxu0
        %5004 = vmatpush.bf16.msra.mxu0 %v4083
        %5005 = vmatpush.bf16.msra.mxu0 %v4081
        %5006 = vmatpush.bf16.msra.mxu0 %v4079
        %5007 = vmatpush.bf16.msra.mxu0 %v4077
        %5008 = vmatpush.bf16.msra.mxu0 %v4075
        %5009 = vmatpush.bf16.msra.mxu0 %v4073
        %5010 = vmatpush.bf16.msra.mxu0 %v4071
        %5011 = vmatpush.bf16.msra.mxu0 %v4069
        %5012 = vmatmul.bf16.gmra.mxu0 %v3042
        %v5013 = vpop.f32.mrf.mxu0
        %v5014 = vadd.f32 %v4995, %v5013
        %v5015 = vpop.f32.mrf.mxu0
        %v5016 = vadd.f32 %v4997, %v5015
        %5017 = vmatmul.bf16.gmra.mxu0 %v3060
        %v5018 = vpop.f32.mrf.mxu0
        %v5019 = vadd.f32 %v5000, %v5018
        %v5020 = vpop.f32.mrf.mxu0
        %v5021 = vadd.f32 %v5002, %v5020
        %5022 = vdwg.mxu0
        %5023 = vmatpush.bf16.msra.mxu0 %v4099
        %5024 = vmatpush.bf16.msra.mxu0 %v4097
        %5025 = vmatpush.bf16.msra.mxu0 %v4095
        %5026 = vmatpush.bf16.msra.mxu0 %v4093
        %5027 = vmatpush.bf16.msra.mxu0 %v4091
        %5028 = vmatpush.bf16.msra.mxu0 %v4089
        %5029 = vmatpush.bf16.msra.mxu0 %v4087
        %5030 = vmatpush.bf16.msra.mxu0 %v4085
        %5031 = vmatmul.bf16.gmra.mxu0 %v3043
        %v5032 = vpop.f32.mrf.mxu0
        %v5033 = vadd.f32 %v5014, %v5032
        %v5034 = vpop.f32.mrf.mxu0
        %v5035 = vadd.f32 %v5016, %v5034
        %5036 = vmatmul.bf16.gmra.mxu0 %v3061
        %v5037 = vpop.f32.mrf.mxu0
        %v5038 = vadd.f32 %v5019, %v5037
        %v5039 = vpop.f32.mrf.mxu0
        %v5040 = vadd.f32 %v5021, %v5039
        %5041 = vdwg.mxu0
        %5042 = vmatpush.bf16.msra.mxu0 %v4115
        %5043 = vmatpush.bf16.msra.mxu0 %v4113
        %5044 = vmatpush.bf16.msra.mxu0 %v4111
        %5045 = vmatpush.bf16.msra.mxu0 %v4109
        %5046 = vmatpush.bf16.msra.mxu0 %v4107
        %5047 = vmatpush.bf16.msra.mxu0 %v4105
        %5048 = vmatpush.bf16.msra.mxu0 %v4103
        %5049 = vmatpush.bf16.msra.mxu0 %v4101
        %5050 = vmatmul.bf16.gmra.mxu0 %v3044
        %v5051 = vpop.f32.mrf.mxu0
        %v5052 = vadd.f32 %v5033, %v5051
        %v5053 = vpop.f32.mrf.mxu0
        %v5054 = vadd.f32 %v5035, %v5053
        %5055 = vmatmul.bf16.gmra.mxu0 %v3062
        %v5056 = vpop.f32.mrf.mxu0
        %v5057 = vadd.f32 %v5038, %v5056
        %v5058 = vpop.f32.mrf.mxu0
        %v5059 = vadd.f32 %v5040, %v5058
        %5060 = vdwg.mxu0
        %5061 = vmatpush.bf16.msra.mxu0 %v4131
        %5062 = vmatpush.bf16.msra.mxu0 %v4129
        %5063 = vmatpush.bf16.msra.mxu0 %v4127
        %5064 = vmatpush.bf16.msra.mxu0 %v4125
        %5065 = vmatpush.bf16.msra.mxu0 %v4123
        %5066 = vmatpush.bf16.msra.mxu0 %v4121
        %5067 = vmatpush.bf16.msra.mxu0 %v4119
        %5068 = vmatpush.bf16.msra.mxu0 %v4117
        %5069 = vmatmul.bf16.gmra.mxu0 %v3045
        %v5070 = vpop.f32.mrf.mxu0
        %v5071 = vadd.f32 %v5052, %v5070
        %v5072 = vpop.f32.mrf.mxu0
        %v5073 = vadd.f32 %v5054, %v5072
        %5074 = vmatmul.bf16.gmra.mxu0 %v3063
        %v5075 = vpop.f32.mrf.mxu0
        %v5076 = vadd.f32 %v5057, %v5075
        %v5077 = vpop.f32.mrf.mxu0
        %v5078 = vadd.f32 %v5059, %v5077
        %5079 = vdwg.mxu0
        %5080 = vmatpush.bf16.msra.mxu0 %v4147
        %5081 = vmatpush.bf16.msra.mxu0 %v4145
        %5082 = vmatpush.bf16.msra.mxu0 %v4143
        %5083 = vmatpush.bf16.msra.mxu0 %v4141
        %5084 = vmatpush.bf16.msra.mxu0 %v4139
        %5085 = vmatpush.bf16.msra.mxu0 %v4137
        %5086 = vmatpush.bf16.msra.mxu0 %v4135
        %5087 = vmatpush.bf16.msra.mxu0 %v4133
        %5088 = vmatmul.bf16.gmra.mxu0 %v3046
        %v5089 = vpop.f32.mrf.mxu0
        %v5090 = vadd.f32 %v5071, %v5089
        %v5091 = vpop.f32.mrf.mxu0
        %v5092 = vadd.f32 %v5073, %v5091
        %5093 = vmatmul.bf16.gmra.mxu0 %v3064
        %v5094 = vpop.f32.mrf.mxu0
        %v5095 = vadd.f32 %v5076, %v5094
        %v5096 = vpop.f32.mrf.mxu0
        %v5097 = vadd.f32 %v5078, %v5096
        %5098 = vdwg.mxu0
        %5099 = vmatpush.bf16.msra.mxu0 %v4163
        %5100 = vmatpush.bf16.msra.mxu0 %v4161
        %5101 = vmatpush.bf16.msra.mxu0 %v4159
        %5102 = vmatpush.bf16.msra.mxu0 %v4157
        %5103 = vmatpush.bf16.msra.mxu0 %v4155
        %5104 = vmatpush.bf16.msra.mxu0 %v4153
        %5105 = vmatpush.bf16.msra.mxu0 %v4151
        %5106 = vmatpush.bf16.msra.mxu0 %v4149
        %5107 = vmatmul.bf16.gmra.mxu0 %v3047
        %v5108 = vpop.f32.mrf.mxu0
        %v5109 = vadd.f32 %v5090, %v5108
        %v5110 = vpop.f32.mrf.mxu0
        %v5111 = vadd.f32 %v5092, %v5110
        %5112 = vmatmul.bf16.gmra.mxu0 %v3065
        %v5113 = vpop.f32.mrf.mxu0
        %v5114 = vadd.f32 %v5095, %v5113
        %v5115 = vpop.f32.mrf.mxu0
        %v5116 = vadd.f32 %v5097, %v5115
        %5117 = vdwg.mxu0
        %5118 = vmatpush.bf16.msra.mxu0 %v4179
        %5119 = vmatpush.bf16.msra.mxu0 %v4177
        %5120 = vmatpush.bf16.msra.mxu0 %v4175
        %5121 = vmatpush.bf16.msra.mxu0 %v4173
        %5122 = vmatpush.bf16.msra.mxu0 %v4171
        %5123 = vmatpush.bf16.msra.mxu0 %v4169
        %5124 = vmatpush.bf16.msra.mxu0 %v4167
        %5125 = vmatpush.bf16.msra.mxu0 %v4165
        %5126 = vmatmul.bf16.gmra.mxu0 %v3048
        %v5127 = vpop.f32.mrf.mxu0
        %v5128 = vadd.f32 %v5109, %v5127
        %v5129 = vpop.f32.mrf.mxu0
        %v5130 = vadd.f32 %v5111, %v5129
        %5131 = vmatmul.bf16.gmra.mxu0 %v3066
        %v5132 = vpop.f32.mrf.mxu0
        %v5133 = vadd.f32 %v5114, %v5132
        %v5134 = vpop.f32.mrf.mxu0
        %v5135 = vadd.f32 %v5116, %v5134
        %5136 = vdwg.mxu0
        %5137 = vmatpush.bf16.msra.mxu0 %v4195
        %5138 = vmatpush.bf16.msra.mxu0 %v4193
        %5139 = vmatpush.bf16.msra.mxu0 %v4191
        %5140 = vmatpush.bf16.msra.mxu0 %v4189
        %5141 = vmatpush.bf16.msra.mxu0 %v4187
        %5142 = vmatpush.bf16.msra.mxu0 %v4185
        %5143 = vmatpush.bf16.msra.mxu0 %v4183
        %5144 = vmatpush.bf16.msra.mxu0 %v4181
        %5145 = vmatmul.bf16.gmra.mxu0 %v3049
        %v5146 = vpop.f32.mrf.mxu0
        %v5147 = vadd.f32 %v5128, %v5146
        %v5148 = vpop.f32.mrf.mxu0
        %v5149 = vadd.f32 %v5130, %v5148
        %5150 = vmatmul.bf16.gmra.mxu0 %v3067
        %v5151 = vpop.f32.mrf.mxu0
        %v5152 = vadd.f32 %v5133, %v5151
        %v5153 = vpop.f32.mrf.mxu0
        %v5154 = vadd.f32 %v5135, %v5153
        %5155 = vdwg.mxu0
        %5156 = vmatpush.bf16.msra.mxu0 %v4211
        %5157 = vmatpush.bf16.msra.mxu0 %v4209
        %5158 = vmatpush.bf16.msra.mxu0 %v4207
        %5159 = vmatpush.bf16.msra.mxu0 %v4205
        %5160 = vmatpush.bf16.msra.mxu0 %v4203
        %5161 = vmatpush.bf16.msra.mxu0 %v4201
        %5162 = vmatpush.bf16.msra.mxu0 %v4199
        %5163 = vmatpush.bf16.msra.mxu0 %v4197
        %5164 = vmatmul.bf16.gmra.mxu0 %v3050
        %v5165 = vpop.f32.mrf.mxu0
        %v5166 = vadd.f32 %v5147, %v5165
        %v5167 = vpop.f32.mrf.mxu0
        %v5168 = vadd.f32 %v5149, %v5167
        %5169 = vmatmul.bf16.gmra.mxu0 %v3068
        %v5170 = vpop.f32.mrf.mxu0
        %v5171 = vadd.f32 %v5152, %v5170
        %v5172 = vpop.f32.mrf.mxu0
        %v5173 = vadd.f32 %v5154, %v5172
        %5174 = vdwg.mxu0
        %5175 = vmatpush.bf16.msra.mxu0 %v4227
        %5176 = vmatpush.bf16.msra.mxu0 %v4225
        %5177 = vmatpush.bf16.msra.mxu0 %v4223
        %5178 = vmatpush.bf16.msra.mxu0 %v4221
        %5179 = vmatpush.bf16.msra.mxu0 %v4219
        %5180 = vmatpush.bf16.msra.mxu0 %v4217
        %5181 = vmatpush.bf16.msra.mxu0 %v4215
        %5182 = vmatpush.bf16.msra.mxu0 %v4213
        %5183 = vmatmul.bf16.gmra.mxu0 %v3051
        %v5184 = vpop.f32.mrf.mxu0
        %v5185 = vadd.f32 %v5166, %v5184
        %v5186 = vpop.f32.mrf.mxu0
        %v5187 = vadd.f32 %v5168, %v5186
        %5188 = vmatmul.bf16.gmra.mxu0 %v3069
        %v5189 = vpop.f32.mrf.mxu0
        %v5190 = vadd.f32 %v5171, %v5189
        %v5191 = vpop.f32.mrf.mxu0
        %v5192 = vadd.f32 %v5173, %v5191
        %5193 = vdwg.mxu0
        %5194 = vmatpush.bf16.msra.mxu0 %v4243
        %5195 = vmatpush.bf16.msra.mxu0 %v4241
        %5196 = vmatpush.bf16.msra.mxu0 %v4239
        %5197 = vmatpush.bf16.msra.mxu0 %v4237
        %5198 = vmatpush.bf16.msra.mxu0 %v4235
        %5199 = vmatpush.bf16.msra.mxu0 %v4233
        %5200 = vmatpush.bf16.msra.mxu0 %v4231
        %5201 = vmatpush.bf16.msra.mxu0 %v4229
        %5202 = vmatmul.bf16.gmra.mxu0 %v3052
        %v5203 = vpop.f32.mrf.mxu0
        %v5204 = vadd.f32 %v5185, %v5203
        %v5205 = vpop.f32.mrf.mxu0
        %v5206 = vadd.f32 %v5187, %v5205
        %5207 = vmatmul.bf16.gmra.mxu0 %v3070
        %v5208 = vpop.f32.mrf.mxu0
        %v5209 = vadd.f32 %v5190, %v5208
        %v5210 = vpop.f32.mrf.mxu0
        %v5211 = vadd.f32 %v5192, %v5210
        %5212 = vdwg.mxu0
        %5213 = vmatpush.bf16.msra.mxu0 %v4259
        %5214 = vmatpush.bf16.msra.mxu0 %v4257
        %5215 = vmatpush.bf16.msra.mxu0 %v4255
        %5216 = vmatpush.bf16.msra.mxu0 %v4253
        %5217 = vmatpush.bf16.msra.mxu0 %v4251
        %5218 = vmatpush.bf16.msra.mxu0 %v4249
        %5219 = vmatpush.bf16.msra.mxu0 %v4247
        %5220 = vmatpush.bf16.msra.mxu0 %v4245
        %5221 = vmatmul.bf16.gmra.mxu0 %v3053
        %v5222 = vpop.f32.mrf.mxu0
        %v5223 = vadd.f32 %v5204, %v5222
        %v5224 = vpop.f32.mrf.mxu0
        %v5225 = vadd.f32 %v5206, %v5224
        %5226 = vmatmul.bf16.gmra.mxu0 %v3071
        %v5227 = vpop.f32.mrf.mxu0
        %v5228 = vadd.f32 %v5209, %v5227
        %v5229 = vpop.f32.mrf.mxu0
        %v5230 = vadd.f32 %v5211, %v5229
        %5231 = vdwg.mxu0
        %v5232 = vmax.f32 %v4881, 0.0
        %v5233 = vmax.f32 %v5223, 0.0
        %v5234 = vmax.f32 %v4883, 0.0
        %v5235 = vmax.f32 %v5225, 0.0
        %v5236 = vmax.f32 %v4886, 0.0
        %v5237 = vmax.f32 %v5228, 0.0
        %v5238 = vmax.f32 %v4888, 0.0
        %v5239 = vmax.f32 %v5230, 0.0
        %5240 = vst [vmem:[%s2582] sm:$0xff] %v5232
        %5241 = vst [vmem:[%s2582 + $0x8] sm:$0xff] %v5233
        %5242 = vst [vmem:[%s2582 + $0x10] sm:$0xff] %v5234
        %5243 = vst [vmem:[%s2582 + $0x18] sm:$0xff] %v5235
        %5244 = vst [vmem:[%s2582 + $0x20] sm:$0xff] %v5236
        %5245 = vst [vmem:[%s2582 + $0x28] sm:$0xff] %v5237
        %5246 = vst [vmem:[%s2582 + $0x30] sm:$0xff] %v5238
        %5247 = vst [vmem:[%s2582 + $0x38] sm:$0xff] %v5239
        %s5248 = sand.u32 %s114, 1
        %s5249 = sand.u32 %s114, 1
        %s5250 = smul.addr %s5249, 64
        %s5251 = scalar_lea.vmem [#allocation3], %s5250
        // Predicated region
        $region85: #{auxiliary_convolutions.5} parent=79 // pred_check
          %p5252 = pneg %p124
        $region86: #{auxiliary_convolutions.5} parent=79 // pred_check_branch
          %5254 = sbr.rel (%p5252) target = $region88
        $region87: #{auxiliary_convolutions.5} parent=79 // pred_region
          %s5255 = smul.u32 4, %s18
          %s5256 = smul.u32 2, %s19
          %s5257 = smul.addr %s5255, 4
          %s5258 = sadd.s32 %s5256, %s5257
          %s5259 = smul.addr %s5258, 8
          %s5260 = scalar_lea.vmem %s3, %s5259
          // Predicated region
          $region89: #{auxiliary_convolutions.5} parent=87 // pred_check
            _
          $region90: #{auxiliary_convolutions.5} parent=87 // pred_check_branch
            %5262 = sbr.rel (0) target = $region92
          $region91: #{auxiliary_convolutions.5} parent=87 // pred_region
            // Predicated region
            $region93: #{auxiliary_convolutions.5} parent=91 // pred_check
              _
            $region94: #{auxiliary_convolutions.5} parent=91 // pred_check_branch
              %5264 = sbr.rel (0) target = $region96
            $region95: #{auxiliary_convolutions.5} parent=91 // pred_region
              loop: start=0, step=1, limit=1
              $region97: #{auxiliary_convolutions.5} parent=95 // loop_pre_header
                _
              $region98: #{auxiliary_convolutions.5} parent=95 // loop_header
                %s5266 = sphi 0, %s5270
                %p5267 = scmp.ge.s32.totalorder %s5266, 1
                %s5271 = sphi %s5251, %s5251
                %s5272 = sphi %s5260, %s5260
              $region99: #{auxiliary_convolutions.5} parent=95 // loop_header_branch
                %5269 = sbr.rel (%p5267) target = $region103
              $region100: #{auxiliary_convolutions.5} parent=95 // loop_body
                %v5273 = vld [vmem:[%s5271] sm:$0xff]
                %5274 = vst [vmem:[%s5272] sm:$0xff] %v5273
                %v5275 = vld [vmem:[%s5271 + $0x8] sm:$0xff]
                %5276 = vst [vmem:[%s5272 + $0x8] sm:$0xff] %v5275
                %v5277 = vld [vmem:[%s5271 + $0x10] sm:$0xff]
                %5278 = vst [vmem:[%s5272 + $0x20] sm:$0xff] %v5277
                %v5279 = vld [vmem:[%s5271 + $0x18] sm:$0xff]
                %5280 = vst [vmem:[%s5272 + $0x28] sm:$0xff] %v5279
                %v5281 = vld [vmem:[%s5271 + $0x20] sm:$0xff]
                %5282 = vst [vmem:[%s5272 + $0x40] sm:$0xff] %v5281
                %v5283 = vld [vmem:[%s5271 + $0x28] sm:$0xff]
                %5284 = vst [vmem:[%s5272 + $0x48] sm:$0xff] %v5283
                %v5285 = vld [vmem:[%s5271 + $0x30] sm:$0xff]
                %5286 = vst [vmem:[%s5272 + $0x60] sm:$0xff] %v5285
                %v5287 = vld [vmem:[%s5271 + $0x38] sm:$0xff]
                %5288 = vst [vmem:[%s5272 + $0x68] sm:$0xff] %v5287
              $region101: #{auxiliary_convolutions.5} parent=95 // loop_footer
                %s5270 = sadd.s32 1, %s5266
              $region102: #{auxiliary_convolutions.5} parent=95 // loop_footer_branch
                %5265 = sbr.rel target = $region98
              $region103: #{auxiliary_convolutions.5} parent=95 // loop_exit
                _
            $region96: #{auxiliary_convolutions.5} parent=91 // pred_fallthru
              _
            // Predicated region
            $region104: #{auxiliary_convolutions.5} parent=91 // pred_check
              _
            $region105: #{auxiliary_convolutions.5} parent=91 // pred_check_branch
              %5290 = sbr.rel target = $region107
            $region106: #{auxiliary_convolutions.5} parent=91 // pred_region
              _
            $region107: #{auxiliary_convolutions.5} parent=91 // pred_fallthru
              _
          $region92: #{auxiliary_convolutions.5} parent=87 // pred_fallthru
            _
          %5291 = vnop
        $region88: #{auxiliary_convolutions.5} parent=79 // pred_fallthru
          _
      $region80: #{auxiliary_convolutions.5} parent=5 // pred_fallthru
        _
      %p5292 = scmp.le.s32.totalorder 2, %s9
      // Predicated region
      $region108: #{auxiliary_convolutions.5} parent=5 // pred_check
        %p5293 = pneg %p5292
      $region109: #{auxiliary_convolutions.5} parent=5 // pred_check_branch
        %5295 = sbr.rel (%p5293) target = $region111
      $region110: #{auxiliary_convolutions.5} parent=5 // pred_region
        %s5296 = ssub.s32 %s9, 2
        // Predicated region
        $region112: #{auxiliary_convolutions.5} parent=110 // pred_check
          %p5297 = pneg %p130
        $region113: #{auxiliary_convolutions.5} parent=110 // pred_check_branch
          %5299 = sbr.rel (%p5297) target = $region115
        $region114: #{auxiliary_convolutions.5} parent=110 // pred_region
          %s5300 = sand.u32 %s115, 1
          %s5301 = sand.u32 %s115, 1
          %s5302 = smul.addr %s5301, 64
          %s5303 = scalar_lea.vmem [#allocation3], %s5302
        $region115: #{auxiliary_convolutions.5} parent=110 // pred_fallthru
          _
      $region111: #{auxiliary_convolutions.5} parent=5 // pred_fallthru
        _
    $region6: #{auxiliary_convolutions.5} parent=1 // loop_footer
      %s13 = sadd.s32 1, %s9
    $region7: #{auxiliary_convolutions.5} parent=1 // loop_footer_branch
      %8 = sbr.rel target = $region3
    $region8: #{auxiliary_convolutions.5} parent=1 // loop_exit
      _

// kernel: auxiliary_convolutions.7
$region0: #{auxiliary_convolutions.7}
  #allocation0 [shape = 'u32[]', space=smem, size = 0x4, offset = 0x4, fixed_abs, tag = 'smem constant byte address 0x4 - core index']
  #allocation1 [shape = 'u32[72,128]{1,0:T(1,128)}', space=vmem, size = 0x9000, scoped, tag = 'internal scratch']
  %s0 = inlined_call_operand.vmem [shape: bf16[8,1152], index: 0, kind: input, shape index: {}]
  %s1 = inlined_call_operand.vmem [shape: bf16[1152,256], index: 1, kind: input, shape index: {}]
  %s2 = inlined_call_operand.vmem [shape: f32[1,256], index: 2, kind: input, shape index: {}]
  %s3 = inlined_call_operand.vmem [shape: f32[8,256], index: 3, kind: output, shape index: {}]
  %s4 = sld [smem:[#allocation0]]
  $region22: #{auxiliary_convolutions.7} parent=0
    _
  %s6 = ssub.s32 1, %s4
  %s7 = scalar_select 0, %s6, %s4
  // Predicated region
  $region2: #{auxiliary_convolutions.7} parent=0 // pred_check
    _
  $region3: #{auxiliary_convolutions.7} parent=0 // pred_check_branch
    %9 = sbr.rel (0) target = $region5
  $region4: #{auxiliary_convolutions.7} parent=0 // pred_region
    _
  $region5: #{auxiliary_convolutions.7} parent=0 // pred_fallthru
    _
  // Predicated region
  $region6: #{auxiliary_convolutions.7} parent=0 // pred_check
    _
  $region7: #{auxiliary_convolutions.7} parent=0 // pred_check_branch
    %11 = sbr.rel (0) target = $region9
  $region8: #{auxiliary_convolutions.7} parent=0 // pred_region
    _
  $region9: #{auxiliary_convolutions.7} parent=0 // pred_fallthru
    _
  // Predicated region
  $region10: #{auxiliary_convolutions.7} parent=0 // pred_check
    _
  $region11: #{auxiliary_convolutions.7} parent=0 // pred_check_branch
    %13 = sbr.rel (0) target = $region13
  $region12: #{auxiliary_convolutions.7} parent=0 // pred_region
    _
  $region13: #{auxiliary_convolutions.7} parent=0 // pred_fallthru
    _
  %v14 = vld [vmem:[%s0] sm:$0xff]
  %v15 = vld [vmem:[%s0 + $0x8] sm:$0xff]
  %v16 = vld [vmem:[%s0 + $0x10] sm:$0xff]
  %v17 = vld [vmem:[%s0 + $0x18] sm:$0xff]
  %v18 = vld [vmem:[%s0 + $0x20] sm:$0xf]
  %v19 = vld [vmem:[%s1] sm:$0xff]
  %v20 = vld [vmem:[%s1 + $0x8] sm:$0xff]
  %v21 = vld [vmem:[%s1 + $0x10] sm:$0xff]
  %v22 = vld [vmem:[%s1 + $0x18] sm:$0xff]
  %v23 = vld [vmem:[%s1 + $0x20] sm:$0xff]
  %v24 = vld [vmem:[%s1 + $0x28] sm:$0xff]
  %v25 = vld [vmem:[%s1 + $0x30] sm:$0xff]
  %v26 = vld [vmem:[%s1 + $0x38] sm:$0xff]
  %v27 = vld [vmem:[%s1 + $0x40] sm:$0xff]
  %v28 = vld [vmem:[%s1 + $0x48] sm:$0xff]
  %v29 = vld [vmem:[%s1 + $0x50] sm:$0xff]
  %v30 = vld [vmem:[%s1 + $0x58] sm:$0xff]
  %v31 = vld [vmem:[%s1 + $0x60] sm:$0xff]
  %v32 = vld [vmem:[%s1 + $0x68] sm:$0xff]
  %v33 = vld [vmem:[%s1 + $0x70] sm:$0xff]
  %v34 = vld [vmem:[%s1 + $0x78] sm:$0xff]
  %v35 = vld [vmem:[%s1 + $0x80] sm:$0xff]
  %v36 = vld [vmem:[%s1 + $0x88] sm:$0xff]
  %v37 = vld [vmem:[%s1 + $0x90] sm:$0xff]
  %v38 = vld [vmem:[%s1 + $0x98] sm:$0xff]
  %v39 = vld [vmem:[%s1 + $0xa0] sm:$0xff]
  %v40 = vld [vmem:[%s1 + $0xa8] sm:$0xff]
  %v41 = vld [vmem:[%s1 + $0xb0] sm:$0xff]
  %v42 = vld [vmem:[%s1 + $0xb8] sm:$0xff]
  %v43 = vld [vmem:[%s1 + $0xc0] sm:$0xff]
  %v44 = vld [vmem:[%s1 + $0xc8] sm:$0xff]
  %v45 = vld [vmem:[%s1 + $0xd0] sm:$0xff]
  %v46 = vld [vmem:[%s1 + $0xd8] sm:$0xff]
  %v47 = vld [vmem:[%s1 + $0xe0] sm:$0xff]
  %v48 = vld [vmem:[%s1 + $0xe8] sm:$0xff]
  %v49 = vld [vmem:[%s1 + $0xf0] sm:$0xff]
  %v50 = vld [vmem:[%s1 + $0xf8] sm:$0xff]
  %v51 = vld [vmem:[%s1 + $0x100] sm:$0xff]
  %v52 = vld [vmem:[%s1 + $0x108] sm:$0xff]
  %v53 = vld [vmem:[%s1 + $0x110] sm:$0xff]
  %v54 = vld [vmem:[%s1 + $0x118] sm:$0xff]
  %v55 = vld [vmem:[%s1 + $0x120] sm:$0xff]
  %v56 = vld [vmem:[%s1 + $0x128] sm:$0xff]
  %v57 = vld [vmem:[%s1 + $0x130] sm:$0xff]
  %v58 = vld [vmem:[%s1 + $0x138] sm:$0xff]
  %v59 = vld [vmem:[%s1 + $0x140] sm:$0xff]
  %v60 = vld [vmem:[%s1 + $0x148] sm:$0xff]
  %v61 = vld [vmem:[%s1 + $0x150] sm:$0xff]
  %v62 = vld [vmem:[%s1 + $0x158] sm:$0xff]
  %v63 = vld [vmem:[%s1 + $0x160] sm:$0xff]
  %v64 = vld [vmem:[%s1 + $0x168] sm:$0xff]
  %v65 = vld [vmem:[%s1 + $0x170] sm:$0xff]
  %v66 = vld [vmem:[%s1 + $0x178] sm:$0xff]
  %v67 = vld [vmem:[%s1 + $0x180] sm:$0xff]
  %v68 = vld [vmem:[%s1 + $0x188] sm:$0xff]
  %v69 = vld [vmem:[%s1 + $0x190] sm:$0xff]
  %v70 = vld [vmem:[%s1 + $0x198] sm:$0xff]
  %v71 = vld [vmem:[%s1 + $0x1a0] sm:$0xff]
  %v72 = vld [vmem:[%s1 + $0x1a8] sm:$0xff]
  %v73 = vld [vmem:[%s1 + $0x1b0] sm:$0xff]
  %v74 = vld [vmem:[%s1 + $0x1b8] sm:$0xff]
  %v75 = vld [vmem:[%s1 + $0x1c0] sm:$0xff]
  %v76 = vld [vmem:[%s1 + $0x1c8] sm:$0xff]
  %v77 = vld [vmem:[%s1 + $0x1d0] sm:$0xff]
  %v78 = vld [vmem:[%s1 + $0x1d8] sm:$0xff]
  %v79 = vld [vmem:[%s1 + $0x1e0] sm:$0xff]
  %v80 = vld [vmem:[%s1 + $0x1e8] sm:$0xff]
  %v81 = vld [vmem:[%s1 + $0x1f0] sm:$0xff]
  %v82 = vld [vmem:[%s1 + $0x1f8] sm:$0xff]
  %v83 = vld [vmem:[%s1 + $0x200] sm:$0xff]
  %v84 = vld [vmem:[%s1 + $0x208] sm:$0xff]
  %v85 = vld [vmem:[%s1 + $0x210] sm:$0xff]
  %v86 = vld [vmem:[%s1 + $0x218] sm:$0xff]
  %v87 = vld [vmem:[%s1 + $0x220] sm:$0xff]
  %v88 = vld [vmem:[%s1 + $0x228] sm:$0xff]
  %v89 = vld [vmem:[%s1 + $0x230] sm:$0xff]
  %v90 = vld [vmem:[%s1 + $0x238] sm:$0xff]
  %v91 = vld [vmem:[%s1 + $0x240] sm:$0xff]
  %v92 = vld [vmem:[%s1 + $0x248] sm:$0xff]
  %v93 = vld [vmem:[%s1 + $0x250] sm:$0xff]
  %v94 = vld [vmem:[%s1 + $0x258] sm:$0xff]
  %v95 = vld [vmem:[%s1 + $0x260] sm:$0xff]
  %v96 = vld [vmem:[%s1 + $0x268] sm:$0xff]
  %v97 = vld [vmem:[%s1 + $0x270] sm:$0xff]
  %v98 = vld [vmem:[%s1 + $0x278] sm:$0xff]
  %v99 = vld [vmem:[%s1 + $0x280] sm:$0xff]
  %v100 = vld [vmem:[%s1 + $0x288] sm:$0xff]
  %v101 = vld [vmem:[%s1 + $0x290] sm:$0xff]
  %v102 = vld [vmem:[%s1 + $0x298] sm:$0xff]
  %v103 = vld [vmem:[%s1 + $0x2a0] sm:$0xff]
  %v104 = vld [vmem:[%s1 + $0x2a8] sm:$0xff]
  %v105 = vld [vmem:[%s1 + $0x2b0] sm:$0xff]
  %v106 = vld [vmem:[%s1 + $0x2b8] sm:$0xff]
  %v107 = vld [vmem:[%s1 + $0x2c0] sm:$0xff]
  %v108 = vld [vmem:[%s1 + $0x2c8] sm:$0xff]
  %v109 = vld [vmem:[%s1 + $0x2d0] sm:$0xff]
  %v110 = vld [vmem:[%s1 + $0x2d8] sm:$0xff]
  %v111 = vld [vmem:[%s1 + $0x2e0] sm:$0xff]
  %v112 = vld [vmem:[%s1 + $0x2e8] sm:$0xff]
  %v113 = vld [vmem:[%s1 + $0x2f0] sm:$0xff]
  %v114 = vld [vmem:[%s1 + $0x2f8] sm:$0xff]
  %v115 = vld [vmem:[%s1 + $0x300] sm:$0xff]
  %v116 = vld [vmem:[%s1 + $0x308] sm:$0xff]
  %v117 = vld [vmem:[%s1 + $0x310] sm:$0xff]
  %v118 = vld [vmem:[%s1 + $0x318] sm:$0xff]
  %v119 = vld [vmem:[%s1 + $0x320] sm:$0xff]
  %v120 = vld [vmem:[%s1 + $0x328] sm:$0xff]
  %v121 = vld [vmem:[%s1 + $0x330] sm:$0xff]
  %v122 = vld [vmem:[%s1 + $0x338] sm:$0xff]
  %v123 = vld [vmem:[%s1 + $0x340] sm:$0xff]
  %v124 = vld [vmem:[%s1 + $0x348] sm:$0xff]
  %v125 = vld [vmem:[%s1 + $0x350] sm:$0xff]
  %v126 = vld [vmem:[%s1 + $0x358] sm:$0xff]
  %v127 = vld [vmem:[%s1 + $0x360] sm:$0xff]
  %v128 = vld [vmem:[%s1 + $0x368] sm:$0xff]
  %v129 = vld [vmem:[%s1 + $0x370] sm:$0xff]
  %v130 = vld [vmem:[%s1 + $0x378] sm:$0xff]
  %v131 = vld [vmem:[%s1 + $0x380] sm:$0xff]
  %v132 = vld [vmem:[%s1 + $0x388] sm:$0xff]
  %v133 = vld [vmem:[%s1 + $0x390] sm:$0xff]
  %v134 = vld [vmem:[%s1 + $0x398] sm:$0xff]
  %v135 = vld [vmem:[%s1 + $0x3a0] sm:$0xff]
  %v136 = vld [vmem:[%s1 + $0x3a8] sm:$0xff]
  %v137 = vld [vmem:[%s1 + $0x3b0] sm:$0xff]
  %v138 = vld [vmem:[%s1 + $0x3b8] sm:$0xff]
  %v139 = vld [vmem:[%s1 + $0x3c0] sm:$0xff]
  %v140 = vld [vmem:[%s1 + $0x3c8] sm:$0xff]
  %v141 = vld [vmem:[%s1 + $0x3d0] sm:$0xff]
  %v142 = vld [vmem:[%s1 + $0x3d8] sm:$0xff]
  %v143 = vld [vmem:[%s1 + $0x3e0] sm:$0xff]
  %v144 = vld [vmem:[%s1 + $0x3e8] sm:$0xff]
  %v145 = vld [vmem:[%s1 + $0x3f0] sm:$0xff]
  %v146 = vld [vmem:[%s1 + $0x3f8] sm:$0xff]
  %v147 = vld [vmem:[%s1 + $0x400] sm:$0xff]
  %v148 = vld [vmem:[%s1 + $0x408] sm:$0xff]
  %v149 = vld [vmem:[%s1 + $0x410] sm:$0xff]
  %v150 = vld [vmem:[%s1 + $0x418] sm:$0xff]
  %v151 = vld [vmem:[%s1 + $0x420] sm:$0xff]
  %v152 = vld [vmem:[%s1 + $0x428] sm:$0xff]
  %v153 = vld [vmem:[%s1 + $0x430] sm:$0xff]
  %v154 = vld [vmem:[%s1 + $0x438] sm:$0xff]
  %v155 = vld [vmem:[%s1 + $0x440] sm:$0xff]
  %v156 = vld [vmem:[%s1 + $0x448] sm:$0xff]
  %v157 = vld [vmem:[%s1 + $0x450] sm:$0xff]
  %v158 = vld [vmem:[%s1 + $0x458] sm:$0xff]
  %v159 = vld [vmem:[%s1 + $0x460] sm:$0xff]
  %v160 = vld [vmem:[%s1 + $0x468] sm:$0xff]
  %v161 = vld [vmem:[%s1 + $0x470] sm:$0xff]
  %v162 = vld [vmem:[%s1 + $0x478] sm:$0xff]
  %v163 = vld [vmem:[%s2] sm:$0x3]
  %v165 = vperm.slane %v163, 0
  %v166 = vperm.slane %v163, 1
  %v174 = vunpack.c.l.b16 %v14
  %v175 = vunpack.c.h.b16 %v14
  %v176 = vunpack.c.l.b16 %v15
  %v177 = vunpack.c.h.b16 %v15
  %v178 = vunpack.c.l.b16 %v16
  %v179 = vunpack.c.h.b16 %v16
  %v180 = vunpack.c.l.b16 %v17
  %v181 = vunpack.c.h.b16 %v17
  %v182 = vunpack.c.l.b16 %v18
  %v183 = vpack.c.b16 %v174, %v174
  %v184 = vpack.c.b16 %v175, %v175
  %v185 = vpack.c.b16 %v176, %v176
  %v186 = vpack.c.b16 %v177, %v177
  %v187 = vpack.c.b16 %v178, %v178
  %v188 = vpack.c.b16 %v179, %v179
  %v189 = vpack.c.b16 %v180, %v180
  %v190 = vpack.c.b16 %v181, %v181
  %v191 = vpack.c.b16 %v182, %v182
  %v345 = vunpack.c.l.b16 %v19
  %v346 = vunpack.c.h.b16 %v19
  %v347 = vunpack.c.l.b16 %v20
  %v348 = vunpack.c.h.b16 %v20
  %v349 = vunpack.c.l.b16 %v21
  %v350 = vunpack.c.h.b16 %v21
  %v351 = vunpack.c.l.b16 %v22
  %v352 = vunpack.c.h.b16 %v22
  %v353 = vunpack.c.l.b16 %v23
  %v354 = vunpack.c.h.b16 %v23
  %v355 = vunpack.c.l.b16 %v24
  %v356 = vunpack.c.h.b16 %v24
  %v357 = vunpack.c.l.b16 %v25
  %v358 = vunpack.c.h.b16 %v25
  %v359 = vunpack.c.l.b16 %v26
  %v360 = vunpack.c.h.b16 %v26
  %v361 = vunpack.c.l.b16 %v27
  %v362 = vunpack.c.h.b16 %v27
  %v363 = vunpack.c.l.b16 %v28
  %v364 = vunpack.c.h.b16 %v28
  %v365 = vunpack.c.l.b16 %v29
  %v366 = vunpack.c.h.b16 %v29
  %v367 = vunpack.c.l.b16 %v30
  %v368 = vunpack.c.h.b16 %v30
  %v369 = vunpack.c.l.b16 %v31
  %v370 = vunpack.c.h.b16 %v31
  %v371 = vunpack.c.l.b16 %v32
  %v372 = vunpack.c.h.b16 %v32
  %v373 = vunpack.c.l.b16 %v33
  %v374 = vunpack.c.h.b16 %v33
  %v375 = vunpack.c.l.b16 %v34
  %v376 = vunpack.c.h.b16 %v34
  %v377 = vunpack.c.l.b16 %v35
  %v378 = vunpack.c.h.b16 %v35
  %v379 = vunpack.c.l.b16 %v36
  %v380 = vunpack.c.h.b16 %v36
  %v381 = vunpack.c.l.b16 %v37
  %v382 = vunpack.c.h.b16 %v37
  %v383 = vunpack.c.l.b16 %v38
  %v384 = vunpack.c.h.b16 %v38
  %v385 = vunpack.c.l.b16 %v39
  %v386 = vunpack.c.h.b16 %v39
  %v387 = vunpack.c.l.b16 %v40
  %v388 = vunpack.c.h.b16 %v40
  %v389 = vunpack.c.l.b16 %v41
  %v390 = vunpack.c.h.b16 %v41
  %v391 = vunpack.c.l.b16 %v42
  %v392 = vunpack.c.h.b16 %v42
  %v393 = vunpack.c.l.b16 %v43
  %v394 = vunpack.c.h.b16 %v43
  %v395 = vunpack.c.l.b16 %v44
  %v396 = vunpack.c.h.b16 %v44
  %v397 = vunpack.c.l.b16 %v45
  %v398 = vunpack.c.h.b16 %v45
  %v399 = vunpack.c.l.b16 %v46
  %v400 = vunpack.c.h.b16 %v46
  %v401 = vunpack.c.l.b16 %v47
  %v402 = vunpack.c.h.b16 %v47
  %v403 = vunpack.c.l.b16 %v48
  %v404 = vunpack.c.h.b16 %v48
  %v405 = vunpack.c.l.b16 %v49
  %v406 = vunpack.c.h.b16 %v49
  %v407 = vunpack.c.l.b16 %v50
  %v408 = vunpack.c.h.b16 %v50
  %v409 = vunpack.c.l.b16 %v51
  %v410 = vunpack.c.h.b16 %v51
  %v411 = vunpack.c.l.b16 %v52
  %v412 = vunpack.c.h.b16 %v52
  %v413 = vunpack.c.l.b16 %v53
  %v414 = vunpack.c.h.b16 %v53
  %v415 = vunpack.c.l.b16 %v54
  %v416 = vunpack.c.h.b16 %v54
  %v417 = vunpack.c.l.b16 %v55
  %v418 = vunpack.c.h.b16 %v55
  %v419 = vunpack.c.l.b16 %v56
  %v420 = vunpack.c.h.b16 %v56
  %v421 = vunpack.c.l.b16 %v57
  %v422 = vunpack.c.h.b16 %v57
  %v423 = vunpack.c.l.b16 %v58
  %v424 = vunpack.c.h.b16 %v58
  %v425 = vunpack.c.l.b16 %v59
  %v426 = vunpack.c.h.b16 %v59
  %v427 = vunpack.c.l.b16 %v60
  %v428 = vunpack.c.h.b16 %v60
  %v429 = vunpack.c.l.b16 %v61
  %v430 = vunpack.c.h.b16 %v61
  %v431 = vunpack.c.l.b16 %v62
  %v432 = vunpack.c.h.b16 %v62
  %v433 = vunpack.c.l.b16 %v63
  %v434 = vunpack.c.h.b16 %v63
  %v435 = vunpack.c.l.b16 %v64
  %v436 = vunpack.c.h.b16 %v64
  %v437 = vunpack.c.l.b16 %v65
  %v438 = vunpack.c.h.b16 %v65
  %v439 = vunpack.c.l.b16 %v66
  %v440 = vunpack.c.h.b16 %v66
  %v441 = vunpack.c.l.b16 %v67
  %v442 = vunpack.c.h.b16 %v67
  %v443 = vunpack.c.l.b16 %v68
  %v444 = vunpack.c.h.b16 %v68
  %v445 = vunpack.c.l.b16 %v69
  %v446 = vunpack.c.h.b16 %v69
  %v447 = vunpack.c.l.b16 %v70
  %v448 = vunpack.c.h.b16 %v70
  %v449 = vunpack.c.l.b16 %v71
  %v450 = vunpack.c.h.b16 %v71
  %v451 = vunpack.c.l.b16 %v72
  %v452 = vunpack.c.h.b16 %v72
  %v453 = vunpack.c.l.b16 %v73
  %v454 = vunpack.c.h.b16 %v73
  %v455 = vunpack.c.l.b16 %v74
  %v456 = vunpack.c.h.b16 %v74
  %v457 = vunpack.c.l.b16 %v75
  %v458 = vunpack.c.h.b16 %v75
  %v459 = vunpack.c.l.b16 %v76
  %v460 = vunpack.c.h.b16 %v76
  %v461 = vunpack.c.l.b16 %v77
  %v462 = vunpack.c.h.b16 %v77
  %v463 = vunpack.c.l.b16 %v78
  %v464 = vunpack.c.h.b16 %v78
  %v465 = vunpack.c.l.b16 %v79
  %v466 = vunpack.c.h.b16 %v79
  %v467 = vunpack.c.l.b16 %v80
  %v468 = vunpack.c.h.b16 %v80
  %v469 = vunpack.c.l.b16 %v81
  %v470 = vunpack.c.h.b16 %v81
  %v471 = vunpack.c.l.b16 %v82
  %v472 = vunpack.c.h.b16 %v82
  %v473 = vunpack.c.l.b16 %v83
  %v474 = vunpack.c.h.b16 %v83
  %v475 = vunpack.c.l.b16 %v84
  %v476 = vunpack.c.h.b16 %v84
  %v477 = vunpack.c.l.b16 %v85
  %v478 = vunpack.c.h.b16 %v85
  %v479 = vunpack.c.l.b16 %v86
  %v480 = vunpack.c.h.b16 %v86
  %v481 = vunpack.c.l.b16 %v87
  %v482 = vunpack.c.h.b16 %v87
  %v483 = vunpack.c.l.b16 %v88
  %v484 = vunpack.c.h.b16 %v88
  %v485 = vunpack.c.l.b16 %v89
  %v486 = vunpack.c.h.b16 %v89
  %v487 = vunpack.c.l.b16 %v90
  %v488 = vunpack.c.h.b16 %v90
  %v489 = vunpack.c.l.b16 %v91
  %v490 = vunpack.c.h.b16 %v91
  %v491 = vunpack.c.l.b16 %v92
  %v492 = vunpack.c.h.b16 %v92
  %v493 = vunpack.c.l.b16 %v93
  %v494 = vunpack.c.h.b16 %v93
  %v495 = vunpack.c.l.b16 %v94
  %v496 = vunpack.c.h.b16 %v94
  %v497 = vunpack.c.l.b16 %v95
  %v498 = vunpack.c.h.b16 %v95
  %v499 = vunpack.c.l.b16 %v96
  %v500 = vunpack.c.h.b16 %v96
  %v501 = vunpack.c.l.b16 %v97
  %v502 = vunpack.c.h.b16 %v97
  %v503 = vunpack.c.l.b16 %v98
  %v504 = vunpack.c.h.b16 %v98
  %v505 = vunpack.c.l.b16 %v99
  %v506 = vunpack.c.h.b16 %v99
  %v507 = vunpack.c.l.b16 %v100
  %v508 = vunpack.c.h.b16 %v100
  %v509 = vunpack.c.l.b16 %v101
  %v510 = vunpack.c.h.b16 %v101
  %v511 = vunpack.c.l.b16 %v102
  %v512 = vunpack.c.h.b16 %v102
  %v513 = vunpack.c.l.b16 %v103
  %v514 = vunpack.c.h.b16 %v103
  %v515 = vunpack.c.l.b16 %v104
  %v516 = vunpack.c.h.b16 %v104
  %v517 = vunpack.c.l.b16 %v105
  %v518 = vunpack.c.h.b16 %v105
  %v519 = vunpack.c.l.b16 %v106
  %v520 = vunpack.c.h.b16 %v106
  %v521 = vunpack.c.l.b16 %v107
  %v522 = vunpack.c.h.b16 %v107
  %v523 = vunpack.c.l.b16 %v108
  %v524 = vunpack.c.h.b16 %v108
  %v525 = vunpack.c.l.b16 %v109
  %v526 = vunpack.c.h.b16 %v109
  %v527 = vunpack.c.l.b16 %v110
  %v528 = vunpack.c.h.b16 %v110
  %v529 = vunpack.c.l.b16 %v111
  %v530 = vunpack.c.h.b16 %v111
  %v531 = vunpack.c.l.b16 %v112
  %v532 = vunpack.c.h.b16 %v112
  %v533 = vunpack.c.l.b16 %v113
  %v534 = vunpack.c.h.b16 %v113
  %v535 = vunpack.c.l.b16 %v114
  %v536 = vunpack.c.h.b16 %v114
  %v537 = vunpack.c.l.b16 %v115
  %v538 = vunpack.c.h.b16 %v115
  %v539 = vunpack.c.l.b16 %v116
  %v540 = vunpack.c.h.b16 %v116
  %v541 = vunpack.c.l.b16 %v117
  %v542 = vunpack.c.h.b16 %v117
  %v543 = vunpack.c.l.b16 %v118
  %v544 = vunpack.c.h.b16 %v118
  %v545 = vunpack.c.l.b16 %v119
  %v546 = vunpack.c.h.b16 %v119
  %v547 = vunpack.c.l.b16 %v120
  %v548 = vunpack.c.h.b16 %v120
  %v549 = vunpack.c.l.b16 %v121
  %v550 = vunpack.c.h.b16 %v121
  %v551 = vunpack.c.l.b16 %v122
  %v552 = vunpack.c.h.b16 %v122
  %v553 = vunpack.c.l.b16 %v123
  %v554 = vunpack.c.h.b16 %v123
  %v555 = vunpack.c.l.b16 %v124
  %v556 = vunpack.c.h.b16 %v124
  %v557 = vunpack.c.l.b16 %v125
  %v558 = vunpack.c.h.b16 %v125
  %v559 = vunpack.c.l.b16 %v126
  %v560 = vunpack.c.h.b16 %v126
  %v561 = vunpack.c.l.b16 %v127
  %v562 = vunpack.c.h.b16 %v127
  %v563 = vunpack.c.l.b16 %v128
  %v564 = vunpack.c.h.b16 %v128
  %v565 = vunpack.c.l.b16 %v129
  %v566 = vunpack.c.h.b16 %v129
  %v567 = vunpack.c.l.b16 %v130
  %v568 = vunpack.c.h.b16 %v130
  %v569 = vunpack.c.l.b16 %v131
  %v570 = vunpack.c.h.b16 %v131
  %v571 = vunpack.c.l.b16 %v132
  %v572 = vunpack.c.h.b16 %v132
  %v573 = vunpack.c.l.b16 %v133
  %v574 = vunpack.c.h.b16 %v133
  %v575 = vunpack.c.l.b16 %v134
  %v576 = vunpack.c.h.b16 %v134
  %v577 = vunpack.c.l.b16 %v135
  %v578 = vunpack.c.h.b16 %v135
  %v579 = vunpack.c.l.b16 %v136
  %v580 = vunpack.c.h.b16 %v136
  %v581 = vunpack.c.l.b16 %v137
  %v582 = vunpack.c.h.b16 %v137
  %v583 = vunpack.c.l.b16 %v138
  %v584 = vunpack.c.h.b16 %v138
  %v585 = vunpack.c.l.b16 %v139
  %v586 = vunpack.c.h.b16 %v139
  %v587 = vunpack.c.l.b16 %v140
  %v588 = vunpack.c.h.b16 %v140
  %v589 = vunpack.c.l.b16 %v141
  %v590 = vunpack.c.h.b16 %v141
  %v591 = vunpack.c.l.b16 %v142
  %v592 = vunpack.c.h.b16 %v142
  %v593 = vunpack.c.l.b16 %v143
  %v594 = vunpack.c.h.b16 %v143
  %v595 = vunpack.c.l.b16 %v144
  %v596 = vunpack.c.h.b16 %v144
  %v597 = vunpack.c.l.b16 %v145
  %v598 = vunpack.c.h.b16 %v145
  %v599 = vunpack.c.l.b16 %v146
  %v600 = vunpack.c.h.b16 %v146
  %v601 = vunpack.c.l.b16 %v147
  %v602 = vunpack.c.h.b16 %v147
  %v603 = vunpack.c.l.b16 %v148
  %v604 = vunpack.c.h.b16 %v148
  %v605 = vunpack.c.l.b16 %v149
  %v606 = vunpack.c.h.b16 %v149
  %v607 = vunpack.c.l.b16 %v150
  %v608 = vunpack.c.h.b16 %v150
  %v609 = vunpack.c.l.b16 %v151
  %v610 = vunpack.c.h.b16 %v151
  %v611 = vunpack.c.l.b16 %v152
  %v612 = vunpack.c.h.b16 %v152
  %v613 = vunpack.c.l.b16 %v153
  %v614 = vunpack.c.h.b16 %v153
  %v615 = vunpack.c.l.b16 %v154
  %v616 = vunpack.c.h.b16 %v154
  %v617 = vunpack.c.l.b16 %v155
  %v618 = vunpack.c.h.b16 %v155
  %v619 = vunpack.c.l.b16 %v156
  %v620 = vunpack.c.h.b16 %v156
  %v621 = vunpack.c.l.b16 %v157
  %v622 = vunpack.c.h.b16 %v157
  %v623 = vunpack.c.l.b16 %v158
  %v624 = vunpack.c.h.b16 %v158
  %v625 = vunpack.c.l.b16 %v159
  %v626 = vunpack.c.h.b16 %v159
  %v627 = vunpack.c.l.b16 %v160
  %v628 = vunpack.c.h.b16 %v160
  %v629 = vunpack.c.l.b16 %v161
  %v630 = vunpack.c.h.b16 %v161
  %v631 = vunpack.c.l.b16 %v162
  %v632 = vunpack.c.h.b16 %v162
  %v633 = vpack.c.b16 %v347, %v345
  %v634 = vpack.c.b16 %v348, %v346
  %v635 = vpack.c.b16 %v351, %v349
  %v636 = vpack.c.b16 %v352, %v350
  %v637 = vpack.c.b16 %v355, %v353
  %v638 = vpack.c.b16 %v356, %v354
  %v639 = vpack.c.b16 %v359, %v357
  %v640 = vpack.c.b16 %v360, %v358
  %v641 = vpack.c.b16 %v363, %v361
  %v642 = vpack.c.b16 %v364, %v362
  %v643 = vpack.c.b16 %v367, %v365
  %v644 = vpack.c.b16 %v368, %v366
  %v645 = vpack.c.b16 %v371, %v369
  %v646 = vpack.c.b16 %v372, %v370
  %v647 = vpack.c.b16 %v375, %v373
  %v648 = vpack.c.b16 %v376, %v374
  %v649 = vpack.c.b16 %v379, %v377
  %v650 = vpack.c.b16 %v380, %v378
  %v651 = vpack.c.b16 %v383, %v381
  %v652 = vpack.c.b16 %v384, %v382
  %v653 = vpack.c.b16 %v387, %v385
  %v654 = vpack.c.b16 %v388, %v386
  %v655 = vpack.c.b16 %v391, %v389
  %v656 = vpack.c.b16 %v392, %v390
  %v657 = vpack.c.b16 %v395, %v393
  %v658 = vpack.c.b16 %v396, %v394
  %v659 = vpack.c.b16 %v399, %v397
  %v660 = vpack.c.b16 %v400, %v398
  %v661 = vpack.c.b16 %v403, %v401
  %v662 = vpack.c.b16 %v404, %v402
  %v663 = vpack.c.b16 %v407, %v405
  %v664 = vpack.c.b16 %v408, %v406
  %v665 = vpack.c.b16 %v411, %v409
  %v666 = vpack.c.b16 %v412, %v410
  %v667 = vpack.c.b16 %v415, %v413
  %v668 = vpack.c.b16 %v416, %v414
  %v669 = vpack.c.b16 %v419, %v417
  %v670 = vpack.c.b16 %v420, %v418
  %v671 = vpack.c.b16 %v423, %v421
  %v672 = vpack.c.b16 %v424, %v422
  %v673 = vpack.c.b16 %v427, %v425
  %v674 = vpack.c.b16 %v428, %v426
  %v675 = vpack.c.b16 %v431, %v429
  %v676 = vpack.c.b16 %v432, %v430
  %v677 = vpack.c.b16 %v435, %v433
  %v678 = vpack.c.b16 %v436, %v434
  %v679 = vpack.c.b16 %v439, %v437
  %v680 = vpack.c.b16 %v440, %v438
  %v681 = vpack.c.b16 %v443, %v441
  %v682 = vpack.c.b16 %v444, %v442
  %v683 = vpack.c.b16 %v447, %v445
  %v684 = vpack.c.b16 %v448, %v446
  %v685 = vpack.c.b16 %v451, %v449
  %v686 = vpack.c.b16 %v452, %v450
  %v687 = vpack.c.b16 %v455, %v453
  %v688 = vpack.c.b16 %v456, %v454
  %v689 = vpack.c.b16 %v459, %v457
  %v690 = vpack.c.b16 %v460, %v458
  %v691 = vpack.c.b16 %v463, %v461
  %v692 = vpack.c.b16 %v464, %v462
  %v693 = vpack.c.b16 %v467, %v465
  %v694 = vpack.c.b16 %v468, %v466
  %v695 = vpack.c.b16 %v471, %v469
  %v696 = vpack.c.b16 %v472, %v470
  %v697 = vpack.c.b16 %v475, %v473
  %v698 = vpack.c.b16 %v476, %v474
  %v699 = vpack.c.b16 %v479, %v477
  %v700 = vpack.c.b16 %v480, %v478
  %v701 = vpack.c.b16 %v483, %v481
  %v702 = vpack.c.b16 %v484, %v482
  %v703 = vpack.c.b16 %v487, %v485
  %v704 = vpack.c.b16 %v488, %v486
  %v705 = vpack.c.b16 %v491, %v489
  %v706 = vpack.c.b16 %v492, %v490
  %v707 = vpack.c.b16 %v495, %v493
  %v708 = vpack.c.b16 %v496, %v494
  %v709 = vpack.c.b16 %v499, %v497
  %v710 = vpack.c.b16 %v500, %v498
  %v711 = vpack.c.b16 %v503, %v501
  %v712 = vpack.c.b16 %v504, %v502
  %v713 = vpack.c.b16 %v507, %v505
  %v714 = vpack.c.b16 %v508, %v506
  %v715 = vpack.c.b16 %v511, %v509
  %v716 = vpack.c.b16 %v512, %v510
  %v717 = vpack.c.b16 %v515, %v513
  %v718 = vpack.c.b16 %v516, %v514
  %v719 = vpack.c.b16 %v519, %v517
  %v720 = vpack.c.b16 %v520, %v518
  %v721 = vpack.c.b16 %v523, %v521
  %v722 = vpack.c.b16 %v524, %v522
  %v723 = vpack.c.b16 %v527, %v525
  %v724 = vpack.c.b16 %v528, %v526
  %v725 = vpack.c.b16 %v531, %v529
  %v726 = vpack.c.b16 %v532, %v530
  %v727 = vpack.c.b16 %v535, %v533
  %v728 = vpack.c.b16 %v536, %v534
  %v729 = vpack.c.b16 %v539, %v537
  %v730 = vpack.c.b16 %v540, %v538
  %v731 = vpack.c.b16 %v543, %v541
  %v732 = vpack.c.b16 %v544, %v542
  %v733 = vpack.c.b16 %v547, %v545
  %v734 = vpack.c.b16 %v548, %v546
  %v735 = vpack.c.b16 %v551, %v549
  %v736 = vpack.c.b16 %v552, %v550
  %v737 = vpack.c.b16 %v555, %v553
  %v738 = vpack.c.b16 %v556, %v554
  %v739 = vpack.c.b16 %v559, %v557
  %v740 = vpack.c.b16 %v560, %v558
  %v741 = vpack.c.b16 %v563, %v561
  %v742 = vpack.c.b16 %v564, %v562
  %v743 = vpack.c.b16 %v567, %v565
  %v744 = vpack.c.b16 %v568, %v566
  %v745 = vpack.c.b16 %v571, %v569
  %v746 = vpack.c.b16 %v572, %v570
  %v747 = vpack.c.b16 %v575, %v573
  %v748 = vpack.c.b16 %v576, %v574
  %v749 = vpack.c.b16 %v579, %v577
  %v750 = vpack.c.b16 %v580, %v578
  %v751 = vpack.c.b16 %v583, %v581
  %v752 = vpack.c.b16 %v584, %v582
  %v753 = vpack.c.b16 %v587, %v585
  %v754 = vpack.c.b16 %v588, %v586
  %v755 = vpack.c.b16 %v591, %v589
  %v756 = vpack.c.b16 %v592, %v590
  %v757 = vpack.c.b16 %v595, %v593
  %v758 = vpack.c.b16 %v596, %v594
  %v759 = vpack.c.b16 %v599, %v597
  %v760 = vpack.c.b16 %v600, %v598
  %v761 = vpack.c.b16 %v603, %v601
  %v762 = vpack.c.b16 %v604, %v602
  %v763 = vpack.c.b16 %v607, %v605
  %v764 = vpack.c.b16 %v608, %v606
  %v765 = vpack.c.b16 %v611, %v609
  %v766 = vpack.c.b16 %v612, %v610
  %v767 = vpack.c.b16 %v615, %v613
  %v768 = vpack.c.b16 %v616, %v614
  %v769 = vpack.c.b16 %v619, %v617
  %v770 = vpack.c.b16 %v620, %v618
  %v771 = vpack.c.b16 %v623, %v621
  %v772 = vpack.c.b16 %v624, %v622
  %v773 = vpack.c.b16 %v627, %v625
  %v774 = vpack.c.b16 %v628, %v626
  %v775 = vpack.c.b16 %v631, %v629
  %v776 = vpack.c.b16 %v632, %v630
  %921 = vmatpush.bf16.msra.mxu0 %v647
  %922 = vmatpush.bf16.msra.mxu0 %v645
  %923 = vmatpush.bf16.msra.mxu0 %v643
  %924 = vmatpush.bf16.msra.mxu0 %v641
  %925 = vmatpush.bf16.msra.mxu0 %v639
  %926 = vmatpush.bf16.msra.mxu0 %v637
  %927 = vmatpush.bf16.msra.mxu0 %v635
  %928 = vmatpush.bf16.msra.mxu0 %v633
  %929 = vmatmul.bf16.gmra.mxu0 %v183
  %v930 = vpop.f32.mrf.mxu0
  %v931 = vadd.f32 %v165, %v930
  %v932 = vpop.f32.mrf.mxu0
  %933 = vdwg.mxu0
  %934 = vmatpush.bf16.msra.mxu0 %v663
  %935 = vmatpush.bf16.msra.mxu0 %v661
  %936 = vmatpush.bf16.msra.mxu0 %v659
  %937 = vmatpush.bf16.msra.mxu0 %v657
  %938 = vmatpush.bf16.msra.mxu0 %v655
  %939 = vmatpush.bf16.msra.mxu0 %v653
  %940 = vmatpush.bf16.msra.mxu0 %v651
  %941 = vmatpush.bf16.msra.mxu0 %v649
  %942 = vmatmul.bf16.gmra.mxu0 %v184
  %v943 = vpop.f32.mrf.mxu0
  %v944 = vadd.f32 %v931, %v943
  %v945 = vpop.f32.mrf.mxu0
  %946 = vdwg.mxu0
  %947 = vmatpush.bf16.msra.mxu0 %v679
  %948 = vmatpush.bf16.msra.mxu0 %v677
  %949 = vmatpush.bf16.msra.mxu0 %v675
  %950 = vmatpush.bf16.msra.mxu0 %v673
  %951 = vmatpush.bf16.msra.mxu0 %v671
  %952 = vmatpush.bf16.msra.mxu0 %v669
  %953 = vmatpush.bf16.msra.mxu0 %v667
  %954 = vmatpush.bf16.msra.mxu0 %v665
  %955 = vmatmul.bf16.gmra.mxu0 %v185
  %v956 = vpop.f32.mrf.mxu0
  %v957 = vadd.f32 %v944, %v956
  %v958 = vpop.f32.mrf.mxu0
  %959 = vdwg.mxu0
  %960 = vmatpush.bf16.msra.mxu0 %v695
  %961 = vmatpush.bf16.msra.mxu0 %v693
  %962 = vmatpush.bf16.msra.mxu0 %v691
  %963 = vmatpush.bf16.msra.mxu0 %v689
  %964 = vmatpush.bf16.msra.mxu0 %v687
  %965 = vmatpush.bf16.msra.mxu0 %v685
  %966 = vmatpush.bf16.msra.mxu0 %v683
  %967 = vmatpush.bf16.msra.mxu0 %v681
  %968 = vmatmul.bf16.gmra.mxu0 %v186
  %v969 = vpop.f32.mrf.mxu0
  %v970 = vadd.f32 %v957, %v969
  %v971 = vpop.f32.mrf.mxu0
  %972 = vdwg.mxu0
  %973 = vmatpush.bf16.msra.mxu0 %v711
  %974 = vmatpush.bf16.msra.mxu0 %v709
  %975 = vmatpush.bf16.msra.mxu0 %v707
  %976 = vmatpush.bf16.msra.mxu0 %v705
  %977 = vmatpush.bf16.msra.mxu0 %v703
  %978 = vmatpush.bf16.msra.mxu0 %v701
  %979 = vmatpush.bf16.msra.mxu0 %v699
  %980 = vmatpush.bf16.msra.mxu0 %v697
  %981 = vmatmul.bf16.gmra.mxu0 %v187
  %v982 = vpop.f32.mrf.mxu0
  %v983 = vadd.f32 %v970, %v982
  %v984 = vpop.f32.mrf.mxu0
  %985 = vdwg.mxu0
  %986 = vmatpush.bf16.msra.mxu0 %v727
  %987 = vmatpush.bf16.msra.mxu0 %v725
  %988 = vmatpush.bf16.msra.mxu0 %v723
  %989 = vmatpush.bf16.msra.mxu0 %v721
  %990 = vmatpush.bf16.msra.mxu0 %v719
  %991 = vmatpush.bf16.msra.mxu0 %v717
  %992 = vmatpush.bf16.msra.mxu0 %v715
  %993 = vmatpush.bf16.msra.mxu0 %v713
  %994 = vmatmul.bf16.gmra.mxu0 %v188
  %v995 = vpop.f32.mrf.mxu0
  %v996 = vadd.f32 %v983, %v995
  %v997 = vpop.f32.mrf.mxu0
  %998 = vdwg.mxu0
  %999 = vmatpush.bf16.msra.mxu0 %v743
  %1000 = vmatpush.bf16.msra.mxu0 %v741
  %1001 = vmatpush.bf16.msra.mxu0 %v739
  %1002 = vmatpush.bf16.msra.mxu0 %v737
  %1003 = vmatpush.bf16.msra.mxu0 %v735
  %1004 = vmatpush.bf16.msra.mxu0 %v733
  %1005 = vmatpush.bf16.msra.mxu0 %v731
  %1006 = vmatpush.bf16.msra.mxu0 %v729
  %1007 = vmatmul.bf16.gmra.mxu0 %v189
  %v1008 = vpop.f32.mrf.mxu0
  %v1009 = vadd.f32 %v996, %v1008
  %v1010 = vpop.f32.mrf.mxu0
  %1011 = vdwg.mxu0
  %1012 = vmatpush.bf16.msra.mxu0 %v759
  %1013 = vmatpush.bf16.msra.mxu0 %v757
  %1014 = vmatpush.bf16.msra.mxu0 %v755
  %1015 = vmatpush.bf16.msra.mxu0 %v753
  %1016 = vmatpush.bf16.msra.mxu0 %v751
  %1017 = vmatpush.bf16.msra.mxu0 %v749
  %1018 = vmatpush.bf16.msra.mxu0 %v747
  %1019 = vmatpush.bf16.msra.mxu0 %v745
  %1020 = vmatmul.bf16.gmra.mxu0 %v190
  %v1021 = vpop.f32.mrf.mxu0
  %v1022 = vadd.f32 %v1009, %v1021
  %v1023 = vpop.f32.mrf.mxu0
  %1024 = vdwg.mxu0
  %1025 = vmatpush.bf16.msra.mxu0 %v775
  %1026 = vmatpush.bf16.msra.mxu0 %v773
  %1027 = vmatpush.bf16.msra.mxu0 %v771
  %1028 = vmatpush.bf16.msra.mxu0 %v769
  %1029 = vmatpush.bf16.msra.mxu0 %v767
  %1030 = vmatpush.bf16.msra.mxu0 %v765
  %1031 = vmatpush.bf16.msra.mxu0 %v763
  %1032 = vmatpush.bf16.msra.mxu0 %v761
  %1033 = vmatmul.bf16.gmra.mxu0 %v191
  %v1034 = vpop.f32.mrf.mxu0
  %v1035 = vadd.f32 %v1022, %v1034
  %v1036 = vpop.f32.mrf.mxu0
  %1037 = vdwg.mxu0
  %1038 = vmatpush.bf16.msra.mxu0 %v648
  %1039 = vmatpush.bf16.msra.mxu0 %v646
  %1040 = vmatpush.bf16.msra.mxu0 %v644
  %1041 = vmatpush.bf16.msra.mxu0 %v642
  %1042 = vmatpush.bf16.msra.mxu0 %v640
  %1043 = vmatpush.bf16.msra.mxu0 %v638
  %1044 = vmatpush.bf16.msra.mxu0 %v636
  %1045 = vmatpush.bf16.msra.mxu0 %v634
  %1046 = vmatmul.bf16.gmra.mxu0 %v183
  %v1047 = vpop.f32.mrf.mxu0
  %v1048 = vadd.f32 %v166, %v1047
  %v1049 = vpop.f32.mrf.mxu0
  %1050 = vdwg.mxu0
  %1051 = vmatpush.bf16.msra.mxu0 %v664
  %1052 = vmatpush.bf16.msra.mxu0 %v662
  %1053 = vmatpush.bf16.msra.mxu0 %v660
  %1054 = vmatpush.bf16.msra.mxu0 %v658
  %1055 = vmatpush.bf16.msra.mxu0 %v656
  %1056 = vmatpush.bf16.msra.mxu0 %v654
  %1057 = vmatpush.bf16.msra.mxu0 %v652
  %1058 = vmatpush.bf16.msra.mxu0 %v650
  %1059 = vmatmul.bf16.gmra.mxu0 %v184
  %v1060 = vpop.f32.mrf.mxu0
  %v1061 = vadd.f32 %v1048, %v1060
  %v1062 = vpop.f32.mrf.mxu0
  %1063 = vdwg.mxu0
  %1064 = vmatpush.bf16.msra.mxu0 %v680
  %1065 = vmatpush.bf16.msra.mxu0 %v678
  %1066 = vmatpush.bf16.msra.mxu0 %v676
  %1067 = vmatpush.bf16.msra.mxu0 %v674
  %1068 = vmatpush.bf16.msra.mxu0 %v672
  %1069 = vmatpush.bf16.msra.mxu0 %v670
  %1070 = vmatpush.bf16.msra.mxu0 %v668
  %1071 = vmatpush.bf16.msra.mxu0 %v666
  %1072 = vmatmul.bf16.gmra.mxu0 %v185
  %v1073 = vpop.f32.mrf.mxu0
  %v1074 = vadd.f32 %v1061, %v1073
  %v1075 = vpop.f32.mrf.mxu0
  %1076 = vdwg.mxu0
  %1077 = vmatpush.bf16.msra.mxu0 %v696
  %1078 = vmatpush.bf16.msra.mxu0 %v694
  %1079 = vmatpush.bf16.msra.mxu0 %v692
  %1080 = vmatpush.bf16.msra.mxu0 %v690
  %1081 = vmatpush.bf16.msra.mxu0 %v688
  %1082 = vmatpush.bf16.msra.mxu0 %v686
  %1083 = vmatpush.bf16.msra.mxu0 %v684
  %1084 = vmatpush.bf16.msra.mxu0 %v682
  %1085 = vmatmul.bf16.gmra.mxu0 %v186
  %v1086 = vpop.f32.mrf.mxu0
  %v1087 = vadd.f32 %v1074, %v1086
  %v1088 = vpop.f32.mrf.mxu0
  %1089 = vdwg.mxu0
  %1090 = vmatpush.bf16.msra.mxu0 %v712
  %1091 = vmatpush.bf16.msra.mxu0 %v710
  %1092 = vmatpush.bf16.msra.mxu0 %v708
  %1093 = vmatpush.bf16.msra.mxu0 %v706
  %1094 = vmatpush.bf16.msra.mxu0 %v704
  %1095 = vmatpush.bf16.msra.mxu0 %v702
  %1096 = vmatpush.bf16.msra.mxu0 %v700
  %1097 = vmatpush.bf16.msra.mxu0 %v698
  %1098 = vmatmul.bf16.gmra.mxu0 %v187
  %v1099 = vpop.f32.mrf.mxu0
  %v1100 = vadd.f32 %v1087, %v1099
  %v1101 = vpop.f32.mrf.mxu0
  %1102 = vdwg.mxu0
  %1103 = vmatpush.bf16.msra.mxu0 %v728
  %1104 = vmatpush.bf16.msra.mxu0 %v726
  %1105 = vmatpush.bf16.msra.mxu0 %v724
  %1106 = vmatpush.bf16.msra.mxu0 %v722
  %1107 = vmatpush.bf16.msra.mxu0 %v720
  %1108 = vmatpush.bf16.msra.mxu0 %v718
  %1109 = vmatpush.bf16.msra.mxu0 %v716
  %1110 = vmatpush.bf16.msra.mxu0 %v714
  %1111 = vmatmul.bf16.gmra.mxu0 %v188
  %v1112 = vpop.f32.mrf.mxu0
  %v1113 = vadd.f32 %v1100, %v1112
  %v1114 = vpop.f32.mrf.mxu0
  %1115 = vdwg.mxu0
  %1116 = vmatpush.bf16.msra.mxu0 %v744
  %1117 = vmatpush.bf16.msra.mxu0 %v742
  %1118 = vmatpush.bf16.msra.mxu0 %v740
  %1119 = vmatpush.bf16.msra.mxu0 %v738
  %1120 = vmatpush.bf16.msra.mxu0 %v736
  %1121 = vmatpush.bf16.msra.mxu0 %v734
  %1122 = vmatpush.bf16.msra.mxu0 %v732
  %1123 = vmatpush.bf16.msra.mxu0 %v730
  %1124 = vmatmul.bf16.gmra.mxu0 %v189
  %v1125 = vpop.f32.mrf.mxu0
  %v1126 = vadd.f32 %v1113, %v1125
  %v1127 = vpop.f32.mrf.mxu0
  %1128 = vdwg.mxu0
  %1129 = vmatpush.bf16.msra.mxu0 %v760
  %1130 = vmatpush.bf16.msra.mxu0 %v758
  %1131 = vmatpush.bf16.msra.mxu0 %v756
  %1132 = vmatpush.bf16.msra.mxu0 %v754
  %1133 = vmatpush.bf16.msra.mxu0 %v752
  %1134 = vmatpush.bf16.msra.mxu0 %v750
  %1135 = vmatpush.bf16.msra.mxu0 %v748
  %1136 = vmatpush.bf16.msra.mxu0 %v746
  %1137 = vmatmul.bf16.gmra.mxu0 %v190
  %v1138 = vpop.f32.mrf.mxu0
  %v1139 = vadd.f32 %v1126, %v1138
  %v1140 = vpop.f32.mrf.mxu0
  %1141 = vdwg.mxu0
  %1142 = vmatpush.bf16.msra.mxu0 %v776
  %1143 = vmatpush.bf16.msra.mxu0 %v774
  %1144 = vmatpush.bf16.msra.mxu0 %v772
  %1145 = vmatpush.bf16.msra.mxu0 %v770
  %1146 = vmatpush.bf16.msra.mxu0 %v768
  %1147 = vmatpush.bf16.msra.mxu0 %v766
  %1148 = vmatpush.bf16.msra.mxu0 %v764
  %1149 = vmatpush.bf16.msra.mxu0 %v762
  %1150 = vmatmul.bf16.gmra.mxu0 %v191
  %v1151 = vpop.f32.mrf.mxu0
  %v1152 = vadd.f32 %v1139, %v1151
  %v1153 = vpop.f32.mrf.mxu0
  %1154 = vdwg.mxu0
  %v1155 = vmax.f32 %v1035, 0.0
  %v1156 = vmax.f32 %v1152, 0.0
  %1157 = vst [vmem:[%s3] sm:$0xff] %v1155
  %1158 = vst [vmem:[%s3 + $0x8] sm:$0xff] %v1156
  // Predicated region
  $region14: #{auxiliary_convolutions.7} parent=0 // pred_check
    _
  $region15: #{auxiliary_convolutions.7} parent=0 // pred_check_branch
    %1160 = sbr.rel (0) target = $region17
  $region16: #{auxiliary_convolutions.7} parent=0 // pred_region
    _
  $region17: #{auxiliary_convolutions.7} parent=0 // pred_fallthru
    _
  // Predicated region
  $region18: #{auxiliary_convolutions.7} parent=0 // pred_check
    _
  $region19: #{auxiliary_convolutions.7} parent=0 // pred_check_branch
    %1162 = sbr.rel (0) target = $region21
  $region20: #{auxiliary_convolutions.7} parent=0 // pred_region
    _
  $region21: #{auxiliary_convolutions.7} parent=0 // pred_fallthru
    _

</llo_original>
